<compile_context>
chip_gen: v6e
topology: v6e:2x2x1
jax: 0.10.0
libtpu: 0.0.40
codegen_flags: <defaults>
</compile_context>

<pallas_src>
import functools
import math

import jax
import jax.numpy as jnp
from jax.experimental import pallas as pl
from jax.experimental.pallas import tpu as pltpu


def _round_up(x, m):
    return ((x + m - 1) // m) * m


def _pick_rows(h_out, cols_pad, n_out):
    """Largest divisor of h_out with rows*cols_pad ~ 512 and a small f32 accumulator."""
    target = max(1, 512 // max(cols_pad, 1))
    cap = max(1, (2 * 1024 * 1024) // max(4 * cols_pad * n_out, 1))
    target = max(1, min(target, cap, h_out))
    best = 1
    for d in range(1, h_out + 1):
        if h_out % d == 0 and d <= target:
            best = d
    return best


# ----------------------------- Pallas kernels -----------------------------

def _conv_tile_kernel(x_ref, w_ref, b_ref, o_ref, *, taps, rows, cols_pad, neg_slope):
    """Fused conv over a tile of output rows.

    x_ref : (Hin, Win, K)      whole prepped image (resident across row tiles), bf16
    w_ref : (T, K, Nout)       stacked per-tap weight matrices, bf16
    b_ref : (1, Nout)          f32 bias
    o_ref : (rows, Wout, Nout) output row tile, bf16
    taps  : static tuple of (dr, dc, t): accumulate x[r0+dr : r0+dr+rows, dc : dc+cols_pad]
            reshaped to (rows*cols_pad, K) against w_ref[t].
    """
    out_cols = o_ref.shape[1]
    n_out = o_ref.shape[2]
    k_in = x_ref.shape[2]
    r0 = pl.program_id(1) * rows

    acc = jnp.zeros((rows * cols_pad, n_out), jnp.float32)
    for (dr, dc, t) in taps:
        xs = x_ref[pl.ds(r0 + dr, rows), pl.ds(dc, cols_pad), :]
        acc = acc + jnp.dot(xs.reshape(rows * cols_pad, k_in), w_ref[t],
                            preferred_element_type=jnp.float32)
    acc = acc + b_ref[...]                                   # bias once per tile (f32)
    acc = jnp.where(acc >= 0.0, acc, neg_slope * acc)        # LeakyReLU in f32
    out = acc.reshape(rows, cols_pad, n_out)[:, :out_cols, :]
    o_ref[...] = out.astype(o_ref.dtype)


def fused_conv(x, w_taps, bias, taps, out_rows, out_cols, n_out, neg_slope=0.2,
               out_dtype=jnp.bfloat16):
    """x: (N, Hin, Win, K) prepped input -> (N, out_rows, out_cols, n_out)."""
    N, Hin, Win, K = x.shape
    T = w_taps.shape[0]
    cols_pad = _round_up(out_cols, 16)
    max_dr = max(t[0] for t in taps)
    max_dc = max(t[1] for t in taps)
    assert Win >= cols_pad + max_dc, (Win, cols_pad, max_dc)
    assert Hin >= out_rows + max_dr, (Hin, out_rows, max_dr)

    rows = _pick_rows(out_rows, cols_pad, n_out)
    n_row_tiles = out_rows // rows

    bias2 = bias.reshape(1, n_out).astype(jnp.float32)

    flops = 2 * N * out_rows * cols_pad * len(taps) * K * n_out
    bytes_acc = (x.size * x.dtype.itemsize
                 + w_taps.size * w_taps.dtype.itemsize
                 + n_out * 4
                 + N * out_rows * out_cols * n_out * jnp.dtype(out_dtype).itemsize)

    x_blk = Hin * Win * K * x.dtype.itemsize
    o_blk = rows * out_cols * n_out * jnp.dtype(out_dtype).itemsize
    need = (2 * x_blk + 2 * o_blk + w_taps.size * w_taps.dtype.itemsize
            + rows * cols_pad * n_out * 4 + rows * cols_pad * K * 4)
    vmem_limit = int(min(48 * 2 ** 20, max(32 * 2 ** 20, 2 * need)))

    kernel = functools.partial(_conv_tile_kernel, taps=taps, rows=rows,
                               cols_pad=cols_pad, neg_slope=neg_slope)
    return pl.pallas_call(
        kernel,
        out_shape=jax.ShapeDtypeStruct((N, out_rows, out_cols, n_out), out_dtype),
        grid=(N, n_row_tiles),
        in_specs=[
            pl.BlockSpec((None, Hin, Win, K), lambda n, r: (n, 0, 0, 0)),
            pl.BlockSpec((T, K, n_out), lambda n, r: (0, 0, 0)),
            pl.BlockSpec((1, n_out), lambda n, r: (0, 0)),
        ],
        out_specs=pl.BlockSpec((None, rows, out_cols, n_out), lambda n, r: (n, r, 0, 0)),
        compiler_params=pltpu.CompilerParams(
            dimension_semantics=("parallel", "parallel"),
            vmem_limit_bytes=vmem_limit),
        cost_estimate=pl.CostEstimate(flops=int(flops), transcendentals=0,
                                      bytes_accessed=int(bytes_acc)),
    )(x, w_taps, bias2)


def _proj_mix_kernel(x_ref, w_ref, b_ref, m_ref, tok_ref, o_ref):
    """1x1-conv projection fused with the mask-token mix epilogue (f32 epilogue)."""
    y = jnp.dot(x_ref[...], w_ref[...], preferred_element_type=jnp.float32)
    y = y + b_ref[...]
    m = m_ref[...].astype(jnp.float32)
    o_ref[...] = (y * (1.0 - m) + tok_ref[...] * m).astype(o_ref.dtype)


def proj_and_mix(x2d, w, b, m2d, tok, tm=1024):
    """x2d: (M, K) bf16 @ w: (K, D) bf16 + b, then mix with mask_token. No M padding."""
    M, K = x2d.shape
    D = w.shape[1]
    tm = min(tm, _round_up(M, 8))
    return pl.pallas_call(
        _proj_mix_kernel,
        out_shape=jax.ShapeDtypeStruct((M, D), jnp.bfloat16),
        grid=(pl.cdiv(M, tm),),
        in_specs=[
            pl.BlockSpec((tm, K), lambda i: (i, 0)),
            pl.BlockSpec((K, D), lambda i: (0, 0)),
            pl.BlockSpec((1, D), lambda i: (0, 0)),
            pl.BlockSpec((tm, 1), lambda i: (i, 0)),
            pl.BlockSpec((1, D), lambda i: (0, 0)),
        ],
        out_specs=pl.BlockSpec((tm, D), lambda i: (i, 0)),
        compiler_params=pltpu.CompilerParams(dimension_semantics=("parallel",)),
    )(x2d, w, b.reshape(1, D).astype(jnp.float32), m2d, tok)


def _masked_mse_kernel(p_ref, t_ref, m_ref, o_ref, num_ref, den_ref,
                       *, n_rows, block_rows):
    i = pl.program_id(0)

    @pl.when(i == 0)
    def _init():
        num_ref[...] = jnp.zeros_like(num_ref)
        den_ref[...] = jnp.zeros_like(den_ref)

    d = p_ref[...] - t_ref[...]
    per_row = jnp.mean(d * d, axis=-1, keepdims=True)               # (tr, 1)
    rows = i * block_rows + jax.lax.broadcasted_iota(jnp.int32, m_ref.shape, 0)
    valid = rows < n_rows
    mv = jnp.where(valid, m_ref[...], 0.0)
    pr = jnp.where(valid, per_row, 0.0)
    num_ref[...] += jnp.sum(pr * mv, axis=(0, 1), keepdims=True)
    den_ref[...] += jnp.sum(mv, axis=(0, 1), keepdims=True)

    @pl.when(i == pl.num_programs(0) - 1)
    def _fin():
        o_ref[...] = num_ref[...] / jnp.maximum(den_ref[...], 1e-8)


def pallas_masked_mse(pred_p, target_p, mask, tr=512):
    N, L, P = pred_p.shape
    R = N * L
    p2 = pred_p.reshape(R, P).astype(jnp.float32)
    t2 = target_p.reshape(R, P).astype(jnp.float32)
    m2 = mask.reshape(R, 1).astype(jnp.float32)
    tr = min(tr, _round_up(R, 8))
    kernel = functools.partial(_masked_mse_kernel, n_rows=R, block_rows=tr)
    out = pl.pallas_call(
        kernel,
        out_shape=jax.ShapeDtypeStruct((1, 1), jnp.float32),
        grid=(pl.cdiv(R, tr),),
        in_specs=[
            pl.BlockSpec((tr, P), lambda i: (i, 0)),
            pl.BlockSpec((tr, P), lambda i: (i, 0)),
            pl.BlockSpec((tr, 1), lambda i: (i, 0)),
        ],
        out_specs=pl.BlockSpec((1, 1), lambda i: (0, 0)),
        scratch_shapes=[pltpu.VMEM((1, 1), jnp.float32),
                        pltpu.VMEM((1, 1), jnp.float32)],
        compiler_params=pltpu.CompilerParams(dimension_semantics=("arbitrary",)),
    )(p2, t2, m2)
    return out[0, 0]


# --------------------- weight / input preparation (XLA, 1x) ---------------------

def _pad_space_to_depth(x, extra_cols=0):
    """(N, H, W, C) [H, W even] -> (N, H//2+1, W//2+1+extra_cols, 4*C).

    Pad-1 + parity split; extra zero columns on the right so the conv kernel can use a
    16-aligned column tile with layout-trivial reshapes.
    """
    xp = jnp.pad(x, ((0, 0), (1, 1), (1, 1 + 2 * extra_cols), (0, 0)))
    N, Hp, Wp, C = xp.shape
    xs = xp.reshape(N, Hp // 2, 2, Wp // 2, 2, C)
    xs = jnp.transpose(xs, (0, 1, 3, 2, 4, 5))
    return xs.reshape(N, Hp // 2, Wp // 2, 4 * C)


def _prep_stride2_weights(w):
    """3x3/stride-2/pad-1 conv weights -> 4 tap matrices over the s2d input.

    w: (3, 3, Cin, Cout) -> (4, 4*Cin, Cout), taps = ((dr, dc, t) x 4).
    """
    kh, kw, cin, cout = w.shape
    wf = jnp.zeros((4, 4, cin, cout), w.dtype).at[:kh, :kw].set(w)
    mats, taps = [], []
    for dr in range(2):
        for dc in range(2):
            blocks = [wf[2 * dr + r, 2 * dc + s]
                      for r in range(2) for s in range(2)]           # parity order r*2+s
            taps.append((dr, dc, len(mats)))
            mats.append(jnp.concatenate(blocks, axis=0))              # (4*Cin, Cout)
    return jnp.stack(mats), tuple(taps)


def _prep_upsample_conv_weights(w):
    """nearest x2 upsample + 3x3/pad-1 conv -> 9 tap matrices over the padded low-res
    input producing a fully 2x2-parity-packed output (lane dim = 4*Cout).

    w: (3, 3, Cin, Cout) -> (9, Cin, 4*Cout); packed channel block (rp*2+rq)*Cout + k
    corresponds to the true output pixel (2a+rp, 2c+rq, k).
    """
    kh, kw, cin, cout = w.shape

    def off(par, i):                 # padded low-res row/col offset of kernel index i
        return (par + i - 1) // 2 + 1

    mats, taps = [], []
    for dr in range(3):
        for dc in range(3):
            blocks = []
            for rp in range(2):
                for rq in range(2):
                    acc = jnp.zeros((cin, cout), w.dtype)
                    for i in range(kh):
                        for j in range(kw):
                            if off(rp, i) == dr and off(rq, j) == dc:
                                acc = acc + w[i, j]
                    blocks.append(acc)
            taps.append((dr, dc, len(mats)))
            mats.append(jnp.concatenate(blocks, axis=1))              # (Cin, 4*Cout)
    return jnp.stack(mats), tuple(taps)


# --------------------------------- model ---------------------------------

class FCMAE:
    def __init__(self, key, enc_nf, dec_nf, in_chans, patch_size,
                 decoder_embed_dim, mask_ratio=0.6, ndims=2, norm_pix_loss=False):
        assert ndims == 2, "this kernel implements the 2-D path"
        # TODO(synk): 3-D (Conv3d) path of the reference module is not implemented.
        self.patch_size = [patch_size] * ndims if isinstance(patch_size, int) else patch_size
        self.ndims = ndims
        self.mask_ratio = mask_ratio
        self.norm_pix_loss = norm_pix_loss
        scale = int(math.log2(self.patch_size[0]))
        assert len(enc_nf) == scale and len(dec_nf) == scale
        assert dec_nf[-1] == in_chans, "decoder must reconstruct in_chans channels"

        keys = list(jax.random.split(key, len(enc_nf) + len(dec_nf) + 2))
        ki = iter(keys)

        def conv_init(k, kh, kw, cin, cout):
            # trunc_normal_ (mean 0, std 1, cut at +-2) weights, zero bias.
            w = jax.random.truncated_normal(k, -2.0, 2.0, (kh, kw, cin, cout),
                                            dtype=jnp.float32)
            return w, jnp.zeros((cout,), jnp.float32)

        # encoder: stride-2 3x3 conv blocks (weights pre-packed for the s2d layout)
        self.enc_layers = []
        cin = in_chans
        for nf in enc_nf:
            w, b = conv_init(next(ki), 3, 3, cin, nf)
            w_taps, taps = _prep_stride2_weights(w)
            self.enc_layers.append((w_taps.astype(jnp.bfloat16), b, taps, nf))
            cin = nf

        # 1x1 projection (fused with the mask-token mix at call time)
        self.proj_w = jax.random.truncated_normal(
            next(ki), -2.0, 2.0, (cin, decoder_embed_dim),
            dtype=jnp.float32).astype(jnp.bfloat16)
        self.proj_b = jnp.zeros((decoder_embed_dim,), jnp.float32)

        # decoder: fused (nearest x2 upsample + 3x3 conv) blocks, parity-packed output
        self.dec_layers = []
        cin = decoder_embed_dim
        for nf in dec_nf:
            w, b = conv_init(next(ki), 3, 3, cin, nf)
            w_taps, taps = _prep_upsample_conv_weights(w)
            self.dec_layers.append((w_taps.astype(jnp.bfloat16), jnp.tile(b, 4), taps, nf))
            cin = nf

        # mask_token ~ N(0, 0.02^2), stored as (1, D)
        self.mask_token = 0.02 * jax.random.normal(
            next(ki), (1, decoder_embed_dim), dtype=jnp.float32)

    # ---- plain-JAX glue ----
    def patchify(self, imgs):
        N, c, H, W = imgs.shape
        p_h, p_w = self.patch_size
        h, w = H // p_h, W // p_w
        x = imgs.reshape(N, c, h, p_h, w, p_w)
        x = jnp.einsum('nchpwq->nhwpqc', x)
        return x.reshape(N, h * w, p_h * p_w * c)

    def gen_random_mask(self, key, x):
        N = x.shape[0]
        gh = x.shape[2] // self.patch_size[0]
        gw = x.shape[3] // self.patch_size[1]
        L = gh * gw
        len_keep = int(L * (1 - self.mask_ratio))
        noise = jax.random.normal(key, (N, L))
        ids_shuffle = jnp.argsort(noise, axis=1)
        ids_restore = jnp.argsort(ids_shuffle, axis=1)
        mask = jnp.ones((N, L), jnp.float32).at[:, :len_keep].set(0.0)
        mask = jnp.take_along_axis(mask, ids_restore, axis=1)
        return mask

    def upsample_mask(self, x_shape, mask):
        N, _, H, W = x_shape
        gh = H // self.patch_size[0]
        gw = W // self.patch_size[1]
        m = mask.reshape(N, gh, gw)
        m = jnp.repeat(m, H // gh, axis=1)
        m = jnp.repeat(m, W // gw, axis=2)
        return m                                                     # (N, H, W)

    # ---- forward pieces ----
    def forward_encoder(self, imgs_nchw, mask):
        x = jnp.transpose(imgs_nchw, (0, 2, 3, 1))                   # NHWC f32
        m_up = self.upsample_mask(imgs_nchw.shape, mask)             # (N, H, W)
        x = (x * (1.0 - m_up[..., None])).astype(jnp.bfloat16)       # mask-mix + bf16
        for (w_taps, b, taps, nf) in self.enc_layers:
            ho, wo = x.shape[1] // 2, x.shape[2] // 2
            wo_pad = _round_up(wo, 16)
            # TODO(synk): fold halo/parity into the kernel to avoid this HBM round trip.
            xs = _pad_space_to_depth(x, extra_cols=wo_pad - wo)
            x = fused_conv(xs, w_taps, b, taps,
                           out_rows=ho, out_cols=wo, n_out=nf, neg_slope=0.2)
        return x                                                     # (N, H/p, W/p, enc_nf[-1]) bf16

    def forward_decoder(self, x, mask):
        N, Hs, Ws, Ce = x.shape
        D = self.proj_w.shape[1]
        x2 = x.reshape(N * Hs * Ws, Ce)
        m2 = mask.reshape(N * Hs * Ws, 1).astype(jnp.float32)
        x = proj_and_mix(x2, self.proj_w, self.proj_b, m2, self.mask_token)
        x = x.reshape(N, Hs, Ws, D)
        for (w_taps, b4, taps, nf) in self.dec_layers:
            h, w = x.shape[1], x.shape[2]
            w_pad = _round_up(w, 16)
            # TODO(synk): handle the +1 halo inside the kernel instead of jnp.pad.
            xp = jnp.pad(x, ((0, 0), (1, 1), (1, 1 + (w_pad - w)), (0, 0)))
            o = fused_conv(xp, w_taps, b4, taps,
                           out_rows=h, out_cols=w, n_out=4 * nf, neg_slope=0.2)
            # 2x2 depth-to-space (XLA): (N, h, w, 4*nf) -> (N, 2h, 2w, nf)
            x = o.reshape(N, h, w, 2, 2, nf).transpose(0, 1, 3, 2, 4, 5)
            x = x.reshape(N, 2 * h, 2 * w, nf)
        return jnp.transpose(x, (0, 3, 1, 2)).astype(jnp.float32)    # NCHW f32

    def forward_loss(self, imgs, pred, mask):
        pred_p = self.patchify(pred) if pred.shape == imgs.shape else pred
        target = self.patchify(imgs)
        if self.norm_pix_loss:
            mean = target.mean(axis=-1, keepdims=True)
            var = target.var(axis=-1, keepdims=True)
            target = (target - mean) / (var + 1e-6) ** 0.5
        return pallas_masked_mse(pred_p, target, mask)

    def forward(self, key, imgs):
        mask = self.gen_random_mask(key, imgs)
        x = self.forward_encoder(imgs, mask)
        pred = self.forward_decoder(x, mask)
        loss = self.forward_loss(imgs, pred, mask)
        return loss, pred, mask


# --------------------------------- main ---------------------------------

if __name__ == "__main__":
    key = jax.random.PRNGKey(0)
    pkey, dkey, mkey = jax.random.split(key, 3)

    # enc_nf / dec_nf lengths == log2(patch_size); dec_nf[-1] == in_chans.
    model = FCMAE(pkey, enc_nf=[8, 16], dec_nf=[8, 4], in_chans=4,
                  patch_size=4, decoder_embed_dim=8, mask_ratio=0.6, ndims=2)

    imgs = jax.random.normal(dkey, (2, 4, 16, 16), dtype=jnp.float32)  # NCHW
    fwd = jax.jit(model.forward)
    loss, pred, mask = fwd(mkey, imgs)
    (loss, pred, mask) = jax.block_until_ready((loss, pred, mask))

    assert pred.shape == imgs.shape, pred.shape
    assert mask.shape == (2, 16), mask.shape
    assert bool(jnp.isfinite(loss)), loss
    print("KERNEL_OK")
</pallas_src>

<mosaic_0001>
module attributes {stable_mosaic.version = 11 : i64} {
  func.func @_conv_tile_kernel(%arg0: i32, %arg1: i32, %arg2: memref<1x9x17x16xbf16, #tpu.memory_space<vmem>>, %arg3: memref<4x16x8xbf16, #tpu.memory_space<vmem>>, %arg4: memref<1x8xf32, #tpu.memory_space<vmem>>, %arg5: memref<1x8x8x8xbf16, #tpu.memory_space<vmem>>) attributes {dimension_semantics = [#tpu.dimension_semantics<parallel>, #tpu.dimension_semantics<parallel>], iteration_bounds = array<i64: 2, 1>, scalar_prefetch = 0 : i64, scratch_operands = 0 : i64, tpu.core_type = #tpu.core_type<tc>, window_params = [{transform_indices = @transform_0, window_bounds = array<i64: 1, 9, 17, 16>}, {pipeline_mode = #tpu.pipeline_mode<synchronous>, transform_indices = @transform_1, window_bounds = array<i64: 4, 16, 8>}, {pipeline_mode = #tpu.pipeline_mode<synchronous>, transform_indices = @transform_2, window_bounds = array<i64: 1, 8>}, {transform_indices = @transform_3, window_bounds = array<i64: 1, 8, 8, 8>}]} {
    %c8_i32 = arith.constant 8 : i32
    %0 = arith.muli %arg1, %c8_i32 : i32
    %cst = arith.constant 0.000000e+00 : f32
    %1 = vector.broadcast %cst : f32 to vector<128x8xf32>
    %c0_i32 = arith.constant 0 : i32
    %2 = arith.addi %0, %c0_i32 : i32
    %c0 = arith.constant 0 : index
    %3 = arith.index_cast %2 : i32 to index
    %c0_0 = arith.constant 0 : index
    %c0_1 = arith.constant 0 : index
    %4 = vector.load %arg2[%c0, %3, %c0_0, %c0_1] : memref<1x9x17x16xbf16, #tpu.memory_space<vmem>>, vector<1x8x16x16xbf16>
    %5 = vector.shape_cast %4 : vector<1x8x16x16xbf16> to vector<8x16x16xbf16>
    %6 = vector.shape_cast %5 : vector<8x16x16xbf16> to vector<128x16xbf16>
    %c0_2 = arith.constant 0 : index
    %c0_3 = arith.constant 0 : index
    %c0_4 = arith.constant 0 : index
    %7 = vector.load %arg3[%c0_2, %c0_3, %c0_4] : memref<4x16x8xbf16, #tpu.memory_space<vmem>>, vector<1x16x8xbf16>
    %8 = vector.shape_cast %7 : vector<1x16x8xbf16> to vector<16x8xbf16>
    %cst_5 = arith.constant dense<0.000000e+00> : vector<128x8xf32>
    %9 = tpu.matmul %6, %8, %cst_5 {dimension_numbers = #tpu.dot_dimension_numbers<[1], [0], [0], [1], [0, 0, 1, 1], [], []>} : vector<128x16xbf16>, vector<16x8xbf16>, vector<128x8xf32> -> vector<128x8xf32>
    %10 = arith.addf %1, %9 : vector<128x8xf32>
    %c0_i32_6 = arith.constant 0 : i32
    %11 = arith.addi %0, %c0_i32_6 : i32
    %c0_7 = arith.constant 0 : index
    %12 = arith.index_cast %11 : i32 to index
    %c1 = arith.constant 1 : index
    %c0_8 = arith.constant 0 : index
    %13 = vector.load %arg2[%c0_7, %12, %c1, %c0_8] : memref<1x9x17x16xbf16, #tpu.memory_space<vmem>>, vector<1x8x16x16xbf16>
    %14 = vector.shape_cast %13 : vector<1x8x16x16xbf16> to vector<8x16x16xbf16>
    %15 = vector.shape_cast %14 : vector<8x16x16xbf16> to vector<128x16xbf16>
    %c1_9 = arith.constant 1 : index
    %c0_10 = arith.constant 0 : index
    %c0_11 = arith.constant 0 : index
    %16 = vector.load %arg3[%c1_9, %c0_10, %c0_11] : memref<4x16x8xbf16, #tpu.memory_space<vmem>>, vector<1x16x8xbf16>
    %17 = vector.shape_cast %16 : vector<1x16x8xbf16> to vector<16x8xbf16>
    %cst_12 = arith.constant dense<0.000000e+00> : vector<128x8xf32>
    %18 = tpu.matmul %15, %17, %cst_12 {dimension_numbers = #tpu.dot_dimension_numbers<[1], [0], [0], [1], [0, 0, 1, 1], [], []>} : vector<128x16xbf16>, vector<16x8xbf16>, vector<128x8xf32> -> vector<128x8xf32>
    %19 = arith.addf %10, %18 : vector<128x8xf32>
    %c1_i32 = arith.constant 1 : i32
    %20 = arith.addi %0, %c1_i32 : i32
    %c0_13 = arith.constant 0 : index
    %21 = arith.index_cast %20 : i32 to index
    %c0_14 = arith.constant 0 : index
    %c0_15 = arith.constant 0 : index
    %22 = vector.load %arg2[%c0_13, %21, %c0_14, %c0_15] : memref<1x9x17x16xbf16, #tpu.memory_space<vmem>>, vector<1x8x16x16xbf16>
    %23 = vector.shape_cast %22 : vector<1x8x16x16xbf16> to vector<8x16x16xbf16>
    %24 = vector.shape_cast %23 : vector<8x16x16xbf16> to vector<128x16xbf16>
    %c2 = arith.constant 2 : index
    %c0_16 = arith.constant 0 : index
    %c0_17 = arith.constant 0 : index
    %25 = vector.load %arg3[%c2, %c0_16, %c0_17] : memref<4x16x8xbf16, #tpu.memory_space<vmem>>, vector<1x16x8xbf16>
    %26 = vector.shape_cast %25 : vector<1x16x8xbf16> to vector<16x8xbf16>
    %cst_18 = arith.constant dense<0.000000e+00> : vector<128x8xf32>
    %27 = tpu.matmul %24, %26, %cst_18 {dimension_numbers = #tpu.dot_dimension_numbers<[1], [0], [0], [1], [0, 0, 1, 1], [], []>} : vector<128x16xbf16>, vector<16x8xbf16>, vector<128x8xf32> -> vector<128x8xf32>
    %28 = arith.addf %19, %27 : vector<128x8xf32>
    %c1_i32_19 = arith.constant 1 : i32
    %29 = arith.addi %0, %c1_i32_19 : i32
    %c0_20 = arith.constant 0 : index
    %30 = arith.index_cast %29 : i32 to index
    %c1_21 = arith.constant 1 : index
    %c0_22 = arith.constant 0 : index
    %31 = vector.load %arg2[%c0_20, %30, %c1_21, %c0_22] : memref<1x9x17x16xbf16, #tpu.memory_space<vmem>>, vector<1x8x16x16xbf16>
    %32 = vector.shape_cast %31 : vector<1x8x16x16xbf16> to vector<8x16x16xbf16>
    %33 = vector.shape_cast %32 : vector<8x16x16xbf16> to vector<128x16xbf16>
    %c3 = arith.constant 3 : index
    %c0_23 = arith.constant 0 : index
    %c0_24 = arith.constant 0 : index
    %34 = vector.load %arg3[%c3, %c0_23, %c0_24] : memref<4x16x8xbf16, #tpu.memory_space<vmem>>, vector<1x16x8xbf16>
    %35 = vector.shape_cast %34 : vector<1x16x8xbf16> to vector<16x8xbf16>
    %cst_25 = arith.constant dense<0.000000e+00> : vector<128x8xf32>
    %36 = tpu.matmul %33, %35, %cst_25 {dimension_numbers = #tpu.dot_dimension_numbers<[1], [0], [0], [1], [0, 0, 1, 1], [], []>} : vector<128x16xbf16>, vector<16x8xbf16>, vector<128x8xf32> -> vector<128x8xf32>
    %37 = arith.addf %28, %36 : vector<128x8xf32>
    %c0_26 = arith.constant 0 : index
    %c0_27 = arith.constant 0 : index
    %38 = vector.load %arg4[%c0_26, %c0_27] : memref<1x8xf32, #tpu.memory_space<vmem>>, vector<1x8xf32>
    %39 = vector.broadcast %38 : vector<1x8xf32> to vector<128x8xf32>
    %40 = arith.addf %37, %39 : vector<128x8xf32>
    %cst_28 = arith.constant 0.000000e+00 : f32
    %41 = vector.broadcast %cst_28 : f32 to vector<128x8xf32>
    %42 = arith.cmpf oge, %40, %41 : vector<128x8xf32>
    %cst_29 = arith.constant 2.000000e-01 : f32
    %43 = vector.broadcast %cst_29 : f32 to vector<128x8xf32>
    %44 = arith.mulf %43, %40 : vector<128x8xf32>
    %45 = arith.select %42, %40, %44 : vector<128x8xi1>, vector<128x8xf32>
    %46 = vector.shape_cast %45 : vector<128x8xf32> to vector<8x16x8xf32>
    %47 = vector.extract_strided_slice %46 {offsets = [0, 0, 0], sizes = [8, 8, 8], strides = [1, 1, 1]} : vector<8x16x8xf32> to vector<8x8x8xf32>
    %48 = arith.truncf %47 : vector<8x8x8xf32> to vector<8x8x8xbf16>
    %c0_30 = arith.constant 0 : index
    %c0_31 = arith.constant 0 : index
    %c0_32 = arith.constant 0 : index
    %c0_33 = arith.constant 0 : index
    %49 = vector.load %arg5[%c0_30, %c0_31, %c0_32, %c0_33] : memref<1x8x8x8xbf16, #tpu.memory_space<vmem>>, vector<1x8x8x8xbf16>
    %50 = vector.shape_cast %49 : vector<1x8x8x8xbf16> to vector<8x8x8xbf16>
    %51 = vector.shape_cast %48 : vector<8x8x8xbf16> to vector<1x8x8x8xbf16>
    tpu.vector_store %arg5[%c0_30, %c0_31, %c0_32, %c0_33], %51 {strides = array<i32>} : memref<1x8x8x8xbf16, #tpu.memory_space<vmem>>, vector<1x8x8x8xbf16>,
    return
  }
  func.func @transform_0(%arg0: i32, %arg1: i32) -> (i32, i32, i32, i32) {
    %c0_i32 = arith.constant 0 : i32
    %c0_i32_0 = arith.constant 0 : i32
    %c0_i32_1 = arith.constant 0 : i32
    %c0_i32_2 = arith.constant 0 : i32
    return %arg0, %c0_i32, %c0_i32_0, %c0_i32_1 : i32, i32, i32, i32
  }
  func.func @transform_1(%arg0: i32, %arg1: i32) -> (i32, i32, i32) {
    %c0_i32 = arith.constant 0 : i32
    %c0_i32_0 = arith.constant 0 : i32
    %c0_i32_1 = arith.constant 0 : i32
    %c0_i32_2 = arith.constant 0 : i32
    return %c0_i32, %c0_i32_0, %c0_i32_1 : i32, i32, i32
  }
  func.func @transform_2(%arg0: i32, %arg1: i32) -> (i32, i32) {
    %c0_i32 = arith.constant 0 : i32
    %c0_i32_0 = arith.constant 0 : i32
    %c0_i32_1 = arith.constant 0 : i32
    return %c0_i32, %c0_i32_0 : i32, i32
  }
  func.func @transform_3(%arg0: i32, %arg1: i32) -> (i32, i32, i32, i32) {
    %c0_i32 = arith.constant 0 : i32
    %c0_i32_0 = arith.constant 0 : i32
    %c0_i32_1 = arith.constant 0 : i32
    return %arg0, %arg1, %c0_i32, %c0_i32_0 : i32, i32, i32, i32
  }
}

module attributes {stable_mosaic.version = 11 : i64} {
  func.func @_conv_tile_kernel(%arg0: i32, %arg1: i32, %arg2: memref<1x5x17x32xbf16, #tpu.memory_space<vmem>>, %arg3: memref<4x32x16xbf16, #tpu.memory_space<vmem>>, %arg4: memref<1x16xf32, #tpu.memory_space<vmem>>, %arg5: memref<1x4x4x16xbf16, #tpu.memory_space<vmem>>) attributes {dimension_semantics = [#tpu.dimension_semantics<parallel>, #tpu.dimension_semantics<parallel>], iteration_bounds = array<i64: 2, 1>, scalar_prefetch = 0 : i64, scratch_operands = 0 : i64, tpu.core_type = #tpu.core_type<tc>, window_params = [{transform_indices = @transform_0, window_bounds = array<i64: 1, 5, 17, 32>}, {pipeline_mode = #tpu.pipeline_mode<synchronous>, transform_indices = @transform_1, window_bounds = array<i64: 4, 32, 16>}, {pipeline_mode = #tpu.pipeline_mode<synchronous>, transform_indices = @transform_2, window_bounds = array<i64: 1, 16>}, {transform_indices = @transform_3, window_bounds = array<i64: 1, 4, 4, 16>}]} {
    %c4_i32 = arith.constant 4 : i32
    %0 = arith.muli %arg1, %c4_i32 : i32
    %cst = arith.constant 0.000000e+00 : f32
    %1 = vector.broadcast %cst : f32 to vector<64x16xf32>
    %c0_i32 = arith.constant 0 : i32
    %2 = arith.addi %0, %c0_i32 : i32
    %c0 = arith.constant 0 : index
    %3 = arith.index_cast %2 : i32 to index
    %c0_0 = arith.constant 0 : index
    %c0_1 = arith.constant 0 : index
    %4 = vector.load %arg2[%c0, %3, %c0_0, %c0_1] : memref<1x5x17x32xbf16, #tpu.memory_space<vmem>>, vector<1x4x16x32xbf16>
    %5 = vector.shape_cast %4 : vector<1x4x16x32xbf16> to vector<4x16x32xbf16>
    %6 = vector.shape_cast %5 : vector<4x16x32xbf16> to vector<64x32xbf16>
    %c0_2 = arith.constant 0 : index
    %c0_3 = arith.constant 0 : index
    %c0_4 = arith.constant 0 : index
    %7 = vector.load %arg3[%c0_2, %c0_3, %c0_4] : memref<4x32x16xbf16, #tpu.memory_space<vmem>>, vector<1x32x16xbf16>
    %8 = vector.shape_cast %7 : vector<1x32x16xbf16> to vector<32x16xbf16>
    %cst_5 = arith.constant dense<0.000000e+00> : vector<64x16xf32>
    %9 = tpu.matmul %6, %8, %cst_5 {dimension_numbers = #tpu.dot_dimension_numbers<[1], [0], [0], [1], [0, 0, 1, 1], [], []>} : vector<64x32xbf16>, vector<32x16xbf16>, vector<64x16xf32> -> vector<64x16xf32>
    %10 = arith.addf %1, %9 : vector<64x16xf32>
    %c0_i32_6 = arith.constant 0 : i32
    %11 = arith.addi %0, %c0_i32_6 : i32
    %c0_7 = arith.constant 0 : index
    %12 = arith.index_cast %11 : i32 to index
    %c1 = arith.constant 1 : index
    %c0_8 = arith.constant 0 : index
    %13 = vector.load %arg2[%c0_7, %12, %c1, %c0_8] : memref<1x5x17x32xbf16, #tpu.memory_space<vmem>>, vector<1x4x16x32xbf16>
    %14 = vector.shape_cast %13 : vector<1x4x16x32xbf16> to vector<4x16x32xbf16>
    %15 = vector.shape_cast %14 : vector<4x16x32xbf16> to vector<64x32xbf16>
    %c1_9 = arith.constant 1 : index
    %c0_10 = arith.constant 0 : index
    %c0_11 = arith.constant 0 : index
    %16 = vector.load %arg3[%c1_9, %c0_10, %c0_11] : memref<4x32x16xbf16, #tpu.memory_space<vmem>>, vector<1x32x16xbf16>
    %17 = vector.shape_cast %16 : vector<1x32x16xbf16> to vector<32x16xbf16>
    %cst_12 = arith.constant dense<0.000000e+00> : vector<64x16xf32>
    %18 = tpu.matmul %15, %17, %cst_12 {dimension_numbers = #tpu.dot_dimension_numbers<[1], [0], [0], [1], [0, 0, 1, 1], [], []>} : vector<64x32xbf16>, vector<32x16xbf16>, vector<64x16xf32> -> vector<64x16xf32>
    %19 = arith.addf %10, %18 : vector<64x16xf32>
    %c1_i32 = arith.constant 1 : i32
    %20 = arith.addi %0, %c1_i32 : i32
    %c0_13 = arith.constant 0 : index
    %21 = arith.index_cast %20 : i32 to index
    %c0_14 = arith.constant 0 : index
    %c0_15 = arith.constant 0 : index
    %22 = vector.load %arg2[%c0_13, %21, %c0_14, %c0_15] : memref<1x5x17x32xbf16, #tpu.memory_space<vmem>>, vector<1x4x16x32xbf16>
    %23 = vector.shape_cast %22 : vector<1x4x16x32xbf16> to vector<4x16x32xbf16>
    %24 = vector.shape_cast %23 : vector<4x16x32xbf16> to vector<64x32xbf16>
    %c2 = arith.constant 2 : index
    %c0_16 = arith.constant 0 : index
    %c0_17 = arith.constant 0 : index
    %25 = vector.load %arg3[%c2, %c0_16, %c0_17] : memref<4x32x16xbf16, #tpu.memory_space<vmem>>, vector<1x32x16xbf16>
    %26 = vector.shape_cast %25 : vector<1x32x16xbf16> to vector<32x16xbf16>
    %cst_18 = arith.constant dense<0.000000e+00> : vector<64x16xf32>
    %27 = tpu.matmul %24, %26, %cst_18 {dimension_numbers = #tpu.dot_dimension_numbers<[1], [0], [0], [1], [0, 0, 1, 1], [], []>} : vector<64x32xbf16>, vector<32x16xbf16>, vector<64x16xf32> -> vector<64x16xf32>
    %28 = arith.addf %19, %27 : vector<64x16xf32>
    %c1_i32_19 = arith.constant 1 : i32
    %29 = arith.addi %0, %c1_i32_19 : i32
    %c0_20 = arith.constant 0 : index
    %30 = arith.index_cast %29 : i32 to index
    %c1_21 = arith.constant 1 : index
    %c0_22 = arith.constant 0 : index
    %31 = vector.load %arg2[%c0_20, %30, %c1_21, %c0_22] : memref<1x5x17x32xbf16, #tpu.memory_space<vmem>>, vector<1x4x16x32xbf16>
    %32 = vector.shape_cast %31 : vector<1x4x16x32xbf16> to vector<4x16x32xbf16>
    %33 = vector.shape_cast %32 : vector<4x16x32xbf16> to vector<64x32xbf16>
    %c3 = arith.constant 3 : index
    %c0_23 = arith.constant 0 : index
    %c0_24 = arith.constant 0 : index
    %34 = vector.load %arg3[%c3, %c0_23, %c0_24] : memref<4x32x16xbf16, #tpu.memory_space<vmem>>, vector<1x32x16xbf16>
    %35 = vector.shape_cast %34 : vector<1x32x16xbf16> to vector<32x16xbf16>
    %cst_25 = arith.constant dense<0.000000e+00> : vector<64x16xf32>
    %36 = tpu.matmul %33, %35, %cst_25 {dimension_numbers = #tpu.dot_dimension_numbers<[1], [0], [0], [1], [0, 0, 1, 1], [], []>} : vector<64x32xbf16>, vector<32x16xbf16>, vector<64x16xf32> -> vector<64x16xf32>
    %37 = arith.addf %28, %36 : vector<64x16xf32>
    %c0_26 = arith.constant 0 : index
    %c0_27 = arith.constant 0 : index
    %38 = vector.load %arg4[%c0_26, %c0_27] : memref<1x16xf32, #tpu.memory_space<vmem>>, vector<1x16xf32>
    %39 = vector.broadcast %38 : vector<1x16xf32> to vector<64x16xf32>
    %40 = arith.addf %37, %39 : vector<64x16xf32>
    %cst_28 = arith.constant 0.000000e+00 : f32
    %41 = vector.broadcast %cst_28 : f32 to vector<64x16xf32>
    %42 = arith.cmpf oge, %40, %41 : vector<64x16xf32>
    %cst_29 = arith.constant 2.000000e-01 : f32
    %43 = vector.broadcast %cst_29 : f32 to vector<64x16xf32>
    %44 = arith.mulf %43, %40 : vector<64x16xf32>
    %45 = arith.select %42, %40, %44 : vector<64x16xi1>, vector<64x16xf32>
    %46 = vector.shape_cast %45 : vector<64x16xf32> to vector<4x16x16xf32>
    %47 = vector.extract_strided_slice %46 {offsets = [0, 0, 0], sizes = [4, 4, 16], strides = [1, 1, 1]} : vector<4x16x16xf32> to vector<4x4x16xf32>
    %48 = arith.truncf %47 : vector<4x4x16xf32> to vector<4x4x16xbf16>
    %c0_30 = arith.constant 0 : index
    %c0_31 = arith.constant 0 : index
    %c0_32 = arith.constant 0 : index
    %c0_33 = arith.constant 0 : index
    %49 = vector.load %arg5[%c0_30, %c0_31, %c0_32, %c0_33] : memref<1x4x4x16xbf16, #tpu.memory_space<vmem>>, vector<1x4x4x16xbf16>
    %50 = vector.shape_cast %49 : vector<1x4x4x16xbf16> to vector<4x4x16xbf16>
    %51 = vector.shape_cast %48 : vector<4x4x16xbf16> to vector<1x4x4x16xbf16>
    tpu.vector_store %arg5[%c0_30, %c0_31, %c0_32, %c0_33], %51 {strides = array<i32>} : memref<1x4x4x16xbf16, #tpu.memory_space<vmem>>, vector<1x4x4x16xbf16>,
    return
  }
  func.func @transform_0(%arg0: i32, %arg1: i32) -> (i32, i32, i32, i32) {
    %c0_i32 = arith.constant 0 : i32
    %c0_i32_0 = arith.constant 0 : i32
    %c0_i32_1 = arith.constant 0 : i32
    %c0_i32_2 = arith.constant 0 : i32
    return %arg0, %c0_i32, %c0_i32_0, %c0_i32_1 : i32, i32, i32, i32
  }
  func.func @transform_1(%arg0: i32, %arg1: i32) -> (i32, i32, i32) {
    %c0_i32 = arith.constant 0 : i32
    %c0_i32_0 = arith.constant 0 : i32
    %c0_i32_1 = arith.constant 0 : i32
    %c0_i32_2 = arith.constant 0 : i32
    return %c0_i32, %c0_i32_0, %c0_i32_1 : i32, i32, i32
  }
  func.func @transform_2(%arg0: i32, %arg1: i32) -> (i32, i32) {
    %c0_i32 = arith.constant 0 : i32
    %c0_i32_0 = arith.constant 0 : i32
    %c0_i32_1 = arith.constant 0 : i32
    return %c0_i32, %c0_i32_0 : i32, i32
  }
  func.func @transform_3(%arg0: i32, %arg1: i32) -> (i32, i32, i32, i32) {
    %c0_i32 = arith.constant 0 : i32
    %c0_i32_0 = arith.constant 0 : i32
    %c0_i32_1 = arith.constant 0 : i32
    return %arg0, %arg1, %c0_i32, %c0_i32_0 : i32, i32, i32, i32
  }
}

module attributes {stable_mosaic.version = 11 : i64} {
  func.func @_proj_mix_kernel(%arg0: i32, %arg1: memref<32x16xbf16, #tpu.memory_space<vmem>>, %arg2: memref<16x8xbf16, #tpu.memory_space<vmem>>, %arg3: memref<1x8xf32, #tpu.memory_space<vmem>>, %arg4: memref<32x1xf32, #tpu.memory_space<vmem>>, %arg5: memref<1x8xf32, #tpu.memory_space<vmem>>, %arg6: memref<32x8xbf16, #tpu.memory_space<vmem>>) attributes {dimension_semantics = [#tpu.dimension_semantics<parallel>], iteration_bounds = array<i64: 1>, scalar_prefetch = 0 : i64, scratch_operands = 0 : i64, tpu.core_type = #tpu.core_type<tc>, window_params = [{transform_indices = @transform_0, window_bounds = array<i64: 32, 16>}, {pipeline_mode = #tpu.pipeline_mode<synchronous>, transform_indices = @transform_1, window_bounds = array<i64: 16, 8>}, {pipeline_mode = #tpu.pipeline_mode<synchronous>, transform_indices = @transform_2, window_bounds = array<i64: 1, 8>}, {transform_indices = @transform_3, window_bounds = array<i64: 32, 1>}, {pipeline_mode = #tpu.pipeline_mode<synchronous>, transform_indices = @transform_4, window_bounds = array<i64: 1, 8>}, {transform_indices = @transform_5, window_bounds = array<i64: 32, 8>}]} {
    %c0 = arith.constant 0 : index
    %c0_0 = arith.constant 0 : index
    %0 = vector.load %arg1[%c0, %c0_0] : memref<32x16xbf16, #tpu.memory_space<vmem>>, vector<32x16xbf16>
    %c0_1 = arith.constant 0 : index
    %c0_2 = arith.constant 0 : index
    %1 = vector.load %arg2[%c0_1, %c0_2] : memref<16x8xbf16, #tpu.memory_space<vmem>>, vector<16x8xbf16>
    %cst = arith.constant dense<0.000000e+00> : vector<32x8xf32>
    %2 = tpu.matmul %0, %1, %cst {dimension_numbers = #tpu.dot_dimension_numbers<[1], [0], [0], [1], [0, 0, 1, 1], [], []>} : vector<32x16xbf16>, vector<16x8xbf16>, vector<32x8xf32> -> vector<32x8xf32>
    %c0_3 = arith.constant 0 : index
    %c0_4 = arith.constant 0 : index
    %3 = vector.load %arg3[%c0_3, %c0_4] : memref<1x8xf32, #tpu.memory_space<vmem>>, vector<1x8xf32>
    %4 = vector.broadcast %3 : vector<1x8xf32> to vector<32x8xf32>
    %5 = arith.addf %2, %4 : vector<32x8xf32>
    %c0_5 = arith.constant 0 : index
    %c0_6 = arith.constant 0 : index
    %6 = vector.load %arg4[%c0_5, %c0_6] : memref<32x1xf32, #tpu.memory_space<vmem>>, vector<32x1xf32>
    %cst_7 = arith.constant 1.000000e+00 : f32
    %7 = vector.broadcast %cst_7 : f32 to vector<32x1xf32>
    %8 = arith.subf %7, %6 : vector<32x1xf32>
    %9 = vector.broadcast %8 : vector<32x1xf32> to vector<32x8xf32>
    %10 = arith.mulf %5, %9 : vector<32x8xf32>
    %c0_8 = arith.constant 0 : index
    %c0_9 = arith.constant 0 : index
    %11 = vector.load %arg5[%c0_8, %c0_9] : memref<1x8xf32, #tpu.memory_space<vmem>>, vector<1x8xf32>
    %12 = vector.broadcast %11 : vector<1x8xf32> to vector<32x8xf32>
    %13 = vector.broadcast %6 : vector<32x1xf32> to vector<32x8xf32>
    %14 = arith.mulf %12, %13 : vector<32x8xf32>
    %15 = arith.addf %10, %14 : vector<32x8xf32>
    %16 = arith.truncf %15 : vector<32x8xf32> to vector<32x8xbf16>
    %c0_10 = arith.constant 0 : index
    %c0_11 = arith.constant 0 : index
    %17 = vector.load %arg6[%c0_10, %c0_11] : memref<32x8xbf16, #tpu.memory_space<vmem>>, vector<32x8xbf16>
    tpu.vector_store %arg6[%c0_10, %c0_11], %16 {strides = array<i32>} : memref<32x8xbf16, #tpu.memory_space<vmem>>, vector<32x8xbf16>,
    return
  }
  func.func @transform_0(%arg0: i32) -> (i32, i32) {
    %c0_i32 = arith.constant 0 : i32
    %c0_i32_0 = arith.constant 0 : i32
    return %arg0, %c0_i32 : i32, i32
  }
  func.func @transform_1(%arg0: i32) -> (i32, i32) {
    %c0_i32 = arith.constant 0 : i32
    %c0_i32_0 = arith.constant 0 : i32
    %c0_i32_1 = arith.constant 0 : i32
    return %c0_i32, %c0_i32_0 : i32, i32
  }
  func.func @transform_2(%arg0: i32) -> (i32, i32) {
    %c0_i32 = arith.constant 0 : i32
    %c0_i32_0 = arith.constant 0 : i32
    %c0_i32_1 = arith.constant 0 : i32
    return %c0_i32, %c0_i32_0 : i32, i32
  }
  func.func @transform_3(%arg0: i32) -> (i32, i32) {
    %c0_i32 = arith.constant 0 : i32
    %c0_i32_0 = arith.constant 0 : i32
    return %arg0, %c0_i32 : i32, i32
  }
  func.func @transform_4(%arg0: i32) -> (i32, i32) {
    %c0_i32 = arith.constant 0 : i32
    %c0_i32_0 = arith.constant 0 : i32
    %c0_i32_1 = arith.constant 0 : i32
    return %c0_i32, %c0_i32_0 : i32, i32
  }
  func.func @transform_5(%arg0: i32) -> (i32, i32) {
    %c0_i32 = arith.constant 0 : i32
    %c0_i32_0 = arith.constant 0 : i32
    return %arg0, %c0_i32 : i32, i32
  }
}

module attributes {stable_mosaic.version = 11 : i64} {
  func.func @_conv_tile_kernel(%arg0: i32, %arg1: i32, %arg2: memref<1x6x18x8xbf16, #tpu.memory_space<vmem>>, %arg3: memref<9x8x32xbf16, #tpu.memory_space<vmem>>, %arg4: memref<1x32xf32, #tpu.memory_space<vmem>>, %arg5: memref<1x4x4x32xbf16, #tpu.memory_space<vmem>>) attributes {dimension_semantics = [#tpu.dimension_semantics<parallel>, #tpu.dimension_semantics<parallel>], iteration_bounds = array<i64: 2, 1>, scalar_prefetch = 0 : i64, scratch_operands = 0 : i64, tpu.core_type = #tpu.core_type<tc>, window_params = [{transform_indices = @transform_0, window_bounds = array<i64: 1, 6, 18, 8>}, {pipeline_mode = #tpu.pipeline_mode<synchronous>, transform_indices = @transform_1, window_bounds = array<i64: 9, 8, 32>}, {pipeline_mode = #tpu.pipeline_mode<synchronous>, transform_indices = @transform_2, window_bounds = array<i64: 1, 32>}, {transform_indices = @transform_3, window_bounds = array<i64: 1, 4, 4, 32>}]} {
    %c4_i32 = arith.constant 4 : i32
    %0 = arith.muli %arg1, %c4_i32 : i32
    %cst = arith.constant 0.000000e+00 : f32
    %1 = vector.broadcast %cst : f32 to vector<64x32xf32>
    %c0_i32 = arith.constant 0 : i32
    %2 = arith.addi %0, %c0_i32 : i32
    %c0 = arith.constant 0 : index
    %3 = arith.index_cast %2 : i32 to index
    %c0_0 = arith.constant 0 : index
    %c0_1 = arith.constant 0 : index
    %4 = vector.load %arg2[%c0, %3, %c0_0, %c0_1] : memref<1x6x18x8xbf16, #tpu.memory_space<vmem>>, vector<1x4x16x8xbf16>
    %5 = vector.shape_cast %4 : vector<1x4x16x8xbf16> to vector<4x16x8xbf16>
    %6 = vector.shape_cast %5 : vector<4x16x8xbf16> to vector<64x8xbf16>
    %c0_2 = arith.constant 0 : index
    %c0_3 = arith.constant 0 : index
    %c0_4 = arith.constant 0 : index
    %7 = vector.load %arg3[%c0_2, %c0_3, %c0_4] : memref<9x8x32xbf16, #tpu.memory_space<vmem>>, vector<1x8x32xbf16>
    %8 = vector.shape_cast %7 : vector<1x8x32xbf16> to vector<8x32xbf16>
    %cst_5 = arith.constant dense<0.000000e+00> : vector<64x32xf32>
    %9 = tpu.matmul %6, %8, %cst_5 {dimension_numbers = #tpu.dot_dimension_numbers<[1], [0], [0], [1], [0, 0, 1, 1], [], []>} : vector<64x8xbf16>, vector<8x32xbf16>, vector<64x32xf32> -> vector<64x32xf32>
    %10 = arith.addf %1, %9 : vector<64x32xf32>
    %c0_i32_6 = arith.constant 0 : i32
    %11 = arith.addi %0, %c0_i32_6 : i32
    %c0_7 = arith.constant 0 : index
    %12 = arith.index_cast %11 : i32 to index
    %c1 = arith.constant 1 : index
    %c0_8 = arith.constant 0 : index
    %13 = vector.load %arg2[%c0_7, %12, %c1, %c0_8] : memref<1x6x18x8xbf16, #tpu.memory_space<vmem>>, vector<1x4x16x8xbf16>
    %14 = vector.shape_cast %13 : vector<1x4x16x8xbf16> to vector<4x16x8xbf16>
    %15 = vector.shape_cast %14 : vector<4x16x8xbf16> to vector<64x8xbf16>
    %c1_9 = arith.constant 1 : index
    %c0_10 = arith.constant 0 : index
    %c0_11 = arith.constant 0 : index
    %16 = vector.load %arg3[%c1_9, %c0_10, %c0_11] : memref<9x8x32xbf16, #tpu.memory_space<vmem>>, vector<1x8x32xbf16>
    %17 = vector.shape_cast %16 : vector<1x8x32xbf16> to vector<8x32xbf16>
    %cst_12 = arith.constant dense<0.000000e+00> : vector<64x32xf32>
    %18 = tpu.matmul %15, %17, %cst_12 {dimension_numbers = #tpu.dot_dimension_numbers<[1], [0], [0], [1], [0, 0, 1, 1], [], []>} : vector<64x8xbf16>, vector<8x32xbf16>, vector<64x32xf32> -> vector<64x32xf32>
    %19 = arith.addf %10, %18 : vector<64x32xf32>
    %c0_i32_13 = arith.constant 0 : i32
    %20 = arith.addi %0, %c0_i32_13 : i32
    %c0_14 = arith.constant 0 : index
    %21 = arith.index_cast %20 : i32 to index
    %c2 = arith.constant 2 : index
    %c0_15 = arith.constant 0 : index
    %22 = vector.load %arg2[%c0_14, %21, %c2, %c0_15] : memref<1x6x18x8xbf16, #tpu.memory_space<vmem>>, vector<1x4x16x8xbf16>
    %23 = vector.shape_cast %22 : vector<1x4x16x8xbf16> to vector<4x16x8xbf16>
    %24 = vector.shape_cast %23 : vector<4x16x8xbf16> to vector<64x8xbf16>
    %c2_16 = arith.constant 2 : index
    %c0_17 = arith.constant 0 : index
    %c0_18 = arith.constant 0 : index
    %25 = vector.load %arg3[%c2_16, %c0_17, %c0_18] : memref<9x8x32xbf16, #tpu.memory_space<vmem>>, vector<1x8x32xbf16>
    %26 = vector.shape_cast %25 : vector<1x8x32xbf16> to vector<8x32xbf16>
    %cst_19 = arith.constant dense<0.000000e+00> : vector<64x32xf32>
    %27 = tpu.matmul %24, %26, %cst_19 {dimension_numbers = #tpu.dot_dimension_numbers<[1], [0], [0], [1], [0, 0, 1, 1], [], []>} : vector<64x8xbf16>, vector<8x32xbf16>, vector<64x32xf32> -> vector<64x32xf32>
    %28 = arith.addf %19, %27 : vector<64x32xf32>
    %c1_i32 = arith.constant 1 : i32
    %29 = arith.addi %0, %c1_i32 : i32
    %c0_20 = arith.constant 0 : index
    %30 = arith.index_cast %29 : i32 to index
    %c0_21 = arith.constant 0 : index
    %c0_22 = arith.constant 0 : index
    %31 = vector.load %arg2[%c0_20, %30, %c0_21, %c0_22] : memref<1x6x18x8xbf16, #tpu.memory_space<vmem>>, vector<1x4x16x8xbf16>
    %32 = vector.shape_cast %31 : vector<1x4x16x8xbf16> to vector<4x16x8xbf16>
    %33 = vector.shape_cast %32 : vector<4x16x8xbf16> to vector<64x8xbf16>
    %c3 = arith.constant 3 : index
    %c0_23 = arith.constant 0 : index
    %c0_24 = arith.constant 0 : index
    %34 = vector.load %arg3[%c3, %c0_23, %c0_24] : memref<9x8x32xbf16, #tpu.memory_space<vmem>>, vector<1x8x32xbf16>
    %35 = vector.shape_cast %34 : vector<1x8x32xbf16> to vector<8x32xbf16>
    %cst_25 = arith.constant dense<0.000000e+00> : vector<64x32xf32>
    %36 = tpu.matmul %33, %35, %cst_25 {dimension_numbers = #tpu.dot_dimension_numbers<[1], [0], [0], [1], [0, 0, 1, 1], [], []>} : vector<64x8xbf16>, vector<8x32xbf16>, vector<64x32xf32> -> vector<64x32xf32>
    %37 = arith.addf %28, %36 : vector<64x32xf32>
    %c1_i32_26 = arith.constant 1 : i32
    %38 = arith.addi %0, %c1_i32_26 : i32
    %c0_27 = arith.constant 0 : index
    %39 = arith.index_cast %38 : i32 to index
    %c1_28 = arith.constant 1 : index
    %c0_29 = arith.constant 0 : index
    %40 = vector.load %arg2[%c0_27, %39, %c1_28, %c0_29] : memref<1x6x18x8xbf16, #tpu.memory_space<vmem>>, vector<1x4x16x8xbf16>
    %41 = vector.shape_cast %40 : vector<1x4x16x8xbf16> to vector<4x16x8xbf16>
    %42 = vector.shape_cast %41 : vector<4x16x8xbf16> to vector<64x8xbf16>
    %c4 = arith.constant 4 : index
    %c0_30 = arith.constant 0 : index
    %c0_31 = arith.constant 0 : index
    %43 = vector.load %arg3[%c4, %c0_30, %c0_31] : memref<9x8x32xbf16, #tpu.memory_space<vmem>>, vector<1x8x32xbf16>
    %44 = vector.shape_cast %43 : vector<1x8x32xbf16> to vector<8x32xbf16>
    %cst_32 = arith.constant dense<0.000000e+00> : vector<64x32xf32>
    %45 = tpu.matmul %42, %44, %cst_32 {dimension_numbers = #tpu.dot_dimension_numbers<[1], [0], [0], [1], [0, 0, 1, 1], [], []>} : vector<64x8xbf16>, vector<8x32xbf16>, vector<64x32xf32> -> vector<64x32xf32>
    %46 = arith.addf %37, %45 : vector<64x32xf32>
    %c1_i32_33 = arith.constant 1 : i32
    %47 = arith.addi %0, %c1_i32_33 : i32
    %c0_34 = arith.constant 0 : index
    %48 = arith.index_cast %47 : i32 to index
    %c2_35 = arith.constant 2 : index
    %c0_36 = arith.constant 0 : index
    %49 = vector.load %arg2[%c0_34, %48, %c2_35, %c0_36] : memref<1x6x18x8xbf16, #tpu.memory_space<vmem>>, vector<1x4x16x8xbf16>
    %50 = vector.shape_cast %49 : vector<1x4x16x8xbf16> to vector<4x16x8xbf16>
    %51 = vector.shape_cast %50 : vector<4x16x8xbf16> to vector<64x8xbf16>
    %c5 = arith.constant 5 : index
    %c0_37 = arith.constant 0 : index
    %c0_38 = arith.constant 0 : index
    %52 = vector.load %arg3[%c5, %c0_37, %c0_38] : memref<9x8x32xbf16, #tpu.memory_space<vmem>>, vector<1x8x32xbf16>
    %53 = vector.shape_cast %52 : vector<1x8x32xbf16> to vector<8x32xbf16>
    %cst_39 = arith.constant dense<0.000000e+00> : vector<64x32xf32>
    %54 = tpu.matmul %51, %53, %cst_39 {dimension_numbers = #tpu.dot_dimension_numbers<[1], [0], [0], [1], [0, 0, 1, 1], [], []>} : vector<64x8xbf16>, vector<8x32xbf16>, vector<64x32xf32> -> vector<64x32xf32>
    %55 = arith.addf %46, %54 : vector<64x32xf32>
    %c2_i32 = arith.constant 2 : i32
    %56 = arith.addi %0, %c2_i32 : i32
    %c0_40 = arith.constant 0 : index
    %57 = arith.index_cast %56 : i32 to index
    %c0_41 = arith.constant 0 : index
    %c0_42 = arith.constant 0 : index
    %58 = vector.load %arg2[%c0_40, %57, %c0_41, %c0_42] : memref<1x6x18x8xbf16, #tpu.memory_space<vmem>>, vector<1x4x16x8xbf16>
    %59 = vector.shape_cast %58 : vector<1x4x16x8xbf16> to vector<4x16x8xbf16>
    %60 = vector.shape_cast %59 : vector<4x16x8xbf16> to vector<64x8xbf16>
    %c6 = arith.constant 6 : index
    %c0_43 = arith.constant 0 : index
    %c0_44 = arith.constant 0 : index
    %61 = vector.load %arg3[%c6, %c0_43, %c0_44] : memref<9x8x32xbf16, #tpu.memory_space<vmem>>, vector<1x8x32xbf16>
    %62 = vector.shape_cast %61 : vector<1x8x32xbf16> to vector<8x32xbf16>
    %cst_45 = arith.constant dense<0.000000e+00> : vector<64x32xf32>
    %63 = tpu.matmul %60, %62, %cst_45 {dimension_numbers = #tpu.dot_dimension_numbers<[1], [0], [0], [1], [0, 0, 1, 1], [], []>} : vector<64x8xbf16>, vector<8x32xbf16>, vector<64x32xf32> -> vector<64x32xf32>
    %64 = arith.addf %55, %63 : vector<64x32xf32>
    %c2_i32_46 = arith.constant 2 : i32
    %65 = arith.addi %0, %c2_i32_46 : i32
    %c0_47 = arith.constant 0 : index
    %66 = arith.index_cast %65 : i32 to index
    %c1_48 = arith.constant 1 : index
    %c0_49 = arith.constant 0 : index
    %67 = vector.load %arg2[%c0_47, %66, %c1_48, %c0_49] : memref<1x6x18x8xbf16, #tpu.memory_space<vmem>>, vector<1x4x16x8xbf16>
    %68 = vector.shape_cast %67 : vector<1x4x16x8xbf16> to vector<4x16x8xbf16>
    %69 = vector.shape_cast %68 : vector<4x16x8xbf16> to vector<64x8xbf16>
    %c7 = arith.constant 7 : index
    %c0_50 = arith.constant 0 : index
    %c0_51 = arith.constant 0 : index
    %70 = vector.load %arg3[%c7, %c0_50, %c0_51] : memref<9x8x32xbf16, #tpu.memory_space<vmem>>, vector<1x8x32xbf16>
    %71 = vector.shape_cast %70 : vector<1x8x32xbf16> to vector<8x32xbf16>
    %cst_52 = arith.constant dense<0.000000e+00> : vector<64x32xf32>
    %72 = tpu.matmul %69, %71, %cst_52 {dimension_numbers = #tpu.dot_dimension_numbers<[1], [0], [0], [1], [0, 0, 1, 1], [], []>} : vector<64x8xbf16>, vector<8x32xbf16>, vector<64x32xf32> -> vector<64x32xf32>
    %73 = arith.addf %64, %72 : vector<64x32xf32>
    %c2_i32_53 = arith.constant 2 : i32
    %74 = arith.addi %0, %c2_i32_53 : i32
    %c0_54 = arith.constant 0 : index
    %75 = arith.index_cast %74 : i32 to index
    %c2_55 = arith.constant 2 : index
    %c0_56 = arith.constant 0 : index
    %76 = vector.load %arg2[%c0_54, %75, %c2_55, %c0_56] : memref<1x6x18x8xbf16, #tpu.memory_space<vmem>>, vector<1x4x16x8xbf16>
    %77 = vector.shape_cast %76 : vector<1x4x16x8xbf16> to vector<4x16x8xbf16>
    %78 = vector.shape_cast %77 : vector<4x16x8xbf16> to vector<64x8xbf16>
    %c8 = arith.constant 8 : index
    %c0_57 = arith.constant 0 : index
    %c0_58 = arith.constant 0 : index
    %79 = vector.load %arg3[%c8, %c0_57, %c0_58] : memref<9x8x32xbf16, #tpu.memory_space<vmem>>, vector<1x8x32xbf16>
    %80 = vector.shape_cast %79 : vector<1x8x32xbf16> to vector<8x32xbf16>
    %cst_59 = arith.constant dense<0.000000e+00> : vector<64x32xf32>
    %81 = tpu.matmul %78, %80, %cst_59 {dimension_numbers = #tpu.dot_dimension_numbers<[1], [0], [0], [1], [0, 0, 1, 1], [], []>} : vector<64x8xbf16>, vector<8x32xbf16>, vector<64x32xf32> -> vector<64x32xf32>
    %82 = arith.addf %73, %81 : vector<64x32xf32>
    %c0_60 = arith.constant 0 : index
    %c0_61 = arith.constant 0 : index
    %83 = vector.load %arg4[%c0_60, %c0_61] : memref<1x32xf32, #tpu.memory_space<vmem>>, vector<1x32xf32>
    %84 = vector.broadcast %83 : vector<1x32xf32> to vector<64x32xf32>
    %85 = arith.addf %82, %84 : vector<64x32xf32>
    %cst_62 = arith.constant 0.000000e+00 : f32
    %86 = vector.broadcast %cst_62 : f32 to vector<64x32xf32>
    %87 = arith.cmpf oge, %85, %86 : vector<64x32xf32>
    %cst_63 = arith.constant 2.000000e-01 : f32
    %88 = vector.broadcast %cst_63 : f32 to vector<64x32xf32>
    %89 = arith.mulf %88, %85 : vector<64x32xf32>
    %90 = arith.select %87, %85, %89 : vector<64x32xi1>, vector<64x32xf32>
    %91 = vector.shape_cast %90 : vector<64x32xf32> to vector<4x16x32xf32>
    %92 = vector.extract_strided_slice %91 {offsets = [0, 0, 0], sizes = [4, 4, 32], strides = [1, 1, 1]} : vector<4x16x32xf32> to vector<4x4x32xf32>
    %93 = arith.truncf %92 : vector<4x4x32xf32> to vector<4x4x32xbf16>
    %c0_64 = arith.constant 0 : index
    %c0_65 = arith.constant 0 : index
    %c0_66 = arith.constant 0 : index
    %c0_67 = arith.constant 0 : index
    %94 = vector.load %arg5[%c0_64, %c0_65, %c0_66, %c0_67] : memref<1x4x4x32xbf16, #tpu.memory_space<vmem>>, vector<1x4x4x32xbf16>
    %95 = vector.shape_cast %94 : vector<1x4x4x32xbf16> to vector<4x4x32xbf16>
    %96 = vector.shape_cast %93 : vector<4x4x32xbf16> to vector<1x4x4x32xbf16>
    tpu.vector_store %arg5[%c0_64, %c0_65, %c0_66, %c0_67], %96 {strides = array<i32>} : memref<1x4x4x32xbf16, #tpu.memory_space<vmem>>, vector<1x4x4x32xbf16>,
    return
  }
  func.func @transform_0(%arg0: i32, %arg1: i32) -> (i32, i32, i32, i32) {
    %c0_i32 = arith.constant 0 : i32
    %c0_i32_0 = arith.constant 0 : i32
    %c0_i32_1 = arith.constant 0 : i32
    %c0_i32_2 = arith.constant 0 : i32
    return %arg0, %c0_i32, %c0_i32_0, %c0_i32_1 : i32, i32, i32, i32
  }
  func.func @transform_1(%arg0: i32, %arg1: i32) -> (i32, i32, i32) {
    %c0_i32 = arith.constant 0 : i32
    %c0_i32_0 = arith.constant 0 : i32
    %c0_i32_1 = arith.constant 0 : i32
    %c0_i32_2 = arith.constant 0 : i32
    return %c0_i32, %c0_i32_0, %c0_i32_1 : i32, i32, i32
  }
  func.func @transform_2(%arg0: i32, %arg1: i32) -> (i32, i32) {
    %c0_i32 = arith.constant 0 : i32
    %c0_i32_0 = arith.constant 0 : i32
    %c0_i32_1 = arith.constant 0 : i32
    return %c0_i32, %c0_i32_0 : i32, i32
  }
  func.func @transform_3(%arg0: i32, %arg1: i32) -> (i32, i32, i32, i32) {
    %c0_i32 = arith.constant 0 : i32
    %c0_i32_0 = arith.constant 0 : i32
    %c0_i32_1 = arith.constant 0 : i32
    return %arg0, %arg1, %c0_i32, %c0_i32_0 : i32, i32, i32, i32
  }
}

module attributes {stable_mosaic.version = 11 : i64} {
  func.func @_conv_tile_kernel(%arg0: i32, %arg1: i32, %arg2: memref<1x10x18x8xbf16, #tpu.memory_space<vmem>>, %arg3: memref<9x8x16xbf16, #tpu.memory_space<vmem>>, %arg4: memref<1x16xf32, #tpu.memory_space<vmem>>, %arg5: memref<1x8x8x16xbf16, #tpu.memory_space<vmem>>) attributes {dimension_semantics = [#tpu.dimension_semantics<parallel>, #tpu.dimension_semantics<parallel>], iteration_bounds = array<i64: 2, 1>, scalar_prefetch = 0 : i64, scratch_operands = 0 : i64, tpu.core_type = #tpu.core_type<tc>, window_params = [{transform_indices = @transform_0, window_bounds = array<i64: 1, 10, 18, 8>}, {pipeline_mode = #tpu.pipeline_mode<synchronous>, transform_indices = @transform_1, window_bounds = array<i64: 9, 8, 16>}, {pipeline_mode = #tpu.pipeline_mode<synchronous>, transform_indices = @transform_2, window_bounds = array<i64: 1, 16>}, {transform_indices = @transform_3, window_bounds = array<i64: 1, 8, 8, 16>}]} {
    %c8_i32 = arith.constant 8 : i32
    %0 = arith.muli %arg1, %c8_i32 : i32
    %cst = arith.constant 0.000000e+00 : f32
    %1 = vector.broadcast %cst : f32 to vector<128x16xf32>
    %c0_i32 = arith.constant 0 : i32
    %2 = arith.addi %0, %c0_i32 : i32
    %c0 = arith.constant 0 : index
    %3 = arith.index_cast %2 : i32 to index
    %c0_0 = arith.constant 0 : index
    %c0_1 = arith.constant 0 : index
    %4 = vector.load %arg2[%c0, %3, %c0_0, %c0_1] : memref<1x10x18x8xbf16, #tpu.memory_space<vmem>>, vector<1x8x16x8xbf16>
    %5 = vector.shape_cast %4 : vector<1x8x16x8xbf16> to vector<8x16x8xbf16>
    %6 = vector.shape_cast %5 : vector<8x16x8xbf16> to vector<128x8xbf16>
    %c0_2 = arith.constant 0 : index
    %c0_3 = arith.constant 0 : index
    %c0_4 = arith.constant 0 : index
    %7 = vector.load %arg3[%c0_2, %c0_3, %c0_4] : memref<9x8x16xbf16, #tpu.memory_space<vmem>>, vector<1x8x16xbf16>
    %8 = vector.shape_cast %7 : vector<1x8x16xbf16> to vector<8x16xbf16>
    %cst_5 = arith.constant dense<0.000000e+00> : vector<128x16xf32>
    %9 = tpu.matmul %6, %8, %cst_5 {dimension_numbers = #tpu.dot_dimension_numbers<[1], [0], [0], [1], [0, 0, 1, 1], [], []>} : vector<128x8xbf16>, vector<8x16xbf16>, vector<128x16xf32> -> vector<128x16xf32>
    %10 = arith.addf %1, %9 : vector<128x16xf32>
    %c0_i32_6 = arith.constant 0 : i32
    %11 = arith.addi %0, %c0_i32_6 : i32
    %c0_7 = arith.constant 0 : index
    %12 = arith.index_cast %11 : i32 to index
    %c1 = arith.constant 1 : index
    %c0_8 = arith.constant 0 : index
    %13 = vector.load %arg2[%c0_7, %12, %c1, %c0_8] : memref<1x10x18x8xbf16, #tpu.memory_space<vmem>>, vector<1x8x16x8xbf16>
    %14 = vector.shape_cast %13 : vector<1x8x16x8xbf16> to vector<8x16x8xbf16>
    %15 = vector.shape_cast %14 : vector<8x16x8xbf16> to vector<128x8xbf16>
    %c1_9 = arith.constant 1 : index
    %c0_10 = arith.constant 0 : index
    %c0_11 = arith.constant 0 : index
    %16 = vector.load %arg3[%c1_9, %c0_10, %c0_11] : memref<9x8x16xbf16, #tpu.memory_space<vmem>>, vector<1x8x16xbf16>
    %17 = vector.shape_cast %16 : vector<1x8x16xbf16> to vector<8x16xbf16>
    %cst_12 = arith.constant dense<0.000000e+00> : vector<128x16xf32>
    %18 = tpu.matmul %15, %17, %cst_12 {dimension_numbers = #tpu.dot_dimension_numbers<[1], [0], [0], [1], [0, 0, 1, 1], [], []>} : vector<128x8xbf16>, vector<8x16xbf16>, vector<128x16xf32> -> vector<128x16xf32>
    %19 = arith.addf %10, %18 : vector<128x16xf32>
    %c0_i32_13 = arith.constant 0 : i32
    %20 = arith.addi %0, %c0_i32_13 : i32
    %c0_14 = arith.constant 0 : index
    %21 = arith.index_cast %20 : i32 to index
    %c2 = arith.constant 2 : index
    %c0_15 = arith.constant 0 : index
    %22 = vector.load %arg2[%c0_14, %21, %c2, %c0_15] : memref<1x10x18x8xbf16, #tpu.memory_space<vmem>>, vector<1x8x16x8xbf16>
    %23 = vector.shape_cast %22 : vector<1x8x16x8xbf16> to vector<8x16x8xbf16>
    %24 = vector.shape_cast %23 : vector<8x16x8xbf16> to vector<128x8xbf16>
    %c2_16 = arith.constant 2 : index
    %c0_17 = arith.constant 0 : index
    %c0_18 = arith.constant 0 : index
    %25 = vector.load %arg3[%c2_16, %c0_17, %c0_18] : memref<9x8x16xbf16, #tpu.memory_space<vmem>>, vector<1x8x16xbf16>
    %26 = vector.shape_cast %25 : vector<1x8x16xbf16> to vector<8x16xbf16>
    %cst_19 = arith.constant dense<0.000000e+00> : vector<128x16xf32>
    %27 = tpu.matmul %24, %26, %cst_19 {dimension_numbers = #tpu.dot_dimension_numbers<[1], [0], [0], [1], [0, 0, 1, 1], [], []>} : vector<128x8xbf16>, vector<8x16xbf16>, vector<128x16xf32> -> vector<128x16xf32>
    %28 = arith.addf %19, %27 : vector<128x16xf32>
    %c1_i32 = arith.constant 1 : i32
    %29 = arith.addi %0, %c1_i32 : i32
    %c0_20 = arith.constant 0 : index
    %30 = arith.index_cast %29 : i32 to index
    %c0_21 = arith.constant 0 : index
    %c0_22 = arith.constant 0 : index
    %31 = vector.load %arg2[%c0_20, %30, %c0_21, %c0_22] : memref<1x10x18x8xbf16, #tpu.memory_space<vmem>>, vector<1x8x16x8xbf16>
    %32 = vector.shape_cast %31 : vector<1x8x16x8xbf16> to vector<8x16x8xbf16>
    %33 = vector.shape_cast %32 : vector<8x16x8xbf16> to vector<128x8xbf16>
    %c3 = arith.constant 3 : index
    %c0_23 = arith.constant 0 : index
    %c0_24 = arith.constant 0 : index
    %34 = vector.load %arg3[%c3, %c0_23, %c0_24] : memref<9x8x16xbf16, #tpu.memory_space<vmem>>, vector<1x8x16xbf16>
    %35 = vector.shape_cast %34 : vector<1x8x16xbf16> to vector<8x16xbf16>
    %cst_25 = arith.constant dense<0.000000e+00> : vector<128x16xf32>
    %36 = tpu.matmul %33, %35, %cst_25 {dimension_numbers = #tpu.dot_dimension_numbers<[1], [0], [0], [1], [0, 0, 1, 1], [], []>} : vector<128x8xbf16>, vector<8x16xbf16>, vector<128x16xf32> -> vector<128x16xf32>
    %37 = arith.addf %28, %36 : vector<128x16xf32>
    %c1_i32_26 = arith.constant 1 : i32
    %38 = arith.addi %0, %c1_i32_26 : i32
    %c0_27 = arith.constant 0 : index
    %39 = arith.index_cast %38 : i32 to index
    %c1_28 = arith.constant 1 : index
    %c0_29 = arith.constant 0 : index
    %40 = vector.load %arg2[%c0_27, %39, %c1_28, %c0_29] : memref<1x10x18x8xbf16, #tpu.memory_space<vmem>>, vector<1x8x16x8xbf16>
    %41 = vector.shape_cast %40 : vector<1x8x16x8xbf16> to vector<8x16x8xbf16>
    %42 = vector.shape_cast %41 : vector<8x16x8xbf16> to vector<128x8xbf16>
    %c4 = arith.constant 4 : index
    %c0_30 = arith.constant 0 : index
    %c0_31 = arith.constant 0 : index
    %43 = vector.load %arg3[%c4, %c0_30, %c0_31] : memref<9x8x16xbf16, #tpu.memory_space<vmem>>, vector<1x8x16xbf16>
    %44 = vector.shape_cast %43 : vector<1x8x16xbf16> to vector<8x16xbf16>
    %cst_32 = arith.constant dense<0.000000e+00> : vector<128x16xf32>
    %45 = tpu.matmul %42, %44, %cst_32 {dimension_numbers = #tpu.dot_dimension_numbers<[1], [0], [0], [1], [0, 0, 1, 1], [], []>} : vector<128x8xbf16>, vector<8x16xbf16>, vector<128x16xf32> -> vector<128x16xf32>
    %46 = arith.addf %37, %45 : vector<128x16xf32>
    %c1_i32_33 = arith.constant 1 : i32
    %47 = arith.addi %0, %c1_i32_33 : i32
    %c0_34 = arith.constant 0 : index
    %48 = arith.index_cast %47 : i32 to index
    %c2_35 = arith.constant 2 : index
    %c0_36 = arith.constant 0 : index
    %49 = vector.load %arg2[%c0_34, %48, %c2_35, %c0_36] : memref<1x10x18x8xbf16, #tpu.memory_space<vmem>>, vector<1x8x16x8xbf16>
    %50 = vector.shape_cast %49 : vector<1x8x16x8xbf16> to vector<8x16x8xbf16>
    %51 = vector.shape_cast %50 : vector<8x16x8xbf16> to vector<128x8xbf16>
    %c5 = arith.constant 5 : index
    %c0_37 = arith.constant 0 : index
    %c0_38 = arith.constant 0 : index
    %52 = vector.load %arg3[%c5, %c0_37, %c0_38] : memref<9x8x16xbf16, #tpu.memory_space<vmem>>, vector<1x8x16xbf16>
    %53 = vector.shape_cast %52 : vector<1x8x16xbf16> to vector<8x16xbf16>
    %cst_39 = arith.constant dense<0.000000e+00> : vector<128x16xf32>
    %54 = tpu.matmul %51, %53, %cst_39 {dimension_numbers = #tpu.dot_dimension_numbers<[1], [0], [0], [1], [0, 0, 1, 1], [], []>} : vector<128x8xbf16>, vector<8x16xbf16>, vector<128x16xf32> -> vector<128x16xf32>
    %55 = arith.addf %46, %54 : vector<128x16xf32>
    %c2_i32 = arith.constant 2 : i32
    %56 = arith.addi %0, %c2_i32 : i32
    %c0_40 = arith.constant 0 : index
    %57 = arith.index_cast %56 : i32 to index
    %c0_41 = arith.constant 0 : index
    %c0_42 = arith.constant 0 : index
    %58 = vector.load %arg2[%c0_40, %57, %c0_41, %c0_42] : memref<1x10x18x8xbf16, #tpu.memory_space<vmem>>, vector<1x8x16x8xbf16>
    %59 = vector.shape_cast %58 : vector<1x8x16x8xbf16> to vector<8x16x8xbf16>
    %60 = vector.shape_cast %59 : vector<8x16x8xbf16> to vector<128x8xbf16>
    %c6 = arith.constant 6 : index
    %c0_43 = arith.constant 0 : index
    %c0_44 = arith.constant 0 : index
    %61 = vector.load %arg3[%c6, %c0_43, %c0_44] : memref<9x8x16xbf16, #tpu.memory_space<vmem>>, vector<1x8x16xbf16>
    %62 = vector.shape_cast %61 : vector<1x8x16xbf16> to vector<8x16xbf16>
    %cst_45 = arith.constant dense<0.000000e+00> : vector<128x16xf32>
    %63 = tpu.matmul %60, %62, %cst_45 {dimension_numbers = #tpu.dot_dimension_numbers<[1], [0], [0], [1], [0, 0, 1, 1], [], []>} : vector<128x8xbf16>, vector<8x16xbf16>, vector<128x16xf32> -> vector<128x16xf32>
    %64 = arith.addf %55, %63 : vector<128x16xf32>
    %c2_i32_46 = arith.constant 2 : i32
    %65 = arith.addi %0, %c2_i32_46 : i32
    %c0_47 = arith.constant 0 : index
    %66 = arith.index_cast %65 : i32 to index
    %c1_48 = arith.constant 1 : index
    %c0_49 = arith.constant 0 : index
    %67 = vector.load %arg2[%c0_47, %66, %c1_48, %c0_49] : memref<1x10x18x8xbf16, #tpu.memory_space<vmem>>, vector<1x8x16x8xbf16>
    %68 = vector.shape_cast %67 : vector<1x8x16x8xbf16> to vector<8x16x8xbf16>
    %69 = vector.shape_cast %68 : vector<8x16x8xbf16> to vector<128x8xbf16>
    %c7 = arith.constant 7 : index
    %c0_50 = arith.constant 0 : index
    %c0_51 = arith.constant 0 : index
    %70 = vector.load %arg3[%c7, %c0_50, %c0_51] : memref<9x8x16xbf16, #tpu.memory_space<vmem>>, vector<1x8x16xbf16>
    %71 = vector.shape_cast %70 : vector<1x8x16xbf16> to vector<8x16xbf16>
    %cst_52 = arith.constant dense<0.000000e+00> : vector<128x16xf32>
    %72 = tpu.matmul %69, %71, %cst_52 {dimension_numbers = #tpu.dot_dimension_numbers<[1], [0], [0], [1], [0, 0, 1, 1], [], []>} : vector<128x8xbf16>, vector<8x16xbf16>, vector<128x16xf32> -> vector<128x16xf32>
    %73 = arith.addf %64, %72 : vector<128x16xf32>
    %c2_i32_53 = arith.constant 2 : i32
    %74 = arith.addi %0, %c2_i32_53 : i32
    %c0_54 = arith.constant 0 : index
    %75 = arith.index_cast %74 : i32 to index
    %c2_55 = arith.constant 2 : index
    %c0_56 = arith.constant 0 : index
    %76 = vector.load %arg2[%c0_54, %75, %c2_55, %c0_56] : memref<1x10x18x8xbf16, #tpu.memory_space<vmem>>, vector<1x8x16x8xbf16>
    %77 = vector.shape_cast %76 : vector<1x8x16x8xbf16> to vector<8x16x8xbf16>
    %78 = vector.shape_cast %77 : vector<8x16x8xbf16> to vector<128x8xbf16>
    %c8 = arith.constant 8 : index
    %c0_57 = arith.constant 0 : index
    %c0_58 = arith.constant 0 : index
    %79 = vector.load %arg3[%c8, %c0_57, %c0_58] : memref<9x8x16xbf16, #tpu.memory_space<vmem>>, vector<1x8x16xbf16>
    %80 = vector.shape_cast %79 : vector<1x8x16xbf16> to vector<8x16xbf16>
    %cst_59 = arith.constant dense<0.000000e+00> : vector<128x16xf32>
    %81 = tpu.matmul %78, %80, %cst_59 {dimension_numbers = #tpu.dot_dimension_numbers<[1], [0], [0], [1], [0, 0, 1, 1], [], []>} : vector<128x8xbf16>, vector<8x16xbf16>, vector<128x16xf32> -> vector<128x16xf32>
    %82 = arith.addf %73, %81 : vector<128x16xf32>
    %c0_60 = arith.constant 0 : index
    %c0_61 = arith.constant 0 : index
    %83 = vector.load %arg4[%c0_60, %c0_61] : memref<1x16xf32, #tpu.memory_space<vmem>>, vector<1x16xf32>
    %84 = vector.broadcast %83 : vector<1x16xf32> to vector<128x16xf32>
    %85 = arith.addf %82, %84 : vector<128x16xf32>
    %cst_62 = arith.constant 0.000000e+00 : f32
    %86 = vector.broadcast %cst_62 : f32 to vector<128x16xf32>
    %87 = arith.cmpf oge, %85, %86 : vector<128x16xf32>
    %cst_63 = arith.constant 2.000000e-01 : f32
    %88 = vector.broadcast %cst_63 : f32 to vector<128x16xf32>
    %89 = arith.mulf %88, %85 : vector<128x16xf32>
    %90 = arith.select %87, %85, %89 : vector<128x16xi1>, vector<128x16xf32>
    %91 = vector.shape_cast %90 : vector<128x16xf32> to vector<8x16x16xf32>
    %92 = vector.extract_strided_slice %91 {offsets = [0, 0, 0], sizes = [8, 8, 16], strides = [1, 1, 1]} : vector<8x16x16xf32> to vector<8x8x16xf32>
    %93 = arith.truncf %92 : vector<8x8x16xf32> to vector<8x8x16xbf16>
    %c0_64 = arith.constant 0 : index
    %c0_65 = arith.constant 0 : index
    %c0_66 = arith.constant 0 : index
    %c0_67 = arith.constant 0 : index
    %94 = vector.load %arg5[%c0_64, %c0_65, %c0_66, %c0_67] : memref<1x8x8x16xbf16, #tpu.memory_space<vmem>>, vector<1x8x8x16xbf16>
    %95 = vector.shape_cast %94 : vector<1x8x8x16xbf16> to vector<8x8x16xbf16>
    %96 = vector.shape_cast %93 : vector<8x8x16xbf16> to vector<1x8x8x16xbf16>
    tpu.vector_store %arg5[%c0_64, %c0_65, %c0_66, %c0_67], %96 {strides = array<i32>} : memref<1x8x8x16xbf16, #tpu.memory_space<vmem>>, vector<1x8x8x16xbf16>,
    return
  }
  func.func @transform_0(%arg0: i32, %arg1: i32) -> (i32, i32, i32, i32) {
    %c0_i32 = arith.constant 0 : i32
    %c0_i32_0 = arith.constant 0 : i32
    %c0_i32_1 = arith.constant 0 : i32
    %c0_i32_2 = arith.constant 0 : i32
    return %arg0, %c0_i32, %c0_i32_0, %c0_i32_1 : i32, i32, i32, i32
  }
  func.func @transform_1(%arg0: i32, %arg1: i32) -> (i32, i32, i32) {
    %c0_i32 = arith.constant 0 : i32
    %c0_i32_0 = arith.constant 0 : i32
    %c0_i32_1 = arith.constant 0 : i32
    %c0_i32_2 = arith.constant 0 : i32
    return %c0_i32, %c0_i32_0, %c0_i32_1 : i32, i32, i32
  }
  func.func @transform_2(%arg0: i32, %arg1: i32) -> (i32, i32) {
    %c0_i32 = arith.constant 0 : i32
    %c0_i32_0 = arith.constant 0 : i32
    %c0_i32_1 = arith.constant 0 : i32
    return %c0_i32, %c0_i32_0 : i32, i32
  }
  func.func @transform_3(%arg0: i32, %arg1: i32) -> (i32, i32, i32, i32) {
    %c0_i32 = arith.constant 0 : i32
    %c0_i32_0 = arith.constant 0 : i32
    %c0_i32_1 = arith.constant 0 : i32
    return %arg0, %arg1, %c0_i32, %c0_i32_0 : i32, i32, i32, i32
  }
}

module attributes {stable_mosaic.version = 11 : i64} {
  func.func @_masked_mse_kernel(%arg0: i32, %arg1: memref<32x64xf32, #tpu.memory_space<vmem>>, %arg2: memref<32x64xf32, #tpu.memory_space<vmem>>, %arg3: memref<32x1xf32, #tpu.memory_space<vmem>>, %arg4: memref<1x1xf32, #tpu.memory_space<vmem>>, %arg5: memref<1x1xf32, #tpu.memory_space<vmem>>, %arg6: memref<1x1xf32, #tpu.memory_space<vmem>>) attributes {dimension_semantics = [#tpu.dimension_semantics<arbitrary>], iteration_bounds = array<i64: 1>, scalar_prefetch = 0 : i64, scratch_operands = 2 : i64, tpu.core_type = #tpu.core_type<tc>, window_params = [{transform_indices = @transform_0, window_bounds = array<i64: 32, 64>}, {transform_indices = @transform_1, window_bounds = array<i64: 32, 64>}, {transform_indices = @transform_2, window_bounds = array<i64: 32, 1>}, {pipeline_mode = #tpu.pipeline_mode<synchronous>, transform_indices = @transform_3, window_bounds = array<i64: 1, 1>}]} {
    %c0_i32 = arith.constant 0 : i32
    %0 = arith.cmpi eq, %arg0, %c0_i32 : i32
    %1 = arith.extui %0 : i1 to i32
    %c0_i32_0 = arith.constant 0 : i32
    %2 = arith.cmpi ne, %1, %c0_i32_0 : i32
    scf.if %2 {
      %cst_22 = arith.constant 0.000000e+00 : f32
      %42 = vector.broadcast %cst_22 : f32 to vector<1x1xf32>
      %c0_23 = arith.constant 0 : index
      %c0_24 = arith.constant 0 : index
      %43 = vector.load %arg5[%c0_23, %c0_24] : memref<1x1xf32, #tpu.memory_space<vmem>>, vector<1x1xf32>
      tpu.vector_store %arg5[%c0_23, %c0_24], %42 {strides = array<i32>} : memref<1x1xf32, #tpu.memory_space<vmem>>, vector<1x1xf32>,
      %cst_25 = arith.constant 0.000000e+00 : f32
      %44 = vector.broadcast %cst_25 : f32 to vector<1x1xf32>
      %c0_26 = arith.constant 0 : index
      %c0_27 = arith.constant 0 : index
      %45 = vector.load %arg6[%c0_26, %c0_27] : memref<1x1xf32, #tpu.memory_space<vmem>>, vector<1x1xf32>
      tpu.vector_store %arg6[%c0_26, %c0_27], %44 {strides = array<i32>} : memref<1x1xf32, #tpu.memory_space<vmem>>, vector<1x1xf32>,
    } else {
    }
    %c0 = arith.constant 0 : index
    %c0_1 = arith.constant 0 : index
    %3 = vector.load %arg1[%c0, %c0_1] : memref<32x64xf32, #tpu.memory_space<vmem>>, vector<32x64xf32>
    %c0_2 = arith.constant 0 : index
    %c0_3 = arith.constant 0 : index
    %4 = vector.load %arg2[%c0_2, %c0_3] : memref<32x64xf32, #tpu.memory_space<vmem>>, vector<32x64xf32>
    %5 = arith.subf %3, %4 : vector<32x64xf32>
    %6 = arith.mulf %5, %5 : vector<32x64xf32>
    %cst = arith.constant dense<0.000000e+00> : vector<32xf32>
    %7 = vector.multi_reduction <add>, %6, %cst [1] : vector<32x64xf32> to vector<32xf32>
    %8 = vector.shape_cast %7 : vector<32xf32> to vector<32x1xf32>
    %cst_4 = arith.constant 6.400000e+01 : f32
    %9 = vector.broadcast %cst_4 : f32 to vector<32x1xf32>
    %10 = arith.divf %8, %9 : vector<32x1xf32>
    %c32_i32 = arith.constant 32 : i32
    %11 = arith.muli %arg0, %c32_i32 : i32
    %12 = tpu.iota {dimensions = array<i32: 0>} : vector<32x1xi32>
    %13 = vector.broadcast %11 : i32 to vector<32x1xi32>
    %14 = arith.addi %13, %12 : vector<32x1xi32>
    %c32_i32_5 = arith.constant 32 : i32
    %15 = vector.broadcast %c32_i32_5 : i32 to vector<32x1xi32>
    %16 = arith.cmpi slt, %14, %15 : vector<32x1xi32>
    %c0_6 = arith.constant 0 : index
    %c0_7 = arith.constant 0 : index
    %17 = vector.load %arg3[%c0_6, %c0_7] : memref<32x1xf32, #tpu.memory_space<vmem>>, vector<32x1xf32>
    %cst_8 = arith.constant 0.000000e+00 : f32
    %18 = vector.broadcast %cst_8 : f32 to vector<32x1xf32>
    %19 = arith.select %16, %17, %18 : vector<32x1xi1>, vector<32x1xf32>
    %cst_9 = arith.constant 0.000000e+00 : f32
    %20 = vector.broadcast %cst_9 : f32 to vector<32x1xf32>
    %21 = arith.select %16, %10, %20 : vector<32x1xi1>, vector<32x1xf32>
    %c0_10 = arith.constant 0 : index
    %c0_11 = arith.constant 0 : index
    %22 = vector.load %arg5[%c0_10, %c0_11] : memref<1x1xf32, #tpu.memory_space<vmem>>, vector<1x1xf32>
    %23 = arith.mulf %21, %19 : vector<32x1xf32>
    %24 = vector.shape_cast %23 : vector<32x1xf32> to vector<1x32x1xf32>
    %cst_12 = arith.constant dense<0.000000e+00> : vector<1xf32>
    %25 = vector.multi_reduction <add>, %24, %cst_12 [1, 2] : vector<1x32x1xf32> to vector<1xf32>
    %26 = vector.shape_cast %25 : vector<1xf32> to vector<1x1x1xf32>
    %27 = vector.extract %26[0, 0, 0] : f32 from vector<1x1x1xf32>
    %28 = vector.broadcast %27 : f32 to vector<1x1xf32>
    %29 = arith.addf %22, %28 : vector<1x1xf32>
    %c0_13 = arith.constant 0 : index
    %c0_14 = arith.constant 0 : index
    %30 = vector.load %arg5[%c0_13, %c0_14] : memref<1x1xf32, #tpu.memory_space<vmem>>, vector<1x1xf32>
    tpu.vector_store %arg5[%c0_13, %c0_14], %29 {strides = array<i32>} : memref<1x1xf32, #tpu.memory_space<vmem>>, vector<1x1xf32>,
    %c0_15 = arith.constant 0 : index
    %c0_16 = arith.constant 0 : index
    %31 = vector.load %arg6[%c0_15, %c0_16] : memref<1x1xf32, #tpu.memory_space<vmem>>, vector<1x1xf32>
    %32 = vector.shape_cast %19 : vector<32x1xf32> to vector<1x32x1xf32>
    %cst_17 = arith.constant dense<0.000000e+00> : vector<1xf32>
    %33 = vector.multi_reduction <add>, %32, %cst_17 [1, 2] : vector<1x32x1xf32> to vector<1xf32>
    %34 = vector.shape_cast %33 : vector<1xf32> to vector<1x1x1xf32>
    %35 = vector.extract %34[0, 0, 0] : f32 from vector<1x1x1xf32>
    %36 = vector.broadcast %35 : f32 to vector<1x1xf32>
    %37 = arith.addf %31, %36 : vector<1x1xf32>
    %c0_18 = arith.constant 0 : index
    %c0_19 = arith.constant 0 : index
    %38 = vector.load %arg6[%c0_18, %c0_19] : memref<1x1xf32, #tpu.memory_space<vmem>>, vector<1x1xf32>
    tpu.vector_store %arg6[%c0_18, %c0_19], %37 {strides = array<i32>} : memref<1x1xf32, #tpu.memory_space<vmem>>, vector<1x1xf32>,
    %c0_i32_20 = arith.constant 0 : i32
    %39 = arith.cmpi eq, %arg0, %c0_i32_20 : i32
    %40 = arith.extui %39 : i1 to i32
    %c0_i32_21 = arith.constant 0 : i32
    %41 = arith.cmpi ne, %40, %c0_i32_21 : i32
    scf.if %41 {
      %c0_22 = arith.constant 0 : index
      %c0_23 = arith.constant 0 : index
      %42 = vector.load %arg5[%c0_22, %c0_23] : memref<1x1xf32, #tpu.memory_space<vmem>>, vector<1x1xf32>
      %c0_24 = arith.constant 0 : index
      %c0_25 = arith.constant 0 : index
      %43 = vector.load %arg6[%c0_24, %c0_25] : memref<1x1xf32, #tpu.memory_space<vmem>>, vector<1x1xf32>
      %cst_26 = arith.constant 9.99999993E-9 : f32
      %44 = vector.broadcast %cst_26 : f32 to vector<1x1xf32>
      %45 = arith.maximumf %43, %44 : vector<1x1xf32>
      %46 = arith.divf %42, %45 : vector<1x1xf32>
      %c0_27 = arith.constant 0 : index
      %c0_28 = arith.constant 0 : index
      %47 = vector.load %arg4[%c0_27, %c0_28] : memref<1x1xf32, #tpu.memory_space<vmem>>, vector<1x1xf32>
      tpu.vector_store %arg4[%c0_27, %c0_28], %46 {strides = array<i32>} : memref<1x1xf32, #tpu.memory_space<vmem>>, vector<1x1xf32>,
    } else {
    }
    return
  }
  func.func @transform_0(%arg0: i32) -> (i32, i32) {
    %c0_i32 = arith.constant 0 : i32
    %c0_i32_0 = arith.constant 0 : i32
    return %arg0, %c0_i32 : i32, i32
  }
  func.func @transform_1(%arg0: i32) -> (i32, i32) {
    %c0_i32 = arith.constant 0 : i32
    %c0_i32_0 = arith.constant 0 : i32
    return %arg0, %c0_i32 : i32, i32
  }
  func.func @transform_2(%arg0: i32) -> (i32, i32) {
    %c0_i32 = arith.constant 0 : i32
    %c0_i32_0 = arith.constant 0 : i32
    return %arg0, %c0_i32 : i32, i32
  }
  func.func @transform_3(%arg0: i32) -> (i32, i32) {
    %c0_i32 = arith.constant 0 : i32
    %c0_i32_0 = arith.constant 0 : i32
    %c0_i32_1 = arith.constant 0 : i32
    return %c0_i32, %c0_i32_0 : i32, i32
  }
}

</mosaic_0001>

<llo_original>
// kernel: forward.6
$region0: #{forward.6}
  #allocation0 [shape = 'u32[]', space=smem, size = 0x4, offset = 0x4, fixed_abs, tag = 'smem constant byte address 0x4 - core index']
  #allocation1 [shape = 'u32[144,128]{1,0:T(1,128)}', space=vmem, size = 0x12000, scoped, tag = 'internal scratch']
  %s0 = inlined_call_operand.vmem [shape: bf16[2,9,17,16], index: 0, kind: input, shape index: {}]
  %s1 = inlined_call_operand.vmem [shape: bf16[4,16,8], index: 1, kind: input, shape index: {}]
  %s2 = inlined_call_operand.vmem [shape: f32[1,8], index: 2, kind: input, shape index: {}]
  %s3 = inlined_call_operand.vmem [shape: bf16[2,8,8,8], index: 3, kind: output, shape index: {}]
  %s4 = sld [smem:[#allocation0]]
  $region45: #{forward.6} parent=0
    _
  %s6 = ssub.s32 1, %s4
  %s7 = scalar_select 0, %s6, %s4
  loop: start=0, step=1, limit=4
  $region2: #{forward.6} parent=0 // loop_pre_header
    _
  $region3: #{forward.6} parent=0 // loop_header
    %s9 = sphi 0, %s13
    %p10 = scmp.ge.s32.totalorder %s9, 4
    %s16 = sphi 0, %s28
    %s17 = sphi 0, %s24
    %s18 = sphi 0, %s16
    %s19 = sphi 0, %s17
    %s20 = sphi 0, %s18
    %s21 = sphi 0, %s19
    %s31 = sphi 0, %s33
    %s34 = sphi 0, %s31
    %s35 = sphi 0, %s34
    %s51 = sphi 0, %s35
    %s55 = sphi 0, %s55
    %s57 = sphi 0, %s55
    %s58 = sphi 0, %s57
    %s72 = sphi 0, %s58
    %s76 = sphi 0, %s76
    %s78 = sphi 0, %s76
    %s79 = sphi 0, %s78
    %s93 = sphi 0, %s79
    %s101 = sphi 0, %s103
    %s104 = sphi 0, %s101
    %s105 = sphi 0, %s104
    %s121 = sphi 0, %s105
  $region4: #{forward.6} parent=0 // loop_header_branch
    %12 = sbr.rel (%p10) target = $region8
  $region5: #{forward.6} parent=0 // loop_body
    %s14 = ssub.s32 %s9, 1
    %s15 = ssub.s32 %s9, 2
    %s22 = sadd.s32 1, %s17
    %p23 = scmp.ge.s32.totalorder %s22, 1
    %s24 = scalar_select %p23, 0, %s22
    %s25 = sadd.s32 1, %s16
    %s26 = scalar_select %p23, %s25, %s16
    %p27 = scmp.ge.s32.totalorder %s26, 2
    %s28 = scalar_select %p27, 0, %s26
    %s29 = ssub.s32 %s16, %s28
    %p30 = scmp.eq.s32.totalorder %s29, 0
    %s32 = sadd.s32 %s31, 1
    %s33 = scalar_select %p30, %s31, %s32
    %p36 = pneg %p30
    %p37 = scmp.eq.s32.totalorder %s9, 1
    %p38 = por %p36, %p37
    %p39 = scmp.ne.s32.totalorder %s31, %s34
    %p40 = scmp.eq.s32.totalorder %s9, 0
    %p41 = por %p39, %p40
    %p42 = scmp.ne.s32.totalorder %s31, %s34
    %p43 = scmp.eq.s32.totalorder %s14, 1
    %p44 = por %p42, %p43
    %p45 = scmp.ne.s32.totalorder %s34, %s35
    %p46 = scmp.eq.s32.totalorder %s14, 0
    %p47 = por %p45, %p46
    %p48 = scmp.ne.s32.totalorder %s34, %s35
    %p49 = scmp.eq.s32.totalorder %s15, 1
    %p50 = por %p48, %p49
    %p52 = scmp.ne.s32.totalorder %s35, %s51
    %p53 = scmp.eq.s32.totalorder %s15, 0
    %p54 = por %p52, %p53
    %s56 = sadd.s32 %s55, 1
    %p59 = scmp.eq.s32.totalorder %s9, 1
    %p60 = scmp.ne.s32.totalorder %s55, %s57
    %p61 = scmp.eq.s32.totalorder %s9, 0
    %p62 = por %p60, %p61
    %p63 = scmp.ne.s32.totalorder %s55, %s57
    %p64 = scmp.eq.s32.totalorder %s14, 1
    %p65 = por %p63, %p64
    %p66 = scmp.ne.s32.totalorder %s57, %s58
    %p67 = scmp.eq.s32.totalorder %s14, 0
    %p68 = por %p66, %p67
    %p69 = scmp.ne.s32.totalorder %s57, %s58
    %p70 = scmp.eq.s32.totalorder %s15, 1
    %p71 = por %p69, %p70
    %p73 = scmp.ne.s32.totalorder %s58, %s72
    %p74 = scmp.eq.s32.totalorder %s15, 0
    %p75 = por %p73, %p74
    %s77 = sadd.s32 %s76, 1
    %p80 = scmp.eq.s32.totalorder %s9, 1
    %p81 = scmp.ne.s32.totalorder %s76, %s78
    %p82 = scmp.eq.s32.totalorder %s9, 0
    %p83 = por %p81, %p82
    %p84 = scmp.ne.s32.totalorder %s76, %s78
    %p85 = scmp.eq.s32.totalorder %s14, 1
    %p86 = por %p84, %p85
    %p87 = scmp.ne.s32.totalorder %s78, %s79
    %p88 = scmp.eq.s32.totalorder %s14, 0
    %p89 = por %p87, %p88
    %p90 = scmp.ne.s32.totalorder %s78, %s79
    %p91 = scmp.eq.s32.totalorder %s15, 1
    %p92 = por %p90, %p91
    %p94 = scmp.ne.s32.totalorder %s79, %s93
    %p95 = scmp.eq.s32.totalorder %s15, 0
    %p96 = por %p94, %p95
    %s97 = ssub.s32 %s16, %s28
    %s98 = ssub.s32 %s17, %s24
    %s99 = sor.u32 %s97, %s98
    %p100 = scmp.eq.s32.totalorder %s99, 0
    %s102 = sadd.s32 %s101, 1
    %s103 = scalar_select %p100, %s101, %s102
    %p106 = pneg %p100
    %p107 = scmp.eq.s32.totalorder %s9, 1
    %p108 = por %p106, %p107
    %p109 = scmp.ne.s32.totalorder %s101, %s104
    %p110 = scmp.eq.s32.totalorder %s9, 0
    %p111 = por %p109, %p110
    %p112 = scmp.ne.s32.totalorder %s101, %s104
    %p113 = scmp.eq.s32.totalorder %s14, 1
    %p114 = por %p112, %p113
    %p115 = scmp.ne.s32.totalorder %s104, %s105
    %p116 = scmp.eq.s32.totalorder %s14, 0
    %p117 = por %p115, %p116
    %p118 = scmp.ne.s32.totalorder %s104, %s105
    %p119 = scmp.eq.s32.totalorder %s15, 1
    %p120 = por %p118, %p119
    %p122 = scmp.ne.s32.totalorder %s105, %s121
    %p123 = scmp.eq.s32.totalorder %s15, 0
    %p124 = por %p122, %p123
    %p125 = scmp.le.s32.totalorder 1, %s9
    %p126 = scmp.lt.s32.totalorder %s9, 3
    %p127 = pnand %p125, %p126
    %p128 = pneg %p127
    // Predicated region
    $region9: #{forward.6} parent=5 // pred_check
      _
    $region10: #{forward.6} parent=5 // pred_check_branch
      %130 = sbr.rel (%p127) target = $region12
    $region11: #{forward.6} parent=5 // pred_region
      %s131 = ssub.s32 %s9, 1
      // Predicated region
      $region13: #{forward.6} parent=11 // pred_check
        %p132 = pneg %p68
      $region14: #{forward.6} parent=11 // pred_check_branch
        %134 = sbr.rel (%p132) target = $region16
      $region15: #{forward.6} parent=11 // pred_region
        _
      $region16: #{forward.6} parent=11 // pred_fallthru
        _
      // Predicated region
      $region17: #{forward.6} parent=11 // pred_check
        %p135 = pneg %p89
      $region18: #{forward.6} parent=11 // pred_check_branch
        %137 = sbr.rel (%p135) target = $region20
      $region19: #{forward.6} parent=11 // pred_region
        _
      $region20: #{forward.6} parent=11 // pred_fallthru
        _
    $region12: #{forward.6} parent=5 // pred_fallthru
      _
    %p138 = scmp.lt.s32.totalorder %s9, 2
    // Predicated region
    $region21: #{forward.6} parent=5 // pred_check
      %p139 = pneg %p138
    $region22: #{forward.6} parent=5 // pred_check_branch
      %141 = sbr.rel (%p139) target = $region24
    $region23: #{forward.6} parent=5 // pred_region
      // Predicated region
      $region25: #{forward.6} parent=23 // pred_check
        %p142 = pneg %p41
      $region26: #{forward.6} parent=23 // pred_check_branch
        %144 = sbr.rel (%p142) target = $region28
      $region27: #{forward.6} parent=23 // pred_region
        %p145 = scmp.lt.s32.totalorder %s16, 1
        %s146 = scalar_select %p145, %s16, 1
        %s147 = smul.addr %s146, 27
        %s148 = smul.addr %s147, 4
        %s149 = scalar_lea.vmem %s0, %s148
      $region28: #{forward.6} parent=23 // pred_fallthru
        _
    $region24: #{forward.6} parent=5 // pred_fallthru
      _
    %p150 = scmp.le.s32.totalorder 1, %s9
    %p151 = scmp.lt.s32.totalorder %s9, 3
    %p152 = pnand %p150, %p151
    %p153 = pneg %p152
    // Predicated region
    $region29: #{forward.6} parent=5 // pred_check
      _
    $region30: #{forward.6} parent=5 // pred_check_branch
      %155 = sbr.rel (%p152) target = $region32
    $region31: #{forward.6} parent=5 // pred_region
      %s156 = ssub.s32 %s9, 1
      %p157 = scmp.lt.s32.totalorder %s18, 1
      %s158 = scalar_select %p157, %s18, 1
      %s159 = smul.addr %s158, 27
      %s160 = smul.addr %s159, 4
      %s161 = scalar_lea.vmem %s0, %s160
      %p162 = pneg %p47
      %p163 = pneg %p44
      %p164 = pneg %p68
      %p165 = pneg %p65
      %p166 = pneg %p89
      %p167 = pneg %p86
      %p168 = pneg %p117
      %p169 = pneg %p114
      %s170 = smul.u32 8, %s19
      %p171 = scmp.lt.s32.totalorder %s18, 1
      %s172 = scalar_select %p171, %s18, 1
      %p173 = scmp.lt.s32.totalorder %s170, 7
      %s174 = scalar_select %p173, %s170, 7
      %s175 = smul.addr %s172, 8
      %s176 = sadd.s32 %s174, %s175
      %s177 = smul.addr %s176, 4
      %s178 = scalar_lea.vmem %s3, %s177
      %p179 = scmp.lt.s32.totalorder %s18, 1
      %s180 = scalar_select %p179, %s18, 1
      %s181 = smul.addr %s180, 27
      %s182 = smul.addr %s181, 4
      %s183 = scalar_lea.vmem %s0, %s182
      %s184 = smul.u32 8, %s19
      %p185 = scmp.lt.s32.totalorder %s18, 1
      %s186 = scalar_select %p185, %s18, 1
      %p187 = scmp.lt.s32.totalorder %s184, 7
      %s188 = scalar_select %p187, %s184, 7
      %s189 = smul.addr %s186, 8
      %s190 = sadd.s32 %s188, %s189
      %s191 = smul.addr %s190, 4
      %s192 = scalar_lea.vmem %s3, %s191
      %s193 = smul.u32 8, %s19
      %s195 = smul.u32 %s19, 8
      %s196 = smul.u32 %s195, 3
      %s197 = smul.addr %s196, 4
      %s198 = scalar_lea.vmem %s183, %s197
      %v199 = vld [vmem:[%s198] sm:$0xf]
      %v200 = vld [vmem:[%s198 + $0x4] sm:$0xf]
      %v201 = vld [vmem:[%s198 + $0xc] sm:$0xf]
      %v202 = vld [vmem:[%s198 + $0x10] sm:$0xf]
      %v203 = vld [vmem:[%s198 + $0x18] sm:$0xf]
      %v204 = vld [vmem:[%s198 + $0x1c] sm:$0xf]
      %v205 = vld [vmem:[%s198 + $0x24] sm:$0xf]
      %v206 = vld [vmem:[%s198 + $0x28] sm:$0xf]
      %v207 = vld [vmem:[%s198 + $0x30] sm:$0xf]
      %v208 = vld [vmem:[%s198 + $0x34] sm:$0xf]
      %v209 = vld [vmem:[%s198 + $0x3c] sm:$0xf]
      %v210 = vld [vmem:[%s198 + $0x40] sm:$0xf]
      %v211 = vld [vmem:[%s198 + $0x48] sm:$0xf]
      %v212 = vld [vmem:[%s198 + $0x4c] sm:$0xf]
      %v213 = vld [vmem:[%s198 + $0x54] sm:$0xf]
      %v214 = vld [vmem:[%s198 + $0x58] sm:$0xf]
      %v215 = vld [vmem:[%s1] sm:$0xf]
      %v216 = vld [vmem:[%s1 + $0x4] sm:$0xf]
      %v217 = vld [vmem:[%s198 + $0x8] sm:$0x1]
      %v218 = vld [vmem:[%s198 + $0x14] sm:$0x1]
      %v219 = vld [vmem:[%s198 + $0x20] sm:$0x1]
      %v220 = vld [vmem:[%s198 + $0x2c] sm:$0x1]
      %v221 = vld [vmem:[%s198 + $0x38] sm:$0x1]
      %v222 = vld [vmem:[%s198 + $0x44] sm:$0x1]
      %v223 = vld [vmem:[%s198 + $0x50] sm:$0x1]
      %v224 = vld [vmem:[%s198 + $0x5c] sm:$0x1]
      %vm225 = vsmask.f32 3328
      %vm226 = vsmask.f32 7440
      %vm227 = vmor %vm225, %vm226
      %v229 = vshrl.u32 %v199, 16
      %v231 = vrot.slane %v229, 4
      %v232 = vshll.u32 %v199, 16
      %v234 = vrot.slane %v232, 5
      %v235 = vor.u32 %v231, %v234
      %v236 = vrot.slane %v235, 4
      %v238 = vshll.u32 %v200, 16
      %v240 = vrot.slane %v238, 5
      %v241 = vsel %vm227, %v236, %v240
      %v242 = vshrl.u32 %v200, 16
      %v244 = vrot.slane %v242, 4
      %v245 = vor.u32 %v244, %v240
      %v246 = vrot.slane %v245, 4
      %v248 = vshll.u32 %v217, 16
      %v250 = vrot.slane %v248, 5
      %v251 = vsel %vm227, %v246, %v250
      %v253 = vshrl.u32 %v201, 16
      %v255 = vrot.slane %v253, 4
      %v256 = vshll.u32 %v201, 16
      %v258 = vrot.slane %v256, 5
      %v259 = vor.u32 %v255, %v258
      %v260 = vrot.slane %v259, 4
      %v262 = vshll.u32 %v202, 16
      %v264 = vrot.slane %v262, 5
      %v265 = vsel %vm227, %v260, %v264
      %v266 = vshrl.u32 %v202, 16
      %v268 = vrot.slane %v266, 4
      %v269 = vor.u32 %v268, %v264
      %v270 = vrot.slane %v269, 4
      %v272 = vshll.u32 %v218, 16
      %v274 = vrot.slane %v272, 5
      %v275 = vsel %vm227, %v270, %v274
      %v277 = vshrl.u32 %v203, 16
      %v279 = vrot.slane %v277, 4
      %v280 = vshll.u32 %v203, 16
      %v282 = vrot.slane %v280, 5
      %v283 = vor.u32 %v279, %v282
      %v284 = vrot.slane %v283, 4
      %v286 = vshll.u32 %v204, 16
      %v288 = vrot.slane %v286, 5
      %v289 = vsel %vm227, %v284, %v288
      %v290 = vshrl.u32 %v204, 16
      %v292 = vrot.slane %v290, 4
      %v293 = vor.u32 %v292, %v288
      %v294 = vrot.slane %v293, 4
      %v296 = vshll.u32 %v219, 16
      %v298 = vrot.slane %v296, 5
      %v299 = vsel %vm227, %v294, %v298
      %v301 = vshrl.u32 %v205, 16
      %v303 = vrot.slane %v301, 4
      %v304 = vshll.u32 %v205, 16
      %v306 = vrot.slane %v304, 5
      %v307 = vor.u32 %v303, %v306
      %v308 = vrot.slane %v307, 4
      %v310 = vshll.u32 %v206, 16
      %v312 = vrot.slane %v310, 5
      %v313 = vsel %vm227, %v308, %v312
      %v314 = vshrl.u32 %v206, 16
      %v316 = vrot.slane %v314, 4
      %v317 = vor.u32 %v316, %v312
      %v318 = vrot.slane %v317, 4
      %v320 = vshll.u32 %v220, 16
      %v322 = vrot.slane %v320, 5
      %v323 = vsel %vm227, %v318, %v322
      %v325 = vshrl.u32 %v207, 16
      %v327 = vrot.slane %v325, 4
      %v328 = vshll.u32 %v207, 16
      %v330 = vrot.slane %v328, 5
      %v331 = vor.u32 %v327, %v330
      %v332 = vrot.slane %v331, 4
      %v334 = vshll.u32 %v208, 16
      %v336 = vrot.slane %v334, 5
      %v337 = vsel %vm227, %v332, %v336
      %v338 = vshrl.u32 %v208, 16
      %v340 = vrot.slane %v338, 4
      %v341 = vor.u32 %v340, %v336
      %v342 = vrot.slane %v341, 4
      %v344 = vshll.u32 %v221, 16
      %v346 = vrot.slane %v344, 5
      %v347 = vsel %vm227, %v342, %v346
      %v349 = vshrl.u32 %v209, 16
      %v351 = vrot.slane %v349, 4
      %v352 = vshll.u32 %v209, 16
      %v354 = vrot.slane %v352, 5
      %v355 = vor.u32 %v351, %v354
      %v356 = vrot.slane %v355, 4
      %v358 = vshll.u32 %v210, 16
      %v360 = vrot.slane %v358, 5
      %v361 = vsel %vm227, %v356, %v360
      %v362 = vshrl.u32 %v210, 16
      %v364 = vrot.slane %v362, 4
      %v365 = vor.u32 %v364, %v360
      %v366 = vrot.slane %v365, 4
      %v368 = vshll.u32 %v222, 16
      %v370 = vrot.slane %v368, 5
      %v371 = vsel %vm227, %v366, %v370
      %v373 = vshrl.u32 %v211, 16
      %v375 = vrot.slane %v373, 4
      %v376 = vshll.u32 %v211, 16
      %v378 = vrot.slane %v376, 5
      %v379 = vor.u32 %v375, %v378
      %v380 = vrot.slane %v379, 4
      %v382 = vshll.u32 %v212, 16
      %v384 = vrot.slane %v382, 5
      %v385 = vsel %vm227, %v380, %v384
      %v386 = vshrl.u32 %v212, 16
      %v388 = vrot.slane %v386, 4
      %v389 = vor.u32 %v388, %v384
      %v390 = vrot.slane %v389, 4
      %v392 = vshll.u32 %v223, 16
      %v394 = vrot.slane %v392, 5
      %v395 = vsel %vm227, %v390, %v394
      %v397 = vshrl.u32 %v213, 16
      %v399 = vrot.slane %v397, 4
      %v400 = vshll.u32 %v213, 16
      %v402 = vrot.slane %v400, 5
      %v403 = vor.u32 %v399, %v402
      %v404 = vrot.slane %v403, 4
      %v406 = vshll.u32 %v214, 16
      %v408 = vrot.slane %v406, 5
      %v409 = vsel %vm227, %v404, %v408
      %v410 = vshrl.u32 %v214, 16
      %v412 = vrot.slane %v410, 4
      %v413 = vor.u32 %v412, %v408
      %v414 = vrot.slane %v413, 4
      %v416 = vshll.u32 %v224, 16
      %v418 = vrot.slane %v416, 5
      %v419 = vsel %vm227, %v414, %v418
      %s420 = scalar_lea.vmem %s1, 8
      %v421 = vld [vmem:[%s420] sm:$0xf]
      %v422 = vld [vmem:[%s420 + $0x4] sm:$0xf]
      %v423 = vunpack.c.l.b16 %v241
      %v424 = vunpack.c.l.b16 %v251
      %v425 = vunpack.c.l.b16 %v265
      %v426 = vunpack.c.l.b16 %v275
      %v427 = vunpack.c.l.b16 %v289
      %v428 = vunpack.c.l.b16 %v299
      %v429 = vunpack.c.l.b16 %v313
      %v430 = vunpack.c.l.b16 %v323
      %v431 = vunpack.c.l.b16 %v337
      %v432 = vunpack.c.l.b16 %v347
      %v433 = vunpack.c.l.b16 %v361
      %v434 = vunpack.c.l.b16 %v371
      %v435 = vunpack.c.l.b16 %v385
      %v436 = vunpack.c.l.b16 %v395
      %v437 = vunpack.c.l.b16 %v409
      %v438 = vunpack.c.l.b16 %v419
      %v439 = vpack.c.b16 %v424, %v423
      %v440 = vpack.c.b16 %v426, %v425
      %v441 = vpack.c.b16 %v428, %v427
      %v442 = vpack.c.b16 %v430, %v429
      %v443 = vpack.c.b16 %v432, %v431
      %v444 = vpack.c.b16 %v434, %v433
      %v445 = vpack.c.b16 %v436, %v435
      %v446 = vpack.c.b16 %v438, %v437
      %v449 = vunpack.c.l.b16 %v421
      %v450 = vunpack.c.l.b16 %v422
      %v451 = vpack.c.b16 %v450, %v449
      %vm453 = vcmask 130048
      %v455 = vsel %vm453, %v439, 0
      %v458 = vsel %vm453, %v440, 0
      %v461 = vsel %vm453, %v441, 0
      %v464 = vsel %vm453, %v442, 0
      %v467 = vsel %vm453, %v443, 0
      %v470 = vsel %vm453, %v444, 0
      %v473 = vsel %vm453, %v445, 0
      %v476 = vsel %vm453, %v446, 0
      %478 = vmatprep.subr.bf16.mxu0 0
      %479 = vmatpush1.bf16.msra.mxu0 0
      %480 = vmatprep.subr.bf16.mxu0 0
      %481 = vmatpush1.bf16.msra.mxu0 0
      %482 = vmatprep.subr.bf16.mxu0 0
      %483 = vmatpush1.bf16.msra.mxu0 0
      %484 = vmatprep.subr.bf16.mxu0 0
      %485 = vmatpush1.bf16.msra.mxu0 0
      %486 = vmatprep.subr.bf16.mxu0 0
      %487 = vmatpush1.bf16.msra.mxu0 0
      %488 = vmatprep.subr.bf16.mxu0 0
      %489 = vmatpush1.bf16.msra.mxu0 0
      %490 = vmatprep.subr.bf16.mxu0 0
      %491 = vmatpush1.bf16.msra.mxu0 0
      %492 = vmatprep.subr.bf16.mxu0 0
      %493 = vmatpush1.bf16.msra.mxu0 %v451
      %494 = vmatprep.subr.bf16.mxu0 0
      %495 = vmatpush2.bf16.msra.mxu0 0
      %496 = vmatprep.subr.bf16.mxu0 0
      %497 = vmatpush2.bf16.msra.mxu0 0
      %498 = vmatprep.subr.bf16.mxu0 0
      %499 = vmatpush2.bf16.msra.mxu0 0
      %500 = vmatprep.subr.bf16.mxu0 0
      %501 = vmatpush2.bf16.msra.mxu0 0
      %502 = vmatprep.subr.bf16.mxu0 0
      %503 = vmatpush2.bf16.msra.mxu0 0
      %504 = vmatprep.subr.bf16.mxu0 0
      %505 = vmatpush2.bf16.msra.mxu0 0
      %506 = vmatprep.subr.bf16.mxu0 0
      %507 = vmatpush2.bf16.msra.mxu0 0
      %508 = vmatprep.subr.bf16.mxu0 0
      %509 = vmatpush2.bf16.msra.mxu0 0
      %510 = vmatprep.mubr.bf16.mxu0 0
      %511 = vmatmul.mubr.bf16.gmra.mxu0 %v455
      %v512 = vpop.f32.mrf.mxu0
      %v513 = vadd.f32 0.0, %v512
      %v514 = vpop.f32.mrf.mxu0
      %v515 = vpop.f32.mrf.mxu0
      %v516 = vpop.f32.mrf.mxu0
      %517 = vmatprep.mubr.bf16.mxu0 0
      %518 = vmatmul.mubr.bf16.gmra.mxu0 %v458
      %v519 = vpop.f32.mrf.mxu0
      %v520 = vadd.f32 0.0, %v519
      %v521 = vpop.f32.mrf.mxu0
      %v522 = vpop.f32.mrf.mxu0
      %v523 = vpop.f32.mrf.mxu0
      %524 = vmatprep.mubr.bf16.mxu0 0
      %525 = vmatmul.mubr.bf16.gmra.mxu0 %v461
      %v526 = vpop.f32.mrf.mxu0
      %v527 = vadd.f32 0.0, %v526
      %v528 = vpop.f32.mrf.mxu0
      %v529 = vpop.f32.mrf.mxu0
      %v530 = vpop.f32.mrf.mxu0
      %531 = vmatprep.mubr.bf16.mxu0 0
      %532 = vmatmul.mubr.bf16.gmra.mxu0 %v464
      %v533 = vpop.f32.mrf.mxu0
      %v534 = vadd.f32 0.0, %v533
      %v535 = vpop.f32.mrf.mxu0
      %v536 = vpop.f32.mrf.mxu0
      %v537 = vpop.f32.mrf.mxu0
      %538 = vmatprep.mubr.bf16.mxu0 0
      %539 = vmatmul.mubr.bf16.gmra.mxu0 %v467
      %v540 = vpop.f32.mrf.mxu0
      %v541 = vadd.f32 0.0, %v540
      %v542 = vpop.f32.mrf.mxu0
      %v543 = vpop.f32.mrf.mxu0
      %v544 = vpop.f32.mrf.mxu0
      %545 = vmatprep.mubr.bf16.mxu0 0
      %546 = vmatmul.mubr.bf16.gmra.mxu0 %v470
      %v547 = vpop.f32.mrf.mxu0
      %v548 = vadd.f32 0.0, %v547
      %v549 = vpop.f32.mrf.mxu0
      %v550 = vpop.f32.mrf.mxu0
      %v551 = vpop.f32.mrf.mxu0
      %552 = vmatprep.mubr.bf16.mxu0 0
      %553 = vmatmul.mubr.bf16.gmra.mxu0 %v473
      %v554 = vpop.f32.mrf.mxu0
      %v555 = vadd.f32 0.0, %v554
      %v556 = vpop.f32.mrf.mxu0
      %v557 = vpop.f32.mrf.mxu0
      %v558 = vpop.f32.mrf.mxu0
      %559 = vmatprep.mubr.bf16.mxu0 0
      %560 = vmatmul.mubr.bf16.gmra.mxu0 %v476
      %v561 = vpop.f32.mrf.mxu0
      %v562 = vadd.f32 0.0, %v561
      %v563 = vpop.f32.mrf.mxu0
      %v564 = vpop.f32.mrf.mxu0
      %v565 = vpop.f32.mrf.mxu0
      %566 = vdwg.mxu0
      %v583 = vunpack.c.l.b16 %v199
      %v584 = vunpack.c.l.b16 %v200
      %v585 = vunpack.c.l.b16 %v201
      %v586 = vunpack.c.l.b16 %v202
      %v587 = vunpack.c.l.b16 %v203
      %v588 = vunpack.c.l.b16 %v204
      %v589 = vunpack.c.l.b16 %v205
      %v590 = vunpack.c.l.b16 %v206
      %v591 = vunpack.c.l.b16 %v207
      %v592 = vunpack.c.l.b16 %v208
      %v593 = vunpack.c.l.b16 %v209
      %v594 = vunpack.c.l.b16 %v210
      %v595 = vunpack.c.l.b16 %v211
      %v596 = vunpack.c.l.b16 %v212
      %v597 = vunpack.c.l.b16 %v213
      %v598 = vunpack.c.l.b16 %v214
      %v599 = vpack.c.b16 %v584, %v583
      %v600 = vpack.c.b16 %v586, %v585
      %v601 = vpack.c.b16 %v588, %v587
      %v602 = vpack.c.b16 %v590, %v589
      %v603 = vpack.c.b16 %v592, %v591
      %v604 = vpack.c.b16 %v594, %v593
      %v605 = vpack.c.b16 %v596, %v595
      %v606 = vpack.c.b16 %v598, %v597
      %v609 = vunpack.c.l.b16 %v215
      %v610 = vunpack.c.l.b16 %v216
      %v611 = vpack.c.b16 %v610, %v609
      %v614 = vsel %vm453, %v599, 0
      %v617 = vsel %vm453, %v600, 0
      %v620 = vsel %vm453, %v601, 0
      %v623 = vsel %vm453, %v602, 0
      %v626 = vsel %vm453, %v603, 0
      %v629 = vsel %vm453, %v604, 0
      %v632 = vsel %vm453, %v605, 0
      %v635 = vsel %vm453, %v606, 0
      %637 = vmatprep.subr.bf16.mxu0 0
      %638 = vmatpush1.bf16.msra.mxu0 0
      %639 = vmatprep.subr.bf16.mxu0 0
      %640 = vmatpush1.bf16.msra.mxu0 0
      %641 = vmatprep.subr.bf16.mxu0 0
      %642 = vmatpush1.bf16.msra.mxu0 0
      %643 = vmatprep.subr.bf16.mxu0 0
      %644 = vmatpush1.bf16.msra.mxu0 0
      %645 = vmatprep.subr.bf16.mxu0 0
      %646 = vmatpush1.bf16.msra.mxu0 0
      %647 = vmatprep.subr.bf16.mxu0 0
      %648 = vmatpush1.bf16.msra.mxu0 0
      %649 = vmatprep.subr.bf16.mxu0 0
      %650 = vmatpush1.bf16.msra.mxu0 0
      %651 = vmatprep.subr.bf16.mxu0 0
      %652 = vmatpush1.bf16.msra.mxu0 %v611
      %653 = vmatprep.subr.bf16.mxu0 0
      %654 = vmatpush2.bf16.msra.mxu0 0
      %655 = vmatprep.subr.bf16.mxu0 0
      %656 = vmatpush2.bf16.msra.mxu0 0
      %657 = vmatprep.subr.bf16.mxu0 0
      %658 = vmatpush2.bf16.msra.mxu0 0
      %659 = vmatprep.subr.bf16.mxu0 0
      %660 = vmatpush2.bf16.msra.mxu0 0
      %661 = vmatprep.subr.bf16.mxu0 0
      %662 = vmatpush2.bf16.msra.mxu0 0
      %663 = vmatprep.subr.bf16.mxu0 0
      %664 = vmatpush2.bf16.msra.mxu0 0
      %665 = vmatprep.subr.bf16.mxu0 0
      %666 = vmatpush2.bf16.msra.mxu0 0
      %667 = vmatprep.subr.bf16.mxu0 0
      %668 = vmatpush2.bf16.msra.mxu0 0
      %669 = vmatprep.mubr.bf16.mxu0 0
      %670 = vmatmul.mubr.bf16.gmra.mxu0 %v614
      %v671 = vpop.f32.mrf.mxu0
      %v672 = vadd.f32 %v513, %v671
      %v673 = vpop.f32.mrf.mxu0
      %v674 = vpop.f32.mrf.mxu0
      %v675 = vpop.f32.mrf.mxu0
      %676 = vmatprep.mubr.bf16.mxu0 0
      %677 = vmatmul.mubr.bf16.gmra.mxu0 %v617
      %v678 = vpop.f32.mrf.mxu0
      %v679 = vadd.f32 %v520, %v678
      %v680 = vpop.f32.mrf.mxu0
      %v681 = vpop.f32.mrf.mxu0
      %v682 = vpop.f32.mrf.mxu0
      %683 = vmatprep.mubr.bf16.mxu0 0
      %684 = vmatmul.mubr.bf16.gmra.mxu0 %v620
      %v685 = vpop.f32.mrf.mxu0
      %v686 = vadd.f32 %v527, %v685
      %v687 = vpop.f32.mrf.mxu0
      %v688 = vpop.f32.mrf.mxu0
      %v689 = vpop.f32.mrf.mxu0
      %690 = vmatprep.mubr.bf16.mxu0 0
      %691 = vmatmul.mubr.bf16.gmra.mxu0 %v623
      %v692 = vpop.f32.mrf.mxu0
      %v693 = vadd.f32 %v534, %v692
      %v694 = vpop.f32.mrf.mxu0
      %v695 = vpop.f32.mrf.mxu0
      %v696 = vpop.f32.mrf.mxu0
      %697 = vmatprep.mubr.bf16.mxu0 0
      %698 = vmatmul.mubr.bf16.gmra.mxu0 %v626
      %v699 = vpop.f32.mrf.mxu0
      %v700 = vadd.f32 %v541, %v699
      %v701 = vpop.f32.mrf.mxu0
      %v702 = vpop.f32.mrf.mxu0
      %v703 = vpop.f32.mrf.mxu0
      %704 = vmatprep.mubr.bf16.mxu0 0
      %705 = vmatmul.mubr.bf16.gmra.mxu0 %v629
      %v706 = vpop.f32.mrf.mxu0
      %v707 = vadd.f32 %v548, %v706
      %v708 = vpop.f32.mrf.mxu0
      %v709 = vpop.f32.mrf.mxu0
      %v710 = vpop.f32.mrf.mxu0
      %711 = vmatprep.mubr.bf16.mxu0 0
      %712 = vmatmul.mubr.bf16.gmra.mxu0 %v632
      %v713 = vpop.f32.mrf.mxu0
      %v714 = vadd.f32 %v555, %v713
      %v715 = vpop.f32.mrf.mxu0
      %v716 = vpop.f32.mrf.mxu0
      %v717 = vpop.f32.mrf.mxu0
      %718 = vmatprep.mubr.bf16.mxu0 0
      %719 = vmatmul.mubr.bf16.gmra.mxu0 %v635
      %v720 = vpop.f32.mrf.mxu0
      %v721 = vadd.f32 %v562, %v720
      %v722 = vpop.f32.mrf.mxu0
      %v723 = vpop.f32.mrf.mxu0
      %v724 = vpop.f32.mrf.mxu0
      %725 = vdwg.mxu0
      %s726 = sadd.s32 %s195, 1
      %s727 = smul.u32 %s726, 3
      %s728 = smul.addr %s727, 4
      %s729 = scalar_lea.vmem %s183, %s728
      %v730 = vld [vmem:[%s729] sm:$0xf]
      %v731 = vld [vmem:[%s729 + $0x4] sm:$0xf]
      %v732 = vld [vmem:[%s729 + $0xc] sm:$0xf]
      %v733 = vld [vmem:[%s729 + $0x10] sm:$0xf]
      %v734 = vld [vmem:[%s729 + $0x18] sm:$0xf]
      %v735 = vld [vmem:[%s729 + $0x1c] sm:$0xf]
      %v736 = vld [vmem:[%s729 + $0x24] sm:$0xf]
      %v737 = vld [vmem:[%s729 + $0x28] sm:$0xf]
      %v738 = vld [vmem:[%s729 + $0x30] sm:$0xf]
      %v739 = vld [vmem:[%s729 + $0x34] sm:$0xf]
      %v740 = vld [vmem:[%s729 + $0x3c] sm:$0xf]
      %v741 = vld [vmem:[%s729 + $0x40] sm:$0xf]
      %v742 = vld [vmem:[%s729 + $0x48] sm:$0xf]
      %v743 = vld [vmem:[%s729 + $0x4c] sm:$0xf]
      %v744 = vld [vmem:[%s729 + $0x54] sm:$0xf]
      %v745 = vld [vmem:[%s729 + $0x58] sm:$0xf]
      %s746 = scalar_lea.vmem %s1, 16
      %v747 = vld [vmem:[%s746] sm:$0xf]
      %v748 = vld [vmem:[%s746 + $0x4] sm:$0xf]
      %v765 = vunpack.c.l.b16 %v730
      %v766 = vunpack.c.l.b16 %v731
      %v767 = vunpack.c.l.b16 %v732
      %v768 = vunpack.c.l.b16 %v733
      %v769 = vunpack.c.l.b16 %v734
      %v770 = vunpack.c.l.b16 %v735
      %v771 = vunpack.c.l.b16 %v736
      %v772 = vunpack.c.l.b16 %v737
      %v773 = vunpack.c.l.b16 %v738
      %v774 = vunpack.c.l.b16 %v739
      %v775 = vunpack.c.l.b16 %v740
      %v776 = vunpack.c.l.b16 %v741
      %v777 = vunpack.c.l.b16 %v742
      %v778 = vunpack.c.l.b16 %v743
      %v779 = vunpack.c.l.b16 %v744
      %v780 = vunpack.c.l.b16 %v745
      %v781 = vpack.c.b16 %v766, %v765
      %v782 = vpack.c.b16 %v768, %v767
      %v783 = vpack.c.b16 %v770, %v769
      %v784 = vpack.c.b16 %v772, %v771
      %v785 = vpack.c.b16 %v774, %v773
      %v786 = vpack.c.b16 %v776, %v775
      %v787 = vpack.c.b16 %v778, %v777
      %v788 = vpack.c.b16 %v780, %v779
      %v791 = vunpack.c.l.b16 %v747
      %v792 = vunpack.c.l.b16 %v748
      %v793 = vpack.c.b16 %v792, %v791
      %v796 = vsel %vm453, %v781, 0
      %v799 = vsel %vm453, %v782, 0
      %v802 = vsel %vm453, %v783, 0
      %v805 = vsel %vm453, %v784, 0
      %v808 = vsel %vm453, %v785, 0
      %v811 = vsel %vm453, %v786, 0
      %v814 = vsel %vm453, %v787, 0
      %v817 = vsel %vm453, %v788, 0
      %819 = vmatprep.subr.bf16.mxu0 0
      %820 = vmatpush1.bf16.msra.mxu0 0
      %821 = vmatprep.subr.bf16.mxu0 0
      %822 = vmatpush1.bf16.msra.mxu0 0
      %823 = vmatprep.subr.bf16.mxu0 0
      %824 = vmatpush1.bf16.msra.mxu0 0
      %825 = vmatprep.subr.bf16.mxu0 0
      %826 = vmatpush1.bf16.msra.mxu0 0
      %827 = vmatprep.subr.bf16.mxu0 0
      %828 = vmatpush1.bf16.msra.mxu0 0
      %829 = vmatprep.subr.bf16.mxu0 0
      %830 = vmatpush1.bf16.msra.mxu0 0
      %831 = vmatprep.subr.bf16.mxu0 0
      %832 = vmatpush1.bf16.msra.mxu0 0
      %833 = vmatprep.subr.bf16.mxu0 0
      %834 = vmatpush1.bf16.msra.mxu0 %v793
      %835 = vmatprep.subr.bf16.mxu0 0
      %836 = vmatpush2.bf16.msra.mxu0 0
      %837 = vmatprep.subr.bf16.mxu0 0
      %838 = vmatpush2.bf16.msra.mxu0 0
      %839 = vmatprep.subr.bf16.mxu0 0
      %840 = vmatpush2.bf16.msra.mxu0 0
      %841 = vmatprep.subr.bf16.mxu0 0
      %842 = vmatpush2.bf16.msra.mxu0 0
      %843 = vmatprep.subr.bf16.mxu0 0
      %844 = vmatpush2.bf16.msra.mxu0 0
      %845 = vmatprep.subr.bf16.mxu0 0
      %846 = vmatpush2.bf16.msra.mxu0 0
      %847 = vmatprep.subr.bf16.mxu0 0
      %848 = vmatpush2.bf16.msra.mxu0 0
      %849 = vmatprep.subr.bf16.mxu0 0
      %850 = vmatpush2.bf16.msra.mxu0 0
      %851 = vmatprep.mubr.bf16.mxu0 0
      %852 = vmatmul.mubr.bf16.gmra.mxu0 %v796
      %v853 = vpop.f32.mrf.mxu0
      %v854 = vadd.f32 0.0, %v853
      %v855 = vpop.f32.mrf.mxu0
      %v856 = vpop.f32.mrf.mxu0
      %v857 = vpop.f32.mrf.mxu0
      %858 = vmatprep.mubr.bf16.mxu0 0
      %859 = vmatmul.mubr.bf16.gmra.mxu0 %v799
      %v860 = vpop.f32.mrf.mxu0
      %v861 = vadd.f32 0.0, %v860
      %v862 = vpop.f32.mrf.mxu0
      %v863 = vpop.f32.mrf.mxu0
      %v864 = vpop.f32.mrf.mxu0
      %865 = vmatprep.mubr.bf16.mxu0 0
      %866 = vmatmul.mubr.bf16.gmra.mxu0 %v802
      %v867 = vpop.f32.mrf.mxu0
      %v868 = vadd.f32 0.0, %v867
      %v869 = vpop.f32.mrf.mxu0
      %v870 = vpop.f32.mrf.mxu0
      %v871 = vpop.f32.mrf.mxu0
      %872 = vmatprep.mubr.bf16.mxu0 0
      %873 = vmatmul.mubr.bf16.gmra.mxu0 %v805
      %v874 = vpop.f32.mrf.mxu0
      %v875 = vadd.f32 0.0, %v874
      %v876 = vpop.f32.mrf.mxu0
      %v877 = vpop.f32.mrf.mxu0
      %v878 = vpop.f32.mrf.mxu0
      %879 = vmatprep.mubr.bf16.mxu0 0
      %880 = vmatmul.mubr.bf16.gmra.mxu0 %v808
      %v881 = vpop.f32.mrf.mxu0
      %v882 = vadd.f32 0.0, %v881
      %v883 = vpop.f32.mrf.mxu0
      %v884 = vpop.f32.mrf.mxu0
      %v885 = vpop.f32.mrf.mxu0
      %886 = vmatprep.mubr.bf16.mxu0 0
      %887 = vmatmul.mubr.bf16.gmra.mxu0 %v811
      %v888 = vpop.f32.mrf.mxu0
      %v889 = vadd.f32 0.0, %v888
      %v890 = vpop.f32.mrf.mxu0
      %v891 = vpop.f32.mrf.mxu0
      %v892 = vpop.f32.mrf.mxu0
      %893 = vmatprep.mubr.bf16.mxu0 0
      %894 = vmatmul.mubr.bf16.gmra.mxu0 %v814
      %v895 = vpop.f32.mrf.mxu0
      %v896 = vadd.f32 0.0, %v895
      %v897 = vpop.f32.mrf.mxu0
      %v898 = vpop.f32.mrf.mxu0
      %v899 = vpop.f32.mrf.mxu0
      %900 = vmatprep.mubr.bf16.mxu0 0
      %901 = vmatmul.mubr.bf16.gmra.mxu0 %v817
      %v902 = vpop.f32.mrf.mxu0
      %v903 = vadd.f32 0.0, %v902
      %v904 = vpop.f32.mrf.mxu0
      %v905 = vpop.f32.mrf.mxu0
      %v906 = vpop.f32.mrf.mxu0
      %907 = vdwg.mxu0
      %v908 = vadd.f32 %v672, %v854
      %v909 = vadd.f32 %v679, %v861
      %v910 = vadd.f32 %v686, %v868
      %v911 = vadd.f32 %v693, %v875
      %v912 = vadd.f32 %v700, %v882
      %v913 = vadd.f32 %v707, %v889
      %v914 = vadd.f32 %v714, %v896
      %v915 = vadd.f32 %v721, %v903
      %v916 = vld [vmem:[%s729] sm:$0xf]
      %v917 = vld [vmem:[%s729 + $0x4] sm:$0xf]
      %v918 = vld [vmem:[%s729 + $0x8] sm:$0x1]
      %v919 = vld [vmem:[%s729 + $0xc] sm:$0xf]
      %v920 = vld [vmem:[%s729 + $0x10] sm:$0xf]
      %v921 = vld [vmem:[%s729 + $0x14] sm:$0x1]
      %v922 = vld [vmem:[%s729 + $0x18] sm:$0xf]
      %v923 = vld [vmem:[%s729 + $0x1c] sm:$0xf]
      %v924 = vld [vmem:[%s729 + $0x20] sm:$0x1]
      %v925 = vld [vmem:[%s729 + $0x24] sm:$0xf]
      %v926 = vld [vmem:[%s729 + $0x28] sm:$0xf]
      %v927 = vld [vmem:[%s729 + $0x2c] sm:$0x1]
      %v928 = vld [vmem:[%s729 + $0x30] sm:$0xf]
      %v929 = vld [vmem:[%s729 + $0x34] sm:$0xf]
      %v930 = vld [vmem:[%s729 + $0x38] sm:$0x1]
      %v931 = vld [vmem:[%s729 + $0x3c] sm:$0xf]
      %v932 = vld [vmem:[%s729 + $0x40] sm:$0xf]
      %v933 = vld [vmem:[%s729 + $0x44] sm:$0x1]
      %v934 = vld [vmem:[%s729 + $0x48] sm:$0xf]
      %v935 = vld [vmem:[%s729 + $0x4c] sm:$0xf]
      %v936 = vld [vmem:[%s729 + $0x50] sm:$0x1]
      %v937 = vld [vmem:[%s729 + $0x54] sm:$0xf]
      %v938 = vld [vmem:[%s729 + $0x58] sm:$0xf]
      %v939 = vld [vmem:[%s729 + $0x5c] sm:$0x1]
      %v941 = vshrl.u32 %v916, 16
      %v943 = vrot.slane %v941, 4
      %v944 = vshll.u32 %v916, 16
      %v946 = vrot.slane %v944, 5
      %v947 = vor.u32 %v943, %v946
      %v948 = vrot.slane %v947, 4
      %v950 = vshll.u32 %v917, 16
      %v952 = vrot.slane %v950, 5
      %v953 = vsel %vm227, %v948, %v952
      %v954 = vshrl.u32 %v917, 16
      %v956 = vrot.slane %v954, 4
      %v957 = vor.u32 %v956, %v952
      %v958 = vrot.slane %v957, 4
      %v960 = vshll.u32 %v918, 16
      %v962 = vrot.slane %v960, 5
      %v963 = vsel %vm227, %v958, %v962
      %v965 = vshrl.u32 %v919, 16
      %v967 = vrot.slane %v965, 4
      %v968 = vshll.u32 %v919, 16
      %v970 = vrot.slane %v968, 5
      %v971 = vor.u32 %v967, %v970
      %v972 = vrot.slane %v971, 4
      %v974 = vshll.u32 %v920, 16
      %v976 = vrot.slane %v974, 5
      %v977 = vsel %vm227, %v972, %v976
      %v978 = vshrl.u32 %v920, 16
      %v980 = vrot.slane %v978, 4
      %v981 = vor.u32 %v980, %v976
      %v982 = vrot.slane %v981, 4
      %v984 = vshll.u32 %v921, 16
      %v986 = vrot.slane %v984, 5
      %v987 = vsel %vm227, %v982, %v986
      %v989 = vshrl.u32 %v922, 16
      %v991 = vrot.slane %v989, 4
      %v992 = vshll.u32 %v922, 16
      %v994 = vrot.slane %v992, 5
      %v995 = vor.u32 %v991, %v994
      %v996 = vrot.slane %v995, 4
      %v998 = vshll.u32 %v923, 16
      %v1000 = vrot.slane %v998, 5
      %v1001 = vsel %vm227, %v996, %v1000
      %v1002 = vshrl.u32 %v923, 16
      %v1004 = vrot.slane %v1002, 4
      %v1005 = vor.u32 %v1004, %v1000
      %v1006 = vrot.slane %v1005, 4
      %v1008 = vshll.u32 %v924, 16
      %v1010 = vrot.slane %v1008, 5
      %v1011 = vsel %vm227, %v1006, %v1010
      %v1013 = vshrl.u32 %v925, 16
      %v1015 = vrot.slane %v1013, 4
      %v1016 = vshll.u32 %v925, 16
      %v1018 = vrot.slane %v1016, 5
      %v1019 = vor.u32 %v1015, %v1018
      %v1020 = vrot.slane %v1019, 4
      %v1022 = vshll.u32 %v926, 16
      %v1024 = vrot.slane %v1022, 5
      %v1025 = vsel %vm227, %v1020, %v1024
      %v1026 = vshrl.u32 %v926, 16
      %v1028 = vrot.slane %v1026, 4
      %v1029 = vor.u32 %v1028, %v1024
      %v1030 = vrot.slane %v1029, 4
      %v1032 = vshll.u32 %v927, 16
      %v1034 = vrot.slane %v1032, 5
      %v1035 = vsel %vm227, %v1030, %v1034
      %v1037 = vshrl.u32 %v928, 16
      %v1039 = vrot.slane %v1037, 4
      %v1040 = vshll.u32 %v928, 16
      %v1042 = vrot.slane %v1040, 5
      %v1043 = vor.u32 %v1039, %v1042
      %v1044 = vrot.slane %v1043, 4
      %v1046 = vshll.u32 %v929, 16
      %v1048 = vrot.slane %v1046, 5
      %v1049 = vsel %vm227, %v1044, %v1048
      %v1050 = vshrl.u32 %v929, 16
      %v1052 = vrot.slane %v1050, 4
      %v1053 = vor.u32 %v1052, %v1048
      %v1054 = vrot.slane %v1053, 4
      %v1056 = vshll.u32 %v930, 16
      %v1058 = vrot.slane %v1056, 5
      %v1059 = vsel %vm227, %v1054, %v1058
      %v1061 = vshrl.u32 %v931, 16
      %v1063 = vrot.slane %v1061, 4
      %v1064 = vshll.u32 %v931, 16
      %v1066 = vrot.slane %v1064, 5
      %v1067 = vor.u32 %v1063, %v1066
      %v1068 = vrot.slane %v1067, 4
      %v1070 = vshll.u32 %v932, 16
      %v1072 = vrot.slane %v1070, 5
      %v1073 = vsel %vm227, %v1068, %v1072
      %v1074 = vshrl.u32 %v932, 16
      %v1076 = vrot.slane %v1074, 4
      %v1077 = vor.u32 %v1076, %v1072
      %v1078 = vrot.slane %v1077, 4
      %v1080 = vshll.u32 %v933, 16
      %v1082 = vrot.slane %v1080, 5
      %v1083 = vsel %vm227, %v1078, %v1082
      %v1085 = vshrl.u32 %v934, 16
      %v1087 = vrot.slane %v1085, 4
      %v1088 = vshll.u32 %v934, 16
      %v1090 = vrot.slane %v1088, 5
      %v1091 = vor.u32 %v1087, %v1090
      %v1092 = vrot.slane %v1091, 4
      %v1094 = vshll.u32 %v935, 16
      %v1096 = vrot.slane %v1094, 5
      %v1097 = vsel %vm227, %v1092, %v1096
      %v1098 = vshrl.u32 %v935, 16
      %v1100 = vrot.slane %v1098, 4
      %v1101 = vor.u32 %v1100, %v1096
      %v1102 = vrot.slane %v1101, 4
      %v1104 = vshll.u32 %v936, 16
      %v1106 = vrot.slane %v1104, 5
      %v1107 = vsel %vm227, %v1102, %v1106
      %v1109 = vshrl.u32 %v937, 16
      %v1111 = vrot.slane %v1109, 4
      %v1112 = vshll.u32 %v937, 16
      %v1114 = vrot.slane %v1112, 5
      %v1115 = vor.u32 %v1111, %v1114
      %v1116 = vrot.slane %v1115, 4
      %v1118 = vshll.u32 %v938, 16
      %v1120 = vrot.slane %v1118, 5
      %v1121 = vsel %vm227, %v1116, %v1120
      %v1122 = vshrl.u32 %v938, 16
      %v1124 = vrot.slane %v1122, 4
      %v1125 = vor.u32 %v1124, %v1120
      %v1126 = vrot.slane %v1125, 4
      %v1128 = vshll.u32 %v939, 16
      %v1130 = vrot.slane %v1128, 5
      %v1131 = vsel %vm227, %v1126, %v1130
      %s1132 = scalar_lea.vmem %s1, 24
      %v1133 = vld [vmem:[%s1132] sm:$0xf]
      %v1134 = vld [vmem:[%s1132 + $0x4] sm:$0xf]
      %v1135 = vunpack.c.l.b16 %v953
      %v1136 = vunpack.c.l.b16 %v963
      %v1137 = vunpack.c.l.b16 %v977
      %v1138 = vunpack.c.l.b16 %v987
      %v1139 = vunpack.c.l.b16 %v1001
      %v1140 = vunpack.c.l.b16 %v1011
      %v1141 = vunpack.c.l.b16 %v1025
      %v1142 = vunpack.c.l.b16 %v1035
      %v1143 = vunpack.c.l.b16 %v1049
      %v1144 = vunpack.c.l.b16 %v1059
      %v1145 = vunpack.c.l.b16 %v1073
      %v1146 = vunpack.c.l.b16 %v1083
      %v1147 = vunpack.c.l.b16 %v1097
      %v1148 = vunpack.c.l.b16 %v1107
      %v1149 = vunpack.c.l.b16 %v1121
      %v1150 = vunpack.c.l.b16 %v1131
      %v1151 = vpack.c.b16 %v1136, %v1135
      %v1152 = vpack.c.b16 %v1138, %v1137
      %v1153 = vpack.c.b16 %v1140, %v1139
      %v1154 = vpack.c.b16 %v1142, %v1141
      %v1155 = vpack.c.b16 %v1144, %v1143
      %v1156 = vpack.c.b16 %v1146, %v1145
      %v1157 = vpack.c.b16 %v1148, %v1147
      %v1158 = vpack.c.b16 %v1150, %v1149
      %v1161 = vunpack.c.l.b16 %v1133
      %v1162 = vunpack.c.l.b16 %v1134
      %v1163 = vpack.c.b16 %v1162, %v1161
      %v1166 = vsel %vm453, %v1151, 0
      %v1169 = vsel %vm453, %v1152, 0
      %v1172 = vsel %vm453, %v1153, 0
      %v1175 = vsel %vm453, %v1154, 0
      %v1178 = vsel %vm453, %v1155, 0
      %v1181 = vsel %vm453, %v1156, 0
      %v1184 = vsel %vm453, %v1157, 0
      %v1187 = vsel %vm453, %v1158, 0
      %1189 = vmatprep.subr.bf16.mxu0 0
      %1190 = vmatpush1.bf16.msra.mxu0 0
      %1191 = vmatprep.subr.bf16.mxu0 0
      %1192 = vmatpush1.bf16.msra.mxu0 0
      %1193 = vmatprep.subr.bf16.mxu0 0
      %1194 = vmatpush1.bf16.msra.mxu0 0
      %1195 = vmatprep.subr.bf16.mxu0 0
      %1196 = vmatpush1.bf16.msra.mxu0 0
      %1197 = vmatprep.subr.bf16.mxu0 0
      %1198 = vmatpush1.bf16.msra.mxu0 0
      %1199 = vmatprep.subr.bf16.mxu0 0
      %1200 = vmatpush1.bf16.msra.mxu0 0
      %1201 = vmatprep.subr.bf16.mxu0 0
      %1202 = vmatpush1.bf16.msra.mxu0 0
      %1203 = vmatprep.subr.bf16.mxu0 0
      %1204 = vmatpush1.bf16.msra.mxu0 %v1163
      %1205 = vmatprep.subr.bf16.mxu0 0
      %1206 = vmatpush2.bf16.msra.mxu0 0
      %1207 = vmatprep.subr.bf16.mxu0 0
      %1208 = vmatpush2.bf16.msra.mxu0 0
      %1209 = vmatprep.subr.bf16.mxu0 0
      %1210 = vmatpush2.bf16.msra.mxu0 0
      %1211 = vmatprep.subr.bf16.mxu0 0
      %1212 = vmatpush2.bf16.msra.mxu0 0
      %1213 = vmatprep.subr.bf16.mxu0 0
      %1214 = vmatpush2.bf16.msra.mxu0 0
      %1215 = vmatprep.subr.bf16.mxu0 0
      %1216 = vmatpush2.bf16.msra.mxu0 0
      %1217 = vmatprep.subr.bf16.mxu0 0
      %1218 = vmatpush2.bf16.msra.mxu0 0
      %1219 = vmatprep.subr.bf16.mxu0 0
      %1220 = vmatpush2.bf16.msra.mxu0 0
      %1221 = vmatprep.mubr.bf16.mxu0 0
      %1222 = vmatmul.mubr.bf16.gmra.mxu0 %v1166
      %v1223 = vpop.f32.mrf.mxu0
      %v1224 = vadd.f32 0.0, %v1223
      %v1225 = vpop.f32.mrf.mxu0
      %v1226 = vpop.f32.mrf.mxu0
      %v1227 = vpop.f32.mrf.mxu0
      %1228 = vmatprep.mubr.bf16.mxu0 0
      %1229 = vmatmul.mubr.bf16.gmra.mxu0 %v1169
      %v1230 = vpop.f32.mrf.mxu0
      %v1231 = vadd.f32 0.0, %v1230
      %v1232 = vpop.f32.mrf.mxu0
      %v1233 = vpop.f32.mrf.mxu0
      %v1234 = vpop.f32.mrf.mxu0
      %1235 = vmatprep.mubr.bf16.mxu0 0
      %1236 = vmatmul.mubr.bf16.gmra.mxu0 %v1172
      %v1237 = vpop.f32.mrf.mxu0
      %v1238 = vadd.f32 0.0, %v1237
      %v1239 = vpop.f32.mrf.mxu0
      %v1240 = vpop.f32.mrf.mxu0
      %v1241 = vpop.f32.mrf.mxu0
      %1242 = vmatprep.mubr.bf16.mxu0 0
      %1243 = vmatmul.mubr.bf16.gmra.mxu0 %v1175
      %v1244 = vpop.f32.mrf.mxu0
      %v1245 = vadd.f32 0.0, %v1244
      %v1246 = vpop.f32.mrf.mxu0
      %v1247 = vpop.f32.mrf.mxu0
      %v1248 = vpop.f32.mrf.mxu0
      %1249 = vmatprep.mubr.bf16.mxu0 0
      %1250 = vmatmul.mubr.bf16.gmra.mxu0 %v1178
      %v1251 = vpop.f32.mrf.mxu0
      %v1252 = vadd.f32 0.0, %v1251
      %v1253 = vpop.f32.mrf.mxu0
      %v1254 = vpop.f32.mrf.mxu0
      %v1255 = vpop.f32.mrf.mxu0
      %1256 = vmatprep.mubr.bf16.mxu0 0
      %1257 = vmatmul.mubr.bf16.gmra.mxu0 %v1181
      %v1258 = vpop.f32.mrf.mxu0
      %v1259 = vadd.f32 0.0, %v1258
      %v1260 = vpop.f32.mrf.mxu0
      %v1261 = vpop.f32.mrf.mxu0
      %v1262 = vpop.f32.mrf.mxu0
      %1263 = vmatprep.mubr.bf16.mxu0 0
      %1264 = vmatmul.mubr.bf16.gmra.mxu0 %v1184
      %v1265 = vpop.f32.mrf.mxu0
      %v1266 = vadd.f32 0.0, %v1265
      %v1267 = vpop.f32.mrf.mxu0
      %v1268 = vpop.f32.mrf.mxu0
      %v1269 = vpop.f32.mrf.mxu0
      %1270 = vmatprep.mubr.bf16.mxu0 0
      %1271 = vmatmul.mubr.bf16.gmra.mxu0 %v1187
      %v1272 = vpop.f32.mrf.mxu0
      %v1273 = vadd.f32 0.0, %v1272
      %v1274 = vpop.f32.mrf.mxu0
      %v1275 = vpop.f32.mrf.mxu0
      %v1276 = vpop.f32.mrf.mxu0
      %1277 = vdwg.mxu0
      %v1278 = vadd.f32 %v908, %v1224
      %v1279 = vadd.f32 %v909, %v1231
      %v1280 = vadd.f32 %v910, %v1238
      %v1281 = vadd.f32 %v911, %v1245
      %v1282 = vadd.f32 %v912, %v1252
      %v1283 = vadd.f32 %v913, %v1259
      %v1284 = vadd.f32 %v914, %v1266
      %v1285 = vadd.f32 %v915, %v1273
      %v1286 = vld [vmem:[%s2] sm:$0x1]
      %v1288 = vlaneseq
      %v1289 = vshrl.u32 %v1288, 7
      %v1290 = vsub.s32 0, %v1289
      %v1291 = vrot.slane %v1286, %v1290
      %v1293 = vadd.f32 %v1278, %v1291
      %v1294 = vadd.f32 %v1279, %v1291
      %v1295 = vadd.f32 %v1280, %v1291
      %v1296 = vadd.f32 %v1281, %v1291
      %v1297 = vadd.f32 %v1282, %v1291
      %v1298 = vadd.f32 %v1283, %v1291
      %v1299 = vadd.f32 %v1284, %v1291
      %v1300 = vadd.f32 %v1285, %v1291
      %vm1301 = vcmp.ge.f32.partialorder %v1293, 0.0
      %vm1302 = vcmp.ge.f32.partialorder %v1294, 0.0
      %vm1303 = vcmp.ge.f32.partialorder %v1295, 0.0
      %vm1304 = vcmp.ge.f32.partialorder %v1296, 0.0
      %vm1305 = vcmp.ge.f32.partialorder %v1297, 0.0
      %vm1306 = vcmp.ge.f32.partialorder %v1298, 0.0
      %vm1307 = vcmp.ge.f32.partialorder %v1299, 0.0
      %vm1308 = vcmp.ge.f32.partialorder %v1300, 0.0
      %v1309 = vmul.f32 %v1293, 0.2
      %v1310 = vmul.f32 %v1294, 0.2
      %v1311 = vmul.f32 %v1295, 0.2
      %v1312 = vmul.f32 %v1296, 0.2
      %v1313 = vmul.f32 %v1297, 0.2
      %v1314 = vmul.f32 %v1298, 0.2
      %v1315 = vmul.f32 %v1299, 0.2
      %v1316 = vmul.f32 %v1300, 0.2
      %v1317 = vsel %vm1301, %v1293, %v1309
      %v1318 = vsel %vm1302, %v1294, %v1310
      %v1319 = vsel %vm1303, %v1295, %v1311
      %v1320 = vsel %vm1304, %v1296, %v1312
      %v1321 = vsel %vm1305, %v1297, %v1313
      %v1322 = vsel %vm1306, %v1298, %v1314
      %v1323 = vsel %vm1307, %v1299, %v1315
      %v1324 = vsel %vm1308, %v1300, %v1316
      %v1325 = vpack.c.bf16 %v1317, %v1317
      %v1326 = vpack.c.bf16 %v1318, %v1318
      %v1327 = vpack.c.bf16 %v1319, %v1319
      %v1328 = vpack.c.bf16 %v1320, %v1320
      %v1329 = vpack.c.bf16 %v1321, %v1321
      %v1330 = vpack.c.bf16 %v1322, %v1322
      %v1331 = vpack.c.bf16 %v1323, %v1323
      %v1332 = vpack.c.bf16 %v1324, %v1324
      %vm1333 = vcmask 60416
      %1334 = vst.msk [vmem:[%s192] sm:$0xf] %vm1333, %v1325
      %1335 = vst.msk [vmem:[%s192 + $0x4] sm:$0xf] %vm1333, %v1326
      %1336 = vst.msk [vmem:[%s192 + $0x8] sm:$0xf] %vm1333, %v1327
      %1337 = vst.msk [vmem:[%s192 + $0xc] sm:$0xf] %vm1333, %v1328
      %1338 = vst.msk [vmem:[%s192 + $0x10] sm:$0xf] %vm1333, %v1329
      %1339 = vst.msk [vmem:[%s192 + $0x14] sm:$0xf] %vm1333, %v1330
      %1340 = vst.msk [vmem:[%s192 + $0x18] sm:$0xf] %vm1333, %v1331
      %1341 = vst.msk [vmem:[%s192 + $0x1c] sm:$0xf] %vm1333, %v1332
      %s1342 = smul.u32 8, %s19
      %p1343 = scmp.lt.s32.totalorder %s18, 1
      %s1344 = scalar_select %p1343, %s18, 1
      %p1345 = scmp.lt.s32.totalorder %s1342, 7
      %s1346 = scalar_select %p1345, %s1342, 7
      %s1347 = smul.addr %s1344, 8
      %s1348 = sadd.s32 %s1346, %s1347
      %s1349 = smul.addr %s1348, 4
      %s1350 = scalar_lea.vmem %s3, %s1349
      // Predicated region
      $region33: #{forward.6} parent=31 // pred_check
        %p1351 = pneg %p114
      $region34: #{forward.6} parent=31 // pred_check_branch
        %1353 = sbr.rel (%p1351) target = $region36
      $region35: #{forward.6} parent=31 // pred_region
        %s1354 = smul.u32 8, %s19
      $region36: #{forward.6} parent=31 // pred_fallthru
        _
    $region32: #{forward.6} parent=5 // pred_fallthru
      _
    %p1355 = scmp.le.s32.totalorder 2, %s9
    // Predicated region
    $region37: #{forward.6} parent=5 // pred_check
      %p1356 = pneg %p1355
    $region38: #{forward.6} parent=5 // pred_check_branch
      %1358 = sbr.rel (%p1356) target = $region40
    $region39: #{forward.6} parent=5 // pred_region
      %s1359 = ssub.s32 %s9, 2
      // Predicated region
      $region41: #{forward.6} parent=39 // pred_check
        %p1360 = pneg %p120
      $region42: #{forward.6} parent=39 // pred_check_branch
        %1362 = sbr.rel (%p1360) target = $region44
      $region43: #{forward.6} parent=39 // pred_region
        %s1363 = smul.u32 8, %s21
        %p1364 = scmp.lt.s32.totalorder %s20, 1
        %s1365 = scalar_select %p1364, %s20, 1
        %p1366 = scmp.lt.s32.totalorder %s1363, 7
        %s1367 = scalar_select %p1366, %s1363, 7
        %s1368 = smul.addr %s1365, 8
        %s1369 = sadd.s32 %s1367, %s1368
        %s1370 = smul.addr %s1369, 4
        %s1371 = scalar_lea.vmem %s3, %s1370
      $region44: #{forward.6} parent=39 // pred_fallthru
        _
    $region40: #{forward.6} parent=5 // pred_fallthru
      _
  $region6: #{forward.6} parent=0 // loop_footer
    %s13 = sadd.s32 1, %s9
  $region7: #{forward.6} parent=0 // loop_footer_branch
    %8 = sbr.rel target = $region3
  $region8: #{forward.6} parent=0 // loop_exit
    _

// kernel: forward.8
$region0: #{forward.8}
  #allocation0 [shape = 'u32[]', space=smem, size = 0x4, offset = 0x4, fixed_abs, tag = 'smem constant byte address 0x4 - core index']
  #allocation1 [shape = 'u32[144,128]{1,0:T(1,128)}', space=vmem, size = 0x12000, scoped, tag = 'internal scratch']
  %s0 = inlined_call_operand.vmem [shape: bf16[32,16], index: 0, kind: input, shape index: {}]
  %s1 = inlined_call_operand.vmem [shape: bf16[16,8], index: 1, kind: input, shape index: {}]
  %s2 = inlined_call_operand.vmem [shape: f32[1,8], index: 2, kind: input, shape index: {}]
  %s3 = inlined_call_operand.vmem [shape: f32[32,1], index: 3, kind: input, shape index: {}]
  %s4 = inlined_call_operand.vmem [shape: f32[1,8], index: 4, kind: input, shape index: {}]
  %s5 = inlined_call_operand.vmem [shape: bf16[32,8], index: 5, kind: output, shape index: {}]
  %s6 = sld [smem:[#allocation0]]
  $region30: #{forward.8} parent=0
    _
  %s8 = ssub.s32 1, %s6
  %s9 = scalar_select 0, %s8, %s6
  // Predicated region
  $region2: #{forward.8} parent=0 // pred_check
    _
  $region3: #{forward.8} parent=0 // pred_check_branch
    %11 = sbr.rel (0) target = $region5
  $region4: #{forward.8} parent=0 // pred_region
    _
  $region5: #{forward.8} parent=0 // pred_fallthru
    _
  // Predicated region
  $region6: #{forward.8} parent=0 // pred_check
    _
  $region7: #{forward.8} parent=0 // pred_check_branch
    %13 = sbr.rel (0) target = $region9
  $region8: #{forward.8} parent=0 // pred_region
    _
  $region9: #{forward.8} parent=0 // pred_fallthru
    _
  // Predicated region
  $region10: #{forward.8} parent=0 // pred_check
    _
  $region11: #{forward.8} parent=0 // pred_check_branch
    %15 = sbr.rel (0) target = $region13
  $region12: #{forward.8} parent=0 // pred_region
    _
  $region13: #{forward.8} parent=0 // pred_fallthru
    _
  // Predicated region
  $region14: #{forward.8} parent=0 // pred_check
    _
  $region15: #{forward.8} parent=0 // pred_check_branch
    %17 = sbr.rel (0) target = $region17
  $region16: #{forward.8} parent=0 // pred_region
    _
  $region17: #{forward.8} parent=0 // pred_fallthru
    _
  // Predicated region
  $region18: #{forward.8} parent=0 // pred_check
    _
  $region19: #{forward.8} parent=0 // pred_check_branch
    %19 = sbr.rel (0) target = $region21
  $region20: #{forward.8} parent=0 // pred_region
    _
  $region21: #{forward.8} parent=0 // pred_fallthru
    _
  %v21 = vld [vmem:[%s0] sm:$0xf]
  %v22 = vld [vmem:[%s0 + $0x4] sm:$0xf]
  %v23 = vld [vmem:[%s0 + $0x8] sm:$0xf]
  %v24 = vld [vmem:[%s0 + $0xc] sm:$0xf]
  %v25 = vld [vmem:[%s1] sm:$0xf]
  %v26 = vld [vmem:[%s1 + $0x4] sm:$0xf]
  %v27 = vld [vmem:[%s2] sm:$0x1]
  %v29 = vlaneseq
  %v30 = vshrl.u32 %v29, 7
  %v31 = vsub.s32 0, %v30
  %v32 = vrot.slane %v27, %v31
  %v38 = vunpack.c.l.b16 %v21
  %v39 = vunpack.c.l.b16 %v22
  %v40 = vunpack.c.l.b16 %v23
  %v41 = vunpack.c.l.b16 %v24
  %v42 = vpack.c.b16 %v39, %v38
  %v43 = vpack.c.b16 %v41, %v40
  %v46 = vunpack.c.l.b16 %v25
  %v47 = vunpack.c.l.b16 %v26
  %v48 = vpack.c.b16 %v47, %v46
  %vm50 = vcmask 130048
  %v52 = vsel %vm50, %v42, 0
  %v55 = vsel %vm50, %v43, 0
  %57 = vmatprep.subr.bf16.mxu0 0
  %58 = vmatpush1.bf16.msra.mxu0 0
  %59 = vmatprep.subr.bf16.mxu0 0
  %60 = vmatpush1.bf16.msra.mxu0 0
  %61 = vmatprep.subr.bf16.mxu0 0
  %62 = vmatpush1.bf16.msra.mxu0 0
  %63 = vmatprep.subr.bf16.mxu0 0
  %64 = vmatpush1.bf16.msra.mxu0 0
  %65 = vmatprep.subr.bf16.mxu0 0
  %66 = vmatpush1.bf16.msra.mxu0 0
  %67 = vmatprep.subr.bf16.mxu0 0
  %68 = vmatpush1.bf16.msra.mxu0 0
  %69 = vmatprep.subr.bf16.mxu0 0
  %70 = vmatpush1.bf16.msra.mxu0 0
  %71 = vmatprep.subr.bf16.mxu0 0
  %72 = vmatpush1.bf16.msra.mxu0 %v48
  %73 = vmatprep.subr.bf16.mxu0 0
  %74 = vmatpush2.bf16.msra.mxu0 0
  %75 = vmatprep.subr.bf16.mxu0 0
  %76 = vmatpush2.bf16.msra.mxu0 0
  %77 = vmatprep.subr.bf16.mxu0 0
  %78 = vmatpush2.bf16.msra.mxu0 0
  %79 = vmatprep.subr.bf16.mxu0 0
  %80 = vmatpush2.bf16.msra.mxu0 0
  %81 = vmatprep.subr.bf16.mxu0 0
  %82 = vmatpush2.bf16.msra.mxu0 0
  %83 = vmatprep.subr.bf16.mxu0 0
  %84 = vmatpush2.bf16.msra.mxu0 0
  %85 = vmatprep.subr.bf16.mxu0 0
  %86 = vmatpush2.bf16.msra.mxu0 0
  %87 = vmatprep.subr.bf16.mxu0 0
  %88 = vmatpush2.bf16.msra.mxu0 0
  %89 = vmatprep.mubr.bf16.mxu0 0
  %90 = vmatmul.mubr.bf16.gmra.mxu0 %v52
  %v91 = vpop.f32.mrf.mxu0
  %v92 = vadd.f32 %v32, %v91
  %v93 = vpop.f32.mrf.mxu0
  %v94 = vpop.f32.mrf.mxu0
  %v95 = vadd.f32 %v32, %v94
  %v96 = vpop.f32.mrf.mxu0
  %97 = vmatprep.mubr.bf16.mxu0 0
  %98 = vmatmul.mubr.bf16.gmra.mxu0 %v55
  %v99 = vpop.f32.mrf.mxu0
  %v100 = vadd.f32 %v32, %v99
  %v101 = vpop.f32.mrf.mxu0
  %v102 = vpop.f32.mrf.mxu0
  %v103 = vadd.f32 %v32, %v102
  %v104 = vpop.f32.mrf.mxu0
  %105 = vdwg.mxu0
  %v106 = vld [vmem:[%s3] sm:$0xff]
  %v107 = vld [vmem:[%s3 + $0x8] sm:$0xff]
  %v108 = vld [vmem:[%s3 + $0x10] sm:$0xff]
  %v109 = vld [vmem:[%s3 + $0x18] sm:$0xff]
  %v110 = vsub.f32 1.0, %v106
  %v111 = vsub.f32 1.0, %v107
  %v112 = vsub.f32 1.0, %v108
  %v113 = vsub.f32 1.0, %v109
  %115 = vset.pattern.permute.xlu0 0
  %116 = vperm.xlu0 %115, %v110
  %v117 = vpop.permute.xlu0 %116
  %120 = vset.pattern.permute.xlu0 0
  %121 = vperm.xlu0 %120, %v111
  %v122 = vpop.permute.xlu0 %121
  %125 = vset.pattern.permute.xlu0 0
  %126 = vperm.xlu0 %125, %v112
  %v127 = vpop.permute.xlu0 %126
  %130 = vset.pattern.permute.xlu0 0
  %131 = vperm.xlu0 %130, %v113
  %v132 = vpop.permute.xlu0 %131
  %v134 = vmul.f32 %v92, %v117
  %v135 = vmul.f32 %v95, %v122
  %v136 = vmul.f32 %v100, %v127
  %v137 = vmul.f32 %v103, %v132
  %v138 = vld [vmem:[%s4] sm:$0x1]
  %v140 = vlaneseq
  %v141 = vshrl.u32 %v140, 7
  %v142 = vsub.s32 0, %v141
  %v143 = vrot.slane %v138, %v142
  %146 = vset.pattern.permute.xlu0 0
  %147 = vperm.xlu0 %146, %v106
  %v148 = vpop.permute.xlu0 %147
  %151 = vset.pattern.permute.xlu0 0
  %152 = vperm.xlu0 %151, %v107
  %v153 = vpop.permute.xlu0 %152
  %156 = vset.pattern.permute.xlu0 0
  %157 = vperm.xlu0 %156, %v108
  %v158 = vpop.permute.xlu0 %157
  %161 = vset.pattern.permute.xlu0 0
  %162 = vperm.xlu0 %161, %v109
  %v163 = vpop.permute.xlu0 %162
  %v165 = vmul.f32 %v143, %v148
  %v166 = vmul.f32 %v143, %v153
  %v167 = vmul.f32 %v143, %v158
  %v168 = vmul.f32 %v143, %v163
  %v169 = vadd.f32 %v134, %v165
  %v170 = vadd.f32 %v135, %v166
  %v171 = vadd.f32 %v136, %v167
  %v172 = vadd.f32 %v137, %v168
  %v173 = vpack.c.bf16 %v170, %v169
  %v174 = vpack.c.bf16 %v172, %v171
  %v177 = vunpack.c.l.b16 %v173
  %v178 = vunpack.c.h.b16 %v173
  %v179 = vunpack.c.l.b16 %v174
  %v180 = vunpack.c.h.b16 %v174
  %v181 = vpack.c.b16 %v177, %v177
  %v182 = vpack.c.b16 %v178, %v178
  %v183 = vpack.c.b16 %v179, %v179
  %v184 = vpack.c.b16 %v180, %v180
  %vm189 = vcmask 60416
  %190 = vst.msk [vmem:[%s5] sm:$0xf] %vm189, %v181
  %191 = vst.msk [vmem:[%s5 + $0x4] sm:$0xf] %vm189, %v182
  %192 = vst.msk [vmem:[%s5 + $0x8] sm:$0xf] %vm189, %v183
  %193 = vst.msk [vmem:[%s5 + $0xc] sm:$0xf] %vm189, %v184
  // Predicated region
  $region22: #{forward.8} parent=0 // pred_check
    _
  $region23: #{forward.8} parent=0 // pred_check_branch
    %195 = sbr.rel (0) target = $region25
  $region24: #{forward.8} parent=0 // pred_region
    _
  $region25: #{forward.8} parent=0 // pred_fallthru
    _
  // Predicated region
  $region26: #{forward.8} parent=0 // pred_check
    _
  $region27: #{forward.8} parent=0 // pred_check_branch
    %197 = sbr.rel (0) target = $region29
  $region28: #{forward.8} parent=0 // pred_region
    _
  $region29: #{forward.8} parent=0 // pred_fallthru
    _

// kernel: forward.7
$region0: #{forward.7}
  #allocation0 [shape = 'u32[]', space=smem, size = 0x4, offset = 0x4, fixed_abs, tag = 'smem constant byte address 0x4 - core index']
  #allocation1 [shape = 'u32[144,128]{1,0:T(1,128)}', space=vmem, size = 0x12000, scoped, tag = 'internal scratch']
  %s0 = inlined_call_operand.vmem [shape: bf16[2,5,17,32], index: 0, kind: input, shape index: {}]
  %s1 = inlined_call_operand.vmem [shape: bf16[4,32,16], index: 1, kind: input, shape index: {}]
  %s2 = inlined_call_operand.vmem [shape: f32[1,16], index: 2, kind: input, shape index: {}]
  %s3 = inlined_call_operand.vmem [shape: bf16[2,4,4,16], index: 3, kind: output, shape index: {}]
  %s4 = sld [smem:[#allocation0]]
  $region45: #{forward.7} parent=0
    _
  %s6 = ssub.s32 1, %s4
  %s7 = scalar_select 0, %s6, %s4
  loop: start=0, step=1, limit=4
  $region2: #{forward.7} parent=0 // loop_pre_header
    _
  $region3: #{forward.7} parent=0 // loop_header
    %s9 = sphi 0, %s13
    %p10 = scmp.ge.s32.totalorder %s9, 4
    %s16 = sphi 0, %s28
    %s17 = sphi 0, %s24
    %s18 = sphi 0, %s16
    %s19 = sphi 0, %s17
    %s20 = sphi 0, %s18
    %s21 = sphi 0, %s19
    %s31 = sphi 0, %s33
    %s34 = sphi 0, %s31
    %s35 = sphi 0, %s34
    %s51 = sphi 0, %s35
    %s55 = sphi 0, %s55
    %s57 = sphi 0, %s55
    %s58 = sphi 0, %s57
    %s72 = sphi 0, %s58
    %s76 = sphi 0, %s76
    %s78 = sphi 0, %s76
    %s79 = sphi 0, %s78
    %s93 = sphi 0, %s79
    %s101 = sphi 0, %s103
    %s104 = sphi 0, %s101
    %s105 = sphi 0, %s104
    %s121 = sphi 0, %s105
  $region4: #{forward.7} parent=0 // loop_header_branch
    %12 = sbr.rel (%p10) target = $region8
  $region5: #{forward.7} parent=0 // loop_body
    %s14 = ssub.s32 %s9, 1
    %s15 = ssub.s32 %s9, 2
    %s22 = sadd.s32 1, %s17
    %p23 = scmp.ge.s32.totalorder %s22, 1
    %s24 = scalar_select %p23, 0, %s22
    %s25 = sadd.s32 1, %s16
    %s26 = scalar_select %p23, %s25, %s16
    %p27 = scmp.ge.s32.totalorder %s26, 2
    %s28 = scalar_select %p27, 0, %s26
    %s29 = ssub.s32 %s16, %s28
    %p30 = scmp.eq.s32.totalorder %s29, 0
    %s32 = sadd.s32 %s31, 1
    %s33 = scalar_select %p30, %s31, %s32
    %p36 = pneg %p30
    %p37 = scmp.eq.s32.totalorder %s9, 1
    %p38 = por %p36, %p37
    %p39 = scmp.ne.s32.totalorder %s31, %s34
    %p40 = scmp.eq.s32.totalorder %s9, 0
    %p41 = por %p39, %p40
    %p42 = scmp.ne.s32.totalorder %s31, %s34
    %p43 = scmp.eq.s32.totalorder %s14, 1
    %p44 = por %p42, %p43
    %p45 = scmp.ne.s32.totalorder %s34, %s35
    %p46 = scmp.eq.s32.totalorder %s14, 0
    %p47 = por %p45, %p46
    %p48 = scmp.ne.s32.totalorder %s34, %s35
    %p49 = scmp.eq.s32.totalorder %s15, 1
    %p50 = por %p48, %p49
    %p52 = scmp.ne.s32.totalorder %s35, %s51
    %p53 = scmp.eq.s32.totalorder %s15, 0
    %p54 = por %p52, %p53
    %s56 = sadd.s32 %s55, 1
    %p59 = scmp.eq.s32.totalorder %s9, 1
    %p60 = scmp.ne.s32.totalorder %s55, %s57
    %p61 = scmp.eq.s32.totalorder %s9, 0
    %p62 = por %p60, %p61
    %p63 = scmp.ne.s32.totalorder %s55, %s57
    %p64 = scmp.eq.s32.totalorder %s14, 1
    %p65 = por %p63, %p64
    %p66 = scmp.ne.s32.totalorder %s57, %s58
    %p67 = scmp.eq.s32.totalorder %s14, 0
    %p68 = por %p66, %p67
    %p69 = scmp.ne.s32.totalorder %s57, %s58
    %p70 = scmp.eq.s32.totalorder %s15, 1
    %p71 = por %p69, %p70
    %p73 = scmp.ne.s32.totalorder %s58, %s72
    %p74 = scmp.eq.s32.totalorder %s15, 0
    %p75 = por %p73, %p74
    %s77 = sadd.s32 %s76, 1
    %p80 = scmp.eq.s32.totalorder %s9, 1
    %p81 = scmp.ne.s32.totalorder %s76, %s78
    %p82 = scmp.eq.s32.totalorder %s9, 0
    %p83 = por %p81, %p82
    %p84 = scmp.ne.s32.totalorder %s76, %s78
    %p85 = scmp.eq.s32.totalorder %s14, 1
    %p86 = por %p84, %p85
    %p87 = scmp.ne.s32.totalorder %s78, %s79
    %p88 = scmp.eq.s32.totalorder %s14, 0
    %p89 = por %p87, %p88
    %p90 = scmp.ne.s32.totalorder %s78, %s79
    %p91 = scmp.eq.s32.totalorder %s15, 1
    %p92 = por %p90, %p91
    %p94 = scmp.ne.s32.totalorder %s79, %s93
    %p95 = scmp.eq.s32.totalorder %s15, 0
    %p96 = por %p94, %p95
    %s97 = ssub.s32 %s16, %s28
    %s98 = ssub.s32 %s17, %s24
    %s99 = sor.u32 %s97, %s98
    %p100 = scmp.eq.s32.totalorder %s99, 0
    %s102 = sadd.s32 %s101, 1
    %s103 = scalar_select %p100, %s101, %s102
    %p106 = pneg %p100
    %p107 = scmp.eq.s32.totalorder %s9, 1
    %p108 = por %p106, %p107
    %p109 = scmp.ne.s32.totalorder %s101, %s104
    %p110 = scmp.eq.s32.totalorder %s9, 0
    %p111 = por %p109, %p110
    %p112 = scmp.ne.s32.totalorder %s101, %s104
    %p113 = scmp.eq.s32.totalorder %s14, 1
    %p114 = por %p112, %p113
    %p115 = scmp.ne.s32.totalorder %s104, %s105
    %p116 = scmp.eq.s32.totalorder %s14, 0
    %p117 = por %p115, %p116
    %p118 = scmp.ne.s32.totalorder %s104, %s105
    %p119 = scmp.eq.s32.totalorder %s15, 1
    %p120 = por %p118, %p119
    %p122 = scmp.ne.s32.totalorder %s105, %s121
    %p123 = scmp.eq.s32.totalorder %s15, 0
    %p124 = por %p122, %p123
    %p125 = scmp.le.s32.totalorder 1, %s9
    %p126 = scmp.lt.s32.totalorder %s9, 3
    %p127 = pnand %p125, %p126
    %p128 = pneg %p127
    // Predicated region
    $region9: #{forward.7} parent=5 // pred_check
      _
    $region10: #{forward.7} parent=5 // pred_check_branch
      %130 = sbr.rel (%p127) target = $region12
    $region11: #{forward.7} parent=5 // pred_region
      %s131 = ssub.s32 %s9, 1
      // Predicated region
      $region13: #{forward.7} parent=11 // pred_check
        %p132 = pneg %p68
      $region14: #{forward.7} parent=11 // pred_check_branch
        %134 = sbr.rel (%p132) target = $region16
      $region15: #{forward.7} parent=11 // pred_region
        _
      $region16: #{forward.7} parent=11 // pred_fallthru
        _
      // Predicated region
      $region17: #{forward.7} parent=11 // pred_check
        %p135 = pneg %p89
      $region18: #{forward.7} parent=11 // pred_check_branch
        %137 = sbr.rel (%p135) target = $region20
      $region19: #{forward.7} parent=11 // pred_region
        _
      $region20: #{forward.7} parent=11 // pred_fallthru
        _
    $region12: #{forward.7} parent=5 // pred_fallthru
      _
    %p138 = scmp.lt.s32.totalorder %s9, 2
    // Predicated region
    $region21: #{forward.7} parent=5 // pred_check
      %p139 = pneg %p138
    $region22: #{forward.7} parent=5 // pred_check_branch
      %141 = sbr.rel (%p139) target = $region24
    $region23: #{forward.7} parent=5 // pred_region
      // Predicated region
      $region25: #{forward.7} parent=23 // pred_check
        %p142 = pneg %p41
      $region26: #{forward.7} parent=23 // pred_check_branch
        %144 = sbr.rel (%p142) target = $region28
      $region27: #{forward.7} parent=23 // pred_region
        %p145 = scmp.lt.s32.totalorder %s16, 1
        %s146 = scalar_select %p145, %s16, 1
        %s147 = smul.addr %s146, 15
        %s148 = smul.addr %s147, 4
        %s149 = scalar_lea.vmem %s0, %s148
      $region28: #{forward.7} parent=23 // pred_fallthru
        _
    $region24: #{forward.7} parent=5 // pred_fallthru
      _
    %p150 = scmp.le.s32.totalorder 1, %s9
    %p151 = scmp.lt.s32.totalorder %s9, 3
    %p152 = pnand %p150, %p151
    %p153 = pneg %p152
    // Predicated region
    $region29: #{forward.7} parent=5 // pred_check
      _
    $region30: #{forward.7} parent=5 // pred_check_branch
      %155 = sbr.rel (%p152) target = $region32
    $region31: #{forward.7} parent=5 // pred_region
      %s156 = ssub.s32 %s9, 1
      %p157 = scmp.lt.s32.totalorder %s18, 1
      %s158 = scalar_select %p157, %s18, 1
      %s159 = smul.addr %s158, 15
      %s160 = smul.addr %s159, 4
      %s161 = scalar_lea.vmem %s0, %s160
      %p162 = pneg %p47
      %p163 = pneg %p44
      %p164 = pneg %p68
      %p165 = pneg %p65
      %p166 = pneg %p89
      %p167 = pneg %p86
      %p168 = pneg %p117
      %p169 = pneg %p114
      %s170 = smul.u32 4, %s19
      %p171 = scmp.lt.s32.totalorder %s18, 1
      %s172 = scalar_select %p171, %s18, 1
      %p173 = scmp.lt.s32.totalorder %s170, 3
      %s174 = scalar_select %p173, %s170, 3
      %s175 = smul.addr %s172, 4
      %s176 = sadd.s32 %s174, %s175
      %s177 = smul.addr %s176, 2
      %s178 = scalar_lea.vmem %s3, %s177
      %p179 = scmp.lt.s32.totalorder %s18, 1
      %s180 = scalar_select %p179, %s18, 1
      %s181 = smul.addr %s180, 15
      %s182 = smul.addr %s181, 4
      %s183 = scalar_lea.vmem %s0, %s182
      %s184 = smul.u32 4, %s19
      %p185 = scmp.lt.s32.totalorder %s18, 1
      %s186 = scalar_select %p185, %s18, 1
      %p187 = scmp.lt.s32.totalorder %s184, 3
      %s188 = scalar_select %p187, %s184, 3
      %s189 = smul.addr %s186, 4
      %s190 = sadd.s32 %s188, %s189
      %s191 = smul.addr %s190, 2
      %s192 = scalar_lea.vmem %s3, %s191
      %s193 = smul.u32 4, %s19
      %s195 = smul.u32 %s19, 4
      %s196 = smul.u32 %s195, 3
      %s197 = smul.addr %s196, 4
      %s198 = scalar_lea.vmem %s183, %s197
      %v199 = vld [vmem:[%s198] sm:$0xf]
      %v200 = vld [vmem:[%s198 + $0x4] sm:$0xf]
      %v201 = vld [vmem:[%s198 + $0xc] sm:$0xf]
      %v202 = vld [vmem:[%s198 + $0x10] sm:$0xf]
      %v203 = vld [vmem:[%s198 + $0x18] sm:$0xf]
      %v204 = vld [vmem:[%s198 + $0x1c] sm:$0xf]
      %v205 = vld [vmem:[%s198 + $0x24] sm:$0xf]
      %v206 = vld [vmem:[%s198 + $0x28] sm:$0xf]
      %v207 = vld [vmem:[%s1] sm:$0xf]
      %v208 = vld [vmem:[%s1 + $0x4] sm:$0xf]
      %v209 = vld [vmem:[%s1 + $0x8] sm:$0xf]
      %v210 = vld [vmem:[%s1 + $0xc] sm:$0xf]
      %v211 = vld [vmem:[%s198 + $0x8] sm:$0x1]
      %v212 = vld [vmem:[%s198 + $0x14] sm:$0x1]
      %v213 = vld [vmem:[%s198 + $0x20] sm:$0x1]
      %v214 = vld [vmem:[%s198 + $0x2c] sm:$0x1]
      %vm215 = vsmask.f32 3328
      %vm216 = vsmask.f32 7440
      %vm217 = vmor %vm215, %vm216
      %v219 = vshrl.u32 %v199, 16
      %v221 = vrot.slane %v219, 4
      %v222 = vshll.u32 %v199, 16
      %v224 = vrot.slane %v222, 5
      %v225 = vor.u32 %v221, %v224
      %v226 = vrot.slane %v225, 4
      %v228 = vshll.u32 %v200, 16
      %v230 = vrot.slane %v228, 5
      %v231 = vsel %vm217, %v226, %v230
      %v232 = vshrl.u32 %v200, 16
      %v234 = vrot.slane %v232, 4
      %v235 = vor.u32 %v234, %v230
      %v236 = vrot.slane %v235, 4
      %v238 = vshll.u32 %v211, 16
      %v240 = vrot.slane %v238, 5
      %v241 = vsel %vm217, %v236, %v240
      %v243 = vshrl.u32 %v201, 16
      %v245 = vrot.slane %v243, 4
      %v246 = vshll.u32 %v201, 16
      %v248 = vrot.slane %v246, 5
      %v249 = vor.u32 %v245, %v248
      %v250 = vrot.slane %v249, 4
      %v252 = vshll.u32 %v202, 16
      %v254 = vrot.slane %v252, 5
      %v255 = vsel %vm217, %v250, %v254
      %v256 = vshrl.u32 %v202, 16
      %v258 = vrot.slane %v256, 4
      %v259 = vor.u32 %v258, %v254
      %v260 = vrot.slane %v259, 4
      %v262 = vshll.u32 %v212, 16
      %v264 = vrot.slane %v262, 5
      %v265 = vsel %vm217, %v260, %v264
      %v267 = vshrl.u32 %v203, 16
      %v269 = vrot.slane %v267, 4
      %v270 = vshll.u32 %v203, 16
      %v272 = vrot.slane %v270, 5
      %v273 = vor.u32 %v269, %v272
      %v274 = vrot.slane %v273, 4
      %v276 = vshll.u32 %v204, 16
      %v278 = vrot.slane %v276, 5
      %v279 = vsel %vm217, %v274, %v278
      %v280 = vshrl.u32 %v204, 16
      %v282 = vrot.slane %v280, 4
      %v283 = vor.u32 %v282, %v278
      %v284 = vrot.slane %v283, 4
      %v286 = vshll.u32 %v213, 16
      %v288 = vrot.slane %v286, 5
      %v289 = vsel %vm217, %v284, %v288
      %v291 = vshrl.u32 %v205, 16
      %v293 = vrot.slane %v291, 4
      %v294 = vshll.u32 %v205, 16
      %v296 = vrot.slane %v294, 5
      %v297 = vor.u32 %v293, %v296
      %v298 = vrot.slane %v297, 4
      %v300 = vshll.u32 %v206, 16
      %v302 = vrot.slane %v300, 5
      %v303 = vsel %vm217, %v298, %v302
      %v304 = vshrl.u32 %v206, 16
      %v306 = vrot.slane %v304, 4
      %v307 = vor.u32 %v306, %v302
      %v308 = vrot.slane %v307, 4
      %v310 = vshll.u32 %v214, 16
      %v312 = vrot.slane %v310, 5
      %v313 = vsel %vm217, %v308, %v312
      %s314 = scalar_lea.vmem %s1, 16
      %v315 = vld [vmem:[%s314] sm:$0xf]
      %v316 = vld [vmem:[%s314 + $0x4] sm:$0xf]
      %v317 = vld [vmem:[%s314 + $0x8] sm:$0xf]
      %v318 = vld [vmem:[%s314 + $0xc] sm:$0xf]
      %v319 = vunpack.c.l.b16 %v231
      %v320 = vunpack.c.l.b16 %v241
      %v321 = vunpack.c.l.b16 %v255
      %v322 = vunpack.c.l.b16 %v265
      %v323 = vunpack.c.l.b16 %v279
      %v324 = vunpack.c.l.b16 %v289
      %v325 = vunpack.c.l.b16 %v303
      %v326 = vunpack.c.l.b16 %v313
      %v327 = vpack.c.b16 %v320, %v319
      %v328 = vpack.c.b16 %v322, %v321
      %v329 = vpack.c.b16 %v324, %v323
      %v330 = vpack.c.b16 %v326, %v325
      %v335 = vunpack.c.l.b16 %v315
      %v336 = vunpack.c.l.b16 %v316
      %v337 = vunpack.c.l.b16 %v317
      %v338 = vunpack.c.l.b16 %v318
      %v339 = vpack.c.b16 %v336, %v335
      %v340 = vpack.c.b16 %v338, %v337
      %vm343 = vcmask 261120
      %v345 = vsel %vm343, %v327, 0
      %v348 = vsel %vm343, %v328, 0
      %v351 = vsel %vm343, %v329, 0
      %v354 = vsel %vm343, %v330, 0
      %356 = vmatprep.subr.bf16.mxu0 0
      %357 = vmatpush1.bf16.msra.mxu0 0
      %358 = vmatprep.subr.bf16.mxu0 0
      %359 = vmatpush1.bf16.msra.mxu0 0
      %360 = vmatprep.subr.bf16.mxu0 0
      %361 = vmatpush1.bf16.msra.mxu0 0
      %362 = vmatprep.subr.bf16.mxu0 0
      %363 = vmatpush1.bf16.msra.mxu0 0
      %364 = vmatprep.subr.bf16.mxu0 0
      %365 = vmatpush1.bf16.msra.mxu0 0
      %366 = vmatprep.subr.bf16.mxu0 0
      %367 = vmatpush1.bf16.msra.mxu0 0
      %368 = vmatprep.subr.bf16.mxu0 0
      %369 = vmatpush1.bf16.msra.mxu0 %v340
      %370 = vmatprep.subr.bf16.mxu0 0
      %371 = vmatpush1.bf16.msra.mxu0 %v339
      %372 = vmatprep.subr.bf16.mxu0 0
      %373 = vmatpush2.bf16.msra.mxu0 0
      %374 = vmatprep.subr.bf16.mxu0 0
      %375 = vmatpush2.bf16.msra.mxu0 0
      %376 = vmatprep.subr.bf16.mxu0 0
      %377 = vmatpush2.bf16.msra.mxu0 0
      %378 = vmatprep.subr.bf16.mxu0 0
      %379 = vmatpush2.bf16.msra.mxu0 0
      %380 = vmatprep.subr.bf16.mxu0 0
      %381 = vmatpush2.bf16.msra.mxu0 0
      %382 = vmatprep.subr.bf16.mxu0 0
      %383 = vmatpush2.bf16.msra.mxu0 0
      %384 = vmatprep.subr.bf16.mxu0 0
      %385 = vmatpush2.bf16.msra.mxu0 0
      %386 = vmatprep.subr.bf16.mxu0 0
      %387 = vmatpush2.bf16.msra.mxu0 0
      %388 = vmatprep.mubr.bf16.mxu0 0
      %389 = vmatmul.mubr.bf16.gmra.mxu0 %v345
      %v390 = vpop.f32.mrf.mxu0
      %v391 = vadd.f32 0.0, %v390
      %v392 = vpop.f32.mrf.mxu0
      %v393 = vpop.f32.mrf.mxu0
      %v394 = vpop.f32.mrf.mxu0
      %395 = vmatprep.mubr.bf16.mxu0 0
      %396 = vmatmul.mubr.bf16.gmra.mxu0 %v348
      %v397 = vpop.f32.mrf.mxu0
      %v398 = vadd.f32 0.0, %v397
      %v399 = vpop.f32.mrf.mxu0
      %v400 = vpop.f32.mrf.mxu0
      %v401 = vpop.f32.mrf.mxu0
      %402 = vmatprep.mubr.bf16.mxu0 0
      %403 = vmatmul.mubr.bf16.gmra.mxu0 %v351
      %v404 = vpop.f32.mrf.mxu0
      %v405 = vadd.f32 0.0, %v404
      %v406 = vpop.f32.mrf.mxu0
      %v407 = vpop.f32.mrf.mxu0
      %v408 = vpop.f32.mrf.mxu0
      %409 = vmatprep.mubr.bf16.mxu0 0
      %410 = vmatmul.mubr.bf16.gmra.mxu0 %v354
      %v411 = vpop.f32.mrf.mxu0
      %v412 = vadd.f32 0.0, %v411
      %v413 = vpop.f32.mrf.mxu0
      %v414 = vpop.f32.mrf.mxu0
      %v415 = vpop.f32.mrf.mxu0
      %416 = vdwg.mxu0
      %v425 = vunpack.c.l.b16 %v199
      %v426 = vunpack.c.l.b16 %v200
      %v427 = vunpack.c.l.b16 %v201
      %v428 = vunpack.c.l.b16 %v202
      %v429 = vunpack.c.l.b16 %v203
      %v430 = vunpack.c.l.b16 %v204
      %v431 = vunpack.c.l.b16 %v205
      %v432 = vunpack.c.l.b16 %v206
      %v433 = vpack.c.b16 %v426, %v425
      %v434 = vpack.c.b16 %v428, %v427
      %v435 = vpack.c.b16 %v430, %v429
      %v436 = vpack.c.b16 %v432, %v431
      %v441 = vunpack.c.l.b16 %v207
      %v442 = vunpack.c.l.b16 %v208
      %v443 = vunpack.c.l.b16 %v209
      %v444 = vunpack.c.l.b16 %v210
      %v445 = vpack.c.b16 %v442, %v441
      %v446 = vpack.c.b16 %v444, %v443
      %v450 = vsel %vm343, %v433, 0
      %v453 = vsel %vm343, %v434, 0
      %v456 = vsel %vm343, %v435, 0
      %v459 = vsel %vm343, %v436, 0
      %461 = vmatprep.subr.bf16.mxu0 0
      %462 = vmatpush1.bf16.msra.mxu0 0
      %463 = vmatprep.subr.bf16.mxu0 0
      %464 = vmatpush1.bf16.msra.mxu0 0
      %465 = vmatprep.subr.bf16.mxu0 0
      %466 = vmatpush1.bf16.msra.mxu0 0
      %467 = vmatprep.subr.bf16.mxu0 0
      %468 = vmatpush1.bf16.msra.mxu0 0
      %469 = vmatprep.subr.bf16.mxu0 0
      %470 = vmatpush1.bf16.msra.mxu0 0
      %471 = vmatprep.subr.bf16.mxu0 0
      %472 = vmatpush1.bf16.msra.mxu0 0
      %473 = vmatprep.subr.bf16.mxu0 0
      %474 = vmatpush1.bf16.msra.mxu0 %v446
      %475 = vmatprep.subr.bf16.mxu0 0
      %476 = vmatpush1.bf16.msra.mxu0 %v445
      %477 = vmatprep.subr.bf16.mxu0 0
      %478 = vmatpush2.bf16.msra.mxu0 0
      %479 = vmatprep.subr.bf16.mxu0 0
      %480 = vmatpush2.bf16.msra.mxu0 0
      %481 = vmatprep.subr.bf16.mxu0 0
      %482 = vmatpush2.bf16.msra.mxu0 0
      %483 = vmatprep.subr.bf16.mxu0 0
      %484 = vmatpush2.bf16.msra.mxu0 0
      %485 = vmatprep.subr.bf16.mxu0 0
      %486 = vmatpush2.bf16.msra.mxu0 0
      %487 = vmatprep.subr.bf16.mxu0 0
      %488 = vmatpush2.bf16.msra.mxu0 0
      %489 = vmatprep.subr.bf16.mxu0 0
      %490 = vmatpush2.bf16.msra.mxu0 0
      %491 = vmatprep.subr.bf16.mxu0 0
      %492 = vmatpush2.bf16.msra.mxu0 0
      %493 = vmatprep.mubr.bf16.mxu0 0
      %494 = vmatmul.mubr.bf16.gmra.mxu0 %v450
      %v495 = vpop.f32.mrf.mxu0
      %v496 = vadd.f32 %v391, %v495
      %v497 = vpop.f32.mrf.mxu0
      %v498 = vpop.f32.mrf.mxu0
      %v499 = vpop.f32.mrf.mxu0
      %500 = vmatprep.mubr.bf16.mxu0 0
      %501 = vmatmul.mubr.bf16.gmra.mxu0 %v453
      %v502 = vpop.f32.mrf.mxu0
      %v503 = vadd.f32 %v398, %v502
      %v504 = vpop.f32.mrf.mxu0
      %v505 = vpop.f32.mrf.mxu0
      %v506 = vpop.f32.mrf.mxu0
      %507 = vmatprep.mubr.bf16.mxu0 0
      %508 = vmatmul.mubr.bf16.gmra.mxu0 %v456
      %v509 = vpop.f32.mrf.mxu0
      %v510 = vadd.f32 %v405, %v509
      %v511 = vpop.f32.mrf.mxu0
      %v512 = vpop.f32.mrf.mxu0
      %v513 = vpop.f32.mrf.mxu0
      %514 = vmatprep.mubr.bf16.mxu0 0
      %515 = vmatmul.mubr.bf16.gmra.mxu0 %v459
      %v516 = vpop.f32.mrf.mxu0
      %v517 = vadd.f32 %v412, %v516
      %v518 = vpop.f32.mrf.mxu0
      %v519 = vpop.f32.mrf.mxu0
      %v520 = vpop.f32.mrf.mxu0
      %521 = vdwg.mxu0
      %s522 = sadd.s32 %s195, 1
      %s523 = smul.u32 %s522, 3
      %s524 = smul.addr %s523, 4
      %s525 = scalar_lea.vmem %s183, %s524
      %v526 = vld [vmem:[%s525] sm:$0xf]
      %v527 = vld [vmem:[%s525 + $0x4] sm:$0xf]
      %v528 = vld [vmem:[%s525 + $0xc] sm:$0xf]
      %v529 = vld [vmem:[%s525 + $0x10] sm:$0xf]
      %v530 = vld [vmem:[%s525 + $0x18] sm:$0xf]
      %v531 = vld [vmem:[%s525 + $0x1c] sm:$0xf]
      %v532 = vld [vmem:[%s525 + $0x24] sm:$0xf]
      %v533 = vld [vmem:[%s525 + $0x28] sm:$0xf]
      %s534 = scalar_lea.vmem %s1, 32
      %v535 = vld [vmem:[%s534] sm:$0xf]
      %v536 = vld [vmem:[%s534 + $0x4] sm:$0xf]
      %v537 = vld [vmem:[%s534 + $0x8] sm:$0xf]
      %v538 = vld [vmem:[%s534 + $0xc] sm:$0xf]
      %v547 = vunpack.c.l.b16 %v526
      %v548 = vunpack.c.l.b16 %v527
      %v549 = vunpack.c.l.b16 %v528
      %v550 = vunpack.c.l.b16 %v529
      %v551 = vunpack.c.l.b16 %v530
      %v552 = vunpack.c.l.b16 %v531
      %v553 = vunpack.c.l.b16 %v532
      %v554 = vunpack.c.l.b16 %v533
      %v555 = vpack.c.b16 %v548, %v547
      %v556 = vpack.c.b16 %v550, %v549
      %v557 = vpack.c.b16 %v552, %v551
      %v558 = vpack.c.b16 %v554, %v553
      %v563 = vunpack.c.l.b16 %v535
      %v564 = vunpack.c.l.b16 %v536
      %v565 = vunpack.c.l.b16 %v537
      %v566 = vunpack.c.l.b16 %v538
      %v567 = vpack.c.b16 %v564, %v563
      %v568 = vpack.c.b16 %v566, %v565
      %v572 = vsel %vm343, %v555, 0
      %v575 = vsel %vm343, %v556, 0
      %v578 = vsel %vm343, %v557, 0
      %v581 = vsel %vm343, %v558, 0
      %583 = vmatprep.subr.bf16.mxu0 0
      %584 = vmatpush1.bf16.msra.mxu0 0
      %585 = vmatprep.subr.bf16.mxu0 0
      %586 = vmatpush1.bf16.msra.mxu0 0
      %587 = vmatprep.subr.bf16.mxu0 0
      %588 = vmatpush1.bf16.msra.mxu0 0
      %589 = vmatprep.subr.bf16.mxu0 0
      %590 = vmatpush1.bf16.msra.mxu0 0
      %591 = vmatprep.subr.bf16.mxu0 0
      %592 = vmatpush1.bf16.msra.mxu0 0
      %593 = vmatprep.subr.bf16.mxu0 0
      %594 = vmatpush1.bf16.msra.mxu0 0
      %595 = vmatprep.subr.bf16.mxu0 0
      %596 = vmatpush1.bf16.msra.mxu0 %v568
      %597 = vmatprep.subr.bf16.mxu0 0
      %598 = vmatpush1.bf16.msra.mxu0 %v567
      %599 = vmatprep.subr.bf16.mxu0 0
      %600 = vmatpush2.bf16.msra.mxu0 0
      %601 = vmatprep.subr.bf16.mxu0 0
      %602 = vmatpush2.bf16.msra.mxu0 0
      %603 = vmatprep.subr.bf16.mxu0 0
      %604 = vmatpush2.bf16.msra.mxu0 0
      %605 = vmatprep.subr.bf16.mxu0 0
      %606 = vmatpush2.bf16.msra.mxu0 0
      %607 = vmatprep.subr.bf16.mxu0 0
      %608 = vmatpush2.bf16.msra.mxu0 0
      %609 = vmatprep.subr.bf16.mxu0 0
      %610 = vmatpush2.bf16.msra.mxu0 0
      %611 = vmatprep.subr.bf16.mxu0 0
      %612 = vmatpush2.bf16.msra.mxu0 0
      %613 = vmatprep.subr.bf16.mxu0 0
      %614 = vmatpush2.bf16.msra.mxu0 0
      %615 = vmatprep.mubr.bf16.mxu0 0
      %616 = vmatmul.mubr.bf16.gmra.mxu0 %v572
      %v617 = vpop.f32.mrf.mxu0
      %v618 = vadd.f32 0.0, %v617
      %v619 = vpop.f32.mrf.mxu0
      %v620 = vpop.f32.mrf.mxu0
      %v621 = vpop.f32.mrf.mxu0
      %622 = vmatprep.mubr.bf16.mxu0 0
      %623 = vmatmul.mubr.bf16.gmra.mxu0 %v575
      %v624 = vpop.f32.mrf.mxu0
      %v625 = vadd.f32 0.0, %v624
      %v626 = vpop.f32.mrf.mxu0
      %v627 = vpop.f32.mrf.mxu0
      %v628 = vpop.f32.mrf.mxu0
      %629 = vmatprep.mubr.bf16.mxu0 0
      %630 = vmatmul.mubr.bf16.gmra.mxu0 %v578
      %v631 = vpop.f32.mrf.mxu0
      %v632 = vadd.f32 0.0, %v631
      %v633 = vpop.f32.mrf.mxu0
      %v634 = vpop.f32.mrf.mxu0
      %v635 = vpop.f32.mrf.mxu0
      %636 = vmatprep.mubr.bf16.mxu0 0
      %637 = vmatmul.mubr.bf16.gmra.mxu0 %v581
      %v638 = vpop.f32.mrf.mxu0
      %v639 = vadd.f32 0.0, %v638
      %v640 = vpop.f32.mrf.mxu0
      %v641 = vpop.f32.mrf.mxu0
      %v642 = vpop.f32.mrf.mxu0
      %643 = vdwg.mxu0
      %v644 = vadd.f32 %v496, %v618
      %v645 = vadd.f32 %v503, %v625
      %v646 = vadd.f32 %v510, %v632
      %v647 = vadd.f32 %v517, %v639
      %v648 = vld [vmem:[%s525] sm:$0xf]
      %v649 = vld [vmem:[%s525 + $0x4] sm:$0xf]
      %v650 = vld [vmem:[%s525 + $0x8] sm:$0x1]
      %v651 = vld [vmem:[%s525 + $0xc] sm:$0xf]
      %v652 = vld [vmem:[%s525 + $0x10] sm:$0xf]
      %v653 = vld [vmem:[%s525 + $0x14] sm:$0x1]
      %v654 = vld [vmem:[%s525 + $0x18] sm:$0xf]
      %v655 = vld [vmem:[%s525 + $0x1c] sm:$0xf]
      %v656 = vld [vmem:[%s525 + $0x20] sm:$0x1]
      %v657 = vld [vmem:[%s525 + $0x24] sm:$0xf]
      %v658 = vld [vmem:[%s525 + $0x28] sm:$0xf]
      %v659 = vld [vmem:[%s525 + $0x2c] sm:$0x1]
      %v661 = vshrl.u32 %v648, 16
      %v663 = vrot.slane %v661, 4
      %v664 = vshll.u32 %v648, 16
      %v666 = vrot.slane %v664, 5
      %v667 = vor.u32 %v663, %v666
      %v668 = vrot.slane %v667, 4
      %v670 = vshll.u32 %v649, 16
      %v672 = vrot.slane %v670, 5
      %v673 = vsel %vm217, %v668, %v672
      %v674 = vshrl.u32 %v649, 16
      %v676 = vrot.slane %v674, 4
      %v677 = vor.u32 %v676, %v672
      %v678 = vrot.slane %v677, 4
      %v680 = vshll.u32 %v650, 16
      %v682 = vrot.slane %v680, 5
      %v683 = vsel %vm217, %v678, %v682
      %v685 = vshrl.u32 %v651, 16
      %v687 = vrot.slane %v685, 4
      %v688 = vshll.u32 %v651, 16
      %v690 = vrot.slane %v688, 5
      %v691 = vor.u32 %v687, %v690
      %v692 = vrot.slane %v691, 4
      %v694 = vshll.u32 %v652, 16
      %v696 = vrot.slane %v694, 5
      %v697 = vsel %vm217, %v692, %v696
      %v698 = vshrl.u32 %v652, 16
      %v700 = vrot.slane %v698, 4
      %v701 = vor.u32 %v700, %v696
      %v702 = vrot.slane %v701, 4
      %v704 = vshll.u32 %v653, 16
      %v706 = vrot.slane %v704, 5
      %v707 = vsel %vm217, %v702, %v706
      %v709 = vshrl.u32 %v654, 16
      %v711 = vrot.slane %v709, 4
      %v712 = vshll.u32 %v654, 16
      %v714 = vrot.slane %v712, 5
      %v715 = vor.u32 %v711, %v714
      %v716 = vrot.slane %v715, 4
      %v718 = vshll.u32 %v655, 16
      %v720 = vrot.slane %v718, 5
      %v721 = vsel %vm217, %v716, %v720
      %v722 = vshrl.u32 %v655, 16
      %v724 = vrot.slane %v722, 4
      %v725 = vor.u32 %v724, %v720
      %v726 = vrot.slane %v725, 4
      %v728 = vshll.u32 %v656, 16
      %v730 = vrot.slane %v728, 5
      %v731 = vsel %vm217, %v726, %v730
      %v733 = vshrl.u32 %v657, 16
      %v735 = vrot.slane %v733, 4
      %v736 = vshll.u32 %v657, 16
      %v738 = vrot.slane %v736, 5
      %v739 = vor.u32 %v735, %v738
      %v740 = vrot.slane %v739, 4
      %v742 = vshll.u32 %v658, 16
      %v744 = vrot.slane %v742, 5
      %v745 = vsel %vm217, %v740, %v744
      %v746 = vshrl.u32 %v658, 16
      %v748 = vrot.slane %v746, 4
      %v749 = vor.u32 %v748, %v744
      %v750 = vrot.slane %v749, 4
      %v752 = vshll.u32 %v659, 16
      %v754 = vrot.slane %v752, 5
      %v755 = vsel %vm217, %v750, %v754
      %s756 = scalar_lea.vmem %s1, 48
      %v757 = vld [vmem:[%s756] sm:$0xf]
      %v758 = vld [vmem:[%s756 + $0x4] sm:$0xf]
      %v759 = vld [vmem:[%s756 + $0x8] sm:$0xf]
      %v760 = vld [vmem:[%s756 + $0xc] sm:$0xf]
      %v761 = vunpack.c.l.b16 %v673
      %v762 = vunpack.c.l.b16 %v683
      %v763 = vunpack.c.l.b16 %v697
      %v764 = vunpack.c.l.b16 %v707
      %v765 = vunpack.c.l.b16 %v721
      %v766 = vunpack.c.l.b16 %v731
      %v767 = vunpack.c.l.b16 %v745
      %v768 = vunpack.c.l.b16 %v755
      %v769 = vpack.c.b16 %v762, %v761
      %v770 = vpack.c.b16 %v764, %v763
      %v771 = vpack.c.b16 %v766, %v765
      %v772 = vpack.c.b16 %v768, %v767
      %v777 = vunpack.c.l.b16 %v757
      %v778 = vunpack.c.l.b16 %v758
      %v779 = vunpack.c.l.b16 %v759
      %v780 = vunpack.c.l.b16 %v760
      %v781 = vpack.c.b16 %v778, %v777
      %v782 = vpack.c.b16 %v780, %v779
      %v786 = vsel %vm343, %v769, 0
      %v789 = vsel %vm343, %v770, 0
      %v792 = vsel %vm343, %v771, 0
      %v795 = vsel %vm343, %v772, 0
      %797 = vmatprep.subr.bf16.mxu0 0
      %798 = vmatpush1.bf16.msra.mxu0 0
      %799 = vmatprep.subr.bf16.mxu0 0
      %800 = vmatpush1.bf16.msra.mxu0 0
      %801 = vmatprep.subr.bf16.mxu0 0
      %802 = vmatpush1.bf16.msra.mxu0 0
      %803 = vmatprep.subr.bf16.mxu0 0
      %804 = vmatpush1.bf16.msra.mxu0 0
      %805 = vmatprep.subr.bf16.mxu0 0
      %806 = vmatpush1.bf16.msra.mxu0 0
      %807 = vmatprep.subr.bf16.mxu0 0
      %808 = vmatpush1.bf16.msra.mxu0 0
      %809 = vmatprep.subr.bf16.mxu0 0
      %810 = vmatpush1.bf16.msra.mxu0 %v782
      %811 = vmatprep.subr.bf16.mxu0 0
      %812 = vmatpush1.bf16.msra.mxu0 %v781
      %813 = vmatprep.subr.bf16.mxu0 0
      %814 = vmatpush2.bf16.msra.mxu0 0
      %815 = vmatprep.subr.bf16.mxu0 0
      %816 = vmatpush2.bf16.msra.mxu0 0
      %817 = vmatprep.subr.bf16.mxu0 0
      %818 = vmatpush2.bf16.msra.mxu0 0
      %819 = vmatprep.subr.bf16.mxu0 0
      %820 = vmatpush2.bf16.msra.mxu0 0
      %821 = vmatprep.subr.bf16.mxu0 0
      %822 = vmatpush2.bf16.msra.mxu0 0
      %823 = vmatprep.subr.bf16.mxu0 0
      %824 = vmatpush2.bf16.msra.mxu0 0
      %825 = vmatprep.subr.bf16.mxu0 0
      %826 = vmatpush2.bf16.msra.mxu0 0
      %827 = vmatprep.subr.bf16.mxu0 0
      %828 = vmatpush2.bf16.msra.mxu0 0
      %829 = vmatprep.mubr.bf16.mxu0 0
      %830 = vmatmul.mubr.bf16.gmra.mxu0 %v786
      %v831 = vpop.f32.mrf.mxu0
      %v832 = vadd.f32 0.0, %v831
      %v833 = vpop.f32.mrf.mxu0
      %v834 = vpop.f32.mrf.mxu0
      %v835 = vpop.f32.mrf.mxu0
      %836 = vmatprep.mubr.bf16.mxu0 0
      %837 = vmatmul.mubr.bf16.gmra.mxu0 %v789
      %v838 = vpop.f32.mrf.mxu0
      %v839 = vadd.f32 0.0, %v838
      %v840 = vpop.f32.mrf.mxu0
      %v841 = vpop.f32.mrf.mxu0
      %v842 = vpop.f32.mrf.mxu0
      %843 = vmatprep.mubr.bf16.mxu0 0
      %844 = vmatmul.mubr.bf16.gmra.mxu0 %v792
      %v845 = vpop.f32.mrf.mxu0
      %v846 = vadd.f32 0.0, %v845
      %v847 = vpop.f32.mrf.mxu0
      %v848 = vpop.f32.mrf.mxu0
      %v849 = vpop.f32.mrf.mxu0
      %850 = vmatprep.mubr.bf16.mxu0 0
      %851 = vmatmul.mubr.bf16.gmra.mxu0 %v795
      %v852 = vpop.f32.mrf.mxu0
      %v853 = vadd.f32 0.0, %v852
      %v854 = vpop.f32.mrf.mxu0
      %v855 = vpop.f32.mrf.mxu0
      %v856 = vpop.f32.mrf.mxu0
      %857 = vdwg.mxu0
      %v858 = vadd.f32 %v644, %v832
      %v859 = vadd.f32 %v645, %v839
      %v860 = vadd.f32 %v646, %v846
      %v861 = vadd.f32 %v647, %v853
      %v862 = vld [vmem:[%s2] sm:$0x1]
      %v864 = vlaneseq
      %v865 = vshrl.u32 %v864, 7
      %v866 = vsub.s32 0, %v865
      %v867 = vrot.slane %v862, %v866
      %v869 = vadd.f32 %v858, %v867
      %v870 = vadd.f32 %v859, %v867
      %v871 = vadd.f32 %v860, %v867
      %v872 = vadd.f32 %v861, %v867
      %vm873 = vcmp.ge.f32.partialorder %v869, 0.0
      %vm874 = vcmp.ge.f32.partialorder %v870, 0.0
      %vm875 = vcmp.ge.f32.partialorder %v871, 0.0
      %vm876 = vcmp.ge.f32.partialorder %v872, 0.0
      %v877 = vmul.f32 %v869, 0.2
      %v878 = vmul.f32 %v870, 0.2
      %v879 = vmul.f32 %v871, 0.2
      %v880 = vmul.f32 %v872, 0.2
      %v881 = vsel %vm873, %v869, %v877
      %v882 = vsel %vm874, %v870, %v878
      %v883 = vsel %vm875, %v871, %v879
      %v884 = vsel %vm876, %v872, %v880
      %v885 = vpack.c.bf16 %v881, %v881
      %v886 = vpack.c.bf16 %v882, %v882
      %v887 = vpack.c.bf16 %v883, %v883
      %v888 = vpack.c.bf16 %v884, %v884
      %vm889 = vcmask 123904
      %890 = vst.msk [vmem:[%s192] sm:$0x3] %vm889, %v885
      %891 = vst.msk [vmem:[%s192 + $0x2] sm:$0x3] %vm889, %v886
      %892 = vst.msk [vmem:[%s192 + $0x4] sm:$0x3] %vm889, %v887
      %893 = vst.msk [vmem:[%s192 + $0x6] sm:$0x3] %vm889, %v888
      %s894 = smul.u32 4, %s19
      %p895 = scmp.lt.s32.totalorder %s18, 1
      %s896 = scalar_select %p895, %s18, 1
      %p897 = scmp.lt.s32.totalorder %s894, 3
      %s898 = scalar_select %p897, %s894, 3
      %s899 = smul.addr %s896, 4
      %s900 = sadd.s32 %s898, %s899
      %s901 = smul.addr %s900, 2
      %s902 = scalar_lea.vmem %s3, %s901
      // Predicated region
      $region33: #{forward.7} parent=31 // pred_check
        %p903 = pneg %p114
      $region34: #{forward.7} parent=31 // pred_check_branch
        %905 = sbr.rel (%p903) target = $region36
      $region35: #{forward.7} parent=31 // pred_region
        %s906 = smul.u32 4, %s19
      $region36: #{forward.7} parent=31 // pred_fallthru
        _
    $region32: #{forward.7} parent=5 // pred_fallthru
      _
    %p907 = scmp.le.s32.totalorder 2, %s9
    // Predicated region
    $region37: #{forward.7} parent=5 // pred_check
      %p908 = pneg %p907
    $region38: #{forward.7} parent=5 // pred_check_branch
      %910 = sbr.rel (%p908) target = $region40
    $region39: #{forward.7} parent=5 // pred_region
      %s911 = ssub.s32 %s9, 2
      // Predicated region
      $region41: #{forward.7} parent=39 // pred_check
        %p912 = pneg %p120
      $region42: #{forward.7} parent=39 // pred_check_branch
        %914 = sbr.rel (%p912) target = $region44
      $region43: #{forward.7} parent=39 // pred_region
        %s915 = smul.u32 4, %s21
        %p916 = scmp.lt.s32.totalorder %s20, 1
        %s917 = scalar_select %p916, %s20, 1
        %p918 = scmp.lt.s32.totalorder %s915, 3
        %s919 = scalar_select %p918, %s915, 3
        %s920 = smul.addr %s917, 4
        %s921 = sadd.s32 %s919, %s920
        %s922 = smul.addr %s921, 2
        %s923 = scalar_lea.vmem %s3, %s922
      $region44: #{forward.7} parent=39 // pred_fallthru
        _
    $region40: #{forward.7} parent=5 // pred_fallthru
      _
  $region6: #{forward.7} parent=0 // loop_footer
    %s13 = sadd.s32 1, %s9
  $region7: #{forward.7} parent=0 // loop_footer_branch
    %8 = sbr.rel target = $region3
  $region8: #{forward.7} parent=0 // loop_exit
    _

// kernel: forward.9
$region0: #{forward.9}
  #allocation0 [shape = 'u32[]', space=smem, size = 0x4, offset = 0x4, fixed_abs, tag = 'smem constant byte address 0x4 - core index']
  #allocation1 [shape = 'u32[144,128]{1,0:T(1,128)}', space=vmem, size = 0x12000, scoped, tag = 'internal scratch']
  %s0 = inlined_call_operand.vmem [shape: bf16[2,6,18,8], index: 0, kind: input, shape index: {}]
  %s1 = inlined_call_operand.vmem [shape: bf16[9,8,32], index: 1, kind: input, shape index: {}]
  %s2 = inlined_call_operand.vmem [shape: f32[1,32], index: 2, kind: input, shape index: {}]
  %s3 = inlined_call_operand.vmem [shape: bf16[2,4,4,32], index: 3, kind: output, shape index: {}]
  %s4 = sld [smem:[#allocation0]]
  $region45: #{forward.9} parent=0
    _
  %s6 = ssub.s32 1, %s4
  %s7 = scalar_select 0, %s6, %s4
  loop: start=0, step=1, limit=4
  $region2: #{forward.9} parent=0 // loop_pre_header
    _
  $region3: #{forward.9} parent=0 // loop_header
    %s9 = sphi 0, %s13
    %p10 = scmp.ge.s32.totalorder %s9, 4
    %s16 = sphi 0, %s28
    %s17 = sphi 0, %s24
    %s18 = sphi 0, %s16
    %s19 = sphi 0, %s17
    %s20 = sphi 0, %s18
    %s21 = sphi 0, %s19
    %s31 = sphi 0, %s33
    %s34 = sphi 0, %s31
    %s35 = sphi 0, %s34
    %s51 = sphi 0, %s35
    %s55 = sphi 0, %s55
    %s57 = sphi 0, %s55
    %s58 = sphi 0, %s57
    %s72 = sphi 0, %s58
    %s76 = sphi 0, %s76
    %s78 = sphi 0, %s76
    %s79 = sphi 0, %s78
    %s93 = sphi 0, %s79
    %s101 = sphi 0, %s103
    %s104 = sphi 0, %s101
    %s105 = sphi 0, %s104
    %s121 = sphi 0, %s105
  $region4: #{forward.9} parent=0 // loop_header_branch
    %12 = sbr.rel (%p10) target = $region8
  $region5: #{forward.9} parent=0 // loop_body
    %s14 = ssub.s32 %s9, 1
    %s15 = ssub.s32 %s9, 2
    %s22 = sadd.s32 1, %s17
    %p23 = scmp.ge.s32.totalorder %s22, 1
    %s24 = scalar_select %p23, 0, %s22
    %s25 = sadd.s32 1, %s16
    %s26 = scalar_select %p23, %s25, %s16
    %p27 = scmp.ge.s32.totalorder %s26, 2
    %s28 = scalar_select %p27, 0, %s26
    %s29 = ssub.s32 %s16, %s28
    %p30 = scmp.eq.s32.totalorder %s29, 0
    %s32 = sadd.s32 %s31, 1
    %s33 = scalar_select %p30, %s31, %s32
    %p36 = pneg %p30
    %p37 = scmp.eq.s32.totalorder %s9, 1
    %p38 = por %p36, %p37
    %p39 = scmp.ne.s32.totalorder %s31, %s34
    %p40 = scmp.eq.s32.totalorder %s9, 0
    %p41 = por %p39, %p40
    %p42 = scmp.ne.s32.totalorder %s31, %s34
    %p43 = scmp.eq.s32.totalorder %s14, 1
    %p44 = por %p42, %p43
    %p45 = scmp.ne.s32.totalorder %s34, %s35
    %p46 = scmp.eq.s32.totalorder %s14, 0
    %p47 = por %p45, %p46
    %p48 = scmp.ne.s32.totalorder %s34, %s35
    %p49 = scmp.eq.s32.totalorder %s15, 1
    %p50 = por %p48, %p49
    %p52 = scmp.ne.s32.totalorder %s35, %s51
    %p53 = scmp.eq.s32.totalorder %s15, 0
    %p54 = por %p52, %p53
    %s56 = sadd.s32 %s55, 1
    %p59 = scmp.eq.s32.totalorder %s9, 1
    %p60 = scmp.ne.s32.totalorder %s55, %s57
    %p61 = scmp.eq.s32.totalorder %s9, 0
    %p62 = por %p60, %p61
    %p63 = scmp.ne.s32.totalorder %s55, %s57
    %p64 = scmp.eq.s32.totalorder %s14, 1
    %p65 = por %p63, %p64
    %p66 = scmp.ne.s32.totalorder %s57, %s58
    %p67 = scmp.eq.s32.totalorder %s14, 0
    %p68 = por %p66, %p67
    %p69 = scmp.ne.s32.totalorder %s57, %s58
    %p70 = scmp.eq.s32.totalorder %s15, 1
    %p71 = por %p69, %p70
    %p73 = scmp.ne.s32.totalorder %s58, %s72
    %p74 = scmp.eq.s32.totalorder %s15, 0
    %p75 = por %p73, %p74
    %s77 = sadd.s32 %s76, 1
    %p80 = scmp.eq.s32.totalorder %s9, 1
    %p81 = scmp.ne.s32.totalorder %s76, %s78
    %p82 = scmp.eq.s32.totalorder %s9, 0
    %p83 = por %p81, %p82
    %p84 = scmp.ne.s32.totalorder %s76, %s78
    %p85 = scmp.eq.s32.totalorder %s14, 1
    %p86 = por %p84, %p85
    %p87 = scmp.ne.s32.totalorder %s78, %s79
    %p88 = scmp.eq.s32.totalorder %s14, 0
    %p89 = por %p87, %p88
    %p90 = scmp.ne.s32.totalorder %s78, %s79
    %p91 = scmp.eq.s32.totalorder %s15, 1
    %p92 = por %p90, %p91
    %p94 = scmp.ne.s32.totalorder %s79, %s93
    %p95 = scmp.eq.s32.totalorder %s15, 0
    %p96 = por %p94, %p95
    %s97 = ssub.s32 %s16, %s28
    %s98 = ssub.s32 %s17, %s24
    %s99 = sor.u32 %s97, %s98
    %p100 = scmp.eq.s32.totalorder %s99, 0
    %s102 = sadd.s32 %s101, 1
    %s103 = scalar_select %p100, %s101, %s102
    %p106 = pneg %p100
    %p107 = scmp.eq.s32.totalorder %s9, 1
    %p108 = por %p106, %p107
    %p109 = scmp.ne.s32.totalorder %s101, %s104
    %p110 = scmp.eq.s32.totalorder %s9, 0
    %p111 = por %p109, %p110
    %p112 = scmp.ne.s32.totalorder %s101, %s104
    %p113 = scmp.eq.s32.totalorder %s14, 1
    %p114 = por %p112, %p113
    %p115 = scmp.ne.s32.totalorder %s104, %s105
    %p116 = scmp.eq.s32.totalorder %s14, 0
    %p117 = por %p115, %p116
    %p118 = scmp.ne.s32.totalorder %s104, %s105
    %p119 = scmp.eq.s32.totalorder %s15, 1
    %p120 = por %p118, %p119
    %p122 = scmp.ne.s32.totalorder %s105, %s121
    %p123 = scmp.eq.s32.totalorder %s15, 0
    %p124 = por %p122, %p123
    %p125 = scmp.le.s32.totalorder 1, %s9
    %p126 = scmp.lt.s32.totalorder %s9, 3
    %p127 = pnand %p125, %p126
    %p128 = pneg %p127
    // Predicated region
    $region9: #{forward.9} parent=5 // pred_check
      _
    $region10: #{forward.9} parent=5 // pred_check_branch
      %130 = sbr.rel (%p127) target = $region12
    $region11: #{forward.9} parent=5 // pred_region
      %s131 = ssub.s32 %s9, 1
      // Predicated region
      $region13: #{forward.9} parent=11 // pred_check
        %p132 = pneg %p68
      $region14: #{forward.9} parent=11 // pred_check_branch
        %134 = sbr.rel (%p132) target = $region16
      $region15: #{forward.9} parent=11 // pred_region
        _
      $region16: #{forward.9} parent=11 // pred_fallthru
        _
      // Predicated region
      $region17: #{forward.9} parent=11 // pred_check
        %p135 = pneg %p89
      $region18: #{forward.9} parent=11 // pred_check_branch
        %137 = sbr.rel (%p135) target = $region20
      $region19: #{forward.9} parent=11 // pred_region
        _
      $region20: #{forward.9} parent=11 // pred_fallthru
        _
    $region12: #{forward.9} parent=5 // pred_fallthru
      _
    %p138 = scmp.lt.s32.totalorder %s9, 2
    // Predicated region
    $region21: #{forward.9} parent=5 // pred_check
      %p139 = pneg %p138
    $region22: #{forward.9} parent=5 // pred_check_branch
      %141 = sbr.rel (%p139) target = $region24
    $region23: #{forward.9} parent=5 // pred_region
      // Predicated region
      $region25: #{forward.9} parent=23 // pred_check
        %p142 = pneg %p41
      $region26: #{forward.9} parent=23 // pred_check_branch
        %144 = sbr.rel (%p142) target = $region28
      $region27: #{forward.9} parent=23 // pred_region
        %p145 = scmp.lt.s32.totalorder %s16, 1
        %s146 = scalar_select %p145, %s16, 1
        %s147 = smul.addr %s146, 18
        %s148 = smul.addr %s147, 4
        %s149 = scalar_lea.vmem %s0, %s148
      $region28: #{forward.9} parent=23 // pred_fallthru
        _
    $region24: #{forward.9} parent=5 // pred_fallthru
      _
    %p150 = scmp.le.s32.totalorder 1, %s9
    %p151 = scmp.lt.s32.totalorder %s9, 3
    %p152 = pnand %p150, %p151
    %p153 = pneg %p152
    // Predicated region
    $region29: #{forward.9} parent=5 // pred_check
      _
    $region30: #{forward.9} parent=5 // pred_check_branch
      %155 = sbr.rel (%p152) target = $region32
    $region31: #{forward.9} parent=5 // pred_region
      %s156 = ssub.s32 %s9, 1
      %p157 = scmp.lt.s32.totalorder %s18, 1
      %s158 = scalar_select %p157, %s18, 1
      %s159 = smul.addr %s158, 18
      %s160 = smul.addr %s159, 4
      %s161 = scalar_lea.vmem %s0, %s160
      %p162 = pneg %p47
      %p163 = pneg %p44
      %p164 = pneg %p68
      %p165 = pneg %p65
      %p166 = pneg %p89
      %p167 = pneg %p86
      %p168 = pneg %p117
      %p169 = pneg %p114
      %s170 = smul.u32 4, %s19
      %p171 = scmp.lt.s32.totalorder %s18, 1
      %s172 = scalar_select %p171, %s18, 1
      %p173 = scmp.lt.s32.totalorder %s170, 3
      %s174 = scalar_select %p173, %s170, 3
      %s175 = smul.addr %s172, 4
      %s176 = sadd.s32 %s174, %s175
      %s177 = smul.addr %s176, 2
      %s178 = scalar_lea.vmem %s3, %s177
      %p179 = scmp.lt.s32.totalorder %s18, 1
      %s180 = scalar_select %p179, %s18, 1
      %s181 = smul.addr %s180, 18
      %s182 = smul.addr %s181, 4
      %s183 = scalar_lea.vmem %s0, %s182
      %s184 = smul.u32 4, %s19
      %p185 = scmp.lt.s32.totalorder %s18, 1
      %s186 = scalar_select %p185, %s18, 1
      %p187 = scmp.lt.s32.totalorder %s184, 3
      %s188 = scalar_select %p187, %s184, 3
      %s189 = smul.addr %s186, 4
      %s190 = sadd.s32 %s188, %s189
      %s191 = smul.addr %s190, 2
      %s192 = scalar_lea.vmem %s3, %s191
      %s193 = smul.u32 4, %s19
      %s195 = smul.u32 %s19, 4
      %s196 = smul.u32 %s195, 3
      %s197 = smul.addr %s196, 4
      %s198 = scalar_lea.vmem %s183, %s197
      %v199 = vld [vmem:[%s198] sm:$0xf]
      %v200 = vld [vmem:[%s198 + $0x4] sm:$0xf]
      %v201 = vld [vmem:[%s198 + $0xc] sm:$0xf]
      %v202 = vld [vmem:[%s198 + $0x10] sm:$0xf]
      %v203 = vld [vmem:[%s198 + $0x18] sm:$0xf]
      %v204 = vld [vmem:[%s198 + $0x1c] sm:$0xf]
      %v205 = vld [vmem:[%s198 + $0x24] sm:$0xf]
      %v206 = vld [vmem:[%s198 + $0x28] sm:$0xf]
      %v207 = vld [vmem:[%s1] sm:$0xf]
      %v208 = vld [vmem:[%s198 + $0x8] sm:$0x1]
      %v209 = vld [vmem:[%s198 + $0x14] sm:$0x1]
      %v210 = vld [vmem:[%s198 + $0x20] sm:$0x1]
      %v211 = vld [vmem:[%s198 + $0x2c] sm:$0x1]
      %vm212 = vsmask.f32 3328
      %vm213 = vsmask.f32 7440
      %vm214 = vmor %vm212, %vm213
      %v216 = vshrl.u32 %v199, 16
      %v218 = vrot.slane %v216, 4
      %v219 = vshll.u32 %v199, 16
      %v221 = vrot.slane %v219, 5
      %v222 = vor.u32 %v218, %v221
      %v223 = vrot.slane %v222, 4
      %v225 = vshll.u32 %v200, 16
      %v227 = vrot.slane %v225, 5
      %v228 = vsel %vm214, %v223, %v227
      %v229 = vshrl.u32 %v200, 16
      %v231 = vrot.slane %v229, 4
      %v232 = vor.u32 %v231, %v227
      %v233 = vrot.slane %v232, 4
      %v235 = vshll.u32 %v208, 16
      %v237 = vrot.slane %v235, 5
      %v238 = vsel %vm214, %v233, %v237
      %v240 = vshrl.u32 %v201, 16
      %v242 = vrot.slane %v240, 4
      %v243 = vshll.u32 %v201, 16
      %v245 = vrot.slane %v243, 5
      %v246 = vor.u32 %v242, %v245
      %v247 = vrot.slane %v246, 4
      %v249 = vshll.u32 %v202, 16
      %v251 = vrot.slane %v249, 5
      %v252 = vsel %vm214, %v247, %v251
      %v253 = vshrl.u32 %v202, 16
      %v255 = vrot.slane %v253, 4
      %v256 = vor.u32 %v255, %v251
      %v257 = vrot.slane %v256, 4
      %v259 = vshll.u32 %v209, 16
      %v261 = vrot.slane %v259, 5
      %v262 = vsel %vm214, %v257, %v261
      %v264 = vshrl.u32 %v203, 16
      %v266 = vrot.slane %v264, 4
      %v267 = vshll.u32 %v203, 16
      %v269 = vrot.slane %v267, 5
      %v270 = vor.u32 %v266, %v269
      %v271 = vrot.slane %v270, 4
      %v273 = vshll.u32 %v204, 16
      %v275 = vrot.slane %v273, 5
      %v276 = vsel %vm214, %v271, %v275
      %v277 = vshrl.u32 %v204, 16
      %v279 = vrot.slane %v277, 4
      %v280 = vor.u32 %v279, %v275
      %v281 = vrot.slane %v280, 4
      %v283 = vshll.u32 %v210, 16
      %v285 = vrot.slane %v283, 5
      %v286 = vsel %vm214, %v281, %v285
      %v288 = vshrl.u32 %v205, 16
      %v290 = vrot.slane %v288, 4
      %v291 = vshll.u32 %v205, 16
      %v293 = vrot.slane %v291, 5
      %v294 = vor.u32 %v290, %v293
      %v295 = vrot.slane %v294, 4
      %v297 = vshll.u32 %v206, 16
      %v299 = vrot.slane %v297, 5
      %v300 = vsel %vm214, %v295, %v299
      %v301 = vshrl.u32 %v206, 16
      %v303 = vrot.slane %v301, 4
      %v304 = vor.u32 %v303, %v299
      %v305 = vrot.slane %v304, 4
      %v307 = vshll.u32 %v211, 16
      %v309 = vrot.slane %v307, 5
      %v310 = vsel %vm214, %v305, %v309
      %s311 = scalar_lea.vmem %s1, 4
      %v312 = vld [vmem:[%s311] sm:$0xf]
      %v313 = vunpack.c.l.b16 %v228
      %v314 = vunpack.c.l.b16 %v238
      %v315 = vunpack.c.l.b16 %v252
      %v316 = vunpack.c.l.b16 %v262
      %v317 = vunpack.c.l.b16 %v276
      %v318 = vunpack.c.l.b16 %v286
      %v319 = vunpack.c.l.b16 %v300
      %v320 = vunpack.c.l.b16 %v310
      %v321 = vpack.c.b16 %v314, %v313
      %v322 = vpack.c.b16 %v316, %v315
      %v323 = vpack.c.b16 %v318, %v317
      %v324 = vpack.c.b16 %v320, %v319
      %vm325 = vcmask 64512
      %v327 = vsel %vm325, %v321, 0
      %v330 = vsel %vm325, %v322, 0
      %v333 = vsel %vm325, %v323, 0
      %v336 = vsel %vm325, %v324, 0
      %vm338 = vcmask 1043456
      %v340 = vsel %vm338, %v312, 0
      %342 = vmatprep.subr.bf16.mxu0 0
      %343 = vmatpush1.bf16.msra.mxu0 0
      %344 = vmatprep.subr.bf16.mxu0 0
      %345 = vmatpush1.bf16.msra.mxu0 0
      %346 = vmatprep.subr.bf16.mxu0 0
      %347 = vmatpush1.bf16.msra.mxu0 0
      %348 = vmatprep.subr.bf16.mxu0 0
      %349 = vmatpush1.bf16.msra.mxu0 0
      %350 = vmatprep.subr.bf16.mxu0 0
      %351 = vmatpush1.bf16.msra.mxu0 0
      %352 = vmatprep.subr.bf16.mxu0 0
      %353 = vmatpush1.bf16.msra.mxu0 0
      %354 = vmatprep.subr.bf16.mxu0 0
      %355 = vmatpush1.bf16.msra.mxu0 0
      %356 = vmatprep.subr.bf16.mxu0 0
      %357 = vmatpush1.bf16.msra.mxu0 %v340
      %358 = vmatprep.subr.bf16.mxu0 0
      %359 = vmatpush2.bf16.msra.mxu0 0
      %360 = vmatprep.subr.bf16.mxu0 0
      %361 = vmatpush2.bf16.msra.mxu0 0
      %362 = vmatprep.subr.bf16.mxu0 0
      %363 = vmatpush2.bf16.msra.mxu0 0
      %364 = vmatprep.subr.bf16.mxu0 0
      %365 = vmatpush2.bf16.msra.mxu0 0
      %366 = vmatprep.subr.bf16.mxu0 0
      %367 = vmatpush2.bf16.msra.mxu0 0
      %368 = vmatprep.subr.bf16.mxu0 0
      %369 = vmatpush2.bf16.msra.mxu0 0
      %370 = vmatprep.subr.bf16.mxu0 0
      %371 = vmatpush2.bf16.msra.mxu0 0
      %372 = vmatprep.subr.bf16.mxu0 0
      %373 = vmatpush2.bf16.msra.mxu0 0
      %374 = vmatprep.mubr.bf16.mxu0 0
      %375 = vmatmul.mubr.bf16.gmra.mxu0 %v327
      %v376 = vpop.f32.mrf.mxu0
      %v377 = vadd.f32 0.0, %v376
      %v378 = vpop.f32.mrf.mxu0
      %v379 = vpop.f32.mrf.mxu0
      %v380 = vpop.f32.mrf.mxu0
      %381 = vmatprep.mubr.bf16.mxu0 0
      %382 = vmatmul.mubr.bf16.gmra.mxu0 %v330
      %v383 = vpop.f32.mrf.mxu0
      %v384 = vadd.f32 0.0, %v383
      %v385 = vpop.f32.mrf.mxu0
      %v386 = vpop.f32.mrf.mxu0
      %v387 = vpop.f32.mrf.mxu0
      %388 = vmatprep.mubr.bf16.mxu0 0
      %389 = vmatmul.mubr.bf16.gmra.mxu0 %v333
      %v390 = vpop.f32.mrf.mxu0
      %v391 = vadd.f32 0.0, %v390
      %v392 = vpop.f32.mrf.mxu0
      %v393 = vpop.f32.mrf.mxu0
      %v394 = vpop.f32.mrf.mxu0
      %395 = vmatprep.mubr.bf16.mxu0 0
      %396 = vmatmul.mubr.bf16.gmra.mxu0 %v336
      %v397 = vpop.f32.mrf.mxu0
      %v398 = vadd.f32 0.0, %v397
      %v399 = vpop.f32.mrf.mxu0
      %v400 = vpop.f32.mrf.mxu0
      %v401 = vpop.f32.mrf.mxu0
      %402 = vdwg.mxu0
      %v411 = vunpack.c.l.b16 %v199
      %v412 = vunpack.c.l.b16 %v200
      %v413 = vunpack.c.l.b16 %v201
      %v414 = vunpack.c.l.b16 %v202
      %v415 = vunpack.c.l.b16 %v203
      %v416 = vunpack.c.l.b16 %v204
      %v417 = vunpack.c.l.b16 %v205
      %v418 = vunpack.c.l.b16 %v206
      %v419 = vpack.c.b16 %v412, %v411
      %v420 = vpack.c.b16 %v414, %v413
      %v421 = vpack.c.b16 %v416, %v415
      %v422 = vpack.c.b16 %v418, %v417
      %v424 = vsel %vm325, %v419, 0
      %v427 = vsel %vm325, %v420, 0
      %v430 = vsel %vm325, %v421, 0
      %v433 = vsel %vm325, %v422, 0
      %v436 = vsel %vm338, %v207, 0
      %438 = vmatprep.subr.bf16.mxu0 0
      %439 = vmatpush1.bf16.msra.mxu0 0
      %440 = vmatprep.subr.bf16.mxu0 0
      %441 = vmatpush1.bf16.msra.mxu0 0
      %442 = vmatprep.subr.bf16.mxu0 0
      %443 = vmatpush1.bf16.msra.mxu0 0
      %444 = vmatprep.subr.bf16.mxu0 0
      %445 = vmatpush1.bf16.msra.mxu0 0
      %446 = vmatprep.subr.bf16.mxu0 0
      %447 = vmatpush1.bf16.msra.mxu0 0
      %448 = vmatprep.subr.bf16.mxu0 0
      %449 = vmatpush1.bf16.msra.mxu0 0
      %450 = vmatprep.subr.bf16.mxu0 0
      %451 = vmatpush1.bf16.msra.mxu0 0
      %452 = vmatprep.subr.bf16.mxu0 0
      %453 = vmatpush1.bf16.msra.mxu0 %v436
      %454 = vmatprep.subr.bf16.mxu0 0
      %455 = vmatpush2.bf16.msra.mxu0 0
      %456 = vmatprep.subr.bf16.mxu0 0
      %457 = vmatpush2.bf16.msra.mxu0 0
      %458 = vmatprep.subr.bf16.mxu0 0
      %459 = vmatpush2.bf16.msra.mxu0 0
      %460 = vmatprep.subr.bf16.mxu0 0
      %461 = vmatpush2.bf16.msra.mxu0 0
      %462 = vmatprep.subr.bf16.mxu0 0
      %463 = vmatpush2.bf16.msra.mxu0 0
      %464 = vmatprep.subr.bf16.mxu0 0
      %465 = vmatpush2.bf16.msra.mxu0 0
      %466 = vmatprep.subr.bf16.mxu0 0
      %467 = vmatpush2.bf16.msra.mxu0 0
      %468 = vmatprep.subr.bf16.mxu0 0
      %469 = vmatpush2.bf16.msra.mxu0 0
      %470 = vmatprep.mubr.bf16.mxu0 0
      %471 = vmatmul.mubr.bf16.gmra.mxu0 %v424
      %v472 = vpop.f32.mrf.mxu0
      %v473 = vadd.f32 %v377, %v472
      %v474 = vpop.f32.mrf.mxu0
      %v475 = vpop.f32.mrf.mxu0
      %v476 = vpop.f32.mrf.mxu0
      %477 = vmatprep.mubr.bf16.mxu0 0
      %478 = vmatmul.mubr.bf16.gmra.mxu0 %v427
      %v479 = vpop.f32.mrf.mxu0
      %v480 = vadd.f32 %v384, %v479
      %v481 = vpop.f32.mrf.mxu0
      %v482 = vpop.f32.mrf.mxu0
      %v483 = vpop.f32.mrf.mxu0
      %484 = vmatprep.mubr.bf16.mxu0 0
      %485 = vmatmul.mubr.bf16.gmra.mxu0 %v430
      %v486 = vpop.f32.mrf.mxu0
      %v487 = vadd.f32 %v391, %v486
      %v488 = vpop.f32.mrf.mxu0
      %v489 = vpop.f32.mrf.mxu0
      %v490 = vpop.f32.mrf.mxu0
      %491 = vmatprep.mubr.bf16.mxu0 0
      %492 = vmatmul.mubr.bf16.gmra.mxu0 %v433
      %v493 = vpop.f32.mrf.mxu0
      %v494 = vadd.f32 %v398, %v493
      %v495 = vpop.f32.mrf.mxu0
      %v496 = vpop.f32.mrf.mxu0
      %v497 = vpop.f32.mrf.mxu0
      %498 = vdwg.mxu0
      %v499 = vld [vmem:[%s198] sm:$0xe]
      %v500 = vld [vmem:[%s198 + $0xc] sm:$0xe]
      %v501 = vld [vmem:[%s198 + $0x18] sm:$0xe]
      %v502 = vld [vmem:[%s198 + $0x24] sm:$0xe]
      %vm511 = vcmask 1042432
      %vm512 = vcmask 1046532
      %vm513 = vmor %vm511, %vm512
      %v514 = vrot.slane %v499, 5
      %v515 = vrot.slane %v514, 4
      %v516 = vrot.slane %v200, 5
      %v517 = vsel %vm513, %v515, %v516
      %v518 = vrot.slane %v516, 4
      %v519 = vrot.slane %v208, 5
      %v520 = vsel %vm513, %v518, %v519
      %v521 = vrot.slane %v500, 5
      %v522 = vrot.slane %v521, 4
      %v523 = vrot.slane %v202, 5
      %v524 = vsel %vm513, %v522, %v523
      %v525 = vrot.slane %v523, 4
      %v526 = vrot.slane %v209, 5
      %v527 = vsel %vm513, %v525, %v526
      %v528 = vrot.slane %v501, 5
      %v529 = vrot.slane %v528, 4
      %v530 = vrot.slane %v204, 5
      %v531 = vsel %vm513, %v529, %v530
      %v532 = vrot.slane %v530, 4
      %v533 = vrot.slane %v210, 5
      %v534 = vsel %vm513, %v532, %v533
      %v535 = vrot.slane %v502, 5
      %v536 = vrot.slane %v535, 4
      %v537 = vrot.slane %v206, 5
      %v538 = vsel %vm513, %v536, %v537
      %v539 = vrot.slane %v537, 4
      %v540 = vrot.slane %v211, 5
      %v541 = vsel %vm513, %v539, %v540
      %s542 = scalar_lea.vmem %s1, 8
      %v543 = vld [vmem:[%s542] sm:$0xf]
      %v544 = vunpack.c.l.b16 %v517
      %v545 = vunpack.c.l.b16 %v520
      %v546 = vunpack.c.l.b16 %v524
      %v547 = vunpack.c.l.b16 %v527
      %v548 = vunpack.c.l.b16 %v531
      %v549 = vunpack.c.l.b16 %v534
      %v550 = vunpack.c.l.b16 %v538
      %v551 = vunpack.c.l.b16 %v541
      %v552 = vpack.c.b16 %v545, %v544
      %v553 = vpack.c.b16 %v547, %v546
      %v554 = vpack.c.b16 %v549, %v548
      %v555 = vpack.c.b16 %v551, %v550
      %v557 = vsel %vm325, %v552, 0
      %v560 = vsel %vm325, %v553, 0
      %v563 = vsel %vm325, %v554, 0
      %v566 = vsel %vm325, %v555, 0
      %v569 = vsel %vm338, %v543, 0
      %571 = vmatprep.subr.bf16.mxu0 0
      %572 = vmatpush1.bf16.msra.mxu0 0
      %573 = vmatprep.subr.bf16.mxu0 0
      %574 = vmatpush1.bf16.msra.mxu0 0
      %575 = vmatprep.subr.bf16.mxu0 0
      %576 = vmatpush1.bf16.msra.mxu0 0
      %577 = vmatprep.subr.bf16.mxu0 0
      %578 = vmatpush1.bf16.msra.mxu0 0
      %579 = vmatprep.subr.bf16.mxu0 0
      %580 = vmatpush1.bf16.msra.mxu0 0
      %581 = vmatprep.subr.bf16.mxu0 0
      %582 = vmatpush1.bf16.msra.mxu0 0
      %583 = vmatprep.subr.bf16.mxu0 0
      %584 = vmatpush1.bf16.msra.mxu0 0
      %585 = vmatprep.subr.bf16.mxu0 0
      %586 = vmatpush1.bf16.msra.mxu0 %v569
      %587 = vmatprep.subr.bf16.mxu0 0
      %588 = vmatpush2.bf16.msra.mxu0 0
      %589 = vmatprep.subr.bf16.mxu0 0
      %590 = vmatpush2.bf16.msra.mxu0 0
      %591 = vmatprep.subr.bf16.mxu0 0
      %592 = vmatpush2.bf16.msra.mxu0 0
      %593 = vmatprep.subr.bf16.mxu0 0
      %594 = vmatpush2.bf16.msra.mxu0 0
      %595 = vmatprep.subr.bf16.mxu0 0
      %596 = vmatpush2.bf16.msra.mxu0 0
      %597 = vmatprep.subr.bf16.mxu0 0
      %598 = vmatpush2.bf16.msra.mxu0 0
      %599 = vmatprep.subr.bf16.mxu0 0
      %600 = vmatpush2.bf16.msra.mxu0 0
      %601 = vmatprep.subr.bf16.mxu0 0
      %602 = vmatpush2.bf16.msra.mxu0 0
      %603 = vmatprep.mubr.bf16.mxu0 0
      %604 = vmatmul.mubr.bf16.gmra.mxu0 %v557
      %v605 = vpop.f32.mrf.mxu0
      %v606 = vadd.f32 0.0, %v605
      %v607 = vpop.f32.mrf.mxu0
      %v608 = vpop.f32.mrf.mxu0
      %v609 = vpop.f32.mrf.mxu0
      %610 = vmatprep.mubr.bf16.mxu0 0
      %611 = vmatmul.mubr.bf16.gmra.mxu0 %v560
      %v612 = vpop.f32.mrf.mxu0
      %v613 = vadd.f32 0.0, %v612
      %v614 = vpop.f32.mrf.mxu0
      %v615 = vpop.f32.mrf.mxu0
      %v616 = vpop.f32.mrf.mxu0
      %617 = vmatprep.mubr.bf16.mxu0 0
      %618 = vmatmul.mubr.bf16.gmra.mxu0 %v563
      %v619 = vpop.f32.mrf.mxu0
      %v620 = vadd.f32 0.0, %v619
      %v621 = vpop.f32.mrf.mxu0
      %v622 = vpop.f32.mrf.mxu0
      %v623 = vpop.f32.mrf.mxu0
      %624 = vmatprep.mubr.bf16.mxu0 0
      %625 = vmatmul.mubr.bf16.gmra.mxu0 %v566
      %v626 = vpop.f32.mrf.mxu0
      %v627 = vadd.f32 0.0, %v626
      %v628 = vpop.f32.mrf.mxu0
      %v629 = vpop.f32.mrf.mxu0
      %v630 = vpop.f32.mrf.mxu0
      %631 = vdwg.mxu0
      %v632 = vadd.f32 %v473, %v606
      %v633 = vadd.f32 %v480, %v613
      %v634 = vadd.f32 %v487, %v620
      %v635 = vadd.f32 %v494, %v627
      %s636 = sadd.s32 %s195, 1
      %s637 = smul.u32 %s636, 3
      %s638 = smul.addr %s637, 4
      %s639 = scalar_lea.vmem %s183, %s638
      %v640 = vld [vmem:[%s639] sm:$0xf]
      %v641 = vld [vmem:[%s639 + $0x4] sm:$0xf]
      %v642 = vld [vmem:[%s639 + $0xc] sm:$0xf]
      %v643 = vld [vmem:[%s639 + $0x10] sm:$0xf]
      %v644 = vld [vmem:[%s639 + $0x18] sm:$0xf]
      %v645 = vld [vmem:[%s639 + $0x1c] sm:$0xf]
      %v646 = vld [vmem:[%s639 + $0x24] sm:$0xf]
      %v647 = vld [vmem:[%s639 + $0x28] sm:$0xf]
      %s648 = scalar_lea.vmem %s1, 12
      %v649 = vld [vmem:[%s648] sm:$0xf]
      %v658 = vunpack.c.l.b16 %v640
      %v659 = vunpack.c.l.b16 %v641
      %v660 = vunpack.c.l.b16 %v642
      %v661 = vunpack.c.l.b16 %v643
      %v662 = vunpack.c.l.b16 %v644
      %v663 = vunpack.c.l.b16 %v645
      %v664 = vunpack.c.l.b16 %v646
      %v665 = vunpack.c.l.b16 %v647
      %v666 = vpack.c.b16 %v659, %v658
      %v667 = vpack.c.b16 %v661, %v660
      %v668 = vpack.c.b16 %v663, %v662
      %v669 = vpack.c.b16 %v665, %v664
      %v671 = vsel %vm325, %v666, 0
      %v674 = vsel %vm325, %v667, 0
      %v677 = vsel %vm325, %v668, 0
      %v680 = vsel %vm325, %v669, 0
      %v683 = vsel %vm338, %v649, 0
      %685 = vmatprep.subr.bf16.mxu0 0
      %686 = vmatpush1.bf16.msra.mxu0 0
      %687 = vmatprep.subr.bf16.mxu0 0
      %688 = vmatpush1.bf16.msra.mxu0 0
      %689 = vmatprep.subr.bf16.mxu0 0
      %690 = vmatpush1.bf16.msra.mxu0 0
      %691 = vmatprep.subr.bf16.mxu0 0
      %692 = vmatpush1.bf16.msra.mxu0 0
      %693 = vmatprep.subr.bf16.mxu0 0
      %694 = vmatpush1.bf16.msra.mxu0 0
      %695 = vmatprep.subr.bf16.mxu0 0
      %696 = vmatpush1.bf16.msra.mxu0 0
      %697 = vmatprep.subr.bf16.mxu0 0
      %698 = vmatpush1.bf16.msra.mxu0 0
      %699 = vmatprep.subr.bf16.mxu0 0
      %700 = vmatpush1.bf16.msra.mxu0 %v683
      %701 = vmatprep.subr.bf16.mxu0 0
      %702 = vmatpush2.bf16.msra.mxu0 0
      %703 = vmatprep.subr.bf16.mxu0 0
      %704 = vmatpush2.bf16.msra.mxu0 0
      %705 = vmatprep.subr.bf16.mxu0 0
      %706 = vmatpush2.bf16.msra.mxu0 0
      %707 = vmatprep.subr.bf16.mxu0 0
      %708 = vmatpush2.bf16.msra.mxu0 0
      %709 = vmatprep.subr.bf16.mxu0 0
      %710 = vmatpush2.bf16.msra.mxu0 0
      %711 = vmatprep.subr.bf16.mxu0 0
      %712 = vmatpush2.bf16.msra.mxu0 0
      %713 = vmatprep.subr.bf16.mxu0 0
      %714 = vmatpush2.bf16.msra.mxu0 0
      %715 = vmatprep.subr.bf16.mxu0 0
      %716 = vmatpush2.bf16.msra.mxu0 0
      %717 = vmatprep.mubr.bf16.mxu0 0
      %718 = vmatmul.mubr.bf16.gmra.mxu0 %v671
      %v719 = vpop.f32.mrf.mxu0
      %v720 = vadd.f32 0.0, %v719
      %v721 = vpop.f32.mrf.mxu0
      %v722 = vpop.f32.mrf.mxu0
      %v723 = vpop.f32.mrf.mxu0
      %724 = vmatprep.mubr.bf16.mxu0 0
      %725 = vmatmul.mubr.bf16.gmra.mxu0 %v674
      %v726 = vpop.f32.mrf.mxu0
      %v727 = vadd.f32 0.0, %v726
      %v728 = vpop.f32.mrf.mxu0
      %v729 = vpop.f32.mrf.mxu0
      %v730 = vpop.f32.mrf.mxu0
      %731 = vmatprep.mubr.bf16.mxu0 0
      %732 = vmatmul.mubr.bf16.gmra.mxu0 %v677
      %v733 = vpop.f32.mrf.mxu0
      %v734 = vadd.f32 0.0, %v733
      %v735 = vpop.f32.mrf.mxu0
      %v736 = vpop.f32.mrf.mxu0
      %v737 = vpop.f32.mrf.mxu0
      %738 = vmatprep.mubr.bf16.mxu0 0
      %739 = vmatmul.mubr.bf16.gmra.mxu0 %v680
      %v740 = vpop.f32.mrf.mxu0
      %v741 = vadd.f32 0.0, %v740
      %v742 = vpop.f32.mrf.mxu0
      %v743 = vpop.f32.mrf.mxu0
      %v744 = vpop.f32.mrf.mxu0
      %745 = vdwg.mxu0
      %v746 = vadd.f32 %v632, %v720
      %v747 = vadd.f32 %v633, %v727
      %v748 = vadd.f32 %v634, %v734
      %v749 = vadd.f32 %v635, %v741
      %v750 = vld [vmem:[%s639] sm:$0xf]
      %v751 = vld [vmem:[%s639 + $0x4] sm:$0xf]
      %v752 = vld [vmem:[%s639 + $0x8] sm:$0x1]
      %v753 = vld [vmem:[%s639 + $0xc] sm:$0xf]
      %v754 = vld [vmem:[%s639 + $0x10] sm:$0xf]
      %v755 = vld [vmem:[%s639 + $0x14] sm:$0x1]
      %v756 = vld [vmem:[%s639 + $0x18] sm:$0xf]
      %v757 = vld [vmem:[%s639 + $0x1c] sm:$0xf]
      %v758 = vld [vmem:[%s639 + $0x20] sm:$0x1]
      %v759 = vld [vmem:[%s639 + $0x24] sm:$0xf]
      %v760 = vld [vmem:[%s639 + $0x28] sm:$0xf]
      %v761 = vld [vmem:[%s639 + $0x2c] sm:$0x1]
      %v763 = vshrl.u32 %v750, 16
      %v765 = vrot.slane %v763, 4
      %v766 = vshll.u32 %v750, 16
      %v768 = vrot.slane %v766, 5
      %v769 = vor.u32 %v765, %v768
      %v770 = vrot.slane %v769, 4
      %v772 = vshll.u32 %v751, 16
      %v774 = vrot.slane %v772, 5
      %v775 = vsel %vm214, %v770, %v774
      %v776 = vshrl.u32 %v751, 16
      %v778 = vrot.slane %v776, 4
      %v779 = vor.u32 %v778, %v774
      %v780 = vrot.slane %v779, 4
      %v782 = vshll.u32 %v752, 16
      %v784 = vrot.slane %v782, 5
      %v785 = vsel %vm214, %v780, %v784
      %v787 = vshrl.u32 %v753, 16
      %v789 = vrot.slane %v787, 4
      %v790 = vshll.u32 %v753, 16
      %v792 = vrot.slane %v790, 5
      %v793 = vor.u32 %v789, %v792
      %v794 = vrot.slane %v793, 4
      %v796 = vshll.u32 %v754, 16
      %v798 = vrot.slane %v796, 5
      %v799 = vsel %vm214, %v794, %v798
      %v800 = vshrl.u32 %v754, 16
      %v802 = vrot.slane %v800, 4
      %v803 = vor.u32 %v802, %v798
      %v804 = vrot.slane %v803, 4
      %v806 = vshll.u32 %v755, 16
      %v808 = vrot.slane %v806, 5
      %v809 = vsel %vm214, %v804, %v808
      %v811 = vshrl.u32 %v756, 16
      %v813 = vrot.slane %v811, 4
      %v814 = vshll.u32 %v756, 16
      %v816 = vrot.slane %v814, 5
      %v817 = vor.u32 %v813, %v816
      %v818 = vrot.slane %v817, 4
      %v820 = vshll.u32 %v757, 16
      %v822 = vrot.slane %v820, 5
      %v823 = vsel %vm214, %v818, %v822
      %v824 = vshrl.u32 %v757, 16
      %v826 = vrot.slane %v824, 4
      %v827 = vor.u32 %v826, %v822
      %v828 = vrot.slane %v827, 4
      %v830 = vshll.u32 %v758, 16
      %v832 = vrot.slane %v830, 5
      %v833 = vsel %vm214, %v828, %v832
      %v835 = vshrl.u32 %v759, 16
      %v837 = vrot.slane %v835, 4
      %v838 = vshll.u32 %v759, 16
      %v840 = vrot.slane %v838, 5
      %v841 = vor.u32 %v837, %v840
      %v842 = vrot.slane %v841, 4
      %v844 = vshll.u32 %v760, 16
      %v846 = vrot.slane %v844, 5
      %v847 = vsel %vm214, %v842, %v846
      %v848 = vshrl.u32 %v760, 16
      %v850 = vrot.slane %v848, 4
      %v851 = vor.u32 %v850, %v846
      %v852 = vrot.slane %v851, 4
      %v854 = vshll.u32 %v761, 16
      %v856 = vrot.slane %v854, 5
      %v857 = vsel %vm214, %v852, %v856
      %s858 = scalar_lea.vmem %s1, 16
      %v859 = vld [vmem:[%s858] sm:$0xf]
      %v860 = vunpack.c.l.b16 %v775
      %v861 = vunpack.c.l.b16 %v785
      %v862 = vunpack.c.l.b16 %v799
      %v863 = vunpack.c.l.b16 %v809
      %v864 = vunpack.c.l.b16 %v823
      %v865 = vunpack.c.l.b16 %v833
      %v866 = vunpack.c.l.b16 %v847
      %v867 = vunpack.c.l.b16 %v857
      %v868 = vpack.c.b16 %v861, %v860
      %v869 = vpack.c.b16 %v863, %v862
      %v870 = vpack.c.b16 %v865, %v864
      %v871 = vpack.c.b16 %v867, %v866
      %v873 = vsel %vm325, %v868, 0
      %v876 = vsel %vm325, %v869, 0
      %v879 = vsel %vm325, %v870, 0
      %v882 = vsel %vm325, %v871, 0
      %v885 = vsel %vm338, %v859, 0
      %887 = vmatprep.subr.bf16.mxu0 0
      %888 = vmatpush1.bf16.msra.mxu0 0
      %889 = vmatprep.subr.bf16.mxu0 0
      %890 = vmatpush1.bf16.msra.mxu0 0
      %891 = vmatprep.subr.bf16.mxu0 0
      %892 = vmatpush1.bf16.msra.mxu0 0
      %893 = vmatprep.subr.bf16.mxu0 0
      %894 = vmatpush1.bf16.msra.mxu0 0
      %895 = vmatprep.subr.bf16.mxu0 0
      %896 = vmatpush1.bf16.msra.mxu0 0
      %897 = vmatprep.subr.bf16.mxu0 0
      %898 = vmatpush1.bf16.msra.mxu0 0
      %899 = vmatprep.subr.bf16.mxu0 0
      %900 = vmatpush1.bf16.msra.mxu0 0
      %901 = vmatprep.subr.bf16.mxu0 0
      %902 = vmatpush1.bf16.msra.mxu0 %v885
      %903 = vmatprep.subr.bf16.mxu0 0
      %904 = vmatpush2.bf16.msra.mxu0 0
      %905 = vmatprep.subr.bf16.mxu0 0
      %906 = vmatpush2.bf16.msra.mxu0 0
      %907 = vmatprep.subr.bf16.mxu0 0
      %908 = vmatpush2.bf16.msra.mxu0 0
      %909 = vmatprep.subr.bf16.mxu0 0
      %910 = vmatpush2.bf16.msra.mxu0 0
      %911 = vmatprep.subr.bf16.mxu0 0
      %912 = vmatpush2.bf16.msra.mxu0 0
      %913 = vmatprep.subr.bf16.mxu0 0
      %914 = vmatpush2.bf16.msra.mxu0 0
      %915 = vmatprep.subr.bf16.mxu0 0
      %916 = vmatpush2.bf16.msra.mxu0 0
      %917 = vmatprep.subr.bf16.mxu0 0
      %918 = vmatpush2.bf16.msra.mxu0 0
      %919 = vmatprep.mubr.bf16.mxu0 0
      %920 = vmatmul.mubr.bf16.gmra.mxu0 %v873
      %v921 = vpop.f32.mrf.mxu0
      %v922 = vadd.f32 0.0, %v921
      %v923 = vpop.f32.mrf.mxu0
      %v924 = vpop.f32.mrf.mxu0
      %v925 = vpop.f32.mrf.mxu0
      %926 = vmatprep.mubr.bf16.mxu0 0
      %927 = vmatmul.mubr.bf16.gmra.mxu0 %v876
      %v928 = vpop.f32.mrf.mxu0
      %v929 = vadd.f32 0.0, %v928
      %v930 = vpop.f32.mrf.mxu0
      %v931 = vpop.f32.mrf.mxu0
      %v932 = vpop.f32.mrf.mxu0
      %933 = vmatprep.mubr.bf16.mxu0 0
      %934 = vmatmul.mubr.bf16.gmra.mxu0 %v879
      %v935 = vpop.f32.mrf.mxu0
      %v936 = vadd.f32 0.0, %v935
      %v937 = vpop.f32.mrf.mxu0
      %v938 = vpop.f32.mrf.mxu0
      %v939 = vpop.f32.mrf.mxu0
      %940 = vmatprep.mubr.bf16.mxu0 0
      %941 = vmatmul.mubr.bf16.gmra.mxu0 %v882
      %v942 = vpop.f32.mrf.mxu0
      %v943 = vadd.f32 0.0, %v942
      %v944 = vpop.f32.mrf.mxu0
      %v945 = vpop.f32.mrf.mxu0
      %v946 = vpop.f32.mrf.mxu0
      %947 = vdwg.mxu0
      %v948 = vadd.f32 %v746, %v922
      %v949 = vadd.f32 %v747, %v929
      %v950 = vadd.f32 %v748, %v936
      %v951 = vadd.f32 %v749, %v943
      %v952 = vld [vmem:[%s639] sm:$0xe]
      %v953 = vld [vmem:[%s639 + $0xc] sm:$0xe]
      %v954 = vld [vmem:[%s639 + $0x18] sm:$0xe]
      %v955 = vld [vmem:[%s639 + $0x24] sm:$0xe]
      %v968 = vrot.slane %v952, 5
      %v969 = vrot.slane %v968, 4
      %v970 = vrot.slane %v751, 5
      %v971 = vsel %vm513, %v969, %v970
      %v972 = vrot.slane %v970, 4
      %v973 = vrot.slane %v752, 5
      %v974 = vsel %vm513, %v972, %v973
      %v975 = vrot.slane %v953, 5
      %v976 = vrot.slane %v975, 4
      %v977 = vrot.slane %v754, 5
      %v978 = vsel %vm513, %v976, %v977
      %v979 = vrot.slane %v977, 4
      %v980 = vrot.slane %v755, 5
      %v981 = vsel %vm513, %v979, %v980
      %v982 = vrot.slane %v954, 5
      %v983 = vrot.slane %v982, 4
      %v984 = vrot.slane %v757, 5
      %v985 = vsel %vm513, %v983, %v984
      %v986 = vrot.slane %v984, 4
      %v987 = vrot.slane %v758, 5
      %v988 = vsel %vm513, %v986, %v987
      %v989 = vrot.slane %v955, 5
      %v990 = vrot.slane %v989, 4
      %v991 = vrot.slane %v760, 5
      %v992 = vsel %vm513, %v990, %v991
      %v993 = vrot.slane %v991, 4
      %v994 = vrot.slane %v761, 5
      %v995 = vsel %vm513, %v993, %v994
      %s996 = scalar_lea.vmem %s1, 20
      %v997 = vld [vmem:[%s996] sm:$0xf]
      %v998 = vunpack.c.l.b16 %v971
      %v999 = vunpack.c.l.b16 %v974
      %v1000 = vunpack.c.l.b16 %v978
      %v1001 = vunpack.c.l.b16 %v981
      %v1002 = vunpack.c.l.b16 %v985
      %v1003 = vunpack.c.l.b16 %v988
      %v1004 = vunpack.c.l.b16 %v992
      %v1005 = vunpack.c.l.b16 %v995
      %v1006 = vpack.c.b16 %v999, %v998
      %v1007 = vpack.c.b16 %v1001, %v1000
      %v1008 = vpack.c.b16 %v1003, %v1002
      %v1009 = vpack.c.b16 %v1005, %v1004
      %v1011 = vsel %vm325, %v1006, 0
      %v1014 = vsel %vm325, %v1007, 0
      %v1017 = vsel %vm325, %v1008, 0
      %v1020 = vsel %vm325, %v1009, 0
      %v1023 = vsel %vm338, %v997, 0
      %1025 = vmatprep.subr.bf16.mxu0 0
      %1026 = vmatpush1.bf16.msra.mxu0 0
      %1027 = vmatprep.subr.bf16.mxu0 0
      %1028 = vmatpush1.bf16.msra.mxu0 0
      %1029 = vmatprep.subr.bf16.mxu0 0
      %1030 = vmatpush1.bf16.msra.mxu0 0
      %1031 = vmatprep.subr.bf16.mxu0 0
      %1032 = vmatpush1.bf16.msra.mxu0 0
      %1033 = vmatprep.subr.bf16.mxu0 0
      %1034 = vmatpush1.bf16.msra.mxu0 0
      %1035 = vmatprep.subr.bf16.mxu0 0
      %1036 = vmatpush1.bf16.msra.mxu0 0
      %1037 = vmatprep.subr.bf16.mxu0 0
      %1038 = vmatpush1.bf16.msra.mxu0 0
      %1039 = vmatprep.subr.bf16.mxu0 0
      %1040 = vmatpush1.bf16.msra.mxu0 %v1023
      %1041 = vmatprep.subr.bf16.mxu0 0
      %1042 = vmatpush2.bf16.msra.mxu0 0
      %1043 = vmatprep.subr.bf16.mxu0 0
      %1044 = vmatpush2.bf16.msra.mxu0 0
      %1045 = vmatprep.subr.bf16.mxu0 0
      %1046 = vmatpush2.bf16.msra.mxu0 0
      %1047 = vmatprep.subr.bf16.mxu0 0
      %1048 = vmatpush2.bf16.msra.mxu0 0
      %1049 = vmatprep.subr.bf16.mxu0 0
      %1050 = vmatpush2.bf16.msra.mxu0 0
      %1051 = vmatprep.subr.bf16.mxu0 0
      %1052 = vmatpush2.bf16.msra.mxu0 0
      %1053 = vmatprep.subr.bf16.mxu0 0
      %1054 = vmatpush2.bf16.msra.mxu0 0
      %1055 = vmatprep.subr.bf16.mxu0 0
      %1056 = vmatpush2.bf16.msra.mxu0 0
      %1057 = vmatprep.mubr.bf16.mxu0 0
      %1058 = vmatmul.mubr.bf16.gmra.mxu0 %v1011
      %v1059 = vpop.f32.mrf.mxu0
      %v1060 = vadd.f32 0.0, %v1059
      %v1061 = vpop.f32.mrf.mxu0
      %v1062 = vpop.f32.mrf.mxu0
      %v1063 = vpop.f32.mrf.mxu0
      %1064 = vmatprep.mubr.bf16.mxu0 0
      %1065 = vmatmul.mubr.bf16.gmra.mxu0 %v1014
      %v1066 = vpop.f32.mrf.mxu0
      %v1067 = vadd.f32 0.0, %v1066
      %v1068 = vpop.f32.mrf.mxu0
      %v1069 = vpop.f32.mrf.mxu0
      %v1070 = vpop.f32.mrf.mxu0
      %1071 = vmatprep.mubr.bf16.mxu0 0
      %1072 = vmatmul.mubr.bf16.gmra.mxu0 %v1017
      %v1073 = vpop.f32.mrf.mxu0
      %v1074 = vadd.f32 0.0, %v1073
      %v1075 = vpop.f32.mrf.mxu0
      %v1076 = vpop.f32.mrf.mxu0
      %v1077 = vpop.f32.mrf.mxu0
      %1078 = vmatprep.mubr.bf16.mxu0 0
      %1079 = vmatmul.mubr.bf16.gmra.mxu0 %v1020
      %v1080 = vpop.f32.mrf.mxu0
      %v1081 = vadd.f32 0.0, %v1080
      %v1082 = vpop.f32.mrf.mxu0
      %v1083 = vpop.f32.mrf.mxu0
      %v1084 = vpop.f32.mrf.mxu0
      %1085 = vdwg.mxu0
      %v1086 = vadd.f32 %v948, %v1060
      %v1087 = vadd.f32 %v949, %v1067
      %v1088 = vadd.f32 %v950, %v1074
      %v1089 = vadd.f32 %v951, %v1081
      %s1090 = sadd.s32 %s195, 2
      %s1091 = smul.u32 %s1090, 3
      %s1092 = smul.addr %s1091, 4
      %s1093 = scalar_lea.vmem %s183, %s1092
      %v1094 = vld [vmem:[%s1093] sm:$0xf]
      %v1095 = vld [vmem:[%s1093 + $0x4] sm:$0xf]
      %v1096 = vld [vmem:[%s1093 + $0xc] sm:$0xf]
      %v1097 = vld [vmem:[%s1093 + $0x10] sm:$0xf]
      %v1098 = vld [vmem:[%s1093 + $0x18] sm:$0xf]
      %v1099 = vld [vmem:[%s1093 + $0x1c] sm:$0xf]
      %v1100 = vld [vmem:[%s1093 + $0x24] sm:$0xf]
      %v1101 = vld [vmem:[%s1093 + $0x28] sm:$0xf]
      %s1102 = scalar_lea.vmem %s1, 24
      %v1103 = vld [vmem:[%s1102] sm:$0xf]
      %v1112 = vunpack.c.l.b16 %v1094
      %v1113 = vunpack.c.l.b16 %v1095
      %v1114 = vunpack.c.l.b16 %v1096
      %v1115 = vunpack.c.l.b16 %v1097
      %v1116 = vunpack.c.l.b16 %v1098
      %v1117 = vunpack.c.l.b16 %v1099
      %v1118 = vunpack.c.l.b16 %v1100
      %v1119 = vunpack.c.l.b16 %v1101
      %v1120 = vpack.c.b16 %v1113, %v1112
      %v1121 = vpack.c.b16 %v1115, %v1114
      %v1122 = vpack.c.b16 %v1117, %v1116
      %v1123 = vpack.c.b16 %v1119, %v1118
      %v1125 = vsel %vm325, %v1120, 0
      %v1128 = vsel %vm325, %v1121, 0
      %v1131 = vsel %vm325, %v1122, 0
      %v1134 = vsel %vm325, %v1123, 0
      %v1137 = vsel %vm338, %v1103, 0
      %1139 = vmatprep.subr.bf16.mxu0 0
      %1140 = vmatpush1.bf16.msra.mxu0 0
      %1141 = vmatprep.subr.bf16.mxu0 0
      %1142 = vmatpush1.bf16.msra.mxu0 0
      %1143 = vmatprep.subr.bf16.mxu0 0
      %1144 = vmatpush1.bf16.msra.mxu0 0
      %1145 = vmatprep.subr.bf16.mxu0 0
      %1146 = vmatpush1.bf16.msra.mxu0 0
      %1147 = vmatprep.subr.bf16.mxu0 0
      %1148 = vmatpush1.bf16.msra.mxu0 0
      %1149 = vmatprep.subr.bf16.mxu0 0
      %1150 = vmatpush1.bf16.msra.mxu0 0
      %1151 = vmatprep.subr.bf16.mxu0 0
      %1152 = vmatpush1.bf16.msra.mxu0 0
      %1153 = vmatprep.subr.bf16.mxu0 0
      %1154 = vmatpush1.bf16.msra.mxu0 %v1137
      %1155 = vmatprep.subr.bf16.mxu0 0
      %1156 = vmatpush2.bf16.msra.mxu0 0
      %1157 = vmatprep.subr.bf16.mxu0 0
      %1158 = vmatpush2.bf16.msra.mxu0 0
      %1159 = vmatprep.subr.bf16.mxu0 0
      %1160 = vmatpush2.bf16.msra.mxu0 0
      %1161 = vmatprep.subr.bf16.mxu0 0
      %1162 = vmatpush2.bf16.msra.mxu0 0
      %1163 = vmatprep.subr.bf16.mxu0 0
      %1164 = vmatpush2.bf16.msra.mxu0 0
      %1165 = vmatprep.subr.bf16.mxu0 0
      %1166 = vmatpush2.bf16.msra.mxu0 0
      %1167 = vmatprep.subr.bf16.mxu0 0
      %1168 = vmatpush2.bf16.msra.mxu0 0
      %1169 = vmatprep.subr.bf16.mxu0 0
      %1170 = vmatpush2.bf16.msra.mxu0 0
      %1171 = vmatprep.mubr.bf16.mxu0 0
      %1172 = vmatmul.mubr.bf16.gmra.mxu0 %v1125
      %v1173 = vpop.f32.mrf.mxu0
      %v1174 = vadd.f32 0.0, %v1173
      %v1175 = vpop.f32.mrf.mxu0
      %v1176 = vpop.f32.mrf.mxu0
      %v1177 = vpop.f32.mrf.mxu0
      %1178 = vmatprep.mubr.bf16.mxu0 0
      %1179 = vmatmul.mubr.bf16.gmra.mxu0 %v1128
      %v1180 = vpop.f32.mrf.mxu0
      %v1181 = vadd.f32 0.0, %v1180
      %v1182 = vpop.f32.mrf.mxu0
      %v1183 = vpop.f32.mrf.mxu0
      %v1184 = vpop.f32.mrf.mxu0
      %1185 = vmatprep.mubr.bf16.mxu0 0
      %1186 = vmatmul.mubr.bf16.gmra.mxu0 %v1131
      %v1187 = vpop.f32.mrf.mxu0
      %v1188 = vadd.f32 0.0, %v1187
      %v1189 = vpop.f32.mrf.mxu0
      %v1190 = vpop.f32.mrf.mxu0
      %v1191 = vpop.f32.mrf.mxu0
      %1192 = vmatprep.mubr.bf16.mxu0 0
      %1193 = vmatmul.mubr.bf16.gmra.mxu0 %v1134
      %v1194 = vpop.f32.mrf.mxu0
      %v1195 = vadd.f32 0.0, %v1194
      %v1196 = vpop.f32.mrf.mxu0
      %v1197 = vpop.f32.mrf.mxu0
      %v1198 = vpop.f32.mrf.mxu0
      %1199 = vdwg.mxu0
      %v1200 = vadd.f32 %v1086, %v1174
      %v1201 = vadd.f32 %v1087, %v1181
      %v1202 = vadd.f32 %v1088, %v1188
      %v1203 = vadd.f32 %v1089, %v1195
      %v1204 = vld [vmem:[%s1093] sm:$0xf]
      %v1205 = vld [vmem:[%s1093 + $0x4] sm:$0xf]
      %v1206 = vld [vmem:[%s1093 + $0x8] sm:$0x1]
      %v1207 = vld [vmem:[%s1093 + $0xc] sm:$0xf]
      %v1208 = vld [vmem:[%s1093 + $0x10] sm:$0xf]
      %v1209 = vld [vmem:[%s1093 + $0x14] sm:$0x1]
      %v1210 = vld [vmem:[%s1093 + $0x18] sm:$0xf]
      %v1211 = vld [vmem:[%s1093 + $0x1c] sm:$0xf]
      %v1212 = vld [vmem:[%s1093 + $0x20] sm:$0x1]
      %v1213 = vld [vmem:[%s1093 + $0x24] sm:$0xf]
      %v1214 = vld [vmem:[%s1093 + $0x28] sm:$0xf]
      %v1215 = vld [vmem:[%s1093 + $0x2c] sm:$0x1]
      %v1217 = vshrl.u32 %v1204, 16
      %v1219 = vrot.slane %v1217, 4
      %v1220 = vshll.u32 %v1204, 16
      %v1222 = vrot.slane %v1220, 5
      %v1223 = vor.u32 %v1219, %v1222
      %v1224 = vrot.slane %v1223, 4
      %v1226 = vshll.u32 %v1205, 16
      %v1228 = vrot.slane %v1226, 5
      %v1229 = vsel %vm214, %v1224, %v1228
      %v1230 = vshrl.u32 %v1205, 16
      %v1232 = vrot.slane %v1230, 4
      %v1233 = vor.u32 %v1232, %v1228
      %v1234 = vrot.slane %v1233, 4
      %v1236 = vshll.u32 %v1206, 16
      %v1238 = vrot.slane %v1236, 5
      %v1239 = vsel %vm214, %v1234, %v1238
      %v1241 = vshrl.u32 %v1207, 16
      %v1243 = vrot.slane %v1241, 4
      %v1244 = vshll.u32 %v1207, 16
      %v1246 = vrot.slane %v1244, 5
      %v1247 = vor.u32 %v1243, %v1246
      %v1248 = vrot.slane %v1247, 4
      %v1250 = vshll.u32 %v1208, 16
      %v1252 = vrot.slane %v1250, 5
      %v1253 = vsel %vm214, %v1248, %v1252
      %v1254 = vshrl.u32 %v1208, 16
      %v1256 = vrot.slane %v1254, 4
      %v1257 = vor.u32 %v1256, %v1252
      %v1258 = vrot.slane %v1257, 4
      %v1260 = vshll.u32 %v1209, 16
      %v1262 = vrot.slane %v1260, 5
      %v1263 = vsel %vm214, %v1258, %v1262
      %v1265 = vshrl.u32 %v1210, 16
      %v1267 = vrot.slane %v1265, 4
      %v1268 = vshll.u32 %v1210, 16
      %v1270 = vrot.slane %v1268, 5
      %v1271 = vor.u32 %v1267, %v1270
      %v1272 = vrot.slane %v1271, 4
      %v1274 = vshll.u32 %v1211, 16
      %v1276 = vrot.slane %v1274, 5
      %v1277 = vsel %vm214, %v1272, %v1276
      %v1278 = vshrl.u32 %v1211, 16
      %v1280 = vrot.slane %v1278, 4
      %v1281 = vor.u32 %v1280, %v1276
      %v1282 = vrot.slane %v1281, 4
      %v1284 = vshll.u32 %v1212, 16
      %v1286 = vrot.slane %v1284, 5
      %v1287 = vsel %vm214, %v1282, %v1286
      %v1289 = vshrl.u32 %v1213, 16
      %v1291 = vrot.slane %v1289, 4
      %v1292 = vshll.u32 %v1213, 16
      %v1294 = vrot.slane %v1292, 5
      %v1295 = vor.u32 %v1291, %v1294
      %v1296 = vrot.slane %v1295, 4
      %v1298 = vshll.u32 %v1214, 16
      %v1300 = vrot.slane %v1298, 5
      %v1301 = vsel %vm214, %v1296, %v1300
      %v1302 = vshrl.u32 %v1214, 16
      %v1304 = vrot.slane %v1302, 4
      %v1305 = vor.u32 %v1304, %v1300
      %v1306 = vrot.slane %v1305, 4
      %v1308 = vshll.u32 %v1215, 16
      %v1310 = vrot.slane %v1308, 5
      %v1311 = vsel %vm214, %v1306, %v1310
      %s1312 = scalar_lea.vmem %s1, 28
      %v1313 = vld [vmem:[%s1312] sm:$0xf]
      %v1314 = vunpack.c.l.b16 %v1229
      %v1315 = vunpack.c.l.b16 %v1239
      %v1316 = vunpack.c.l.b16 %v1253
      %v1317 = vunpack.c.l.b16 %v1263
      %v1318 = vunpack.c.l.b16 %v1277
      %v1319 = vunpack.c.l.b16 %v1287
      %v1320 = vunpack.c.l.b16 %v1301
      %v1321 = vunpack.c.l.b16 %v1311
      %v1322 = vpack.c.b16 %v1315, %v1314
      %v1323 = vpack.c.b16 %v1317, %v1316
      %v1324 = vpack.c.b16 %v1319, %v1318
      %v1325 = vpack.c.b16 %v1321, %v1320
      %v1327 = vsel %vm325, %v1322, 0
      %v1330 = vsel %vm325, %v1323, 0
      %v1333 = vsel %vm325, %v1324, 0
      %v1336 = vsel %vm325, %v1325, 0
      %v1339 = vsel %vm338, %v1313, 0
      %1341 = vmatprep.subr.bf16.mxu0 0
      %1342 = vmatpush1.bf16.msra.mxu0 0
      %1343 = vmatprep.subr.bf16.mxu0 0
      %1344 = vmatpush1.bf16.msra.mxu0 0
      %1345 = vmatprep.subr.bf16.mxu0 0
      %1346 = vmatpush1.bf16.msra.mxu0 0
      %1347 = vmatprep.subr.bf16.mxu0 0
      %1348 = vmatpush1.bf16.msra.mxu0 0
      %1349 = vmatprep.subr.bf16.mxu0 0
      %1350 = vmatpush1.bf16.msra.mxu0 0
      %1351 = vmatprep.subr.bf16.mxu0 0
      %1352 = vmatpush1.bf16.msra.mxu0 0
      %1353 = vmatprep.subr.bf16.mxu0 0
      %1354 = vmatpush1.bf16.msra.mxu0 0
      %1355 = vmatprep.subr.bf16.mxu0 0
      %1356 = vmatpush1.bf16.msra.mxu0 %v1339
      %1357 = vmatprep.subr.bf16.mxu0 0
      %1358 = vmatpush2.bf16.msra.mxu0 0
      %1359 = vmatprep.subr.bf16.mxu0 0
      %1360 = vmatpush2.bf16.msra.mxu0 0
      %1361 = vmatprep.subr.bf16.mxu0 0
      %1362 = vmatpush2.bf16.msra.mxu0 0
      %1363 = vmatprep.subr.bf16.mxu0 0
      %1364 = vmatpush2.bf16.msra.mxu0 0
      %1365 = vmatprep.subr.bf16.mxu0 0
      %1366 = vmatpush2.bf16.msra.mxu0 0
      %1367 = vmatprep.subr.bf16.mxu0 0
      %1368 = vmatpush2.bf16.msra.mxu0 0
      %1369 = vmatprep.subr.bf16.mxu0 0
      %1370 = vmatpush2.bf16.msra.mxu0 0
      %1371 = vmatprep.subr.bf16.mxu0 0
      %1372 = vmatpush2.bf16.msra.mxu0 0
      %1373 = vmatprep.mubr.bf16.mxu0 0
      %1374 = vmatmul.mubr.bf16.gmra.mxu0 %v1327
      %v1375 = vpop.f32.mrf.mxu0
      %v1376 = vadd.f32 0.0, %v1375
      %v1377 = vpop.f32.mrf.mxu0
      %v1378 = vpop.f32.mrf.mxu0
      %v1379 = vpop.f32.mrf.mxu0
      %1380 = vmatprep.mubr.bf16.mxu0 0
      %1381 = vmatmul.mubr.bf16.gmra.mxu0 %v1330
      %v1382 = vpop.f32.mrf.mxu0
      %v1383 = vadd.f32 0.0, %v1382
      %v1384 = vpop.f32.mrf.mxu0
      %v1385 = vpop.f32.mrf.mxu0
      %v1386 = vpop.f32.mrf.mxu0
      %1387 = vmatprep.mubr.bf16.mxu0 0
      %1388 = vmatmul.mubr.bf16.gmra.mxu0 %v1333
      %v1389 = vpop.f32.mrf.mxu0
      %v1390 = vadd.f32 0.0, %v1389
      %v1391 = vpop.f32.mrf.mxu0
      %v1392 = vpop.f32.mrf.mxu0
      %v1393 = vpop.f32.mrf.mxu0
      %1394 = vmatprep.mubr.bf16.mxu0 0
      %1395 = vmatmul.mubr.bf16.gmra.mxu0 %v1336
      %v1396 = vpop.f32.mrf.mxu0
      %v1397 = vadd.f32 0.0, %v1396
      %v1398 = vpop.f32.mrf.mxu0
      %v1399 = vpop.f32.mrf.mxu0
      %v1400 = vpop.f32.mrf.mxu0
      %1401 = vdwg.mxu0
      %v1402 = vadd.f32 %v1200, %v1376
      %v1403 = vadd.f32 %v1201, %v1383
      %v1404 = vadd.f32 %v1202, %v1390
      %v1405 = vadd.f32 %v1203, %v1397
      %v1406 = vld [vmem:[%s1093] sm:$0xe]
      %v1407 = vld [vmem:[%s1093 + $0xc] sm:$0xe]
      %v1408 = vld [vmem:[%s1093 + $0x18] sm:$0xe]
      %v1409 = vld [vmem:[%s1093 + $0x24] sm:$0xe]
      %v1422 = vrot.slane %v1406, 5
      %v1423 = vrot.slane %v1422, 4
      %v1424 = vrot.slane %v1205, 5
      %v1425 = vsel %vm513, %v1423, %v1424
      %v1426 = vrot.slane %v1424, 4
      %v1427 = vrot.slane %v1206, 5
      %v1428 = vsel %vm513, %v1426, %v1427
      %v1429 = vrot.slane %v1407, 5
      %v1430 = vrot.slane %v1429, 4
      %v1431 = vrot.slane %v1208, 5
      %v1432 = vsel %vm513, %v1430, %v1431
      %v1433 = vrot.slane %v1431, 4
      %v1434 = vrot.slane %v1209, 5
      %v1435 = vsel %vm513, %v1433, %v1434
      %v1436 = vrot.slane %v1408, 5
      %v1437 = vrot.slane %v1436, 4
      %v1438 = vrot.slane %v1211, 5
      %v1439 = vsel %vm513, %v1437, %v1438
      %v1440 = vrot.slane %v1438, 4
      %v1441 = vrot.slane %v1212, 5
      %v1442 = vsel %vm513, %v1440, %v1441
      %v1443 = vrot.slane %v1409, 5
      %v1444 = vrot.slane %v1443, 4
      %v1445 = vrot.slane %v1214, 5
      %v1446 = vsel %vm513, %v1444, %v1445
      %v1447 = vrot.slane %v1445, 4
      %v1448 = vrot.slane %v1215, 5
      %v1449 = vsel %vm513, %v1447, %v1448
      %s1450 = scalar_lea.vmem %s1, 32
      %v1451 = vld [vmem:[%s1450] sm:$0xf]
      %v1452 = vunpack.c.l.b16 %v1425
      %v1453 = vunpack.c.l.b16 %v1428
      %v1454 = vunpack.c.l.b16 %v1432
      %v1455 = vunpack.c.l.b16 %v1435
      %v1456 = vunpack.c.l.b16 %v1439
      %v1457 = vunpack.c.l.b16 %v1442
      %v1458 = vunpack.c.l.b16 %v1446
      %v1459 = vunpack.c.l.b16 %v1449
      %v1460 = vpack.c.b16 %v1453, %v1452
      %v1461 = vpack.c.b16 %v1455, %v1454
      %v1462 = vpack.c.b16 %v1457, %v1456
      %v1463 = vpack.c.b16 %v1459, %v1458
      %v1465 = vsel %vm325, %v1460, 0
      %v1468 = vsel %vm325, %v1461, 0
      %v1471 = vsel %vm325, %v1462, 0
      %v1474 = vsel %vm325, %v1463, 0
      %v1477 = vsel %vm338, %v1451, 0
      %1479 = vmatprep.subr.bf16.mxu0 0
      %1480 = vmatpush1.bf16.msra.mxu0 0
      %1481 = vmatprep.subr.bf16.mxu0 0
      %1482 = vmatpush1.bf16.msra.mxu0 0
      %1483 = vmatprep.subr.bf16.mxu0 0
      %1484 = vmatpush1.bf16.msra.mxu0 0
      %1485 = vmatprep.subr.bf16.mxu0 0
      %1486 = vmatpush1.bf16.msra.mxu0 0
      %1487 = vmatprep.subr.bf16.mxu0 0
      %1488 = vmatpush1.bf16.msra.mxu0 0
      %1489 = vmatprep.subr.bf16.mxu0 0
      %1490 = vmatpush1.bf16.msra.mxu0 0
      %1491 = vmatprep.subr.bf16.mxu0 0
      %1492 = vmatpush1.bf16.msra.mxu0 0
      %1493 = vmatprep.subr.bf16.mxu0 0
      %1494 = vmatpush1.bf16.msra.mxu0 %v1477
      %1495 = vmatprep.subr.bf16.mxu0 0
      %1496 = vmatpush2.bf16.msra.mxu0 0
      %1497 = vmatprep.subr.bf16.mxu0 0
      %1498 = vmatpush2.bf16.msra.mxu0 0
      %1499 = vmatprep.subr.bf16.mxu0 0
      %1500 = vmatpush2.bf16.msra.mxu0 0
      %1501 = vmatprep.subr.bf16.mxu0 0
      %1502 = vmatpush2.bf16.msra.mxu0 0
      %1503 = vmatprep.subr.bf16.mxu0 0
      %1504 = vmatpush2.bf16.msra.mxu0 0
      %1505 = vmatprep.subr.bf16.mxu0 0
      %1506 = vmatpush2.bf16.msra.mxu0 0
      %1507 = vmatprep.subr.bf16.mxu0 0
      %1508 = vmatpush2.bf16.msra.mxu0 0
      %1509 = vmatprep.subr.bf16.mxu0 0
      %1510 = vmatpush2.bf16.msra.mxu0 0
      %1511 = vmatprep.mubr.bf16.mxu0 0
      %1512 = vmatmul.mubr.bf16.gmra.mxu0 %v1465
      %v1513 = vpop.f32.mrf.mxu0
      %v1514 = vadd.f32 0.0, %v1513
      %v1515 = vpop.f32.mrf.mxu0
      %v1516 = vpop.f32.mrf.mxu0
      %v1517 = vpop.f32.mrf.mxu0
      %1518 = vmatprep.mubr.bf16.mxu0 0
      %1519 = vmatmul.mubr.bf16.gmra.mxu0 %v1468
      %v1520 = vpop.f32.mrf.mxu0
      %v1521 = vadd.f32 0.0, %v1520
      %v1522 = vpop.f32.mrf.mxu0
      %v1523 = vpop.f32.mrf.mxu0
      %v1524 = vpop.f32.mrf.mxu0
      %1525 = vmatprep.mubr.bf16.mxu0 0
      %1526 = vmatmul.mubr.bf16.gmra.mxu0 %v1471
      %v1527 = vpop.f32.mrf.mxu0
      %v1528 = vadd.f32 0.0, %v1527
      %v1529 = vpop.f32.mrf.mxu0
      %v1530 = vpop.f32.mrf.mxu0
      %v1531 = vpop.f32.mrf.mxu0
      %1532 = vmatprep.mubr.bf16.mxu0 0
      %1533 = vmatmul.mubr.bf16.gmra.mxu0 %v1474
      %v1534 = vpop.f32.mrf.mxu0
      %v1535 = vadd.f32 0.0, %v1534
      %v1536 = vpop.f32.mrf.mxu0
      %v1537 = vpop.f32.mrf.mxu0
      %v1538 = vpop.f32.mrf.mxu0
      %1539 = vdwg.mxu0
      %v1540 = vadd.f32 %v1402, %v1514
      %v1541 = vadd.f32 %v1403, %v1521
      %v1542 = vadd.f32 %v1404, %v1528
      %v1543 = vadd.f32 %v1405, %v1535
      %v1544 = vld [vmem:[%s2] sm:$0x1]
      %v1546 = vlaneseq
      %v1547 = vshrl.u32 %v1546, 7
      %v1548 = vsub.s32 0, %v1547
      %v1549 = vrot.slane %v1544, %v1548
      %v1551 = vadd.f32 %v1540, %v1549
      %v1552 = vadd.f32 %v1541, %v1549
      %v1553 = vadd.f32 %v1542, %v1549
      %v1554 = vadd.f32 %v1543, %v1549
      %vm1555 = vcmp.ge.f32.partialorder %v1551, 0.0
      %vm1556 = vcmp.ge.f32.partialorder %v1552, 0.0
      %vm1557 = vcmp.ge.f32.partialorder %v1553, 0.0
      %vm1558 = vcmp.ge.f32.partialorder %v1554, 0.0
      %v1559 = vmul.f32 %v1551, 0.2
      %v1560 = vmul.f32 %v1552, 0.2
      %v1561 = vmul.f32 %v1553, 0.2
      %v1562 = vmul.f32 %v1554, 0.2
      %v1563 = vsel %vm1555, %v1551, %v1559
      %v1564 = vsel %vm1556, %v1552, %v1560
      %v1565 = vsel %vm1557, %v1553, %v1561
      %v1566 = vsel %vm1558, %v1554, %v1562
      %v1567 = vpack.c.bf16 %v1563, %v1563
      %v1568 = vpack.c.bf16 %v1564, %v1564
      %v1569 = vpack.c.bf16 %v1565, %v1565
      %v1570 = vpack.c.bf16 %v1566, %v1566
      %vm1571 = vcmask 254976
      %1572 = vst.msk [vmem:[%s192] sm:$0x3] %vm1571, %v1567
      %1573 = vst.msk [vmem:[%s192 + $0x2] sm:$0x3] %vm1571, %v1568
      %1574 = vst.msk [vmem:[%s192 + $0x4] sm:$0x3] %vm1571, %v1569
      %1575 = vst.msk [vmem:[%s192 + $0x6] sm:$0x3] %vm1571, %v1570
      %s1576 = smul.u32 4, %s19
      %p1577 = scmp.lt.s32.totalorder %s18, 1
      %s1578 = scalar_select %p1577, %s18, 1
      %p1579 = scmp.lt.s32.totalorder %s1576, 3
      %s1580 = scalar_select %p1579, %s1576, 3
      %s1581 = smul.addr %s1578, 4
      %s1582 = sadd.s32 %s1580, %s1581
      %s1583 = smul.addr %s1582, 2
      %s1584 = scalar_lea.vmem %s3, %s1583
      // Predicated region
      $region33: #{forward.9} parent=31 // pred_check
        %p1585 = pneg %p114
      $region34: #{forward.9} parent=31 // pred_check_branch
        %1587 = sbr.rel (%p1585) target = $region36
      $region35: #{forward.9} parent=31 // pred_region
        %s1588 = smul.u32 4, %s19
      $region36: #{forward.9} parent=31 // pred_fallthru
        _
    $region32: #{forward.9} parent=5 // pred_fallthru
      _
    %p1589 = scmp.le.s32.totalorder 2, %s9
    // Predicated region
    $region37: #{forward.9} parent=5 // pred_check
      %p1590 = pneg %p1589
    $region38: #{forward.9} parent=5 // pred_check_branch
      %1592 = sbr.rel (%p1590) target = $region40
    $region39: #{forward.9} parent=5 // pred_region
      %s1593 = ssub.s32 %s9, 2
      // Predicated region
      $region41: #{forward.9} parent=39 // pred_check
        %p1594 = pneg %p120
      $region42: #{forward.9} parent=39 // pred_check_branch
        %1596 = sbr.rel (%p1594) target = $region44
      $region43: #{forward.9} parent=39 // pred_region
        %s1597 = smul.u32 4, %s21
        %p1598 = scmp.lt.s32.totalorder %s20, 1
        %s1599 = scalar_select %p1598, %s20, 1
        %p1600 = scmp.lt.s32.totalorder %s1597, 3
        %s1601 = scalar_select %p1600, %s1597, 3
        %s1602 = smul.addr %s1599, 4
        %s1603 = sadd.s32 %s1601, %s1602
        %s1604 = smul.addr %s1603, 2
        %s1605 = scalar_lea.vmem %s3, %s1604
      $region44: #{forward.9} parent=39 // pred_fallthru
        _
    $region40: #{forward.9} parent=5 // pred_fallthru
      _
  $region6: #{forward.9} parent=0 // loop_footer
    %s13 = sadd.s32 1, %s9
  $region7: #{forward.9} parent=0 // loop_footer_branch
    %8 = sbr.rel target = $region3
  $region8: #{forward.9} parent=0 // loop_exit
    _

// kernel: forward.10
$region0: #{forward.10}
  #allocation0 [shape = 'u32[]', space=smem, size = 0x4, offset = 0x4, fixed_abs, tag = 'smem constant byte address 0x4 - core index']
  #allocation1 [shape = 'u32[144,128]{1,0:T(1,128)}', space=vmem, size = 0x12000, scoped, tag = 'internal scratch']
  %s0 = inlined_call_operand.vmem [shape: bf16[2,10,18,8], index: 0, kind: input, shape index: {}]
  %s1 = inlined_call_operand.vmem [shape: bf16[9,8,16], index: 1, kind: input, shape index: {}]
  %s2 = inlined_call_operand.vmem [shape: f32[1,16], index: 2, kind: input, shape index: {}]
  %s3 = inlined_call_operand.vmem [shape: bf16[2,8,8,16], index: 3, kind: output, shape index: {}]
  %s4 = sld [smem:[#allocation0]]
  $region45: #{forward.10} parent=0
    _
  %s6 = ssub.s32 1, %s4
  %s7 = scalar_select 0, %s6, %s4
  loop: start=0, step=1, limit=4
  $region2: #{forward.10} parent=0 // loop_pre_header
    _
  $region3: #{forward.10} parent=0 // loop_header
    %s9 = sphi 0, %s13
    %p10 = scmp.ge.s32.totalorder %s9, 4
    %s16 = sphi 0, %s28
    %s17 = sphi 0, %s24
    %s18 = sphi 0, %s16
    %s19 = sphi 0, %s17
    %s20 = sphi 0, %s18
    %s21 = sphi 0, %s19
    %s31 = sphi 0, %s33
    %s34 = sphi 0, %s31
    %s35 = sphi 0, %s34
    %s51 = sphi 0, %s35
    %s55 = sphi 0, %s55
    %s57 = sphi 0, %s55
    %s58 = sphi 0, %s57
    %s72 = sphi 0, %s58
    %s76 = sphi 0, %s76
    %s78 = sphi 0, %s76
    %s79 = sphi 0, %s78
    %s93 = sphi 0, %s79
    %s101 = sphi 0, %s103
    %s104 = sphi 0, %s101
    %s105 = sphi 0, %s104
    %s121 = sphi 0, %s105
  $region4: #{forward.10} parent=0 // loop_header_branch
    %12 = sbr.rel (%p10) target = $region8
  $region5: #{forward.10} parent=0 // loop_body
    %s14 = ssub.s32 %s9, 1
    %s15 = ssub.s32 %s9, 2
    %s22 = sadd.s32 1, %s17
    %p23 = scmp.ge.s32.totalorder %s22, 1
    %s24 = scalar_select %p23, 0, %s22
    %s25 = sadd.s32 1, %s16
    %s26 = scalar_select %p23, %s25, %s16
    %p27 = scmp.ge.s32.totalorder %s26, 2
    %s28 = scalar_select %p27, 0, %s26
    %s29 = ssub.s32 %s16, %s28
    %p30 = scmp.eq.s32.totalorder %s29, 0
    %s32 = sadd.s32 %s31, 1
    %s33 = scalar_select %p30, %s31, %s32
    %p36 = pneg %p30
    %p37 = scmp.eq.s32.totalorder %s9, 1
    %p38 = por %p36, %p37
    %p39 = scmp.ne.s32.totalorder %s31, %s34
    %p40 = scmp.eq.s32.totalorder %s9, 0
    %p41 = por %p39, %p40
    %p42 = scmp.ne.s32.totalorder %s31, %s34
    %p43 = scmp.eq.s32.totalorder %s14, 1
    %p44 = por %p42, %p43
    %p45 = scmp.ne.s32.totalorder %s34, %s35
    %p46 = scmp.eq.s32.totalorder %s14, 0
    %p47 = por %p45, %p46
    %p48 = scmp.ne.s32.totalorder %s34, %s35
    %p49 = scmp.eq.s32.totalorder %s15, 1
    %p50 = por %p48, %p49
    %p52 = scmp.ne.s32.totalorder %s35, %s51
    %p53 = scmp.eq.s32.totalorder %s15, 0
    %p54 = por %p52, %p53
    %s56 = sadd.s32 %s55, 1
    %p59 = scmp.eq.s32.totalorder %s9, 1
    %p60 = scmp.ne.s32.totalorder %s55, %s57
    %p61 = scmp.eq.s32.totalorder %s9, 0
    %p62 = por %p60, %p61
    %p63 = scmp.ne.s32.totalorder %s55, %s57
    %p64 = scmp.eq.s32.totalorder %s14, 1
    %p65 = por %p63, %p64
    %p66 = scmp.ne.s32.totalorder %s57, %s58
    %p67 = scmp.eq.s32.totalorder %s14, 0
    %p68 = por %p66, %p67
    %p69 = scmp.ne.s32.totalorder %s57, %s58
    %p70 = scmp.eq.s32.totalorder %s15, 1
    %p71 = por %p69, %p70
    %p73 = scmp.ne.s32.totalorder %s58, %s72
    %p74 = scmp.eq.s32.totalorder %s15, 0
    %p75 = por %p73, %p74
    %s77 = sadd.s32 %s76, 1
    %p80 = scmp.eq.s32.totalorder %s9, 1
    %p81 = scmp.ne.s32.totalorder %s76, %s78
    %p82 = scmp.eq.s32.totalorder %s9, 0
    %p83 = por %p81, %p82
    %p84 = scmp.ne.s32.totalorder %s76, %s78
    %p85 = scmp.eq.s32.totalorder %s14, 1
    %p86 = por %p84, %p85
    %p87 = scmp.ne.s32.totalorder %s78, %s79
    %p88 = scmp.eq.s32.totalorder %s14, 0
    %p89 = por %p87, %p88
    %p90 = scmp.ne.s32.totalorder %s78, %s79
    %p91 = scmp.eq.s32.totalorder %s15, 1
    %p92 = por %p90, %p91
    %p94 = scmp.ne.s32.totalorder %s79, %s93
    %p95 = scmp.eq.s32.totalorder %s15, 0
    %p96 = por %p94, %p95
    %s97 = ssub.s32 %s16, %s28
    %s98 = ssub.s32 %s17, %s24
    %s99 = sor.u32 %s97, %s98
    %p100 = scmp.eq.s32.totalorder %s99, 0
    %s102 = sadd.s32 %s101, 1
    %s103 = scalar_select %p100, %s101, %s102
    %p106 = pneg %p100
    %p107 = scmp.eq.s32.totalorder %s9, 1
    %p108 = por %p106, %p107
    %p109 = scmp.ne.s32.totalorder %s101, %s104
    %p110 = scmp.eq.s32.totalorder %s9, 0
    %p111 = por %p109, %p110
    %p112 = scmp.ne.s32.totalorder %s101, %s104
    %p113 = scmp.eq.s32.totalorder %s14, 1
    %p114 = por %p112, %p113
    %p115 = scmp.ne.s32.totalorder %s104, %s105
    %p116 = scmp.eq.s32.totalorder %s14, 0
    %p117 = por %p115, %p116
    %p118 = scmp.ne.s32.totalorder %s104, %s105
    %p119 = scmp.eq.s32.totalorder %s15, 1
    %p120 = por %p118, %p119
    %p122 = scmp.ne.s32.totalorder %s105, %s121
    %p123 = scmp.eq.s32.totalorder %s15, 0
    %p124 = por %p122, %p123
    %p125 = scmp.le.s32.totalorder 1, %s9
    %p126 = scmp.lt.s32.totalorder %s9, 3
    %p127 = pnand %p125, %p126
    %p128 = pneg %p127
    // Predicated region
    $region9: #{forward.10} parent=5 // pred_check
      _
    $region10: #{forward.10} parent=5 // pred_check_branch
      %130 = sbr.rel (%p127) target = $region12
    $region11: #{forward.10} parent=5 // pred_region
      %s131 = ssub.s32 %s9, 1
      // Predicated region
      $region13: #{forward.10} parent=11 // pred_check
        %p132 = pneg %p68
      $region14: #{forward.10} parent=11 // pred_check_branch
        %134 = sbr.rel (%p132) target = $region16
      $region15: #{forward.10} parent=11 // pred_region
        _
      $region16: #{forward.10} parent=11 // pred_fallthru
        _
      // Predicated region
      $region17: #{forward.10} parent=11 // pred_check
        %p135 = pneg %p89
      $region18: #{forward.10} parent=11 // pred_check_branch
        %137 = sbr.rel (%p135) target = $region20
      $region19: #{forward.10} parent=11 // pred_region
        _
      $region20: #{forward.10} parent=11 // pred_fallthru
        _
    $region12: #{forward.10} parent=5 // pred_fallthru
      _
    %p138 = scmp.lt.s32.totalorder %s9, 2
    // Predicated region
    $region21: #{forward.10} parent=5 // pred_check
      %p139 = pneg %p138
    $region22: #{forward.10} parent=5 // pred_check_branch
      %141 = sbr.rel (%p139) target = $region24
    $region23: #{forward.10} parent=5 // pred_region
      // Predicated region
      $region25: #{forward.10} parent=23 // pred_check
        %p142 = pneg %p41
      $region26: #{forward.10} parent=23 // pred_check_branch
        %144 = sbr.rel (%p142) target = $region28
      $region27: #{forward.10} parent=23 // pred_region
        %p145 = scmp.lt.s32.totalorder %s16, 1
        %s146 = scalar_select %p145, %s16, 1
        %s147 = smul.addr %s146, 30
        %s148 = smul.addr %s147, 4
        %s149 = scalar_lea.vmem %s0, %s148
      $region28: #{forward.10} parent=23 // pred_fallthru
        _
    $region24: #{forward.10} parent=5 // pred_fallthru
      _
    %p150 = scmp.le.s32.totalorder 1, %s9
    %p151 = scmp.lt.s32.totalorder %s9, 3
    %p152 = pnand %p150, %p151
    %p153 = pneg %p152
    // Predicated region
    $region29: #{forward.10} parent=5 // pred_check
      _
    $region30: #{forward.10} parent=5 // pred_check_branch
      %155 = sbr.rel (%p152) target = $region32
    $region31: #{forward.10} parent=5 // pred_region
      %s156 = ssub.s32 %s9, 1
      %p157 = scmp.lt.s32.totalorder %s18, 1
      %s158 = scalar_select %p157, %s18, 1
      %s159 = smul.addr %s158, 30
      %s160 = smul.addr %s159, 4
      %s161 = scalar_lea.vmem %s0, %s160
      %p162 = pneg %p47
      %p163 = pneg %p44
      %p164 = pneg %p68
      %p165 = pneg %p65
      %p166 = pneg %p89
      %p167 = pneg %p86
      %p168 = pneg %p117
      %p169 = pneg %p114
      %s170 = smul.u32 8, %s19
      %p171 = scmp.lt.s32.totalorder %s18, 1
      %s172 = scalar_select %p171, %s18, 1
      %p173 = scmp.lt.s32.totalorder %s170, 7
      %s174 = scalar_select %p173, %s170, 7
      %s175 = smul.addr %s172, 8
      %s176 = sadd.s32 %s174, %s175
      %s177 = smul.addr %s176, 4
      %s178 = scalar_lea.vmem %s3, %s177
      %p179 = scmp.lt.s32.totalorder %s18, 1
      %s180 = scalar_select %p179, %s18, 1
      %s181 = smul.addr %s180, 30
      %s182 = smul.addr %s181, 4
      %s183 = scalar_lea.vmem %s0, %s182
      %s184 = smul.u32 8, %s19
      %p185 = scmp.lt.s32.totalorder %s18, 1
      %s186 = scalar_select %p185, %s18, 1
      %p187 = scmp.lt.s32.totalorder %s184, 7
      %s188 = scalar_select %p187, %s184, 7
      %s189 = smul.addr %s186, 8
      %s190 = sadd.s32 %s188, %s189
      %s191 = smul.addr %s190, 4
      %s192 = scalar_lea.vmem %s3, %s191
      %s193 = smul.u32 8, %s19
      %s195 = smul.u32 %s19, 8
      %s196 = smul.u32 %s195, 3
      %s197 = smul.addr %s196, 4
      %s198 = scalar_lea.vmem %s183, %s197
      %v199 = vld [vmem:[%s198] sm:$0xf]
      %v200 = vld [vmem:[%s198 + $0x4] sm:$0xf]
      %v201 = vld [vmem:[%s198 + $0xc] sm:$0xf]
      %v202 = vld [vmem:[%s198 + $0x10] sm:$0xf]
      %v203 = vld [vmem:[%s198 + $0x18] sm:$0xf]
      %v204 = vld [vmem:[%s198 + $0x1c] sm:$0xf]
      %v205 = vld [vmem:[%s198 + $0x24] sm:$0xf]
      %v206 = vld [vmem:[%s198 + $0x28] sm:$0xf]
      %v207 = vld [vmem:[%s198 + $0x30] sm:$0xf]
      %v208 = vld [vmem:[%s198 + $0x34] sm:$0xf]
      %v209 = vld [vmem:[%s198 + $0x3c] sm:$0xf]
      %v210 = vld [vmem:[%s198 + $0x40] sm:$0xf]
      %v211 = vld [vmem:[%s198 + $0x48] sm:$0xf]
      %v212 = vld [vmem:[%s198 + $0x4c] sm:$0xf]
      %v213 = vld [vmem:[%s198 + $0x54] sm:$0xf]
      %v214 = vld [vmem:[%s198 + $0x58] sm:$0xf]
      %v215 = vld [vmem:[%s1] sm:$0xf]
      %v216 = vld [vmem:[%s198 + $0x8] sm:$0x1]
      %v217 = vld [vmem:[%s198 + $0x14] sm:$0x1]
      %v218 = vld [vmem:[%s198 + $0x20] sm:$0x1]
      %v219 = vld [vmem:[%s198 + $0x2c] sm:$0x1]
      %v220 = vld [vmem:[%s198 + $0x38] sm:$0x1]
      %v221 = vld [vmem:[%s198 + $0x44] sm:$0x1]
      %v222 = vld [vmem:[%s198 + $0x50] sm:$0x1]
      %v223 = vld [vmem:[%s198 + $0x5c] sm:$0x1]
      %vm224 = vsmask.f32 3328
      %vm225 = vsmask.f32 7440
      %vm226 = vmor %vm224, %vm225
      %v228 = vshrl.u32 %v199, 16
      %v230 = vrot.slane %v228, 4
      %v231 = vshll.u32 %v199, 16
      %v233 = vrot.slane %v231, 5
      %v234 = vor.u32 %v230, %v233
      %v235 = vrot.slane %v234, 4
      %v237 = vshll.u32 %v200, 16
      %v239 = vrot.slane %v237, 5
      %v240 = vsel %vm226, %v235, %v239
      %v241 = vshrl.u32 %v200, 16
      %v243 = vrot.slane %v241, 4
      %v244 = vor.u32 %v243, %v239
      %v245 = vrot.slane %v244, 4
      %v247 = vshll.u32 %v216, 16
      %v249 = vrot.slane %v247, 5
      %v250 = vsel %vm226, %v245, %v249
      %v252 = vshrl.u32 %v201, 16
      %v254 = vrot.slane %v252, 4
      %v255 = vshll.u32 %v201, 16
      %v257 = vrot.slane %v255, 5
      %v258 = vor.u32 %v254, %v257
      %v259 = vrot.slane %v258, 4
      %v261 = vshll.u32 %v202, 16
      %v263 = vrot.slane %v261, 5
      %v264 = vsel %vm226, %v259, %v263
      %v265 = vshrl.u32 %v202, 16
      %v267 = vrot.slane %v265, 4
      %v268 = vor.u32 %v267, %v263
      %v269 = vrot.slane %v268, 4
      %v271 = vshll.u32 %v217, 16
      %v273 = vrot.slane %v271, 5
      %v274 = vsel %vm226, %v269, %v273
      %v276 = vshrl.u32 %v203, 16
      %v278 = vrot.slane %v276, 4
      %v279 = vshll.u32 %v203, 16
      %v281 = vrot.slane %v279, 5
      %v282 = vor.u32 %v278, %v281
      %v283 = vrot.slane %v282, 4
      %v285 = vshll.u32 %v204, 16
      %v287 = vrot.slane %v285, 5
      %v288 = vsel %vm226, %v283, %v287
      %v289 = vshrl.u32 %v204, 16
      %v291 = vrot.slane %v289, 4
      %v292 = vor.u32 %v291, %v287
      %v293 = vrot.slane %v292, 4
      %v295 = vshll.u32 %v218, 16
      %v297 = vrot.slane %v295, 5
      %v298 = vsel %vm226, %v293, %v297
      %v300 = vshrl.u32 %v205, 16
      %v302 = vrot.slane %v300, 4
      %v303 = vshll.u32 %v205, 16
      %v305 = vrot.slane %v303, 5
      %v306 = vor.u32 %v302, %v305
      %v307 = vrot.slane %v306, 4
      %v309 = vshll.u32 %v206, 16
      %v311 = vrot.slane %v309, 5
      %v312 = vsel %vm226, %v307, %v311
      %v313 = vshrl.u32 %v206, 16
      %v315 = vrot.slane %v313, 4
      %v316 = vor.u32 %v315, %v311
      %v317 = vrot.slane %v316, 4
      %v319 = vshll.u32 %v219, 16
      %v321 = vrot.slane %v319, 5
      %v322 = vsel %vm226, %v317, %v321
      %v324 = vshrl.u32 %v207, 16
      %v326 = vrot.slane %v324, 4
      %v327 = vshll.u32 %v207, 16
      %v329 = vrot.slane %v327, 5
      %v330 = vor.u32 %v326, %v329
      %v331 = vrot.slane %v330, 4
      %v333 = vshll.u32 %v208, 16
      %v335 = vrot.slane %v333, 5
      %v336 = vsel %vm226, %v331, %v335
      %v337 = vshrl.u32 %v208, 16
      %v339 = vrot.slane %v337, 4
      %v340 = vor.u32 %v339, %v335
      %v341 = vrot.slane %v340, 4
      %v343 = vshll.u32 %v220, 16
      %v345 = vrot.slane %v343, 5
      %v346 = vsel %vm226, %v341, %v345
      %v348 = vshrl.u32 %v209, 16
      %v350 = vrot.slane %v348, 4
      %v351 = vshll.u32 %v209, 16
      %v353 = vrot.slane %v351, 5
      %v354 = vor.u32 %v350, %v353
      %v355 = vrot.slane %v354, 4
      %v357 = vshll.u32 %v210, 16
      %v359 = vrot.slane %v357, 5
      %v360 = vsel %vm226, %v355, %v359
      %v361 = vshrl.u32 %v210, 16
      %v363 = vrot.slane %v361, 4
      %v364 = vor.u32 %v363, %v359
      %v365 = vrot.slane %v364, 4
      %v367 = vshll.u32 %v221, 16
      %v369 = vrot.slane %v367, 5
      %v370 = vsel %vm226, %v365, %v369
      %v372 = vshrl.u32 %v211, 16
      %v374 = vrot.slane %v372, 4
      %v375 = vshll.u32 %v211, 16
      %v377 = vrot.slane %v375, 5
      %v378 = vor.u32 %v374, %v377
      %v379 = vrot.slane %v378, 4
      %v381 = vshll.u32 %v212, 16
      %v383 = vrot.slane %v381, 5
      %v384 = vsel %vm226, %v379, %v383
      %v385 = vshrl.u32 %v212, 16
      %v387 = vrot.slane %v385, 4
      %v388 = vor.u32 %v387, %v383
      %v389 = vrot.slane %v388, 4
      %v391 = vshll.u32 %v222, 16
      %v393 = vrot.slane %v391, 5
      %v394 = vsel %vm226, %v389, %v393
      %v396 = vshrl.u32 %v213, 16
      %v398 = vrot.slane %v396, 4
      %v399 = vshll.u32 %v213, 16
      %v401 = vrot.slane %v399, 5
      %v402 = vor.u32 %v398, %v401
      %v403 = vrot.slane %v402, 4
      %v405 = vshll.u32 %v214, 16
      %v407 = vrot.slane %v405, 5
      %v408 = vsel %vm226, %v403, %v407
      %v409 = vshrl.u32 %v214, 16
      %v411 = vrot.slane %v409, 4
      %v412 = vor.u32 %v411, %v407
      %v413 = vrot.slane %v412, 4
      %v415 = vshll.u32 %v223, 16
      %v417 = vrot.slane %v415, 5
      %v418 = vsel %vm226, %v413, %v417
      %s419 = scalar_lea.vmem %s1, 4
      %v420 = vld [vmem:[%s419] sm:$0xf]
      %v421 = vunpack.c.l.b16 %v240
      %v422 = vunpack.c.l.b16 %v250
      %v423 = vunpack.c.l.b16 %v264
      %v424 = vunpack.c.l.b16 %v274
      %v425 = vunpack.c.l.b16 %v288
      %v426 = vunpack.c.l.b16 %v298
      %v427 = vunpack.c.l.b16 %v312
      %v428 = vunpack.c.l.b16 %v322
      %v429 = vunpack.c.l.b16 %v336
      %v430 = vunpack.c.l.b16 %v346
      %v431 = vunpack.c.l.b16 %v360
      %v432 = vunpack.c.l.b16 %v370
      %v433 = vunpack.c.l.b16 %v384
      %v434 = vunpack.c.l.b16 %v394
      %v435 = vunpack.c.l.b16 %v408
      %v436 = vunpack.c.l.b16 %v418
      %v437 = vpack.c.b16 %v422, %v421
      %v438 = vpack.c.b16 %v424, %v423
      %v439 = vpack.c.b16 %v426, %v425
      %v440 = vpack.c.b16 %v428, %v427
      %v441 = vpack.c.b16 %v430, %v429
      %v442 = vpack.c.b16 %v432, %v431
      %v443 = vpack.c.b16 %v434, %v433
      %v444 = vpack.c.b16 %v436, %v435
      %vm445 = vcmask 64512
      %v447 = vsel %vm445, %v437, 0
      %v450 = vsel %vm445, %v438, 0
      %v453 = vsel %vm445, %v439, 0
      %v456 = vsel %vm445, %v440, 0
      %v459 = vsel %vm445, %v441, 0
      %v462 = vsel %vm445, %v442, 0
      %v465 = vsel %vm445, %v443, 0
      %v468 = vsel %vm445, %v444, 0
      %vm470 = vcmask 1043456
      %v472 = vsel %vm470, %v420, 0
      %474 = vmatprep.subr.bf16.mxu0 0
      %475 = vmatpush1.bf16.msra.mxu0 0
      %476 = vmatprep.subr.bf16.mxu0 0
      %477 = vmatpush1.bf16.msra.mxu0 0
      %478 = vmatprep.subr.bf16.mxu0 0
      %479 = vmatpush1.bf16.msra.mxu0 0
      %480 = vmatprep.subr.bf16.mxu0 0
      %481 = vmatpush1.bf16.msra.mxu0 0
      %482 = vmatprep.subr.bf16.mxu0 0
      %483 = vmatpush1.bf16.msra.mxu0 0
      %484 = vmatprep.subr.bf16.mxu0 0
      %485 = vmatpush1.bf16.msra.mxu0 0
      %486 = vmatprep.subr.bf16.mxu0 0
      %487 = vmatpush1.bf16.msra.mxu0 0
      %488 = vmatprep.subr.bf16.mxu0 0
      %489 = vmatpush1.bf16.msra.mxu0 %v472
      %490 = vmatprep.subr.bf16.mxu0 0
      %491 = vmatpush2.bf16.msra.mxu0 0
      %492 = vmatprep.subr.bf16.mxu0 0
      %493 = vmatpush2.bf16.msra.mxu0 0
      %494 = vmatprep.subr.bf16.mxu0 0
      %495 = vmatpush2.bf16.msra.mxu0 0
      %496 = vmatprep.subr.bf16.mxu0 0
      %497 = vmatpush2.bf16.msra.mxu0 0
      %498 = vmatprep.subr.bf16.mxu0 0
      %499 = vmatpush2.bf16.msra.mxu0 0
      %500 = vmatprep.subr.bf16.mxu0 0
      %501 = vmatpush2.bf16.msra.mxu0 0
      %502 = vmatprep.subr.bf16.mxu0 0
      %503 = vmatpush2.bf16.msra.mxu0 0
      %504 = vmatprep.subr.bf16.mxu0 0
      %505 = vmatpush2.bf16.msra.mxu0 0
      %506 = vmatprep.mubr.bf16.mxu0 0
      %507 = vmatmul.mubr.bf16.gmra.mxu0 %v447
      %v508 = vpop.f32.mrf.mxu0
      %v509 = vadd.f32 0.0, %v508
      %v510 = vpop.f32.mrf.mxu0
      %v511 = vpop.f32.mrf.mxu0
      %v512 = vpop.f32.mrf.mxu0
      %513 = vmatprep.mubr.bf16.mxu0 0
      %514 = vmatmul.mubr.bf16.gmra.mxu0 %v450
      %v515 = vpop.f32.mrf.mxu0
      %v516 = vadd.f32 0.0, %v515
      %v517 = vpop.f32.mrf.mxu0
      %v518 = vpop.f32.mrf.mxu0
      %v519 = vpop.f32.mrf.mxu0
      %520 = vmatprep.mubr.bf16.mxu0 0
      %521 = vmatmul.mubr.bf16.gmra.mxu0 %v453
      %v522 = vpop.f32.mrf.mxu0
      %v523 = vadd.f32 0.0, %v522
      %v524 = vpop.f32.mrf.mxu0
      %v525 = vpop.f32.mrf.mxu0
      %v526 = vpop.f32.mrf.mxu0
      %527 = vmatprep.mubr.bf16.mxu0 0
      %528 = vmatmul.mubr.bf16.gmra.mxu0 %v456
      %v529 = vpop.f32.mrf.mxu0
      %v530 = vadd.f32 0.0, %v529
      %v531 = vpop.f32.mrf.mxu0
      %v532 = vpop.f32.mrf.mxu0
      %v533 = vpop.f32.mrf.mxu0
      %534 = vmatprep.mubr.bf16.mxu0 0
      %535 = vmatmul.mubr.bf16.gmra.mxu0 %v459
      %v536 = vpop.f32.mrf.mxu0
      %v537 = vadd.f32 0.0, %v536
      %v538 = vpop.f32.mrf.mxu0
      %v539 = vpop.f32.mrf.mxu0
      %v540 = vpop.f32.mrf.mxu0
      %541 = vmatprep.mubr.bf16.mxu0 0
      %542 = vmatmul.mubr.bf16.gmra.mxu0 %v462
      %v543 = vpop.f32.mrf.mxu0
      %v544 = vadd.f32 0.0, %v543
      %v545 = vpop.f32.mrf.mxu0
      %v546 = vpop.f32.mrf.mxu0
      %v547 = vpop.f32.mrf.mxu0
      %548 = vmatprep.mubr.bf16.mxu0 0
      %549 = vmatmul.mubr.bf16.gmra.mxu0 %v465
      %v550 = vpop.f32.mrf.mxu0
      %v551 = vadd.f32 0.0, %v550
      %v552 = vpop.f32.mrf.mxu0
      %v553 = vpop.f32.mrf.mxu0
      %v554 = vpop.f32.mrf.mxu0
      %555 = vmatprep.mubr.bf16.mxu0 0
      %556 = vmatmul.mubr.bf16.gmra.mxu0 %v468
      %v557 = vpop.f32.mrf.mxu0
      %v558 = vadd.f32 0.0, %v557
      %v559 = vpop.f32.mrf.mxu0
      %v560 = vpop.f32.mrf.mxu0
      %v561 = vpop.f32.mrf.mxu0
      %562 = vdwg.mxu0
      %v579 = vunpack.c.l.b16 %v199
      %v580 = vunpack.c.l.b16 %v200
      %v581 = vunpack.c.l.b16 %v201
      %v582 = vunpack.c.l.b16 %v202
      %v583 = vunpack.c.l.b16 %v203
      %v584 = vunpack.c.l.b16 %v204
      %v585 = vunpack.c.l.b16 %v205
      %v586 = vunpack.c.l.b16 %v206
      %v587 = vunpack.c.l.b16 %v207
      %v588 = vunpack.c.l.b16 %v208
      %v589 = vunpack.c.l.b16 %v209
      %v590 = vunpack.c.l.b16 %v210
      %v591 = vunpack.c.l.b16 %v211
      %v592 = vunpack.c.l.b16 %v212
      %v593 = vunpack.c.l.b16 %v213
      %v594 = vunpack.c.l.b16 %v214
      %v595 = vpack.c.b16 %v580, %v579
      %v596 = vpack.c.b16 %v582, %v581
      %v597 = vpack.c.b16 %v584, %v583
      %v598 = vpack.c.b16 %v586, %v585
      %v599 = vpack.c.b16 %v588, %v587
      %v600 = vpack.c.b16 %v590, %v589
      %v601 = vpack.c.b16 %v592, %v591
      %v602 = vpack.c.b16 %v594, %v593
      %v604 = vsel %vm445, %v595, 0
      %v607 = vsel %vm445, %v596, 0
      %v610 = vsel %vm445, %v597, 0
      %v613 = vsel %vm445, %v598, 0
      %v616 = vsel %vm445, %v599, 0
      %v619 = vsel %vm445, %v600, 0
      %v622 = vsel %vm445, %v601, 0
      %v625 = vsel %vm445, %v602, 0
      %v628 = vsel %vm470, %v215, 0
      %630 = vmatprep.subr.bf16.mxu0 0
      %631 = vmatpush1.bf16.msra.mxu0 0
      %632 = vmatprep.subr.bf16.mxu0 0
      %633 = vmatpush1.bf16.msra.mxu0 0
      %634 = vmatprep.subr.bf16.mxu0 0
      %635 = vmatpush1.bf16.msra.mxu0 0
      %636 = vmatprep.subr.bf16.mxu0 0
      %637 = vmatpush1.bf16.msra.mxu0 0
      %638 = vmatprep.subr.bf16.mxu0 0
      %639 = vmatpush1.bf16.msra.mxu0 0
      %640 = vmatprep.subr.bf16.mxu0 0
      %641 = vmatpush1.bf16.msra.mxu0 0
      %642 = vmatprep.subr.bf16.mxu0 0
      %643 = vmatpush1.bf16.msra.mxu0 0
      %644 = vmatprep.subr.bf16.mxu0 0
      %645 = vmatpush1.bf16.msra.mxu0 %v628
      %646 = vmatprep.subr.bf16.mxu0 0
      %647 = vmatpush2.bf16.msra.mxu0 0
      %648 = vmatprep.subr.bf16.mxu0 0
      %649 = vmatpush2.bf16.msra.mxu0 0
      %650 = vmatprep.subr.bf16.mxu0 0
      %651 = vmatpush2.bf16.msra.mxu0 0
      %652 = vmatprep.subr.bf16.mxu0 0
      %653 = vmatpush2.bf16.msra.mxu0 0
      %654 = vmatprep.subr.bf16.mxu0 0
      %655 = vmatpush2.bf16.msra.mxu0 0
      %656 = vmatprep.subr.bf16.mxu0 0
      %657 = vmatpush2.bf16.msra.mxu0 0
      %658 = vmatprep.subr.bf16.mxu0 0
      %659 = vmatpush2.bf16.msra.mxu0 0
      %660 = vmatprep.subr.bf16.mxu0 0
      %661 = vmatpush2.bf16.msra.mxu0 0
      %662 = vmatprep.mubr.bf16.mxu0 0
      %663 = vmatmul.mubr.bf16.gmra.mxu0 %v604
      %v664 = vpop.f32.mrf.mxu0
      %v665 = vadd.f32 %v509, %v664
      %v666 = vpop.f32.mrf.mxu0
      %v667 = vpop.f32.mrf.mxu0
      %v668 = vpop.f32.mrf.mxu0
      %669 = vmatprep.mubr.bf16.mxu0 0
      %670 = vmatmul.mubr.bf16.gmra.mxu0 %v607
      %v671 = vpop.f32.mrf.mxu0
      %v672 = vadd.f32 %v516, %v671
      %v673 = vpop.f32.mrf.mxu0
      %v674 = vpop.f32.mrf.mxu0
      %v675 = vpop.f32.mrf.mxu0
      %676 = vmatprep.mubr.bf16.mxu0 0
      %677 = vmatmul.mubr.bf16.gmra.mxu0 %v610
      %v678 = vpop.f32.mrf.mxu0
      %v679 = vadd.f32 %v523, %v678
      %v680 = vpop.f32.mrf.mxu0
      %v681 = vpop.f32.mrf.mxu0
      %v682 = vpop.f32.mrf.mxu0
      %683 = vmatprep.mubr.bf16.mxu0 0
      %684 = vmatmul.mubr.bf16.gmra.mxu0 %v613
      %v685 = vpop.f32.mrf.mxu0
      %v686 = vadd.f32 %v530, %v685
      %v687 = vpop.f32.mrf.mxu0
      %v688 = vpop.f32.mrf.mxu0
      %v689 = vpop.f32.mrf.mxu0
      %690 = vmatprep.mubr.bf16.mxu0 0
      %691 = vmatmul.mubr.bf16.gmra.mxu0 %v616
      %v692 = vpop.f32.mrf.mxu0
      %v693 = vadd.f32 %v537, %v692
      %v694 = vpop.f32.mrf.mxu0
      %v695 = vpop.f32.mrf.mxu0
      %v696 = vpop.f32.mrf.mxu0
      %697 = vmatprep.mubr.bf16.mxu0 0
      %698 = vmatmul.mubr.bf16.gmra.mxu0 %v619
      %v699 = vpop.f32.mrf.mxu0
      %v700 = vadd.f32 %v544, %v699
      %v701 = vpop.f32.mrf.mxu0
      %v702 = vpop.f32.mrf.mxu0
      %v703 = vpop.f32.mrf.mxu0
      %704 = vmatprep.mubr.bf16.mxu0 0
      %705 = vmatmul.mubr.bf16.gmra.mxu0 %v622
      %v706 = vpop.f32.mrf.mxu0
      %v707 = vadd.f32 %v551, %v706
      %v708 = vpop.f32.mrf.mxu0
      %v709 = vpop.f32.mrf.mxu0
      %v710 = vpop.f32.mrf.mxu0
      %711 = vmatprep.mubr.bf16.mxu0 0
      %712 = vmatmul.mubr.bf16.gmra.mxu0 %v625
      %v713 = vpop.f32.mrf.mxu0
      %v714 = vadd.f32 %v558, %v713
      %v715 = vpop.f32.mrf.mxu0
      %v716 = vpop.f32.mrf.mxu0
      %v717 = vpop.f32.mrf.mxu0
      %718 = vdwg.mxu0
      %v719 = vld [vmem:[%s198] sm:$0xe]
      %v720 = vld [vmem:[%s198 + $0xc] sm:$0xe]
      %v721 = vld [vmem:[%s198 + $0x18] sm:$0xe]
      %v722 = vld [vmem:[%s198 + $0x24] sm:$0xe]
      %v723 = vld [vmem:[%s198 + $0x30] sm:$0xe]
      %v724 = vld [vmem:[%s198 + $0x3c] sm:$0xe]
      %v725 = vld [vmem:[%s198 + $0x48] sm:$0xe]
      %v726 = vld [vmem:[%s198 + $0x54] sm:$0xe]
      %vm743 = vcmask 1042432
      %vm744 = vcmask 1046532
      %vm745 = vmor %vm743, %vm744
      %v746 = vrot.slane %v719, 5
      %v747 = vrot.slane %v746, 4
      %v748 = vrot.slane %v200, 5
      %v749 = vsel %vm745, %v747, %v748
      %v750 = vrot.slane %v748, 4
      %v751 = vrot.slane %v216, 5
      %v752 = vsel %vm745, %v750, %v751
      %v753 = vrot.slane %v720, 5
      %v754 = vrot.slane %v753, 4
      %v755 = vrot.slane %v202, 5
      %v756 = vsel %vm745, %v754, %v755
      %v757 = vrot.slane %v755, 4
      %v758 = vrot.slane %v217, 5
      %v759 = vsel %vm745, %v757, %v758
      %v760 = vrot.slane %v721, 5
      %v761 = vrot.slane %v760, 4
      %v762 = vrot.slane %v204, 5
      %v763 = vsel %vm745, %v761, %v762
      %v764 = vrot.slane %v762, 4
      %v765 = vrot.slane %v218, 5
      %v766 = vsel %vm745, %v764, %v765
      %v767 = vrot.slane %v722, 5
      %v768 = vrot.slane %v767, 4
      %v769 = vrot.slane %v206, 5
      %v770 = vsel %vm745, %v768, %v769
      %v771 = vrot.slane %v769, 4
      %v772 = vrot.slane %v219, 5
      %v773 = vsel %vm745, %v771, %v772
      %v774 = vrot.slane %v723, 5
      %v775 = vrot.slane %v774, 4
      %v776 = vrot.slane %v208, 5
      %v777 = vsel %vm745, %v775, %v776
      %v778 = vrot.slane %v776, 4
      %v779 = vrot.slane %v220, 5
      %v780 = vsel %vm745, %v778, %v779
      %v781 = vrot.slane %v724, 5
      %v782 = vrot.slane %v781, 4
      %v783 = vrot.slane %v210, 5
      %v784 = vsel %vm745, %v782, %v783
      %v785 = vrot.slane %v783, 4
      %v786 = vrot.slane %v221, 5
      %v787 = vsel %vm745, %v785, %v786
      %v788 = vrot.slane %v725, 5
      %v789 = vrot.slane %v788, 4
      %v790 = vrot.slane %v212, 5
      %v791 = vsel %vm745, %v789, %v790
      %v792 = vrot.slane %v790, 4
      %v793 = vrot.slane %v222, 5
      %v794 = vsel %vm745, %v792, %v793
      %v795 = vrot.slane %v726, 5
      %v796 = vrot.slane %v795, 4
      %v797 = vrot.slane %v214, 5
      %v798 = vsel %vm745, %v796, %v797
      %v799 = vrot.slane %v797, 4
      %v800 = vrot.slane %v223, 5
      %v801 = vsel %vm745, %v799, %v800
      %s802 = scalar_lea.vmem %s1, 8
      %v803 = vld [vmem:[%s802] sm:$0xf]
      %v804 = vunpack.c.l.b16 %v749
      %v805 = vunpack.c.l.b16 %v752
      %v806 = vunpack.c.l.b16 %v756
      %v807 = vunpack.c.l.b16 %v759
      %v808 = vunpack.c.l.b16 %v763
      %v809 = vunpack.c.l.b16 %v766
      %v810 = vunpack.c.l.b16 %v770
      %v811 = vunpack.c.l.b16 %v773
      %v812 = vunpack.c.l.b16 %v777
      %v813 = vunpack.c.l.b16 %v780
      %v814 = vunpack.c.l.b16 %v784
      %v815 = vunpack.c.l.b16 %v787
      %v816 = vunpack.c.l.b16 %v791
      %v817 = vunpack.c.l.b16 %v794
      %v818 = vunpack.c.l.b16 %v798
      %v819 = vunpack.c.l.b16 %v801
      %v820 = vpack.c.b16 %v805, %v804
      %v821 = vpack.c.b16 %v807, %v806
      %v822 = vpack.c.b16 %v809, %v808
      %v823 = vpack.c.b16 %v811, %v810
      %v824 = vpack.c.b16 %v813, %v812
      %v825 = vpack.c.b16 %v815, %v814
      %v826 = vpack.c.b16 %v817, %v816
      %v827 = vpack.c.b16 %v819, %v818
      %v829 = vsel %vm445, %v820, 0
      %v832 = vsel %vm445, %v821, 0
      %v835 = vsel %vm445, %v822, 0
      %v838 = vsel %vm445, %v823, 0
      %v841 = vsel %vm445, %v824, 0
      %v844 = vsel %vm445, %v825, 0
      %v847 = vsel %vm445, %v826, 0
      %v850 = vsel %vm445, %v827, 0
      %v853 = vsel %vm470, %v803, 0
      %855 = vmatprep.subr.bf16.mxu0 0
      %856 = vmatpush1.bf16.msra.mxu0 0
      %857 = vmatprep.subr.bf16.mxu0 0
      %858 = vmatpush1.bf16.msra.mxu0 0
      %859 = vmatprep.subr.bf16.mxu0 0
      %860 = vmatpush1.bf16.msra.mxu0 0
      %861 = vmatprep.subr.bf16.mxu0 0
      %862 = vmatpush1.bf16.msra.mxu0 0
      %863 = vmatprep.subr.bf16.mxu0 0
      %864 = vmatpush1.bf16.msra.mxu0 0
      %865 = vmatprep.subr.bf16.mxu0 0
      %866 = vmatpush1.bf16.msra.mxu0 0
      %867 = vmatprep.subr.bf16.mxu0 0
      %868 = vmatpush1.bf16.msra.mxu0 0
      %869 = vmatprep.subr.bf16.mxu0 0
      %870 = vmatpush1.bf16.msra.mxu0 %v853
      %871 = vmatprep.subr.bf16.mxu0 0
      %872 = vmatpush2.bf16.msra.mxu0 0
      %873 = vmatprep.subr.bf16.mxu0 0
      %874 = vmatpush2.bf16.msra.mxu0 0
      %875 = vmatprep.subr.bf16.mxu0 0
      %876 = vmatpush2.bf16.msra.mxu0 0
      %877 = vmatprep.subr.bf16.mxu0 0
      %878 = vmatpush2.bf16.msra.mxu0 0
      %879 = vmatprep.subr.bf16.mxu0 0
      %880 = vmatpush2.bf16.msra.mxu0 0
      %881 = vmatprep.subr.bf16.mxu0 0
      %882 = vmatpush2.bf16.msra.mxu0 0
      %883 = vmatprep.subr.bf16.mxu0 0
      %884 = vmatpush2.bf16.msra.mxu0 0
      %885 = vmatprep.subr.bf16.mxu0 0
      %886 = vmatpush2.bf16.msra.mxu0 0
      %887 = vmatprep.mubr.bf16.mxu0 0
      %888 = vmatmul.mubr.bf16.gmra.mxu0 %v829
      %v889 = vpop.f32.mrf.mxu0
      %v890 = vadd.f32 0.0, %v889
      %v891 = vpop.f32.mrf.mxu0
      %v892 = vpop.f32.mrf.mxu0
      %v893 = vpop.f32.mrf.mxu0
      %894 = vmatprep.mubr.bf16.mxu0 0
      %895 = vmatmul.mubr.bf16.gmra.mxu0 %v832
      %v896 = vpop.f32.mrf.mxu0
      %v897 = vadd.f32 0.0, %v896
      %v898 = vpop.f32.mrf.mxu0
      %v899 = vpop.f32.mrf.mxu0
      %v900 = vpop.f32.mrf.mxu0
      %901 = vmatprep.mubr.bf16.mxu0 0
      %902 = vmatmul.mubr.bf16.gmra.mxu0 %v835
      %v903 = vpop.f32.mrf.mxu0
      %v904 = vadd.f32 0.0, %v903
      %v905 = vpop.f32.mrf.mxu0
      %v906 = vpop.f32.mrf.mxu0
      %v907 = vpop.f32.mrf.mxu0
      %908 = vmatprep.mubr.bf16.mxu0 0
      %909 = vmatmul.mubr.bf16.gmra.mxu0 %v838
      %v910 = vpop.f32.mrf.mxu0
      %v911 = vadd.f32 0.0, %v910
      %v912 = vpop.f32.mrf.mxu0
      %v913 = vpop.f32.mrf.mxu0
      %v914 = vpop.f32.mrf.mxu0
      %915 = vmatprep.mubr.bf16.mxu0 0
      %916 = vmatmul.mubr.bf16.gmra.mxu0 %v841
      %v917 = vpop.f32.mrf.mxu0
      %v918 = vadd.f32 0.0, %v917
      %v919 = vpop.f32.mrf.mxu0
      %v920 = vpop.f32.mrf.mxu0
      %v921 = vpop.f32.mrf.mxu0
      %922 = vmatprep.mubr.bf16.mxu0 0
      %923 = vmatmul.mubr.bf16.gmra.mxu0 %v844
      %v924 = vpop.f32.mrf.mxu0
      %v925 = vadd.f32 0.0, %v924
      %v926 = vpop.f32.mrf.mxu0
      %v927 = vpop.f32.mrf.mxu0
      %v928 = vpop.f32.mrf.mxu0
      %929 = vmatprep.mubr.bf16.mxu0 0
      %930 = vmatmul.mubr.bf16.gmra.mxu0 %v847
      %v931 = vpop.f32.mrf.mxu0
      %v932 = vadd.f32 0.0, %v931
      %v933 = vpop.f32.mrf.mxu0
      %v934 = vpop.f32.mrf.mxu0
      %v935 = vpop.f32.mrf.mxu0
      %936 = vmatprep.mubr.bf16.mxu0 0
      %937 = vmatmul.mubr.bf16.gmra.mxu0 %v850
      %v938 = vpop.f32.mrf.mxu0
      %v939 = vadd.f32 0.0, %v938
      %v940 = vpop.f32.mrf.mxu0
      %v941 = vpop.f32.mrf.mxu0
      %v942 = vpop.f32.mrf.mxu0
      %943 = vdwg.mxu0
      %v944 = vadd.f32 %v665, %v890
      %v945 = vadd.f32 %v672, %v897
      %v946 = vadd.f32 %v679, %v904
      %v947 = vadd.f32 %v686, %v911
      %v948 = vadd.f32 %v693, %v918
      %v949 = vadd.f32 %v700, %v925
      %v950 = vadd.f32 %v707, %v932
      %v951 = vadd.f32 %v714, %v939
      %s952 = sadd.s32 %s195, 1
      %s953 = smul.u32 %s952, 3
      %s954 = smul.addr %s953, 4
      %s955 = scalar_lea.vmem %s183, %s954
      %v956 = vld [vmem:[%s955] sm:$0xf]
      %v957 = vld [vmem:[%s955 + $0x4] sm:$0xf]
      %v958 = vld [vmem:[%s955 + $0xc] sm:$0xf]
      %v959 = vld [vmem:[%s955 + $0x10] sm:$0xf]
      %v960 = vld [vmem:[%s955 + $0x18] sm:$0xf]
      %v961 = vld [vmem:[%s955 + $0x1c] sm:$0xf]
      %v962 = vld [vmem:[%s955 + $0x24] sm:$0xf]
      %v963 = vld [vmem:[%s955 + $0x28] sm:$0xf]
      %v964 = vld [vmem:[%s955 + $0x30] sm:$0xf]
      %v965 = vld [vmem:[%s955 + $0x34] sm:$0xf]
      %v966 = vld [vmem:[%s955 + $0x3c] sm:$0xf]
      %v967 = vld [vmem:[%s955 + $0x40] sm:$0xf]
      %v968 = vld [vmem:[%s955 + $0x48] sm:$0xf]
      %v969 = vld [vmem:[%s955 + $0x4c] sm:$0xf]
      %v970 = vld [vmem:[%s955 + $0x54] sm:$0xf]
      %v971 = vld [vmem:[%s955 + $0x58] sm:$0xf]
      %s972 = scalar_lea.vmem %s1, 12
      %v973 = vld [vmem:[%s972] sm:$0xf]
      %v990 = vunpack.c.l.b16 %v956
      %v991 = vunpack.c.l.b16 %v957
      %v992 = vunpack.c.l.b16 %v958
      %v993 = vunpack.c.l.b16 %v959
      %v994 = vunpack.c.l.b16 %v960
      %v995 = vunpack.c.l.b16 %v961
      %v996 = vunpack.c.l.b16 %v962
      %v997 = vunpack.c.l.b16 %v963
      %v998 = vunpack.c.l.b16 %v964
      %v999 = vunpack.c.l.b16 %v965
      %v1000 = vunpack.c.l.b16 %v966
      %v1001 = vunpack.c.l.b16 %v967
      %v1002 = vunpack.c.l.b16 %v968
      %v1003 = vunpack.c.l.b16 %v969
      %v1004 = vunpack.c.l.b16 %v970
      %v1005 = vunpack.c.l.b16 %v971
      %v1006 = vpack.c.b16 %v991, %v990
      %v1007 = vpack.c.b16 %v993, %v992
      %v1008 = vpack.c.b16 %v995, %v994
      %v1009 = vpack.c.b16 %v997, %v996
      %v1010 = vpack.c.b16 %v999, %v998
      %v1011 = vpack.c.b16 %v1001, %v1000
      %v1012 = vpack.c.b16 %v1003, %v1002
      %v1013 = vpack.c.b16 %v1005, %v1004
      %v1015 = vsel %vm445, %v1006, 0
      %v1018 = vsel %vm445, %v1007, 0
      %v1021 = vsel %vm445, %v1008, 0
      %v1024 = vsel %vm445, %v1009, 0
      %v1027 = vsel %vm445, %v1010, 0
      %v1030 = vsel %vm445, %v1011, 0
      %v1033 = vsel %vm445, %v1012, 0
      %v1036 = vsel %vm445, %v1013, 0
      %v1039 = vsel %vm470, %v973, 0
      %1041 = vmatprep.subr.bf16.mxu0 0
      %1042 = vmatpush1.bf16.msra.mxu0 0
      %1043 = vmatprep.subr.bf16.mxu0 0
      %1044 = vmatpush1.bf16.msra.mxu0 0
      %1045 = vmatprep.subr.bf16.mxu0 0
      %1046 = vmatpush1.bf16.msra.mxu0 0
      %1047 = vmatprep.subr.bf16.mxu0 0
      %1048 = vmatpush1.bf16.msra.mxu0 0
      %1049 = vmatprep.subr.bf16.mxu0 0
      %1050 = vmatpush1.bf16.msra.mxu0 0
      %1051 = vmatprep.subr.bf16.mxu0 0
      %1052 = vmatpush1.bf16.msra.mxu0 0
      %1053 = vmatprep.subr.bf16.mxu0 0
      %1054 = vmatpush1.bf16.msra.mxu0 0
      %1055 = vmatprep.subr.bf16.mxu0 0
      %1056 = vmatpush1.bf16.msra.mxu0 %v1039
      %1057 = vmatprep.subr.bf16.mxu0 0
      %1058 = vmatpush2.bf16.msra.mxu0 0
      %1059 = vmatprep.subr.bf16.mxu0 0
      %1060 = vmatpush2.bf16.msra.mxu0 0
      %1061 = vmatprep.subr.bf16.mxu0 0
      %1062 = vmatpush2.bf16.msra.mxu0 0
      %1063 = vmatprep.subr.bf16.mxu0 0
      %1064 = vmatpush2.bf16.msra.mxu0 0
      %1065 = vmatprep.subr.bf16.mxu0 0
      %1066 = vmatpush2.bf16.msra.mxu0 0
      %1067 = vmatprep.subr.bf16.mxu0 0
      %1068 = vmatpush2.bf16.msra.mxu0 0
      %1069 = vmatprep.subr.bf16.mxu0 0
      %1070 = vmatpush2.bf16.msra.mxu0 0
      %1071 = vmatprep.subr.bf16.mxu0 0
      %1072 = vmatpush2.bf16.msra.mxu0 0
      %1073 = vmatprep.mubr.bf16.mxu0 0
      %1074 = vmatmul.mubr.bf16.gmra.mxu0 %v1015
      %v1075 = vpop.f32.mrf.mxu0
      %v1076 = vadd.f32 0.0, %v1075
      %v1077 = vpop.f32.mrf.mxu0
      %v1078 = vpop.f32.mrf.mxu0
      %v1079 = vpop.f32.mrf.mxu0
      %1080 = vmatprep.mubr.bf16.mxu0 0
      %1081 = vmatmul.mubr.bf16.gmra.mxu0 %v1018
      %v1082 = vpop.f32.mrf.mxu0
      %v1083 = vadd.f32 0.0, %v1082
      %v1084 = vpop.f32.mrf.mxu0
      %v1085 = vpop.f32.mrf.mxu0
      %v1086 = vpop.f32.mrf.mxu0
      %1087 = vmatprep.mubr.bf16.mxu0 0
      %1088 = vmatmul.mubr.bf16.gmra.mxu0 %v1021
      %v1089 = vpop.f32.mrf.mxu0
      %v1090 = vadd.f32 0.0, %v1089
      %v1091 = vpop.f32.mrf.mxu0
      %v1092 = vpop.f32.mrf.mxu0
      %v1093 = vpop.f32.mrf.mxu0
      %1094 = vmatprep.mubr.bf16.mxu0 0
      %1095 = vmatmul.mubr.bf16.gmra.mxu0 %v1024
      %v1096 = vpop.f32.mrf.mxu0
      %v1097 = vadd.f32 0.0, %v1096
      %v1098 = vpop.f32.mrf.mxu0
      %v1099 = vpop.f32.mrf.mxu0
      %v1100 = vpop.f32.mrf.mxu0
      %1101 = vmatprep.mubr.bf16.mxu0 0
      %1102 = vmatmul.mubr.bf16.gmra.mxu0 %v1027
      %v1103 = vpop.f32.mrf.mxu0
      %v1104 = vadd.f32 0.0, %v1103
      %v1105 = vpop.f32.mrf.mxu0
      %v1106 = vpop.f32.mrf.mxu0
      %v1107 = vpop.f32.mrf.mxu0
      %1108 = vmatprep.mubr.bf16.mxu0 0
      %1109 = vmatmul.mubr.bf16.gmra.mxu0 %v1030
      %v1110 = vpop.f32.mrf.mxu0
      %v1111 = vadd.f32 0.0, %v1110
      %v1112 = vpop.f32.mrf.mxu0
      %v1113 = vpop.f32.mrf.mxu0
      %v1114 = vpop.f32.mrf.mxu0
      %1115 = vmatprep.mubr.bf16.mxu0 0
      %1116 = vmatmul.mubr.bf16.gmra.mxu0 %v1033
      %v1117 = vpop.f32.mrf.mxu0
      %v1118 = vadd.f32 0.0, %v1117
      %v1119 = vpop.f32.mrf.mxu0
      %v1120 = vpop.f32.mrf.mxu0
      %v1121 = vpop.f32.mrf.mxu0
      %1122 = vmatprep.mubr.bf16.mxu0 0
      %1123 = vmatmul.mubr.bf16.gmra.mxu0 %v1036
      %v1124 = vpop.f32.mrf.mxu0
      %v1125 = vadd.f32 0.0, %v1124
      %v1126 = vpop.f32.mrf.mxu0
      %v1127 = vpop.f32.mrf.mxu0
      %v1128 = vpop.f32.mrf.mxu0
      %1129 = vdwg.mxu0
      %v1130 = vadd.f32 %v944, %v1076
      %v1131 = vadd.f32 %v945, %v1083
      %v1132 = vadd.f32 %v946, %v1090
      %v1133 = vadd.f32 %v947, %v1097
      %v1134 = vadd.f32 %v948, %v1104
      %v1135 = vadd.f32 %v949, %v1111
      %v1136 = vadd.f32 %v950, %v1118
      %v1137 = vadd.f32 %v951, %v1125
      %v1138 = vld [vmem:[%s955] sm:$0xf]
      %v1139 = vld [vmem:[%s955 + $0x4] sm:$0xf]
      %v1140 = vld [vmem:[%s955 + $0x8] sm:$0x1]
      %v1141 = vld [vmem:[%s955 + $0xc] sm:$0xf]
      %v1142 = vld [vmem:[%s955 + $0x10] sm:$0xf]
      %v1143 = vld [vmem:[%s955 + $0x14] sm:$0x1]
      %v1144 = vld [vmem:[%s955 + $0x18] sm:$0xf]
      %v1145 = vld [vmem:[%s955 + $0x1c] sm:$0xf]
      %v1146 = vld [vmem:[%s955 + $0x20] sm:$0x1]
      %v1147 = vld [vmem:[%s955 + $0x24] sm:$0xf]
      %v1148 = vld [vmem:[%s955 + $0x28] sm:$0xf]
      %v1149 = vld [vmem:[%s955 + $0x2c] sm:$0x1]
      %v1150 = vld [vmem:[%s955 + $0x30] sm:$0xf]
      %v1151 = vld [vmem:[%s955 + $0x34] sm:$0xf]
      %v1152 = vld [vmem:[%s955 + $0x38] sm:$0x1]
      %v1153 = vld [vmem:[%s955 + $0x3c] sm:$0xf]
      %v1154 = vld [vmem:[%s955 + $0x40] sm:$0xf]
      %v1155 = vld [vmem:[%s955 + $0x44] sm:$0x1]
      %v1156 = vld [vmem:[%s955 + $0x48] sm:$0xf]
      %v1157 = vld [vmem:[%s955 + $0x4c] sm:$0xf]
      %v1158 = vld [vmem:[%s955 + $0x50] sm:$0x1]
      %v1159 = vld [vmem:[%s955 + $0x54] sm:$0xf]
      %v1160 = vld [vmem:[%s955 + $0x58] sm:$0xf]
      %v1161 = vld [vmem:[%s955 + $0x5c] sm:$0x1]
      %v1163 = vshrl.u32 %v1138, 16
      %v1165 = vrot.slane %v1163, 4
      %v1166 = vshll.u32 %v1138, 16
      %v1168 = vrot.slane %v1166, 5
      %v1169 = vor.u32 %v1165, %v1168
      %v1170 = vrot.slane %v1169, 4
      %v1172 = vshll.u32 %v1139, 16
      %v1174 = vrot.slane %v1172, 5
      %v1175 = vsel %vm226, %v1170, %v1174
      %v1176 = vshrl.u32 %v1139, 16
      %v1178 = vrot.slane %v1176, 4
      %v1179 = vor.u32 %v1178, %v1174
      %v1180 = vrot.slane %v1179, 4
      %v1182 = vshll.u32 %v1140, 16
      %v1184 = vrot.slane %v1182, 5
      %v1185 = vsel %vm226, %v1180, %v1184
      %v1187 = vshrl.u32 %v1141, 16
      %v1189 = vrot.slane %v1187, 4
      %v1190 = vshll.u32 %v1141, 16
      %v1192 = vrot.slane %v1190, 5
      %v1193 = vor.u32 %v1189, %v1192
      %v1194 = vrot.slane %v1193, 4
      %v1196 = vshll.u32 %v1142, 16
      %v1198 = vrot.slane %v1196, 5
      %v1199 = vsel %vm226, %v1194, %v1198
      %v1200 = vshrl.u32 %v1142, 16
      %v1202 = vrot.slane %v1200, 4
      %v1203 = vor.u32 %v1202, %v1198
      %v1204 = vrot.slane %v1203, 4
      %v1206 = vshll.u32 %v1143, 16
      %v1208 = vrot.slane %v1206, 5
      %v1209 = vsel %vm226, %v1204, %v1208
      %v1211 = vshrl.u32 %v1144, 16
      %v1213 = vrot.slane %v1211, 4
      %v1214 = vshll.u32 %v1144, 16
      %v1216 = vrot.slane %v1214, 5
      %v1217 = vor.u32 %v1213, %v1216
      %v1218 = vrot.slane %v1217, 4
      %v1220 = vshll.u32 %v1145, 16
      %v1222 = vrot.slane %v1220, 5
      %v1223 = vsel %vm226, %v1218, %v1222
      %v1224 = vshrl.u32 %v1145, 16
      %v1226 = vrot.slane %v1224, 4
      %v1227 = vor.u32 %v1226, %v1222
      %v1228 = vrot.slane %v1227, 4
      %v1230 = vshll.u32 %v1146, 16
      %v1232 = vrot.slane %v1230, 5
      %v1233 = vsel %vm226, %v1228, %v1232
      %v1235 = vshrl.u32 %v1147, 16
      %v1237 = vrot.slane %v1235, 4
      %v1238 = vshll.u32 %v1147, 16
      %v1240 = vrot.slane %v1238, 5
      %v1241 = vor.u32 %v1237, %v1240
      %v1242 = vrot.slane %v1241, 4
      %v1244 = vshll.u32 %v1148, 16
      %v1246 = vrot.slane %v1244, 5
      %v1247 = vsel %vm226, %v1242, %v1246
      %v1248 = vshrl.u32 %v1148, 16
      %v1250 = vrot.slane %v1248, 4
      %v1251 = vor.u32 %v1250, %v1246
      %v1252 = vrot.slane %v1251, 4
      %v1254 = vshll.u32 %v1149, 16
      %v1256 = vrot.slane %v1254, 5
      %v1257 = vsel %vm226, %v1252, %v1256
      %v1259 = vshrl.u32 %v1150, 16
      %v1261 = vrot.slane %v1259, 4
      %v1262 = vshll.u32 %v1150, 16
      %v1264 = vrot.slane %v1262, 5
      %v1265 = vor.u32 %v1261, %v1264
      %v1266 = vrot.slane %v1265, 4
      %v1268 = vshll.u32 %v1151, 16
      %v1270 = vrot.slane %v1268, 5
      %v1271 = vsel %vm226, %v1266, %v1270
      %v1272 = vshrl.u32 %v1151, 16
      %v1274 = vrot.slane %v1272, 4
      %v1275 = vor.u32 %v1274, %v1270
      %v1276 = vrot.slane %v1275, 4
      %v1278 = vshll.u32 %v1152, 16
      %v1280 = vrot.slane %v1278, 5
      %v1281 = vsel %vm226, %v1276, %v1280
      %v1283 = vshrl.u32 %v1153, 16
      %v1285 = vrot.slane %v1283, 4
      %v1286 = vshll.u32 %v1153, 16
      %v1288 = vrot.slane %v1286, 5
      %v1289 = vor.u32 %v1285, %v1288
      %v1290 = vrot.slane %v1289, 4
      %v1292 = vshll.u32 %v1154, 16
      %v1294 = vrot.slane %v1292, 5
      %v1295 = vsel %vm226, %v1290, %v1294
      %v1296 = vshrl.u32 %v1154, 16
      %v1298 = vrot.slane %v1296, 4
      %v1299 = vor.u32 %v1298, %v1294
      %v1300 = vrot.slane %v1299, 4
      %v1302 = vshll.u32 %v1155, 16
      %v1304 = vrot.slane %v1302, 5
      %v1305 = vsel %vm226, %v1300, %v1304
      %v1307 = vshrl.u32 %v1156, 16
      %v1309 = vrot.slane %v1307, 4
      %v1310 = vshll.u32 %v1156, 16
      %v1312 = vrot.slane %v1310, 5
      %v1313 = vor.u32 %v1309, %v1312
      %v1314 = vrot.slane %v1313, 4
      %v1316 = vshll.u32 %v1157, 16
      %v1318 = vrot.slane %v1316, 5
      %v1319 = vsel %vm226, %v1314, %v1318
      %v1320 = vshrl.u32 %v1157, 16
      %v1322 = vrot.slane %v1320, 4
      %v1323 = vor.u32 %v1322, %v1318
      %v1324 = vrot.slane %v1323, 4
      %v1326 = vshll.u32 %v1158, 16
      %v1328 = vrot.slane %v1326, 5
      %v1329 = vsel %vm226, %v1324, %v1328
      %v1331 = vshrl.u32 %v1159, 16
      %v1333 = vrot.slane %v1331, 4
      %v1334 = vshll.u32 %v1159, 16
      %v1336 = vrot.slane %v1334, 5
      %v1337 = vor.u32 %v1333, %v1336
      %v1338 = vrot.slane %v1337, 4
      %v1340 = vshll.u32 %v1160, 16
      %v1342 = vrot.slane %v1340, 5
      %v1343 = vsel %vm226, %v1338, %v1342
      %v1344 = vshrl.u32 %v1160, 16
      %v1346 = vrot.slane %v1344, 4
      %v1347 = vor.u32 %v1346, %v1342
      %v1348 = vrot.slane %v1347, 4
      %v1350 = vshll.u32 %v1161, 16
      %v1352 = vrot.slane %v1350, 5
      %v1353 = vsel %vm226, %v1348, %v1352
      %s1354 = scalar_lea.vmem %s1, 16
      %v1355 = vld [vmem:[%s1354] sm:$0xf]
      %v1356 = vunpack.c.l.b16 %v1175
      %v1357 = vunpack.c.l.b16 %v1185
      %v1358 = vunpack.c.l.b16 %v1199
      %v1359 = vunpack.c.l.b16 %v1209
      %v1360 = vunpack.c.l.b16 %v1223
      %v1361 = vunpack.c.l.b16 %v1233
      %v1362 = vunpack.c.l.b16 %v1247
      %v1363 = vunpack.c.l.b16 %v1257
      %v1364 = vunpack.c.l.b16 %v1271
      %v1365 = vunpack.c.l.b16 %v1281
      %v1366 = vunpack.c.l.b16 %v1295
      %v1367 = vunpack.c.l.b16 %v1305
      %v1368 = vunpack.c.l.b16 %v1319
      %v1369 = vunpack.c.l.b16 %v1329
      %v1370 = vunpack.c.l.b16 %v1343
      %v1371 = vunpack.c.l.b16 %v1353
      %v1372 = vpack.c.b16 %v1357, %v1356
      %v1373 = vpack.c.b16 %v1359, %v1358
      %v1374 = vpack.c.b16 %v1361, %v1360
      %v1375 = vpack.c.b16 %v1363, %v1362
      %v1376 = vpack.c.b16 %v1365, %v1364
      %v1377 = vpack.c.b16 %v1367, %v1366
      %v1378 = vpack.c.b16 %v1369, %v1368
      %v1379 = vpack.c.b16 %v1371, %v1370
      %v1381 = vsel %vm445, %v1372, 0
      %v1384 = vsel %vm445, %v1373, 0
      %v1387 = vsel %vm445, %v1374, 0
      %v1390 = vsel %vm445, %v1375, 0
      %v1393 = vsel %vm445, %v1376, 0
      %v1396 = vsel %vm445, %v1377, 0
      %v1399 = vsel %vm445, %v1378, 0
      %v1402 = vsel %vm445, %v1379, 0
      %v1405 = vsel %vm470, %v1355, 0
      %1407 = vmatprep.subr.bf16.mxu0 0
      %1408 = vmatpush1.bf16.msra.mxu0 0
      %1409 = vmatprep.subr.bf16.mxu0 0
      %1410 = vmatpush1.bf16.msra.mxu0 0
      %1411 = vmatprep.subr.bf16.mxu0 0
      %1412 = vmatpush1.bf16.msra.mxu0 0
      %1413 = vmatprep.subr.bf16.mxu0 0
      %1414 = vmatpush1.bf16.msra.mxu0 0
      %1415 = vmatprep.subr.bf16.mxu0 0
      %1416 = vmatpush1.bf16.msra.mxu0 0
      %1417 = vmatprep.subr.bf16.mxu0 0
      %1418 = vmatpush1.bf16.msra.mxu0 0
      %1419 = vmatprep.subr.bf16.mxu0 0
      %1420 = vmatpush1.bf16.msra.mxu0 0
      %1421 = vmatprep.subr.bf16.mxu0 0
      %1422 = vmatpush1.bf16.msra.mxu0 %v1405
      %1423 = vmatprep.subr.bf16.mxu0 0
      %1424 = vmatpush2.bf16.msra.mxu0 0
      %1425 = vmatprep.subr.bf16.mxu0 0
      %1426 = vmatpush2.bf16.msra.mxu0 0
      %1427 = vmatprep.subr.bf16.mxu0 0
      %1428 = vmatpush2.bf16.msra.mxu0 0
      %1429 = vmatprep.subr.bf16.mxu0 0
      %1430 = vmatpush2.bf16.msra.mxu0 0
      %1431 = vmatprep.subr.bf16.mxu0 0
      %1432 = vmatpush2.bf16.msra.mxu0 0
      %1433 = vmatprep.subr.bf16.mxu0 0
      %1434 = vmatpush2.bf16.msra.mxu0 0
      %1435 = vmatprep.subr.bf16.mxu0 0
      %1436 = vmatpush2.bf16.msra.mxu0 0
      %1437 = vmatprep.subr.bf16.mxu0 0
      %1438 = vmatpush2.bf16.msra.mxu0 0
      %1439 = vmatprep.mubr.bf16.mxu0 0
      %1440 = vmatmul.mubr.bf16.gmra.mxu0 %v1381
      %v1441 = vpop.f32.mrf.mxu0
      %v1442 = vadd.f32 0.0, %v1441
      %v1443 = vpop.f32.mrf.mxu0
      %v1444 = vpop.f32.mrf.mxu0
      %v1445 = vpop.f32.mrf.mxu0
      %1446 = vmatprep.mubr.bf16.mxu0 0
      %1447 = vmatmul.mubr.bf16.gmra.mxu0 %v1384
      %v1448 = vpop.f32.mrf.mxu0
      %v1449 = vadd.f32 0.0, %v1448
      %v1450 = vpop.f32.mrf.mxu0
      %v1451 = vpop.f32.mrf.mxu0
      %v1452 = vpop.f32.mrf.mxu0
      %1453 = vmatprep.mubr.bf16.mxu0 0
      %1454 = vmatmul.mubr.bf16.gmra.mxu0 %v1387
      %v1455 = vpop.f32.mrf.mxu0
      %v1456 = vadd.f32 0.0, %v1455
      %v1457 = vpop.f32.mrf.mxu0
      %v1458 = vpop.f32.mrf.mxu0
      %v1459 = vpop.f32.mrf.mxu0
      %1460 = vmatprep.mubr.bf16.mxu0 0
      %1461 = vmatmul.mubr.bf16.gmra.mxu0 %v1390
      %v1462 = vpop.f32.mrf.mxu0
      %v1463 = vadd.f32 0.0, %v1462
      %v1464 = vpop.f32.mrf.mxu0
      %v1465 = vpop.f32.mrf.mxu0
      %v1466 = vpop.f32.mrf.mxu0
      %1467 = vmatprep.mubr.bf16.mxu0 0
      %1468 = vmatmul.mubr.bf16.gmra.mxu0 %v1393
      %v1469 = vpop.f32.mrf.mxu0
      %v1470 = vadd.f32 0.0, %v1469
      %v1471 = vpop.f32.mrf.mxu0
      %v1472 = vpop.f32.mrf.mxu0
      %v1473 = vpop.f32.mrf.mxu0
      %1474 = vmatprep.mubr.bf16.mxu0 0
      %1475 = vmatmul.mubr.bf16.gmra.mxu0 %v1396
      %v1476 = vpop.f32.mrf.mxu0
      %v1477 = vadd.f32 0.0, %v1476
      %v1478 = vpop.f32.mrf.mxu0
      %v1479 = vpop.f32.mrf.mxu0
      %v1480 = vpop.f32.mrf.mxu0
      %1481 = vmatprep.mubr.bf16.mxu0 0
      %1482 = vmatmul.mubr.bf16.gmra.mxu0 %v1399
      %v1483 = vpop.f32.mrf.mxu0
      %v1484 = vadd.f32 0.0, %v1483
      %v1485 = vpop.f32.mrf.mxu0
      %v1486 = vpop.f32.mrf.mxu0
      %v1487 = vpop.f32.mrf.mxu0
      %1488 = vmatprep.mubr.bf16.mxu0 0
      %1489 = vmatmul.mubr.bf16.gmra.mxu0 %v1402
      %v1490 = vpop.f32.mrf.mxu0
      %v1491 = vadd.f32 0.0, %v1490
      %v1492 = vpop.f32.mrf.mxu0
      %v1493 = vpop.f32.mrf.mxu0
      %v1494 = vpop.f32.mrf.mxu0
      %1495 = vdwg.mxu0
      %v1496 = vadd.f32 %v1130, %v1442
      %v1497 = vadd.f32 %v1131, %v1449
      %v1498 = vadd.f32 %v1132, %v1456
      %v1499 = vadd.f32 %v1133, %v1463
      %v1500 = vadd.f32 %v1134, %v1470
      %v1501 = vadd.f32 %v1135, %v1477
      %v1502 = vadd.f32 %v1136, %v1484
      %v1503 = vadd.f32 %v1137, %v1491
      %v1504 = vld [vmem:[%s955] sm:$0xe]
      %v1505 = vld [vmem:[%s955 + $0xc] sm:$0xe]
      %v1506 = vld [vmem:[%s955 + $0x18] sm:$0xe]
      %v1507 = vld [vmem:[%s955 + $0x24] sm:$0xe]
      %v1508 = vld [vmem:[%s955 + $0x30] sm:$0xe]
      %v1509 = vld [vmem:[%s955 + $0x3c] sm:$0xe]
      %v1510 = vld [vmem:[%s955 + $0x48] sm:$0xe]
      %v1511 = vld [vmem:[%s955 + $0x54] sm:$0xe]
      %v1536 = vrot.slane %v1504, 5
      %v1537 = vrot.slane %v1536, 4
      %v1538 = vrot.slane %v1139, 5
      %v1539 = vsel %vm745, %v1537, %v1538
      %v1540 = vrot.slane %v1538, 4
      %v1541 = vrot.slane %v1140, 5
      %v1542 = vsel %vm745, %v1540, %v1541
      %v1543 = vrot.slane %v1505, 5
      %v1544 = vrot.slane %v1543, 4
      %v1545 = vrot.slane %v1142, 5
      %v1546 = vsel %vm745, %v1544, %v1545
      %v1547 = vrot.slane %v1545, 4
      %v1548 = vrot.slane %v1143, 5
      %v1549 = vsel %vm745, %v1547, %v1548
      %v1550 = vrot.slane %v1506, 5
      %v1551 = vrot.slane %v1550, 4
      %v1552 = vrot.slane %v1145, 5
      %v1553 = vsel %vm745, %v1551, %v1552
      %v1554 = vrot.slane %v1552, 4
      %v1555 = vrot.slane %v1146, 5
      %v1556 = vsel %vm745, %v1554, %v1555
      %v1557 = vrot.slane %v1507, 5
      %v1558 = vrot.slane %v1557, 4
      %v1559 = vrot.slane %v1148, 5
      %v1560 = vsel %vm745, %v1558, %v1559
      %v1561 = vrot.slane %v1559, 4
      %v1562 = vrot.slane %v1149, 5
      %v1563 = vsel %vm745, %v1561, %v1562
      %v1564 = vrot.slane %v1508, 5
      %v1565 = vrot.slane %v1564, 4
      %v1566 = vrot.slane %v1151, 5
      %v1567 = vsel %vm745, %v1565, %v1566
      %v1568 = vrot.slane %v1566, 4
      %v1569 = vrot.slane %v1152, 5
      %v1570 = vsel %vm745, %v1568, %v1569
      %v1571 = vrot.slane %v1509, 5
      %v1572 = vrot.slane %v1571, 4
      %v1573 = vrot.slane %v1154, 5
      %v1574 = vsel %vm745, %v1572, %v1573
      %v1575 = vrot.slane %v1573, 4
      %v1576 = vrot.slane %v1155, 5
      %v1577 = vsel %vm745, %v1575, %v1576
      %v1578 = vrot.slane %v1510, 5
      %v1579 = vrot.slane %v1578, 4
      %v1580 = vrot.slane %v1157, 5
      %v1581 = vsel %vm745, %v1579, %v1580
      %v1582 = vrot.slane %v1580, 4
      %v1583 = vrot.slane %v1158, 5
      %v1584 = vsel %vm745, %v1582, %v1583
      %v1585 = vrot.slane %v1511, 5
      %v1586 = vrot.slane %v1585, 4
      %v1587 = vrot.slane %v1160, 5
      %v1588 = vsel %vm745, %v1586, %v1587
      %v1589 = vrot.slane %v1587, 4
      %v1590 = vrot.slane %v1161, 5
      %v1591 = vsel %vm745, %v1589, %v1590
      %s1592 = scalar_lea.vmem %s1, 20
      %v1593 = vld [vmem:[%s1592] sm:$0xf]
      %v1594 = vunpack.c.l.b16 %v1539
      %v1595 = vunpack.c.l.b16 %v1542
      %v1596 = vunpack.c.l.b16 %v1546
      %v1597 = vunpack.c.l.b16 %v1549
      %v1598 = vunpack.c.l.b16 %v1553
      %v1599 = vunpack.c.l.b16 %v1556
      %v1600 = vunpack.c.l.b16 %v1560
      %v1601 = vunpack.c.l.b16 %v1563
      %v1602 = vunpack.c.l.b16 %v1567
      %v1603 = vunpack.c.l.b16 %v1570
      %v1604 = vunpack.c.l.b16 %v1574
      %v1605 = vunpack.c.l.b16 %v1577
      %v1606 = vunpack.c.l.b16 %v1581
      %v1607 = vunpack.c.l.b16 %v1584
      %v1608 = vunpack.c.l.b16 %v1588
      %v1609 = vunpack.c.l.b16 %v1591
      %v1610 = vpack.c.b16 %v1595, %v1594
      %v1611 = vpack.c.b16 %v1597, %v1596
      %v1612 = vpack.c.b16 %v1599, %v1598
      %v1613 = vpack.c.b16 %v1601, %v1600
      %v1614 = vpack.c.b16 %v1603, %v1602
      %v1615 = vpack.c.b16 %v1605, %v1604
      %v1616 = vpack.c.b16 %v1607, %v1606
      %v1617 = vpack.c.b16 %v1609, %v1608
      %v1619 = vsel %vm445, %v1610, 0
      %v1622 = vsel %vm445, %v1611, 0
      %v1625 = vsel %vm445, %v1612, 0
      %v1628 = vsel %vm445, %v1613, 0
      %v1631 = vsel %vm445, %v1614, 0
      %v1634 = vsel %vm445, %v1615, 0
      %v1637 = vsel %vm445, %v1616, 0
      %v1640 = vsel %vm445, %v1617, 0
      %v1643 = vsel %vm470, %v1593, 0
      %1645 = vmatprep.subr.bf16.mxu0 0
      %1646 = vmatpush1.bf16.msra.mxu0 0
      %1647 = vmatprep.subr.bf16.mxu0 0
      %1648 = vmatpush1.bf16.msra.mxu0 0
      %1649 = vmatprep.subr.bf16.mxu0 0
      %1650 = vmatpush1.bf16.msra.mxu0 0
      %1651 = vmatprep.subr.bf16.mxu0 0
      %1652 = vmatpush1.bf16.msra.mxu0 0
      %1653 = vmatprep.subr.bf16.mxu0 0
      %1654 = vmatpush1.bf16.msra.mxu0 0
      %1655 = vmatprep.subr.bf16.mxu0 0
      %1656 = vmatpush1.bf16.msra.mxu0 0
      %1657 = vmatprep.subr.bf16.mxu0 0
      %1658 = vmatpush1.bf16.msra.mxu0 0
      %1659 = vmatprep.subr.bf16.mxu0 0
      %1660 = vmatpush1.bf16.msra.mxu0 %v1643
      %1661 = vmatprep.subr.bf16.mxu0 0
      %1662 = vmatpush2.bf16.msra.mxu0 0
      %1663 = vmatprep.subr.bf16.mxu0 0
      %1664 = vmatpush2.bf16.msra.mxu0 0
      %1665 = vmatprep.subr.bf16.mxu0 0
      %1666 = vmatpush2.bf16.msra.mxu0 0
      %1667 = vmatprep.subr.bf16.mxu0 0
      %1668 = vmatpush2.bf16.msra.mxu0 0
      %1669 = vmatprep.subr.bf16.mxu0 0
      %1670 = vmatpush2.bf16.msra.mxu0 0
      %1671 = vmatprep.subr.bf16.mxu0 0
      %1672 = vmatpush2.bf16.msra.mxu0 0
      %1673 = vmatprep.subr.bf16.mxu0 0
      %1674 = vmatpush2.bf16.msra.mxu0 0
      %1675 = vmatprep.subr.bf16.mxu0 0
      %1676 = vmatpush2.bf16.msra.mxu0 0
      %1677 = vmatprep.mubr.bf16.mxu0 0
      %1678 = vmatmul.mubr.bf16.gmra.mxu0 %v1619
      %v1679 = vpop.f32.mrf.mxu0
      %v1680 = vadd.f32 0.0, %v1679
      %v1681 = vpop.f32.mrf.mxu0
      %v1682 = vpop.f32.mrf.mxu0
      %v1683 = vpop.f32.mrf.mxu0
      %1684 = vmatprep.mubr.bf16.mxu0 0
      %1685 = vmatmul.mubr.bf16.gmra.mxu0 %v1622
      %v1686 = vpop.f32.mrf.mxu0
      %v1687 = vadd.f32 0.0, %v1686
      %v1688 = vpop.f32.mrf.mxu0
      %v1689 = vpop.f32.mrf.mxu0
      %v1690 = vpop.f32.mrf.mxu0
      %1691 = vmatprep.mubr.bf16.mxu0 0
      %1692 = vmatmul.mubr.bf16.gmra.mxu0 %v1625
      %v1693 = vpop.f32.mrf.mxu0
      %v1694 = vadd.f32 0.0, %v1693
      %v1695 = vpop.f32.mrf.mxu0
      %v1696 = vpop.f32.mrf.mxu0
      %v1697 = vpop.f32.mrf.mxu0
      %1698 = vmatprep.mubr.bf16.mxu0 0
      %1699 = vmatmul.mubr.bf16.gmra.mxu0 %v1628
      %v1700 = vpop.f32.mrf.mxu0
      %v1701 = vadd.f32 0.0, %v1700
      %v1702 = vpop.f32.mrf.mxu0
      %v1703 = vpop.f32.mrf.mxu0
      %v1704 = vpop.f32.mrf.mxu0
      %1705 = vmatprep.mubr.bf16.mxu0 0
      %1706 = vmatmul.mubr.bf16.gmra.mxu0 %v1631
      %v1707 = vpop.f32.mrf.mxu0
      %v1708 = vadd.f32 0.0, %v1707
      %v1709 = vpop.f32.mrf.mxu0
      %v1710 = vpop.f32.mrf.mxu0
      %v1711 = vpop.f32.mrf.mxu0
      %1712 = vmatprep.mubr.bf16.mxu0 0
      %1713 = vmatmul.mubr.bf16.gmra.mxu0 %v1634
      %v1714 = vpop.f32.mrf.mxu0
      %v1715 = vadd.f32 0.0, %v1714
      %v1716 = vpop.f32.mrf.mxu0
      %v1717 = vpop.f32.mrf.mxu0
      %v1718 = vpop.f32.mrf.mxu0
      %1719 = vmatprep.mubr.bf16.mxu0 0
      %1720 = vmatmul.mubr.bf16.gmra.mxu0 %v1637
      %v1721 = vpop.f32.mrf.mxu0
      %v1722 = vadd.f32 0.0, %v1721
      %v1723 = vpop.f32.mrf.mxu0
      %v1724 = vpop.f32.mrf.mxu0
      %v1725 = vpop.f32.mrf.mxu0
      %1726 = vmatprep.mubr.bf16.mxu0 0
      %1727 = vmatmul.mubr.bf16.gmra.mxu0 %v1640
      %v1728 = vpop.f32.mrf.mxu0
      %v1729 = vadd.f32 0.0, %v1728
      %v1730 = vpop.f32.mrf.mxu0
      %v1731 = vpop.f32.mrf.mxu0
      %v1732 = vpop.f32.mrf.mxu0
      %1733 = vdwg.mxu0
      %v1734 = vadd.f32 %v1496, %v1680
      %v1735 = vadd.f32 %v1497, %v1687
      %v1736 = vadd.f32 %v1498, %v1694
      %v1737 = vadd.f32 %v1499, %v1701
      %v1738 = vadd.f32 %v1500, %v1708
      %v1739 = vadd.f32 %v1501, %v1715
      %v1740 = vadd.f32 %v1502, %v1722
      %v1741 = vadd.f32 %v1503, %v1729
      %s1742 = sadd.s32 %s195, 2
      %s1743 = smul.u32 %s1742, 3
      %s1744 = smul.addr %s1743, 4
      %s1745 = scalar_lea.vmem %s183, %s1744
      %v1746 = vld [vmem:[%s1745] sm:$0xf]
      %v1747 = vld [vmem:[%s1745 + $0x4] sm:$0xf]
      %v1748 = vld [vmem:[%s1745 + $0xc] sm:$0xf]
      %v1749 = vld [vmem:[%s1745 + $0x10] sm:$0xf]
      %v1750 = vld [vmem:[%s1745 + $0x18] sm:$0xf]
      %v1751 = vld [vmem:[%s1745 + $0x1c] sm:$0xf]
      %v1752 = vld [vmem:[%s1745 + $0x24] sm:$0xf]
      %v1753 = vld [vmem:[%s1745 + $0x28] sm:$0xf]
      %v1754 = vld [vmem:[%s1745 + $0x30] sm:$0xf]
      %v1755 = vld [vmem:[%s1745 + $0x34] sm:$0xf]
      %v1756 = vld [vmem:[%s1745 + $0x3c] sm:$0xf]
      %v1757 = vld [vmem:[%s1745 + $0x40] sm:$0xf]
      %v1758 = vld [vmem:[%s1745 + $0x48] sm:$0xf]
      %v1759 = vld [vmem:[%s1745 + $0x4c] sm:$0xf]
      %v1760 = vld [vmem:[%s1745 + $0x54] sm:$0xf]
      %v1761 = vld [vmem:[%s1745 + $0x58] sm:$0xf]
      %s1762 = scalar_lea.vmem %s1, 24
      %v1763 = vld [vmem:[%s1762] sm:$0xf]
      %v1780 = vunpack.c.l.b16 %v1746
      %v1781 = vunpack.c.l.b16 %v1747
      %v1782 = vunpack.c.l.b16 %v1748
      %v1783 = vunpack.c.l.b16 %v1749
      %v1784 = vunpack.c.l.b16 %v1750
      %v1785 = vunpack.c.l.b16 %v1751
      %v1786 = vunpack.c.l.b16 %v1752
      %v1787 = vunpack.c.l.b16 %v1753
      %v1788 = vunpack.c.l.b16 %v1754
      %v1789 = vunpack.c.l.b16 %v1755
      %v1790 = vunpack.c.l.b16 %v1756
      %v1791 = vunpack.c.l.b16 %v1757
      %v1792 = vunpack.c.l.b16 %v1758
      %v1793 = vunpack.c.l.b16 %v1759
      %v1794 = vunpack.c.l.b16 %v1760
      %v1795 = vunpack.c.l.b16 %v1761
      %v1796 = vpack.c.b16 %v1781, %v1780
      %v1797 = vpack.c.b16 %v1783, %v1782
      %v1798 = vpack.c.b16 %v1785, %v1784
      %v1799 = vpack.c.b16 %v1787, %v1786
      %v1800 = vpack.c.b16 %v1789, %v1788
      %v1801 = vpack.c.b16 %v1791, %v1790
      %v1802 = vpack.c.b16 %v1793, %v1792
      %v1803 = vpack.c.b16 %v1795, %v1794
      %v1805 = vsel %vm445, %v1796, 0
      %v1808 = vsel %vm445, %v1797, 0
      %v1811 = vsel %vm445, %v1798, 0
      %v1814 = vsel %vm445, %v1799, 0
      %v1817 = vsel %vm445, %v1800, 0
      %v1820 = vsel %vm445, %v1801, 0
      %v1823 = vsel %vm445, %v1802, 0
      %v1826 = vsel %vm445, %v1803, 0
      %v1829 = vsel %vm470, %v1763, 0
      %1831 = vmatprep.subr.bf16.mxu0 0
      %1832 = vmatpush1.bf16.msra.mxu0 0
      %1833 = vmatprep.subr.bf16.mxu0 0
      %1834 = vmatpush1.bf16.msra.mxu0 0
      %1835 = vmatprep.subr.bf16.mxu0 0
      %1836 = vmatpush1.bf16.msra.mxu0 0
      %1837 = vmatprep.subr.bf16.mxu0 0
      %1838 = vmatpush1.bf16.msra.mxu0 0
      %1839 = vmatprep.subr.bf16.mxu0 0
      %1840 = vmatpush1.bf16.msra.mxu0 0
      %1841 = vmatprep.subr.bf16.mxu0 0
      %1842 = vmatpush1.bf16.msra.mxu0 0
      %1843 = vmatprep.subr.bf16.mxu0 0
      %1844 = vmatpush1.bf16.msra.mxu0 0
      %1845 = vmatprep.subr.bf16.mxu0 0
      %1846 = vmatpush1.bf16.msra.mxu0 %v1829
      %1847 = vmatprep.subr.bf16.mxu0 0
      %1848 = vmatpush2.bf16.msra.mxu0 0
      %1849 = vmatprep.subr.bf16.mxu0 0
      %1850 = vmatpush2.bf16.msra.mxu0 0
      %1851 = vmatprep.subr.bf16.mxu0 0
      %1852 = vmatpush2.bf16.msra.mxu0 0
      %1853 = vmatprep.subr.bf16.mxu0 0
      %1854 = vmatpush2.bf16.msra.mxu0 0
      %1855 = vmatprep.subr.bf16.mxu0 0
      %1856 = vmatpush2.bf16.msra.mxu0 0
      %1857 = vmatprep.subr.bf16.mxu0 0
      %1858 = vmatpush2.bf16.msra.mxu0 0
      %1859 = vmatprep.subr.bf16.mxu0 0
      %1860 = vmatpush2.bf16.msra.mxu0 0
      %1861 = vmatprep.subr.bf16.mxu0 0
      %1862 = vmatpush2.bf16.msra.mxu0 0
      %1863 = vmatprep.mubr.bf16.mxu0 0
      %1864 = vmatmul.mubr.bf16.gmra.mxu0 %v1805
      %v1865 = vpop.f32.mrf.mxu0
      %v1866 = vadd.f32 0.0, %v1865
      %v1867 = vpop.f32.mrf.mxu0
      %v1868 = vpop.f32.mrf.mxu0
      %v1869 = vpop.f32.mrf.mxu0
      %1870 = vmatprep.mubr.bf16.mxu0 0
      %1871 = vmatmul.mubr.bf16.gmra.mxu0 %v1808
      %v1872 = vpop.f32.mrf.mxu0
      %v1873 = vadd.f32 0.0, %v1872
      %v1874 = vpop.f32.mrf.mxu0
      %v1875 = vpop.f32.mrf.mxu0
      %v1876 = vpop.f32.mrf.mxu0
      %1877 = vmatprep.mubr.bf16.mxu0 0
      %1878 = vmatmul.mubr.bf16.gmra.mxu0 %v1811
      %v1879 = vpop.f32.mrf.mxu0
      %v1880 = vadd.f32 0.0, %v1879
      %v1881 = vpop.f32.mrf.mxu0
      %v1882 = vpop.f32.mrf.mxu0
      %v1883 = vpop.f32.mrf.mxu0
      %1884 = vmatprep.mubr.bf16.mxu0 0
      %1885 = vmatmul.mubr.bf16.gmra.mxu0 %v1814
      %v1886 = vpop.f32.mrf.mxu0
      %v1887 = vadd.f32 0.0, %v1886
      %v1888 = vpop.f32.mrf.mxu0
      %v1889 = vpop.f32.mrf.mxu0
      %v1890 = vpop.f32.mrf.mxu0
      %1891 = vmatprep.mubr.bf16.mxu0 0
      %1892 = vmatmul.mubr.bf16.gmra.mxu0 %v1817
      %v1893 = vpop.f32.mrf.mxu0
      %v1894 = vadd.f32 0.0, %v1893
      %v1895 = vpop.f32.mrf.mxu0
      %v1896 = vpop.f32.mrf.mxu0
      %v1897 = vpop.f32.mrf.mxu0
      %1898 = vmatprep.mubr.bf16.mxu0 0
      %1899 = vmatmul.mubr.bf16.gmra.mxu0 %v1820
      %v1900 = vpop.f32.mrf.mxu0
      %v1901 = vadd.f32 0.0, %v1900
      %v1902 = vpop.f32.mrf.mxu0
      %v1903 = vpop.f32.mrf.mxu0
      %v1904 = vpop.f32.mrf.mxu0
      %1905 = vmatprep.mubr.bf16.mxu0 0
      %1906 = vmatmul.mubr.bf16.gmra.mxu0 %v1823
      %v1907 = vpop.f32.mrf.mxu0
      %v1908 = vadd.f32 0.0, %v1907
      %v1909 = vpop.f32.mrf.mxu0
      %v1910 = vpop.f32.mrf.mxu0
      %v1911 = vpop.f32.mrf.mxu0
      %1912 = vmatprep.mubr.bf16.mxu0 0
      %1913 = vmatmul.mubr.bf16.gmra.mxu0 %v1826
      %v1914 = vpop.f32.mrf.mxu0
      %v1915 = vadd.f32 0.0, %v1914
      %v1916 = vpop.f32.mrf.mxu0
      %v1917 = vpop.f32.mrf.mxu0
      %v1918 = vpop.f32.mrf.mxu0
      %1919 = vdwg.mxu0
      %v1920 = vadd.f32 %v1734, %v1866
      %v1921 = vadd.f32 %v1735, %v1873
      %v1922 = vadd.f32 %v1736, %v1880
      %v1923 = vadd.f32 %v1737, %v1887
      %v1924 = vadd.f32 %v1738, %v1894
      %v1925 = vadd.f32 %v1739, %v1901
      %v1926 = vadd.f32 %v1740, %v1908
      %v1927 = vadd.f32 %v1741, %v1915
      %v1928 = vld [vmem:[%s1745] sm:$0xf]
      %v1929 = vld [vmem:[%s1745 + $0x4] sm:$0xf]
      %v1930 = vld [vmem:[%s1745 + $0x8] sm:$0x1]
      %v1931 = vld [vmem:[%s1745 + $0xc] sm:$0xf]
      %v1932 = vld [vmem:[%s1745 + $0x10] sm:$0xf]
      %v1933 = vld [vmem:[%s1745 + $0x14] sm:$0x1]
      %v1934 = vld [vmem:[%s1745 + $0x18] sm:$0xf]
      %v1935 = vld [vmem:[%s1745 + $0x1c] sm:$0xf]
      %v1936 = vld [vmem:[%s1745 + $0x20] sm:$0x1]
      %v1937 = vld [vmem:[%s1745 + $0x24] sm:$0xf]
      %v1938 = vld [vmem:[%s1745 + $0x28] sm:$0xf]
      %v1939 = vld [vmem:[%s1745 + $0x2c] sm:$0x1]
      %v1940 = vld [vmem:[%s1745 + $0x30] sm:$0xf]
      %v1941 = vld [vmem:[%s1745 + $0x34] sm:$0xf]
      %v1942 = vld [vmem:[%s1745 + $0x38] sm:$0x1]
      %v1943 = vld [vmem:[%s1745 + $0x3c] sm:$0xf]
      %v1944 = vld [vmem:[%s1745 + $0x40] sm:$0xf]
      %v1945 = vld [vmem:[%s1745 + $0x44] sm:$0x1]
      %v1946 = vld [vmem:[%s1745 + $0x48] sm:$0xf]
      %v1947 = vld [vmem:[%s1745 + $0x4c] sm:$0xf]
      %v1948 = vld [vmem:[%s1745 + $0x50] sm:$0x1]
      %v1949 = vld [vmem:[%s1745 + $0x54] sm:$0xf]
      %v1950 = vld [vmem:[%s1745 + $0x58] sm:$0xf]
      %v1951 = vld [vmem:[%s1745 + $0x5c] sm:$0x1]
      %v1953 = vshrl.u32 %v1928, 16
      %v1955 = vrot.slane %v1953, 4
      %v1956 = vshll.u32 %v1928, 16
      %v1958 = vrot.slane %v1956, 5
      %v1959 = vor.u32 %v1955, %v1958
      %v1960 = vrot.slane %v1959, 4
      %v1962 = vshll.u32 %v1929, 16
      %v1964 = vrot.slane %v1962, 5
      %v1965 = vsel %vm226, %v1960, %v1964
      %v1966 = vshrl.u32 %v1929, 16
      %v1968 = vrot.slane %v1966, 4
      %v1969 = vor.u32 %v1968, %v1964
      %v1970 = vrot.slane %v1969, 4
      %v1972 = vshll.u32 %v1930, 16
      %v1974 = vrot.slane %v1972, 5
      %v1975 = vsel %vm226, %v1970, %v1974
      %v1977 = vshrl.u32 %v1931, 16
      %v1979 = vrot.slane %v1977, 4
      %v1980 = vshll.u32 %v1931, 16
      %v1982 = vrot.slane %v1980, 5
      %v1983 = vor.u32 %v1979, %v1982
      %v1984 = vrot.slane %v1983, 4
      %v1986 = vshll.u32 %v1932, 16
      %v1988 = vrot.slane %v1986, 5
      %v1989 = vsel %vm226, %v1984, %v1988
      %v1990 = vshrl.u32 %v1932, 16
      %v1992 = vrot.slane %v1990, 4
      %v1993 = vor.u32 %v1992, %v1988
      %v1994 = vrot.slane %v1993, 4
      %v1996 = vshll.u32 %v1933, 16
      %v1998 = vrot.slane %v1996, 5
      %v1999 = vsel %vm226, %v1994, %v1998
      %v2001 = vshrl.u32 %v1934, 16
      %v2003 = vrot.slane %v2001, 4
      %v2004 = vshll.u32 %v1934, 16
      %v2006 = vrot.slane %v2004, 5
      %v2007 = vor.u32 %v2003, %v2006
      %v2008 = vrot.slane %v2007, 4
      %v2010 = vshll.u32 %v1935, 16
      %v2012 = vrot.slane %v2010, 5
      %v2013 = vsel %vm226, %v2008, %v2012
      %v2014 = vshrl.u32 %v1935, 16
      %v2016 = vrot.slane %v2014, 4
      %v2017 = vor.u32 %v2016, %v2012
      %v2018 = vrot.slane %v2017, 4
      %v2020 = vshll.u32 %v1936, 16
      %v2022 = vrot.slane %v2020, 5
      %v2023 = vsel %vm226, %v2018, %v2022
      %v2025 = vshrl.u32 %v1937, 16
      %v2027 = vrot.slane %v2025, 4
      %v2028 = vshll.u32 %v1937, 16
      %v2030 = vrot.slane %v2028, 5
      %v2031 = vor.u32 %v2027, %v2030
      %v2032 = vrot.slane %v2031, 4
      %v2034 = vshll.u32 %v1938, 16
      %v2036 = vrot.slane %v2034, 5
      %v2037 = vsel %vm226, %v2032, %v2036
      %v2038 = vshrl.u32 %v1938, 16
      %v2040 = vrot.slane %v2038, 4
      %v2041 = vor.u32 %v2040, %v2036
      %v2042 = vrot.slane %v2041, 4
      %v2044 = vshll.u32 %v1939, 16
      %v2046 = vrot.slane %v2044, 5
      %v2047 = vsel %vm226, %v2042, %v2046
      %v2049 = vshrl.u32 %v1940, 16
      %v2051 = vrot.slane %v2049, 4
      %v2052 = vshll.u32 %v1940, 16
      %v2054 = vrot.slane %v2052, 5
      %v2055 = vor.u32 %v2051, %v2054
      %v2056 = vrot.slane %v2055, 4
      %v2058 = vshll.u32 %v1941, 16
      %v2060 = vrot.slane %v2058, 5
      %v2061 = vsel %vm226, %v2056, %v2060
      %v2062 = vshrl.u32 %v1941, 16
      %v2064 = vrot.slane %v2062, 4
      %v2065 = vor.u32 %v2064, %v2060
      %v2066 = vrot.slane %v2065, 4
      %v2068 = vshll.u32 %v1942, 16
      %v2070 = vrot.slane %v2068, 5
      %v2071 = vsel %vm226, %v2066, %v2070
      %v2073 = vshrl.u32 %v1943, 16
      %v2075 = vrot.slane %v2073, 4
      %v2076 = vshll.u32 %v1943, 16
      %v2078 = vrot.slane %v2076, 5
      %v2079 = vor.u32 %v2075, %v2078
      %v2080 = vrot.slane %v2079, 4
      %v2082 = vshll.u32 %v1944, 16
      %v2084 = vrot.slane %v2082, 5
      %v2085 = vsel %vm226, %v2080, %v2084
      %v2086 = vshrl.u32 %v1944, 16
      %v2088 = vrot.slane %v2086, 4
      %v2089 = vor.u32 %v2088, %v2084
      %v2090 = vrot.slane %v2089, 4
      %v2092 = vshll.u32 %v1945, 16
      %v2094 = vrot.slane %v2092, 5
      %v2095 = vsel %vm226, %v2090, %v2094
      %v2097 = vshrl.u32 %v1946, 16
      %v2099 = vrot.slane %v2097, 4
      %v2100 = vshll.u32 %v1946, 16
      %v2102 = vrot.slane %v2100, 5
      %v2103 = vor.u32 %v2099, %v2102
      %v2104 = vrot.slane %v2103, 4
      %v2106 = vshll.u32 %v1947, 16
      %v2108 = vrot.slane %v2106, 5
      %v2109 = vsel %vm226, %v2104, %v2108
      %v2110 = vshrl.u32 %v1947, 16
      %v2112 = vrot.slane %v2110, 4
      %v2113 = vor.u32 %v2112, %v2108
      %v2114 = vrot.slane %v2113, 4
      %v2116 = vshll.u32 %v1948, 16
      %v2118 = vrot.slane %v2116, 5
      %v2119 = vsel %vm226, %v2114, %v2118
      %v2121 = vshrl.u32 %v1949, 16
      %v2123 = vrot.slane %v2121, 4
      %v2124 = vshll.u32 %v1949, 16
      %v2126 = vrot.slane %v2124, 5
      %v2127 = vor.u32 %v2123, %v2126
      %v2128 = vrot.slane %v2127, 4
      %v2130 = vshll.u32 %v1950, 16
      %v2132 = vrot.slane %v2130, 5
      %v2133 = vsel %vm226, %v2128, %v2132
      %v2134 = vshrl.u32 %v1950, 16
      %v2136 = vrot.slane %v2134, 4
      %v2137 = vor.u32 %v2136, %v2132
      %v2138 = vrot.slane %v2137, 4
      %v2140 = vshll.u32 %v1951, 16
      %v2142 = vrot.slane %v2140, 5
      %v2143 = vsel %vm226, %v2138, %v2142
      %s2144 = scalar_lea.vmem %s1, 28
      %v2145 = vld [vmem:[%s2144] sm:$0xf]
      %v2146 = vunpack.c.l.b16 %v1965
      %v2147 = vunpack.c.l.b16 %v1975
      %v2148 = vunpack.c.l.b16 %v1989
      %v2149 = vunpack.c.l.b16 %v1999
      %v2150 = vunpack.c.l.b16 %v2013
      %v2151 = vunpack.c.l.b16 %v2023
      %v2152 = vunpack.c.l.b16 %v2037
      %v2153 = vunpack.c.l.b16 %v2047
      %v2154 = vunpack.c.l.b16 %v2061
      %v2155 = vunpack.c.l.b16 %v2071
      %v2156 = vunpack.c.l.b16 %v2085
      %v2157 = vunpack.c.l.b16 %v2095
      %v2158 = vunpack.c.l.b16 %v2109
      %v2159 = vunpack.c.l.b16 %v2119
      %v2160 = vunpack.c.l.b16 %v2133
      %v2161 = vunpack.c.l.b16 %v2143
      %v2162 = vpack.c.b16 %v2147, %v2146
      %v2163 = vpack.c.b16 %v2149, %v2148
      %v2164 = vpack.c.b16 %v2151, %v2150
      %v2165 = vpack.c.b16 %v2153, %v2152
      %v2166 = vpack.c.b16 %v2155, %v2154
      %v2167 = vpack.c.b16 %v2157, %v2156
      %v2168 = vpack.c.b16 %v2159, %v2158
      %v2169 = vpack.c.b16 %v2161, %v2160
      %v2171 = vsel %vm445, %v2162, 0
      %v2174 = vsel %vm445, %v2163, 0
      %v2177 = vsel %vm445, %v2164, 0
      %v2180 = vsel %vm445, %v2165, 0
      %v2183 = vsel %vm445, %v2166, 0
      %v2186 = vsel %vm445, %v2167, 0
      %v2189 = vsel %vm445, %v2168, 0
      %v2192 = vsel %vm445, %v2169, 0
      %v2195 = vsel %vm470, %v2145, 0
      %2197 = vmatprep.subr.bf16.mxu0 0
      %2198 = vmatpush1.bf16.msra.mxu0 0
      %2199 = vmatprep.subr.bf16.mxu0 0
      %2200 = vmatpush1.bf16.msra.mxu0 0
      %2201 = vmatprep.subr.bf16.mxu0 0
      %2202 = vmatpush1.bf16.msra.mxu0 0
      %2203 = vmatprep.subr.bf16.mxu0 0
      %2204 = vmatpush1.bf16.msra.mxu0 0
      %2205 = vmatprep.subr.bf16.mxu0 0
      %2206 = vmatpush1.bf16.msra.mxu0 0
      %2207 = vmatprep.subr.bf16.mxu0 0
      %2208 = vmatpush1.bf16.msra.mxu0 0
      %2209 = vmatprep.subr.bf16.mxu0 0
      %2210 = vmatpush1.bf16.msra.mxu0 0
      %2211 = vmatprep.subr.bf16.mxu0 0
      %2212 = vmatpush1.bf16.msra.mxu0 %v2195
      %2213 = vmatprep.subr.bf16.mxu0 0
      %2214 = vmatpush2.bf16.msra.mxu0 0
      %2215 = vmatprep.subr.bf16.mxu0 0
      %2216 = vmatpush2.bf16.msra.mxu0 0
      %2217 = vmatprep.subr.bf16.mxu0 0
      %2218 = vmatpush2.bf16.msra.mxu0 0
      %2219 = vmatprep.subr.bf16.mxu0 0
      %2220 = vmatpush2.bf16.msra.mxu0 0
      %2221 = vmatprep.subr.bf16.mxu0 0
      %2222 = vmatpush2.bf16.msra.mxu0 0
      %2223 = vmatprep.subr.bf16.mxu0 0
      %2224 = vmatpush2.bf16.msra.mxu0 0
      %2225 = vmatprep.subr.bf16.mxu0 0
      %2226 = vmatpush2.bf16.msra.mxu0 0
      %2227 = vmatprep.subr.bf16.mxu0 0
      %2228 = vmatpush2.bf16.msra.mxu0 0
      %2229 = vmatprep.mubr.bf16.mxu0 0
      %2230 = vmatmul.mubr.bf16.gmra.mxu0 %v2171
      %v2231 = vpop.f32.mrf.mxu0
      %v2232 = vadd.f32 0.0, %v2231
      %v2233 = vpop.f32.mrf.mxu0
      %v2234 = vpop.f32.mrf.mxu0
      %v2235 = vpop.f32.mrf.mxu0
      %2236 = vmatprep.mubr.bf16.mxu0 0
      %2237 = vmatmul.mubr.bf16.gmra.mxu0 %v2174
      %v2238 = vpop.f32.mrf.mxu0
      %v2239 = vadd.f32 0.0, %v2238
      %v2240 = vpop.f32.mrf.mxu0
      %v2241 = vpop.f32.mrf.mxu0
      %v2242 = vpop.f32.mrf.mxu0
      %2243 = vmatprep.mubr.bf16.mxu0 0
      %2244 = vmatmul.mubr.bf16.gmra.mxu0 %v2177
      %v2245 = vpop.f32.mrf.mxu0
      %v2246 = vadd.f32 0.0, %v2245
      %v2247 = vpop.f32.mrf.mxu0
      %v2248 = vpop.f32.mrf.mxu0
      %v2249 = vpop.f32.mrf.mxu0
      %2250 = vmatprep.mubr.bf16.mxu0 0
      %2251 = vmatmul.mubr.bf16.gmra.mxu0 %v2180
      %v2252 = vpop.f32.mrf.mxu0
      %v2253 = vadd.f32 0.0, %v2252
      %v2254 = vpop.f32.mrf.mxu0
      %v2255 = vpop.f32.mrf.mxu0
      %v2256 = vpop.f32.mrf.mxu0
      %2257 = vmatprep.mubr.bf16.mxu0 0
      %2258 = vmatmul.mubr.bf16.gmra.mxu0 %v2183
      %v2259 = vpop.f32.mrf.mxu0
      %v2260 = vadd.f32 0.0, %v2259
      %v2261 = vpop.f32.mrf.mxu0
      %v2262 = vpop.f32.mrf.mxu0
      %v2263 = vpop.f32.mrf.mxu0
      %2264 = vmatprep.mubr.bf16.mxu0 0
      %2265 = vmatmul.mubr.bf16.gmra.mxu0 %v2186
      %v2266 = vpop.f32.mrf.mxu0
      %v2267 = vadd.f32 0.0, %v2266
      %v2268 = vpop.f32.mrf.mxu0
      %v2269 = vpop.f32.mrf.mxu0
      %v2270 = vpop.f32.mrf.mxu0
      %2271 = vmatprep.mubr.bf16.mxu0 0
      %2272 = vmatmul.mubr.bf16.gmra.mxu0 %v2189
      %v2273 = vpop.f32.mrf.mxu0
      %v2274 = vadd.f32 0.0, %v2273
      %v2275 = vpop.f32.mrf.mxu0
      %v2276 = vpop.f32.mrf.mxu0
      %v2277 = vpop.f32.mrf.mxu0
      %2278 = vmatprep.mubr.bf16.mxu0 0
      %2279 = vmatmul.mubr.bf16.gmra.mxu0 %v2192
      %v2280 = vpop.f32.mrf.mxu0
      %v2281 = vadd.f32 0.0, %v2280
      %v2282 = vpop.f32.mrf.mxu0
      %v2283 = vpop.f32.mrf.mxu0
      %v2284 = vpop.f32.mrf.mxu0
      %2285 = vdwg.mxu0
      %v2286 = vadd.f32 %v1920, %v2232
      %v2287 = vadd.f32 %v1921, %v2239
      %v2288 = vadd.f32 %v1922, %v2246
      %v2289 = vadd.f32 %v1923, %v2253
      %v2290 = vadd.f32 %v1924, %v2260
      %v2291 = vadd.f32 %v1925, %v2267
      %v2292 = vadd.f32 %v1926, %v2274
      %v2293 = vadd.f32 %v1927, %v2281
      %v2294 = vld [vmem:[%s1745] sm:$0xe]
      %v2295 = vld [vmem:[%s1745 + $0xc] sm:$0xe]
      %v2296 = vld [vmem:[%s1745 + $0x18] sm:$0xe]
      %v2297 = vld [vmem:[%s1745 + $0x24] sm:$0xe]
      %v2298 = vld [vmem:[%s1745 + $0x30] sm:$0xe]
      %v2299 = vld [vmem:[%s1745 + $0x3c] sm:$0xe]
      %v2300 = vld [vmem:[%s1745 + $0x48] sm:$0xe]
      %v2301 = vld [vmem:[%s1745 + $0x54] sm:$0xe]
      %v2326 = vrot.slane %v2294, 5
      %v2327 = vrot.slane %v2326, 4
      %v2328 = vrot.slane %v1929, 5
      %v2329 = vsel %vm745, %v2327, %v2328
      %v2330 = vrot.slane %v2328, 4
      %v2331 = vrot.slane %v1930, 5
      %v2332 = vsel %vm745, %v2330, %v2331
      %v2333 = vrot.slane %v2295, 5
      %v2334 = vrot.slane %v2333, 4
      %v2335 = vrot.slane %v1932, 5
      %v2336 = vsel %vm745, %v2334, %v2335
      %v2337 = vrot.slane %v2335, 4
      %v2338 = vrot.slane %v1933, 5
      %v2339 = vsel %vm745, %v2337, %v2338
      %v2340 = vrot.slane %v2296, 5
      %v2341 = vrot.slane %v2340, 4
      %v2342 = vrot.slane %v1935, 5
      %v2343 = vsel %vm745, %v2341, %v2342
      %v2344 = vrot.slane %v2342, 4
      %v2345 = vrot.slane %v1936, 5
      %v2346 = vsel %vm745, %v2344, %v2345
      %v2347 = vrot.slane %v2297, 5
      %v2348 = vrot.slane %v2347, 4
      %v2349 = vrot.slane %v1938, 5
      %v2350 = vsel %vm745, %v2348, %v2349
      %v2351 = vrot.slane %v2349, 4
      %v2352 = vrot.slane %v1939, 5
      %v2353 = vsel %vm745, %v2351, %v2352
      %v2354 = vrot.slane %v2298, 5
      %v2355 = vrot.slane %v2354, 4
      %v2356 = vrot.slane %v1941, 5
      %v2357 = vsel %vm745, %v2355, %v2356
      %v2358 = vrot.slane %v2356, 4
      %v2359 = vrot.slane %v1942, 5
      %v2360 = vsel %vm745, %v2358, %v2359
      %v2361 = vrot.slane %v2299, 5
      %v2362 = vrot.slane %v2361, 4
      %v2363 = vrot.slane %v1944, 5
      %v2364 = vsel %vm745, %v2362, %v2363
      %v2365 = vrot.slane %v2363, 4
      %v2366 = vrot.slane %v1945, 5
      %v2367 = vsel %vm745, %v2365, %v2366
      %v2368 = vrot.slane %v2300, 5
      %v2369 = vrot.slane %v2368, 4
      %v2370 = vrot.slane %v1947, 5
      %v2371 = vsel %vm745, %v2369, %v2370
      %v2372 = vrot.slane %v2370, 4
      %v2373 = vrot.slane %v1948, 5
      %v2374 = vsel %vm745, %v2372, %v2373
      %v2375 = vrot.slane %v2301, 5
      %v2376 = vrot.slane %v2375, 4
      %v2377 = vrot.slane %v1950, 5
      %v2378 = vsel %vm745, %v2376, %v2377
      %v2379 = vrot.slane %v2377, 4
      %v2380 = vrot.slane %v1951, 5
      %v2381 = vsel %vm745, %v2379, %v2380
      %s2382 = scalar_lea.vmem %s1, 32
      %v2383 = vld [vmem:[%s2382] sm:$0xf]
      %v2384 = vunpack.c.l.b16 %v2329
      %v2385 = vunpack.c.l.b16 %v2332
      %v2386 = vunpack.c.l.b16 %v2336
      %v2387 = vunpack.c.l.b16 %v2339
      %v2388 = vunpack.c.l.b16 %v2343
      %v2389 = vunpack.c.l.b16 %v2346
      %v2390 = vunpack.c.l.b16 %v2350
      %v2391 = vunpack.c.l.b16 %v2353
      %v2392 = vunpack.c.l.b16 %v2357
      %v2393 = vunpack.c.l.b16 %v2360
      %v2394 = vunpack.c.l.b16 %v2364
      %v2395 = vunpack.c.l.b16 %v2367
      %v2396 = vunpack.c.l.b16 %v2371
      %v2397 = vunpack.c.l.b16 %v2374
      %v2398 = vunpack.c.l.b16 %v2378
      %v2399 = vunpack.c.l.b16 %v2381
      %v2400 = vpack.c.b16 %v2385, %v2384
      %v2401 = vpack.c.b16 %v2387, %v2386
      %v2402 = vpack.c.b16 %v2389, %v2388
      %v2403 = vpack.c.b16 %v2391, %v2390
      %v2404 = vpack.c.b16 %v2393, %v2392
      %v2405 = vpack.c.b16 %v2395, %v2394
      %v2406 = vpack.c.b16 %v2397, %v2396
      %v2407 = vpack.c.b16 %v2399, %v2398
      %v2409 = vsel %vm445, %v2400, 0
      %v2412 = vsel %vm445, %v2401, 0
      %v2415 = vsel %vm445, %v2402, 0
      %v2418 = vsel %vm445, %v2403, 0
      %v2421 = vsel %vm445, %v2404, 0
      %v2424 = vsel %vm445, %v2405, 0
      %v2427 = vsel %vm445, %v2406, 0
      %v2430 = vsel %vm445, %v2407, 0
      %v2433 = vsel %vm470, %v2383, 0
      %2435 = vmatprep.subr.bf16.mxu0 0
      %2436 = vmatpush1.bf16.msra.mxu0 0
      %2437 = vmatprep.subr.bf16.mxu0 0
      %2438 = vmatpush1.bf16.msra.mxu0 0
      %2439 = vmatprep.subr.bf16.mxu0 0
      %2440 = vmatpush1.bf16.msra.mxu0 0
      %2441 = vmatprep.subr.bf16.mxu0 0
      %2442 = vmatpush1.bf16.msra.mxu0 0
      %2443 = vmatprep.subr.bf16.mxu0 0
      %2444 = vmatpush1.bf16.msra.mxu0 0
      %2445 = vmatprep.subr.bf16.mxu0 0
      %2446 = vmatpush1.bf16.msra.mxu0 0
      %2447 = vmatprep.subr.bf16.mxu0 0
      %2448 = vmatpush1.bf16.msra.mxu0 0
      %2449 = vmatprep.subr.bf16.mxu0 0
      %2450 = vmatpush1.bf16.msra.mxu0 %v2433
      %2451 = vmatprep.subr.bf16.mxu0 0
      %2452 = vmatpush2.bf16.msra.mxu0 0
      %2453 = vmatprep.subr.bf16.mxu0 0
      %2454 = vmatpush2.bf16.msra.mxu0 0
      %2455 = vmatprep.subr.bf16.mxu0 0
      %2456 = vmatpush2.bf16.msra.mxu0 0
      %2457 = vmatprep.subr.bf16.mxu0 0
      %2458 = vmatpush2.bf16.msra.mxu0 0
      %2459 = vmatprep.subr.bf16.mxu0 0
      %2460 = vmatpush2.bf16.msra.mxu0 0
      %2461 = vmatprep.subr.bf16.mxu0 0
      %2462 = vmatpush2.bf16.msra.mxu0 0
      %2463 = vmatprep.subr.bf16.mxu0 0
      %2464 = vmatpush2.bf16.msra.mxu0 0
      %2465 = vmatprep.subr.bf16.mxu0 0
      %2466 = vmatpush2.bf16.msra.mxu0 0
      %2467 = vmatprep.mubr.bf16.mxu0 0
      %2468 = vmatmul.mubr.bf16.gmra.mxu0 %v2409
      %v2469 = vpop.f32.mrf.mxu0
      %v2470 = vadd.f32 0.0, %v2469
      %v2471 = vpop.f32.mrf.mxu0
      %v2472 = vpop.f32.mrf.mxu0
      %v2473 = vpop.f32.mrf.mxu0
      %2474 = vmatprep.mubr.bf16.mxu0 0
      %2475 = vmatmul.mubr.bf16.gmra.mxu0 %v2412
      %v2476 = vpop.f32.mrf.mxu0
      %v2477 = vadd.f32 0.0, %v2476
      %v2478 = vpop.f32.mrf.mxu0
      %v2479 = vpop.f32.mrf.mxu0
      %v2480 = vpop.f32.mrf.mxu0
      %2481 = vmatprep.mubr.bf16.mxu0 0
      %2482 = vmatmul.mubr.bf16.gmra.mxu0 %v2415
      %v2483 = vpop.f32.mrf.mxu0
      %v2484 = vadd.f32 0.0, %v2483
      %v2485 = vpop.f32.mrf.mxu0
      %v2486 = vpop.f32.mrf.mxu0
      %v2487 = vpop.f32.mrf.mxu0
      %2488 = vmatprep.mubr.bf16.mxu0 0
      %2489 = vmatmul.mubr.bf16.gmra.mxu0 %v2418
      %v2490 = vpop.f32.mrf.mxu0
      %v2491 = vadd.f32 0.0, %v2490
      %v2492 = vpop.f32.mrf.mxu0
      %v2493 = vpop.f32.mrf.mxu0
      %v2494 = vpop.f32.mrf.mxu0
      %2495 = vmatprep.mubr.bf16.mxu0 0
      %2496 = vmatmul.mubr.bf16.gmra.mxu0 %v2421
      %v2497 = vpop.f32.mrf.mxu0
      %v2498 = vadd.f32 0.0, %v2497
      %v2499 = vpop.f32.mrf.mxu0
      %v2500 = vpop.f32.mrf.mxu0
      %v2501 = vpop.f32.mrf.mxu0
      %2502 = vmatprep.mubr.bf16.mxu0 0
      %2503 = vmatmul.mubr.bf16.gmra.mxu0 %v2424
      %v2504 = vpop.f32.mrf.mxu0
      %v2505 = vadd.f32 0.0, %v2504
      %v2506 = vpop.f32.mrf.mxu0
      %v2507 = vpop.f32.mrf.mxu0
      %v2508 = vpop.f32.mrf.mxu0
      %2509 = vmatprep.mubr.bf16.mxu0 0
      %2510 = vmatmul.mubr.bf16.gmra.mxu0 %v2427
      %v2511 = vpop.f32.mrf.mxu0
      %v2512 = vadd.f32 0.0, %v2511
      %v2513 = vpop.f32.mrf.mxu0
      %v2514 = vpop.f32.mrf.mxu0
      %v2515 = vpop.f32.mrf.mxu0
      %2516 = vmatprep.mubr.bf16.mxu0 0
      %2517 = vmatmul.mubr.bf16.gmra.mxu0 %v2430
      %v2518 = vpop.f32.mrf.mxu0
      %v2519 = vadd.f32 0.0, %v2518
      %v2520 = vpop.f32.mrf.mxu0
      %v2521 = vpop.f32.mrf.mxu0
      %v2522 = vpop.f32.mrf.mxu0
      %2523 = vdwg.mxu0
      %v2524 = vadd.f32 %v2286, %v2470
      %v2525 = vadd.f32 %v2287, %v2477
      %v2526 = vadd.f32 %v2288, %v2484
      %v2527 = vadd.f32 %v2289, %v2491
      %v2528 = vadd.f32 %v2290, %v2498
      %v2529 = vadd.f32 %v2291, %v2505
      %v2530 = vadd.f32 %v2292, %v2512
      %v2531 = vadd.f32 %v2293, %v2519
      %v2532 = vld [vmem:[%s2] sm:$0x1]
      %v2534 = vlaneseq
      %v2535 = vshrl.u32 %v2534, 7
      %v2536 = vsub.s32 0, %v2535
      %v2537 = vrot.slane %v2532, %v2536
      %v2539 = vadd.f32 %v2524, %v2537
      %v2540 = vadd.f32 %v2525, %v2537
      %v2541 = vadd.f32 %v2526, %v2537
      %v2542 = vadd.f32 %v2527, %v2537
      %v2543 = vadd.f32 %v2528, %v2537
      %v2544 = vadd.f32 %v2529, %v2537
      %v2545 = vadd.f32 %v2530, %v2537
      %v2546 = vadd.f32 %v2531, %v2537
      %vm2547 = vcmp.ge.f32.partialorder %v2539, 0.0
      %vm2548 = vcmp.ge.f32.partialorder %v2540, 0.0
      %vm2549 = vcmp.ge.f32.partialorder %v2541, 0.0
      %vm2550 = vcmp.ge.f32.partialorder %v2542, 0.0
      %vm2551 = vcmp.ge.f32.partialorder %v2543, 0.0
      %vm2552 = vcmp.ge.f32.partialorder %v2544, 0.0
      %vm2553 = vcmp.ge.f32.partialorder %v2545, 0.0
      %vm2554 = vcmp.ge.f32.partialorder %v2546, 0.0
      %v2555 = vmul.f32 %v2539, 0.2
      %v2556 = vmul.f32 %v2540, 0.2
      %v2557 = vmul.f32 %v2541, 0.2
      %v2558 = vmul.f32 %v2542, 0.2
      %v2559 = vmul.f32 %v2543, 0.2
      %v2560 = vmul.f32 %v2544, 0.2
      %v2561 = vmul.f32 %v2545, 0.2
      %v2562 = vmul.f32 %v2546, 0.2
      %v2563 = vsel %vm2547, %v2539, %v2555
      %v2564 = vsel %vm2548, %v2540, %v2556
      %v2565 = vsel %vm2549, %v2541, %v2557
      %v2566 = vsel %vm2550, %v2542, %v2558
      %v2567 = vsel %vm2551, %v2543, %v2559
      %v2568 = vsel %vm2552, %v2544, %v2560
      %v2569 = vsel %vm2553, %v2545, %v2561
      %v2570 = vsel %vm2554, %v2546, %v2562
      %v2571 = vpack.c.bf16 %v2563, %v2563
      %v2572 = vpack.c.bf16 %v2564, %v2564
      %v2573 = vpack.c.bf16 %v2565, %v2565
      %v2574 = vpack.c.bf16 %v2566, %v2566
      %v2575 = vpack.c.bf16 %v2567, %v2567
      %v2576 = vpack.c.bf16 %v2568, %v2568
      %v2577 = vpack.c.bf16 %v2569, %v2569
      %v2578 = vpack.c.bf16 %v2570, %v2570
      %vm2579 = vcmask 125952
      %2580 = vst.msk [vmem:[%s192] sm:$0xf] %vm2579, %v2571
      %2581 = vst.msk [vmem:[%s192 + $0x4] sm:$0xf] %vm2579, %v2572
      %2582 = vst.msk [vmem:[%s192 + $0x8] sm:$0xf] %vm2579, %v2573
      %2583 = vst.msk [vmem:[%s192 + $0xc] sm:$0xf] %vm2579, %v2574
      %2584 = vst.msk [vmem:[%s192 + $0x10] sm:$0xf] %vm2579, %v2575
      %2585 = vst.msk [vmem:[%s192 + $0x14] sm:$0xf] %vm2579, %v2576
      %2586 = vst.msk [vmem:[%s192 + $0x18] sm:$0xf] %vm2579, %v2577
      %2587 = vst.msk [vmem:[%s192 + $0x1c] sm:$0xf] %vm2579, %v2578
      %s2588 = smul.u32 8, %s19
      %p2589 = scmp.lt.s32.totalorder %s18, 1
      %s2590 = scalar_select %p2589, %s18, 1
      %p2591 = scmp.lt.s32.totalorder %s2588, 7
      %s2592 = scalar_select %p2591, %s2588, 7
      %s2593 = smul.addr %s2590, 8
      %s2594 = sadd.s32 %s2592, %s2593
      %s2595 = smul.addr %s2594, 4
      %s2596 = scalar_lea.vmem %s3, %s2595
      // Predicated region
      $region33: #{forward.10} parent=31 // pred_check
        %p2597 = pneg %p114
      $region34: #{forward.10} parent=31 // pred_check_branch
        %2599 = sbr.rel (%p2597) target = $region36
      $region35: #{forward.10} parent=31 // pred_region
        %s2600 = smul.u32 8, %s19
      $region36: #{forward.10} parent=31 // pred_fallthru
        _
    $region32: #{forward.10} parent=5 // pred_fallthru
      _
    %p2601 = scmp.le.s32.totalorder 2, %s9
    // Predicated region
    $region37: #{forward.10} parent=5 // pred_check
      %p2602 = pneg %p2601
    $region38: #{forward.10} parent=5 // pred_check_branch
      %2604 = sbr.rel (%p2602) target = $region40
    $region39: #{forward.10} parent=5 // pred_region
      %s2605 = ssub.s32 %s9, 2
      // Predicated region
      $region41: #{forward.10} parent=39 // pred_check
        %p2606 = pneg %p120
      $region42: #{forward.10} parent=39 // pred_check_branch
        %2608 = sbr.rel (%p2606) target = $region44
      $region43: #{forward.10} parent=39 // pred_region
        %s2609 = smul.u32 8, %s21
        %p2610 = scmp.lt.s32.totalorder %s20, 1
        %s2611 = scalar_select %p2610, %s20, 1
        %p2612 = scmp.lt.s32.totalorder %s2609, 7
        %s2613 = scalar_select %p2612, %s2609, 7
        %s2614 = smul.addr %s2611, 8
        %s2615 = sadd.s32 %s2613, %s2614
        %s2616 = smul.addr %s2615, 4
        %s2617 = scalar_lea.vmem %s3, %s2616
      $region44: #{forward.10} parent=39 // pred_fallthru
        _
    $region40: #{forward.10} parent=5 // pred_fallthru
      _
  $region6: #{forward.10} parent=0 // loop_footer
    %s13 = sadd.s32 1, %s9
  $region7: #{forward.10} parent=0 // loop_footer_branch
    %8 = sbr.rel target = $region3
  $region8: #{forward.10} parent=0 // loop_exit
    _

// kernel: forward.11
$region0: #{forward.11}
  #allocation0 [shape = 'u32[]', space=smem, size = 0x4, offset = 0x4, fixed_abs, tag = 'smem constant byte address 0x4 - core index']
  #allocation1 [shape = 'u32[144,128]{1,0:T(1,128)}', space=vmem, size = 0x12000, scoped, tag = 'internal scratch']
  #allocation2 [shape = 'f32[1,1]{1,0:T(1,128)}', space=vmem, size = 0x200, scoped, tag = 'scratch operand']
  #allocation3 [shape = 'f32[1,1]{1,0:T(1,128)}', space=vmem, size = 0x200, scoped, tag = 'scratch operand']
  %s0 = inlined_call_operand.vmem [shape: f32[32,64], index: 0, kind: input, shape index: {}]
  %s1 = inlined_call_operand.vmem [shape: f32[32,64], index: 1, kind: input, shape index: {}]
  %s2 = inlined_call_operand.vmem [shape: f32[32,1], index: 2, kind: input, shape index: {}]
  %s3 = inlined_call_operand.hbm [shape: f32[1,1], index: 3, kind: output, shape index: {}]
  %s4 = sld [smem:[#allocation0]]
  $region30: #{forward.11} parent=0
    _
  %s6 = ssub.s32 1, %s4
  %s7 = scalar_select 0, %s6, %s4
  $region1: #{forward.11} parent=0
    #allocation4 [shape = 'u8[512]{0}', space=vmem, size = 0x400, scoped, tag = 'output window, operand 0, single buffered']
    #allocation5 [shape = 's32[1]{0}', space=sflag, size = 0x4, scoped, tag = 'scoped memory for forward.11']
    %8 = vsyncpa [#allocation5], 0
    // Predicated region
    $region2: #{forward.11} parent=1 // pred_check
      _
    $region3: #{forward.11} parent=1 // pred_check_branch
      %10 = sbr.rel (0) target = $region5
    $region4: #{forward.11} parent=1 // pred_region
      _
    $region5: #{forward.11} parent=1 // pred_fallthru
      _
    // Predicated region
    $region6: #{forward.11} parent=1 // pred_check
      _
    $region7: #{forward.11} parent=1 // pred_check_branch
      %12 = sbr.rel (0) target = $region9
    $region8: #{forward.11} parent=1 // pred_region
      _
    $region9: #{forward.11} parent=1 // pred_fallthru
      _
    // Predicated region
    $region10: #{forward.11} parent=1 // pred_check
      _
    $region11: #{forward.11} parent=1 // pred_check_branch
      %14 = sbr.rel (0) target = $region13
    $region12: #{forward.11} parent=1 // pred_region
      _
    $region13: #{forward.11} parent=1 // pred_fallthru
      _
    %p15 = scmp.eq.s32.totalorder 0, 0
    // Predicated region
    $region14: #{forward.11} parent=1 // pred_check
      %p16 = pneg %p15
    $region15: #{forward.11} parent=1 // pred_check_branch
      %18 = sbr.rel (%p16) target = $region17
    $region16: #{forward.11} parent=1 // pred_region
      %vm19 = vcmask 0
      %20 = vst.msk [vmem:[#allocation2] sm:$0x1] %vm19, 0.0
      %21 = vst.msk [vmem:[#allocation3] sm:$0x1] %vm19, 0.0
    $region17: #{forward.11} parent=1 // pred_fallthru
      _
    %v22 = vld [vmem:[%s0] sm:$0xff]
    %v23 = vld [vmem:[%s0 + $0x8] sm:$0xff]
    %v24 = vld [vmem:[%s0 + $0x10] sm:$0xff]
    %v25 = vld [vmem:[%s0 + $0x18] sm:$0xff]
    %v26 = vld [vmem:[%s1] sm:$0xff]
    %v27 = vld [vmem:[%s1 + $0x8] sm:$0xff]
    %v28 = vld [vmem:[%s1 + $0x10] sm:$0xff]
    %v29 = vld [vmem:[%s1 + $0x18] sm:$0xff]
    %v30 = vsub.f32 %v22, %v26
    %v31 = vsub.f32 %v23, %v27
    %v32 = vsub.f32 %v24, %v28
    %v33 = vsub.f32 %v25, %v29
    %v34 = vmul.f32 %v30, %v30
    %v35 = vmul.f32 %v31, %v31
    %v36 = vmul.f32 %v32, %v32
    %v37 = vmul.f32 %v33, %v33
    %vm38 = vcmask 523264
    %v39 = vsel %vm38, %v34, 0.0
    %40 = vadd.xlane.f32.xlu0 %v39
    %v41 = vpop.xlane.xlu0 %40
    %v42 = vsel %vm38, %v35, 0.0
    %43 = vadd.xlane.f32.xlu0 %v42
    %v44 = vpop.xlane.xlu0 %43
    %v45 = vsel %vm38, %v36, 0.0
    %46 = vadd.xlane.f32.xlu0 %v45
    %v47 = vpop.xlane.xlu0 %46
    %v48 = vsel %vm38, %v37, 0.0
    %49 = vadd.xlane.f32.xlu0 %v48
    %v50 = vpop.xlane.xlu0 %49
    %v51 = vrcp.pop 64.0
    %v52 = vmul.f32 %v41, %v51
    %v53 = vmul.f32 %v44, %v51
    %v54 = vmul.f32 %v47, %v51
    %v55 = vmul.f32 %v50, %v51
    %s56 = smul.u32 0, 32
    %v57 = vlaneseq
    %v58 = vshrl.u32 %v57, 7
    %v59 = vadd.s32 %v58, 8
    %v60 = vadd.s32 %v58, 16
    %v61 = vadd.s32 %v58, 24
    %v62 = vstv %s56
    %v63 = vadd.s32 %v62, %v58
    %v64 = vadd.s32 %v62, %v59
    %v65 = vadd.s32 %v62, %v60
    %v66 = vadd.s32 %v62, %v61
    %vm67 = vcmp.lt.s32.totalorder %v63, 32
    %vm68 = vcmp.lt.s32.totalorder %v64, 32
    %vm69 = vcmp.lt.s32.totalorder %v65, 32
    %vm70 = vcmp.lt.s32.totalorder %v66, 32
    %v71 = vld [vmem:[%s2] sm:$0xff]
    %v72 = vld [vmem:[%s2 + $0x8] sm:$0xff]
    %v73 = vld [vmem:[%s2 + $0x10] sm:$0xff]
    %v74 = vld [vmem:[%s2 + $0x18] sm:$0xff]
    %v75 = vsel %vm67, %v71, 0.0
    %v76 = vsel %vm68, %v72, 0.0
    %v77 = vsel %vm69, %v73, 0.0
    %v78 = vsel %vm70, %v74, 0.0
    %v79 = vsel %vm67, %v52, 0.0
    %v80 = vsel %vm68, %v53, 0.0
    %v81 = vsel %vm69, %v54, 0.0
    %v82 = vsel %vm70, %v55, 0.0
    %v83 = vld [vmem:[#allocation2] sm:$0x1]
    %v84 = vmul.f32 %v79, %v75
    %v85 = vmul.f32 %v80, %v76
    %v86 = vmul.f32 %v81, %v77
    %v87 = vmul.f32 %v82, %v78
    %vm88 = vcmask 7168
    %v89 = vsel %vm88, %v84, 0.0
    %v90 = vsel %vm88, %v85, 0.0
    %v91 = vadd.f32 %v89, %v90
    %v92 = vsel %vm88, %v86, 0.0
    %v93 = vadd.f32 %v91, %v92
    %v94 = vsel %vm88, %v87, 0.0
    %v95 = vadd.f32 %v93, %v94
    %96 = vadd.xlane.f32.xlu0 %v95
    %v97 = vpop.xlane.xlu0 %96
    %v98 = vrot.slane %v97, 4
    %v99 = vadd.f32 %v97, %v98
    %v100 = vrot.slane %v99, 2
    %v101 = vadd.f32 %v99, %v100
    %v102 = vrot.slane %v101, 1
    %v103 = vadd.f32 %v101, %v102
    %s104 = vtos %v103
    %v105 = vstv %s104
    %v106 = vadd.f32 %v83, %v105
    %vm107 = vcmask 0
    %108 = vst.msk [vmem:[#allocation2] sm:$0x1] %vm107, %v106
    %v109 = vld [vmem:[#allocation3] sm:$0x1]
    %v110 = vsel %vm88, %v75, 0.0
    %v111 = vsel %vm88, %v76, 0.0
    %v112 = vadd.f32 %v110, %v111
    %v113 = vsel %vm88, %v77, 0.0
    %v114 = vadd.f32 %v112, %v113
    %v115 = vsel %vm88, %v78, 0.0
    %v116 = vadd.f32 %v114, %v115
    %117 = vadd.xlane.f32.xlu0 %v116
    %v118 = vpop.xlane.xlu0 %117
    %v119 = vrot.slane %v118, 4
    %v120 = vadd.f32 %v118, %v119
    %v121 = vrot.slane %v120, 2
    %v122 = vadd.f32 %v120, %v121
    %v123 = vrot.slane %v122, 1
    %v124 = vadd.f32 %v122, %v123
    %s125 = vtos %v124
    %v126 = vstv %s125
    %v127 = vadd.f32 %v109, %v126
    %128 = vst.msk [vmem:[#allocation3] sm:$0x1] %vm107, %v127
    // Predicated region
    $region18: #{forward.11} parent=1 // pred_check
      %p129 = pneg %p15
    $region19: #{forward.11} parent=1 // pred_check_branch
      %131 = sbr.rel (%p129) target = $region21
    $region20: #{forward.11} parent=1 // pred_region
      %v132 = vld [vmem:[#allocation2] sm:$0x1]
      %v133 = vld [vmem:[#allocation3] sm:$0x1]
      %v134 = vmax.f32 %v133, 1e-08
      %v135 = vrcp.pop %v134
      %v136 = vmul.f32 %v132, %v135
      %137 = vst.msk [vmem:[#allocation4] sm:$0x1] %vm107, %v136
    $region21: #{forward.11} parent=1 // pred_fallthru
      _
    // Predicated region
    $region22: #{forward.11} parent=1 // pred_check
      _
    $region23: #{forward.11} parent=1 // pred_check_branch
      %139 = sbr.rel (0) target = $region25
    $region24: #{forward.11} parent=1 // pred_region
      %s141 = ssub.s32 16, 16
      %142 = vsyncadd [#allocation5], %s141
      %s144 = sshll.u32 [#allocation4], 4
      %s145 = int_to_ptr.vmem [resolvable:$true] %s144
      %147 = dma.vmem_to_hbm [thread:$0]  %s145, 16, %s3, [#allocation5]
    $region25: #{forward.11} parent=1 // pred_fallthru
      _
    // Predicated region
    $region26: #{forward.11} parent=1 // pred_check
      _
    $region27: #{forward.11} parent=1 // pred_check_branch
      %149 = sbr.rel (0) target = $region29
    $region28: #{forward.11} parent=1 // pred_region
      %150 = dma.done [#allocation5], 16
    $region29: #{forward.11} parent=1 // pred_fallthru
      _
    %151 = vsyncpa [#allocation5], 1

</llo_original>
